<compile_context>
chip_gen: v6e
topology: v6e:2x2x1
jax: 0.10.0
libtpu: 0.0.40
codegen_flags: <defaults>
</compile_context>

<pallas_src>
import functools

import jax
import jax.numpy as jnp
from jax.experimental import pallas as pl
from jax.experimental.pallas import tpu as pltpu


def _round_up(x, m):
    return (x + m - 1) // m * m


# ----------------------------------------------------------------------------
# Fused kernel: conv1 -> LReLU -> conv2 -> LReLU for one batch element
# ----------------------------------------------------------------------------
def _conv_block_kernel(x_ref, w1_ref, b1_ref, w2_ref, b2_ref, o_ref,
                       patches_ref, mid_ref, acc2_ref, *,
                       K, stride, dilation, pad, H1, W1, H2, W2, neg_slope):
    # x_ref       : (Hp, Wp, Cin)             spatially pre-padded input (bf16)
    # w1_ref      : (K*K*Cin, Cp)             conv1 weights, taps folded into K (bf16)
    # b1_ref      : (1, Cp)                   conv1 bias (f32)
    # w2_ref      : (K*K, Cp, Cp)             conv2 weights (bf16)
    # b2_ref      : (1, Cp)                   conv2 bias (f32)
    # o_ref       : (H2, W2, Cp)              output tile (f32)
    # patches_ref : (H1*W1, K*K*Cin)          conv1 im2col scratch (bf16)
    # mid_ref     : (H1+2*pad, W1+2*pad, Cp)  zero-padded intermediate (bf16)
    # acc2_ref    : (H2*W2, Cp)               conv2 f32 accumulator scratch
    Cin = x_ref.shape[-1]
    Cp = o_ref.shape[-1]

    # ---- conv1: pack K*K shifted slices into VMEM im2col, ONE MXU matmul ----
    x_full = x_ref[...] if stride != 1 else None
    for kh in range(K):
        for kw in range(K):
            t = kh * K + kw
            h0 = kh * dilation
            w0 = kw * dilation
            if stride == 1:
                a = x_ref[h0:h0 + H1, w0:w0 + W1, :]
            else:
                a = x_full[h0:h0 + stride * H1:stride,
                           w0:w0 + stride * W1:stride, :]
            patches_ref[:, t * Cin:(t + 1) * Cin] = a.reshape(H1 * W1, Cin)

    y1 = jnp.dot(patches_ref[...], w1_ref[...],
                 preferred_element_type=jnp.float32) + b1_ref[...]
    y1 = jnp.maximum(y1, neg_slope * y1)                   # LeakyReLU(0.2)

    # ---- intermediate stays in VMEM (zero halo, never written to HBM) -------
    mid_ref[...] = jnp.zeros_like(mid_ref)                 # megacore-safe halo
    mid_ref[pad:pad + H1, pad:pad + W1, :] = (
        y1.reshape(H1, W1, Cp).astype(mid_ref.dtype))

    # ---- conv2 (stride 1): K*K shifted-slice matmuls, f32 accumulation ------
    acc2_ref[...] = jnp.broadcast_to(b2_ref[...], acc2_ref.shape)  # bias as init
    for kh in range(K):
        for kw in range(K):
            h0 = kh * dilation
            w0 = kw * dilation
            a = mid_ref[h0:h0 + H2, w0:w0 + W2, :].reshape(H2 * W2, Cp)
            acc2_ref[...] += jnp.dot(a, w2_ref[kh * K + kw],
                                     preferred_element_type=jnp.float32)
    y2 = acc2_ref[...]
    y2 = jnp.maximum(y2, neg_slope * y2)                   # LeakyReLU(0.2)
    o_ref[...] = y2.reshape(H2, W2, Cp).astype(o_ref.dtype)


# ----------------------------------------------------------------------------
# Wrapper: NCHW public interface, NHWC internally, lane-dense padded channels
# ----------------------------------------------------------------------------
def conv_block_forward(x_nchw, params, *, kernel_size, stride, dilation, padding,
                       neg_slope=0.2):
    N, Cin, H, W = x_nchw.shape
    K = kernel_size
    Cout = params["conv1_w"].shape[0]
    Cp = max(128, _round_up(Cout, 128))                    # lane-dense channels

    H1 = (H + 2 * padding - dilation * (K - 1) - 1) // stride + 1
    W1 = (W + 2 * padding - dilation * (K - 1) - 1) // stride + 1
    H2 = H1 + 2 * padding - dilation * (K - 1)
    W2 = W1 + 2 * padding - dilation * (K - 1)
    Hp, Wp = H + 2 * padding, W + 2 * padding

    # NCHW -> NHWC once; spatial zero-pad once; bf16 for the MXU.
    x_nhwc = jnp.transpose(x_nchw, (0, 2, 3, 1))
    xp = jnp.pad(x_nhwc, ((0, 0), (padding, padding), (padding, padding), (0, 0)))
    xp = xp.astype(jnp.bfloat16)

    # conv1: OIHW -> (K*K*Cin, Cp), taps folded into the contraction dim so the
    # kernel does a single matmul; output channels zero-padded to Cp.
    def prep_w1(w_oihw):
        co, ci = w_oihw.shape[0], w_oihw.shape[1]
        w = jnp.transpose(w_oihw, (2, 3, 1, 0))            # (K, K, Cin, Cout)
        w = jnp.pad(w, ((0, 0), (0, 0), (0, 0), (0, Cp - co)))
        return w.reshape(K * K * ci, Cp).astype(jnp.bfloat16)

    # conv2: OIHW -> (K*K, Cp, Cp); input and output channels padded to Cp so
    # every matmul and every store is 128-lane dense.
    def prep_w2(w_oihw):
        co, ci = w_oihw.shape[0], w_oihw.shape[1]
        w = jnp.transpose(w_oihw, (2, 3, 1, 0))            # (K, K, Cout, Cout)
        w = jnp.pad(w, ((0, 0), (0, 0), (0, Cp - ci), (0, Cp - co)))
        return w.reshape(K * K, Cp, Cp).astype(jnp.bfloat16)

    def prep_b(b):
        return jnp.pad(b, (0, Cp - b.shape[0])).reshape(1, Cp).astype(jnp.float32)

    w1 = prep_w1(params["conv1_w"])                        # (K*K*Cin, Cp)
    b1 = prep_b(params["conv1_b"])
    w2 = prep_w2(params["conv2_w"])                        # (K*K, Cp, Cp)
    b2 = prep_b(params["conv2_b"])

    kernel = functools.partial(
        _conv_block_kernel, K=K, stride=stride, dilation=dilation, pad=padding,
        H1=H1, W1=W1, H2=H2, W2=W2, neg_slope=neg_slope)

    grid_spec = pltpu.PrefetchScalarGridSpec(
        num_scalar_prefetch=0,
        grid=(N,),                                         # one image per step
        in_specs=[
            pl.BlockSpec((None, Hp, Wp, Cin), lambda n: (n, 0, 0, 0)),
            pl.BlockSpec((K * K * Cin, Cp), lambda n: (0, 0)),
            pl.BlockSpec((1, Cp), lambda n: (0, 0)),
            pl.BlockSpec((K * K, Cp, Cp), lambda n: (0, 0, 0)),
            pl.BlockSpec((1, Cp), lambda n: (0, 0)),
        ],
        out_specs=pl.BlockSpec((None, H2, W2, Cp), lambda n: (n, 0, 0, 0)),
        scratch_shapes=[
            pltpu.VMEM((H1 * W1, K * K * Cin), jnp.bfloat16),   # conv1 im2col
            pltpu.VMEM((H1 + 2 * padding, W1 + 2 * padding, Cp), jnp.bfloat16),
            pltpu.VMEM((H2 * W2, Cp), jnp.float32),             # conv2 acc
        ],
    )

    out = pl.pallas_call(
        kernel,
        out_shape=jax.ShapeDtypeStruct((N, H2, W2, Cp), jnp.float32),
        grid_spec=grid_spec,
        compiler_params=pltpu.CompilerParams(
            dimension_semantics=("parallel",),             # v7x: shard across TCs
            vmem_limit_bytes=32 * 1024 * 1024,             # fits v5e/v6e/v7x
        ),
    )(xp, w1, b1, w2, b2)

    # slice padded channels away, back to public NCHW layout (single transpose)
    return jnp.transpose(out[..., :Cout], (0, 3, 1, 2))


def init_params(key, channels_in, channels_out, kernel_size):
    k1, k2, k3, k4 = jax.random.split(key, 4)
    fan1 = channels_in * kernel_size * kernel_size
    fan2 = channels_out * kernel_size * kernel_size
    s1 = 1.0 / jnp.sqrt(fan1)
    s2 = 1.0 / jnp.sqrt(fan2)
    return {
        "conv1_w": jax.random.uniform(k1, (channels_out, channels_in, kernel_size, kernel_size),
                                      jnp.float32, -s1, s1),
        "conv1_b": jax.random.uniform(k2, (channels_out,), jnp.float32, -s1, s1),
        "conv2_w": jax.random.uniform(k3, (channels_out, channels_out, kernel_size, kernel_size),
                                      jnp.float32, -s2, s2),
        "conv2_b": jax.random.uniform(k4, (channels_out,), jnp.float32, -s2, s2),
    }


if __name__ == "__main__":
    key = jax.random.PRNGKey(0)
    k_x, k_p = jax.random.split(key)

    N, C_in, H, W = 2, 4, 16, 16
    C_out, ksize, stride, dilation, padding = 8, 3, 1, 1, 1

    x = jax.random.normal(k_x, (N, C_in, H, W), jnp.float32)
    params = init_params(k_p, C_in, C_out, ksize)

    fwd = jax.jit(functools.partial(conv_block_forward,
                                    kernel_size=ksize, stride=stride,
                                    dilation=dilation, padding=padding))
    out = jax.block_until_ready(fwd(x, params))
    assert out.shape == (N, C_out, H, W)

    # sanity check against XLA conv + leaky_relu (bf16-matmul and f32 refs)
    def ref(x, params, matmul_dtype):
        def conv(v, w, b, s):
            y = jax.lax.conv_general_dilated(
                v.astype(matmul_dtype), w.astype(matmul_dtype),
                window_strides=(s, s), padding=[(padding, padding)] * 2,
                rhs_dilation=(dilation, dilation),
                dimension_numbers=("NCHW", "OIHW", "NCHW"),
                preferred_element_type=jnp.float32)
            return y + b.reshape(1, -1, 1, 1)
        o = conv(x, params["conv1_w"], params["conv1_b"], stride)
        o = jnp.where(o > 0, o, 0.2 * o)
        o = conv(o, params["conv2_w"], params["conv2_b"], 1)
        return jnp.where(o > 0, o, 0.2 * o)

    ref_bf16 = ref(x, params, jnp.bfloat16)   # same bf16-input / f32-acc recipe
    ref_f32 = ref(x, params, jnp.float32)     # full-precision reference

    err_bf16 = float(jnp.max(jnp.abs(out - ref_bf16)))
    err_f32 = float(jnp.max(jnp.abs(out - ref_f32)))
    assert err_bf16 < 3e-2, f"bf16-reference mismatch: {err_bf16}"
    assert err_f32 < 1e-1, f"f32-reference mismatch: {err_f32}"

    print("KERNEL_OK")
</pallas_src>

<mosaic_0001>
module attributes {stable_mosaic.version = 11 : i64} {
  func.func @_conv_block_kernel(%arg0: i32, %arg1: memref<1x18x18x4xbf16, #tpu.memory_space<vmem>>, %arg2: memref<36x128xbf16, #tpu.memory_space<vmem>>, %arg3: memref<1x128xf32, #tpu.memory_space<vmem>>, %arg4: memref<9x128x128xbf16, #tpu.memory_space<vmem>>, %arg5: memref<1x128xf32, #tpu.memory_space<vmem>>, %arg6: memref<1x16x16x128xf32, #tpu.memory_space<vmem>>, %arg7: memref<256x36xbf16, #tpu.memory_space<vmem>>, %arg8: memref<18x18x128xbf16, #tpu.memory_space<vmem>>, %arg9: memref<256x128xf32, #tpu.memory_space<vmem>>) attributes {dimension_semantics = [#tpu.dimension_semantics<parallel>], iteration_bounds = array<i64: 2>, scalar_prefetch = 0 : i64, scratch_operands = 3 : i64, tpu.core_type = #tpu.core_type<tc>, window_params = [{transform_indices = @transform_0, window_bounds = array<i64: 1, 18, 18, 4>}, {pipeline_mode = #tpu.pipeline_mode<synchronous>, transform_indices = @transform_1, window_bounds = array<i64: 36, 128>}, {pipeline_mode = #tpu.pipeline_mode<synchronous>, transform_indices = @transform_2, window_bounds = array<i64: 1, 128>}, {pipeline_mode = #tpu.pipeline_mode<synchronous>, transform_indices = @transform_3, window_bounds = array<i64: 9, 128, 128>}, {pipeline_mode = #tpu.pipeline_mode<synchronous>, transform_indices = @transform_4, window_bounds = array<i64: 1, 128>}, {transform_indices = @transform_5, window_bounds = array<i64: 1, 16, 16, 128>}]} {
    %c0 = arith.constant 0 : index
    %c0_0 = arith.constant 0 : index
    %c0_1 = arith.constant 0 : index
    %c0_2 = arith.constant 0 : index
    %0 = vector.load %arg1[%c0, %c0_0, %c0_1, %c0_2] : memref<1x18x18x4xbf16, #tpu.memory_space<vmem>>, vector<1x16x16x4xbf16>
    %1 = vector.shape_cast %0 : vector<1x16x16x4xbf16> to vector<16x16x4xbf16>
    %2 = vector.shape_cast %1 : vector<16x16x4xbf16> to vector<256x4xbf16>
    %c0_3 = arith.constant 0 : index
    %c0_4 = arith.constant 0 : index
    %3 = vector.load %arg7[%c0_3, %c0_4] : memref<256x36xbf16, #tpu.memory_space<vmem>>, vector<256x4xbf16>
    tpu.vector_store %arg7[%c0_3, %c0_4], %2 {strides = array<i32>} : memref<256x36xbf16, #tpu.memory_space<vmem>>, vector<256x4xbf16>,
    %c0_5 = arith.constant 0 : index
    %c0_6 = arith.constant 0 : index
    %c1 = arith.constant 1 : index
    %c0_7 = arith.constant 0 : index
    %4 = vector.load %arg1[%c0_5, %c0_6, %c1, %c0_7] : memref<1x18x18x4xbf16, #tpu.memory_space<vmem>>, vector<1x16x16x4xbf16>
    %5 = vector.shape_cast %4 : vector<1x16x16x4xbf16> to vector<16x16x4xbf16>
    %6 = vector.shape_cast %5 : vector<16x16x4xbf16> to vector<256x4xbf16>
    %c0_8 = arith.constant 0 : index
    %c4 = arith.constant 4 : index
    %7 = vector.load %arg7[%c0_8, %c4] : memref<256x36xbf16, #tpu.memory_space<vmem>>, vector<256x4xbf16>
    tpu.vector_store %arg7[%c0_8, %c4], %6 {strides = array<i32>} : memref<256x36xbf16, #tpu.memory_space<vmem>>, vector<256x4xbf16>,
    %c0_9 = arith.constant 0 : index
    %c0_10 = arith.constant 0 : index
    %c2 = arith.constant 2 : index
    %c0_11 = arith.constant 0 : index
    %8 = vector.load %arg1[%c0_9, %c0_10, %c2, %c0_11] : memref<1x18x18x4xbf16, #tpu.memory_space<vmem>>, vector<1x16x16x4xbf16>
    %9 = vector.shape_cast %8 : vector<1x16x16x4xbf16> to vector<16x16x4xbf16>
    %10 = vector.shape_cast %9 : vector<16x16x4xbf16> to vector<256x4xbf16>
    %c0_12 = arith.constant 0 : index
    %c8 = arith.constant 8 : index
    %11 = vector.load %arg7[%c0_12, %c8] : memref<256x36xbf16, #tpu.memory_space<vmem>>, vector<256x4xbf16>
    tpu.vector_store %arg7[%c0_12, %c8], %10 {strides = array<i32>} : memref<256x36xbf16, #tpu.memory_space<vmem>>, vector<256x4xbf16>,
    %c0_13 = arith.constant 0 : index
    %c1_14 = arith.constant 1 : index
    %c0_15 = arith.constant 0 : index
    %c0_16 = arith.constant 0 : index
    %12 = vector.load %arg1[%c0_13, %c1_14, %c0_15, %c0_16] : memref<1x18x18x4xbf16, #tpu.memory_space<vmem>>, vector<1x16x16x4xbf16>
    %13 = vector.shape_cast %12 : vector<1x16x16x4xbf16> to vector<16x16x4xbf16>
    %14 = vector.shape_cast %13 : vector<16x16x4xbf16> to vector<256x4xbf16>
    %c0_17 = arith.constant 0 : index
    %c12 = arith.constant 12 : index
    %15 = vector.load %arg7[%c0_17, %c12] : memref<256x36xbf16, #tpu.memory_space<vmem>>, vector<256x4xbf16>
    tpu.vector_store %arg7[%c0_17, %c12], %14 {strides = array<i32>} : memref<256x36xbf16, #tpu.memory_space<vmem>>, vector<256x4xbf16>,
    %c0_18 = arith.constant 0 : index
    %c1_19 = arith.constant 1 : index
    %c1_20 = arith.constant 1 : index
    %c0_21 = arith.constant 0 : index
    %16 = vector.load %arg1[%c0_18, %c1_19, %c1_20, %c0_21] : memref<1x18x18x4xbf16, #tpu.memory_space<vmem>>, vector<1x16x16x4xbf16>
    %17 = vector.shape_cast %16 : vector<1x16x16x4xbf16> to vector<16x16x4xbf16>
    %18 = vector.shape_cast %17 : vector<16x16x4xbf16> to vector<256x4xbf16>
    %c0_22 = arith.constant 0 : index
    %c16 = arith.constant 16 : index
    %19 = vector.load %arg7[%c0_22, %c16] : memref<256x36xbf16, #tpu.memory_space<vmem>>, vector<256x4xbf16>
    tpu.vector_store %arg7[%c0_22, %c16], %18 {strides = array<i32>} : memref<256x36xbf16, #tpu.memory_space<vmem>>, vector<256x4xbf16>,
    %c0_23 = arith.constant 0 : index
    %c1_24 = arith.constant 1 : index
    %c2_25 = arith.constant 2 : index
    %c0_26 = arith.constant 0 : index
    %20 = vector.load %arg1[%c0_23, %c1_24, %c2_25, %c0_26] : memref<1x18x18x4xbf16, #tpu.memory_space<vmem>>, vector<1x16x16x4xbf16>
    %21 = vector.shape_cast %20 : vector<1x16x16x4xbf16> to vector<16x16x4xbf16>
    %22 = vector.shape_cast %21 : vector<16x16x4xbf16> to vector<256x4xbf16>
    %c0_27 = arith.constant 0 : index
    %c20 = arith.constant 20 : index
    %23 = vector.load %arg7[%c0_27, %c20] : memref<256x36xbf16, #tpu.memory_space<vmem>>, vector<256x4xbf16>
    tpu.vector_store %arg7[%c0_27, %c20], %22 {strides = array<i32>} : memref<256x36xbf16, #tpu.memory_space<vmem>>, vector<256x4xbf16>,
    %c0_28 = arith.constant 0 : index
    %c2_29 = arith.constant 2 : index
    %c0_30 = arith.constant 0 : index
    %c0_31 = arith.constant 0 : index
    %24 = vector.load %arg1[%c0_28, %c2_29, %c0_30, %c0_31] : memref<1x18x18x4xbf16, #tpu.memory_space<vmem>>, vector<1x16x16x4xbf16>
    %25 = vector.shape_cast %24 : vector<1x16x16x4xbf16> to vector<16x16x4xbf16>
    %26 = vector.shape_cast %25 : vector<16x16x4xbf16> to vector<256x4xbf16>
    %c0_32 = arith.constant 0 : index
    %c24 = arith.constant 24 : index
    %27 = vector.load %arg7[%c0_32, %c24] : memref<256x36xbf16, #tpu.memory_space<vmem>>, vector<256x4xbf16>
    tpu.vector_store %arg7[%c0_32, %c24], %26 {strides = array<i32>} : memref<256x36xbf16, #tpu.memory_space<vmem>>, vector<256x4xbf16>,
    %c0_33 = arith.constant 0 : index
    %c2_34 = arith.constant 2 : index
    %c1_35 = arith.constant 1 : index
    %c0_36 = arith.constant 0 : index
    %28 = vector.load %arg1[%c0_33, %c2_34, %c1_35, %c0_36] : memref<1x18x18x4xbf16, #tpu.memory_space<vmem>>, vector<1x16x16x4xbf16>
    %29 = vector.shape_cast %28 : vector<1x16x16x4xbf16> to vector<16x16x4xbf16>
    %30 = vector.shape_cast %29 : vector<16x16x4xbf16> to vector<256x4xbf16>
    %c0_37 = arith.constant 0 : index
    %c28 = arith.constant 28 : index
    %31 = vector.load %arg7[%c0_37, %c28] : memref<256x36xbf16, #tpu.memory_space<vmem>>, vector<256x4xbf16>
    tpu.vector_store %arg7[%c0_37, %c28], %30 {strides = array<i32>} : memref<256x36xbf16, #tpu.memory_space<vmem>>, vector<256x4xbf16>,
    %c0_38 = arith.constant 0 : index
    %c2_39 = arith.constant 2 : index
    %c2_40 = arith.constant 2 : index
    %c0_41 = arith.constant 0 : index
    %32 = vector.load %arg1[%c0_38, %c2_39, %c2_40, %c0_41] : memref<1x18x18x4xbf16, #tpu.memory_space<vmem>>, vector<1x16x16x4xbf16>
    %33 = vector.shape_cast %32 : vector<1x16x16x4xbf16> to vector<16x16x4xbf16>
    %34 = vector.shape_cast %33 : vector<16x16x4xbf16> to vector<256x4xbf16>
    %c0_42 = arith.constant 0 : index
    %c32 = arith.constant 32 : index
    %35 = vector.load %arg7[%c0_42, %c32] : memref<256x36xbf16, #tpu.memory_space<vmem>>, vector<256x4xbf16>
    tpu.vector_store %arg7[%c0_42, %c32], %34 {strides = array<i32>} : memref<256x36xbf16, #tpu.memory_space<vmem>>, vector<256x4xbf16>,
    %c0_43 = arith.constant 0 : index
    %c0_44 = arith.constant 0 : index
    %36 = vector.load %arg7[%c0_43, %c0_44] : memref<256x36xbf16, #tpu.memory_space<vmem>>, vector<256x36xbf16>
    %c0_45 = arith.constant 0 : index
    %c0_46 = arith.constant 0 : index
    %37 = vector.load %arg2[%c0_45, %c0_46] : memref<36x128xbf16, #tpu.memory_space<vmem>>, vector<36x128xbf16>
    %cst = arith.constant dense<0.000000e+00> : vector<256x128xf32>
    %38 = tpu.matmul %36, %37, %cst {dimension_numbers = #tpu.dot_dimension_numbers<[1], [0], [0], [1], [0, 0, 1, 1], [], []>} : vector<256x36xbf16>, vector<36x128xbf16>, vector<256x128xf32> -> vector<256x128xf32>
    %c0_47 = arith.constant 0 : index
    %c0_48 = arith.constant 0 : index
    %39 = vector.load %arg3[%c0_47, %c0_48] : memref<1x128xf32, #tpu.memory_space<vmem>>, vector<1x128xf32>
    %40 = vector.broadcast %39 : vector<1x128xf32> to vector<256x128xf32>
    %41 = arith.addf %38, %40 : vector<256x128xf32>
    %cst_49 = arith.constant 2.000000e-01 : f32
    %42 = vector.broadcast %cst_49 : f32 to vector<256x128xf32>
    %43 = arith.mulf %42, %41 : vector<256x128xf32>
    %44 = arith.maximumf %41, %43 : vector<256x128xf32>
    %cst_50 = arith.constant 0.000000e+00 : bf16
    %45 = vector.broadcast %cst_50 : bf16 to vector<18x18x128xbf16>
    %c0_51 = arith.constant 0 : index
    %c0_52 = arith.constant 0 : index
    %c0_53 = arith.constant 0 : index
    %46 = vector.load %arg8[%c0_51, %c0_52, %c0_53] : memref<18x18x128xbf16, #tpu.memory_space<vmem>>, vector<18x18x128xbf16>
    tpu.vector_store %arg8[%c0_51, %c0_52, %c0_53], %45 {strides = array<i32>} : memref<18x18x128xbf16, #tpu.memory_space<vmem>>, vector<18x18x128xbf16>,
    %47 = vector.shape_cast %44 : vector<256x128xf32> to vector<16x16x128xf32>
    %48 = arith.truncf %47 : vector<16x16x128xf32> to vector<16x16x128xbf16>
    %c1_54 = arith.constant 1 : index
    %c1_55 = arith.constant 1 : index
    %c0_56 = arith.constant 0 : index
    %49 = vector.load %arg8[%c1_54, %c1_55, %c0_56] : memref<18x18x128xbf16, #tpu.memory_space<vmem>>, vector<16x16x128xbf16>
    tpu.vector_store %arg8[%c1_54, %c1_55, %c0_56], %48 {strides = array<i32>} : memref<18x18x128xbf16, #tpu.memory_space<vmem>>, vector<16x16x128xbf16>,
    %c0_57 = arith.constant 0 : index
    %c0_58 = arith.constant 0 : index
    %50 = vector.load %arg5[%c0_57, %c0_58] : memref<1x128xf32, #tpu.memory_space<vmem>>, vector<1x128xf32>
    %51 = vector.shape_cast %50 : vector<1x128xf32> to vector<1x128xf32>
    %52 = vector.broadcast %51 : vector<1x128xf32> to vector<256x128xf32>
    %c0_59 = arith.constant 0 : index
    %c0_60 = arith.constant 0 : index
    %53 = vector.load %arg9[%c0_59, %c0_60] : memref<256x128xf32, #tpu.memory_space<vmem>>, vector<256x128xf32>
    tpu.vector_store %arg9[%c0_59, %c0_60], %52 {strides = array<i32>} : memref<256x128xf32, #tpu.memory_space<vmem>>, vector<256x128xf32>,
    %c0_61 = arith.constant 0 : index
    %c0_62 = arith.constant 0 : index
    %c0_63 = arith.constant 0 : index
    %54 = vector.load %arg8[%c0_61, %c0_62, %c0_63] : memref<18x18x128xbf16, #tpu.memory_space<vmem>>, vector<16x16x128xbf16>
    %55 = vector.shape_cast %54 : vector<16x16x128xbf16> to vector<256x128xbf16>
    %c0_64 = arith.constant 0 : index
    %c0_65 = arith.constant 0 : index
    %56 = vector.load %arg9[%c0_64, %c0_65] : memref<256x128xf32, #tpu.memory_space<vmem>>, vector<256x128xf32>
    %c0_66 = arith.constant 0 : index
    %c0_67 = arith.constant 0 : index
    %c0_68 = arith.constant 0 : index
    %57 = vector.load %arg4[%c0_66, %c0_67, %c0_68] : memref<9x128x128xbf16, #tpu.memory_space<vmem>>, vector<1x128x128xbf16>
    %58 = vector.shape_cast %57 : vector<1x128x128xbf16> to vector<128x128xbf16>
    %cst_69 = arith.constant dense<0.000000e+00> : vector<256x128xf32>
    %59 = tpu.matmul %55, %58, %cst_69 {dimension_numbers = #tpu.dot_dimension_numbers<[1], [0], [0], [1], [0, 0, 1, 1], [], []>} : vector<256x128xbf16>, vector<128x128xbf16>, vector<256x128xf32> -> vector<256x128xf32>
    %60 = arith.addf %56, %59 : vector<256x128xf32>
    %c0_70 = arith.constant 0 : index
    %c0_71 = arith.constant 0 : index
    %61 = vector.load %arg9[%c0_70, %c0_71] : memref<256x128xf32, #tpu.memory_space<vmem>>, vector<256x128xf32>
    tpu.vector_store %arg9[%c0_70, %c0_71], %60 {strides = array<i32>} : memref<256x128xf32, #tpu.memory_space<vmem>>, vector<256x128xf32>,
    %c0_72 = arith.constant 0 : index
    %c1_73 = arith.constant 1 : index
    %c0_74 = arith.constant 0 : index
    %62 = vector.load %arg8[%c0_72, %c1_73, %c0_74] : memref<18x18x128xbf16, #tpu.memory_space<vmem>>, vector<16x16x128xbf16>
    %63 = vector.shape_cast %62 : vector<16x16x128xbf16> to vector<256x128xbf16>
    %c0_75 = arith.constant 0 : index
    %c0_76 = arith.constant 0 : index
    %64 = vector.load %arg9[%c0_75, %c0_76] : memref<256x128xf32, #tpu.memory_space<vmem>>, vector<256x128xf32>
    %c1_77 = arith.constant 1 : index
    %c0_78 = arith.constant 0 : index
    %c0_79 = arith.constant 0 : index
    %65 = vector.load %arg4[%c1_77, %c0_78, %c0_79] : memref<9x128x128xbf16, #tpu.memory_space<vmem>>, vector<1x128x128xbf16>
    %66 = vector.shape_cast %65 : vector<1x128x128xbf16> to vector<128x128xbf16>
    %cst_80 = arith.constant dense<0.000000e+00> : vector<256x128xf32>
    %67 = tpu.matmul %63, %66, %cst_80 {dimension_numbers = #tpu.dot_dimension_numbers<[1], [0], [0], [1], [0, 0, 1, 1], [], []>} : vector<256x128xbf16>, vector<128x128xbf16>, vector<256x128xf32> -> vector<256x128xf32>
    %68 = arith.addf %64, %67 : vector<256x128xf32>
    %c0_81 = arith.constant 0 : index
    %c0_82 = arith.constant 0 : index
    %69 = vector.load %arg9[%c0_81, %c0_82] : memref<256x128xf32, #tpu.memory_space<vmem>>, vector<256x128xf32>
    tpu.vector_store %arg9[%c0_81, %c0_82], %68 {strides = array<i32>} : memref<256x128xf32, #tpu.memory_space<vmem>>, vector<256x128xf32>,
    %c0_83 = arith.constant 0 : index
    %c2_84 = arith.constant 2 : index
    %c0_85 = arith.constant 0 : index
    %70 = vector.load %arg8[%c0_83, %c2_84, %c0_85] : memref<18x18x128xbf16, #tpu.memory_space<vmem>>, vector<16x16x128xbf16>
    %71 = vector.shape_cast %70 : vector<16x16x128xbf16> to vector<256x128xbf16>
    %c0_86 = arith.constant 0 : index
    %c0_87 = arith.constant 0 : index
    %72 = vector.load %arg9[%c0_86, %c0_87] : memref<256x128xf32, #tpu.memory_space<vmem>>, vector<256x128xf32>
    %c2_88 = arith.constant 2 : index
    %c0_89 = arith.constant 0 : index
    %c0_90 = arith.constant 0 : index
    %73 = vector.load %arg4[%c2_88, %c0_89, %c0_90] : memref<9x128x128xbf16, #tpu.memory_space<vmem>>, vector<1x128x128xbf16>
    %74 = vector.shape_cast %73 : vector<1x128x128xbf16> to vector<128x128xbf16>
    %cst_91 = arith.constant dense<0.000000e+00> : vector<256x128xf32>
    %75 = tpu.matmul %71, %74, %cst_91 {dimension_numbers = #tpu.dot_dimension_numbers<[1], [0], [0], [1], [0, 0, 1, 1], [], []>} : vector<256x128xbf16>, vector<128x128xbf16>, vector<256x128xf32> -> vector<256x128xf32>
    %76 = arith.addf %72, %75 : vector<256x128xf32>
    %c0_92 = arith.constant 0 : index
    %c0_93 = arith.constant 0 : index
    %77 = vector.load %arg9[%c0_92, %c0_93] : memref<256x128xf32, #tpu.memory_space<vmem>>, vector<256x128xf32>
    tpu.vector_store %arg9[%c0_92, %c0_93], %76 {strides = array<i32>} : memref<256x128xf32, #tpu.memory_space<vmem>>, vector<256x128xf32>,
    %c1_94 = arith.constant 1 : index
    %c0_95 = arith.constant 0 : index
    %c0_96 = arith.constant 0 : index
    %78 = vector.load %arg8[%c1_94, %c0_95, %c0_96] : memref<18x18x128xbf16, #tpu.memory_space<vmem>>, vector<16x16x128xbf16>
    %79 = vector.shape_cast %78 : vector<16x16x128xbf16> to vector<256x128xbf16>
    %c0_97 = arith.constant 0 : index
    %c0_98 = arith.constant 0 : index
    %80 = vector.load %arg9[%c0_97, %c0_98] : memref<256x128xf32, #tpu.memory_space<vmem>>, vector<256x128xf32>
    %c3 = arith.constant 3 : index
    %c0_99 = arith.constant 0 : index
    %c0_100 = arith.constant 0 : index
    %81 = vector.load %arg4[%c3, %c0_99, %c0_100] : memref<9x128x128xbf16, #tpu.memory_space<vmem>>, vector<1x128x128xbf16>
    %82 = vector.shape_cast %81 : vector<1x128x128xbf16> to vector<128x128xbf16>
    %cst_101 = arith.constant dense<0.000000e+00> : vector<256x128xf32>
    %83 = tpu.matmul %79, %82, %cst_101 {dimension_numbers = #tpu.dot_dimension_numbers<[1], [0], [0], [1], [0, 0, 1, 1], [], []>} : vector<256x128xbf16>, vector<128x128xbf16>, vector<256x128xf32> -> vector<256x128xf32>
    %84 = arith.addf %80, %83 : vector<256x128xf32>
    %c0_102 = arith.constant 0 : index
    %c0_103 = arith.constant 0 : index
    %85 = vector.load %arg9[%c0_102, %c0_103] : memref<256x128xf32, #tpu.memory_space<vmem>>, vector<256x128xf32>
    tpu.vector_store %arg9[%c0_102, %c0_103], %84 {strides = array<i32>} : memref<256x128xf32, #tpu.memory_space<vmem>>, vector<256x128xf32>,
    %c1_104 = arith.constant 1 : index
    %c1_105 = arith.constant 1 : index
    %c0_106 = arith.constant 0 : index
    %86 = vector.load %arg8[%c1_104, %c1_105, %c0_106] : memref<18x18x128xbf16, #tpu.memory_space<vmem>>, vector<16x16x128xbf16>
    %87 = vector.shape_cast %86 : vector<16x16x128xbf16> to vector<256x128xbf16>
    %c0_107 = arith.constant 0 : index
    %c0_108 = arith.constant 0 : index
    %88 = vector.load %arg9[%c0_107, %c0_108] : memref<256x128xf32, #tpu.memory_space<vmem>>, vector<256x128xf32>
    %c4_109 = arith.constant 4 : index
    %c0_110 = arith.constant 0 : index
    %c0_111 = arith.constant 0 : index
    %89 = vector.load %arg4[%c4_109, %c0_110, %c0_111] : memref<9x128x128xbf16, #tpu.memory_space<vmem>>, vector<1x128x128xbf16>
    %90 = vector.shape_cast %89 : vector<1x128x128xbf16> to vector<128x128xbf16>
    %cst_112 = arith.constant dense<0.000000e+00> : vector<256x128xf32>
    %91 = tpu.matmul %87, %90, %cst_112 {dimension_numbers = #tpu.dot_dimension_numbers<[1], [0], [0], [1], [0, 0, 1, 1], [], []>} : vector<256x128xbf16>, vector<128x128xbf16>, vector<256x128xf32> -> vector<256x128xf32>
    %92 = arith.addf %88, %91 : vector<256x128xf32>
    %c0_113 = arith.constant 0 : index
    %c0_114 = arith.constant 0 : index
    %93 = vector.load %arg9[%c0_113, %c0_114] : memref<256x128xf32, #tpu.memory_space<vmem>>, vector<256x128xf32>
    tpu.vector_store %arg9[%c0_113, %c0_114], %92 {strides = array<i32>} : memref<256x128xf32, #tpu.memory_space<vmem>>, vector<256x128xf32>,
    %c1_115 = arith.constant 1 : index
    %c2_116 = arith.constant 2 : index
    %c0_117 = arith.constant 0 : index
    %94 = vector.load %arg8[%c1_115, %c2_116, %c0_117] : memref<18x18x128xbf16, #tpu.memory_space<vmem>>, vector<16x16x128xbf16>
    %95 = vector.shape_cast %94 : vector<16x16x128xbf16> to vector<256x128xbf16>
    %c0_118 = arith.constant 0 : index
    %c0_119 = arith.constant 0 : index
    %96 = vector.load %arg9[%c0_118, %c0_119] : memref<256x128xf32, #tpu.memory_space<vmem>>, vector<256x128xf32>
    %c5 = arith.constant 5 : index
    %c0_120 = arith.constant 0 : index
    %c0_121 = arith.constant 0 : index
    %97 = vector.load %arg4[%c5, %c0_120, %c0_121] : memref<9x128x128xbf16, #tpu.memory_space<vmem>>, vector<1x128x128xbf16>
    %98 = vector.shape_cast %97 : vector<1x128x128xbf16> to vector<128x128xbf16>
    %cst_122 = arith.constant dense<0.000000e+00> : vector<256x128xf32>
    %99 = tpu.matmul %95, %98, %cst_122 {dimension_numbers = #tpu.dot_dimension_numbers<[1], [0], [0], [1], [0, 0, 1, 1], [], []>} : vector<256x128xbf16>, vector<128x128xbf16>, vector<256x128xf32> -> vector<256x128xf32>
    %100 = arith.addf %96, %99 : vector<256x128xf32>
    %c0_123 = arith.constant 0 : index
    %c0_124 = arith.constant 0 : index
    %101 = vector.load %arg9[%c0_123, %c0_124] : memref<256x128xf32, #tpu.memory_space<vmem>>, vector<256x128xf32>
    tpu.vector_store %arg9[%c0_123, %c0_124], %100 {strides = array<i32>} : memref<256x128xf32, #tpu.memory_space<vmem>>, vector<256x128xf32>,
    %c2_125 = arith.constant 2 : index
    %c0_126 = arith.constant 0 : index
    %c0_127 = arith.constant 0 : index
    %102 = vector.load %arg8[%c2_125, %c0_126, %c0_127] : memref<18x18x128xbf16, #tpu.memory_space<vmem>>, vector<16x16x128xbf16>
    %103 = vector.shape_cast %102 : vector<16x16x128xbf16> to vector<256x128xbf16>
    %c0_128 = arith.constant 0 : index
    %c0_129 = arith.constant 0 : index
    %104 = vector.load %arg9[%c0_128, %c0_129] : memref<256x128xf32, #tpu.memory_space<vmem>>, vector<256x128xf32>
    %c6 = arith.constant 6 : index
    %c0_130 = arith.constant 0 : index
    %c0_131 = arith.constant 0 : index
    %105 = vector.load %arg4[%c6, %c0_130, %c0_131] : memref<9x128x128xbf16, #tpu.memory_space<vmem>>, vector<1x128x128xbf16>
    %106 = vector.shape_cast %105 : vector<1x128x128xbf16> to vector<128x128xbf16>
    %cst_132 = arith.constant dense<0.000000e+00> : vector<256x128xf32>
    %107 = tpu.matmul %103, %106, %cst_132 {dimension_numbers = #tpu.dot_dimension_numbers<[1], [0], [0], [1], [0, 0, 1, 1], [], []>} : vector<256x128xbf16>, vector<128x128xbf16>, vector<256x128xf32> -> vector<256x128xf32>
    %108 = arith.addf %104, %107 : vector<256x128xf32>
    %c0_133 = arith.constant 0 : index
    %c0_134 = arith.constant 0 : index
    %109 = vector.load %arg9[%c0_133, %c0_134] : memref<256x128xf32, #tpu.memory_space<vmem>>, vector<256x128xf32>
    tpu.vector_store %arg9[%c0_133, %c0_134], %108 {strides = array<i32>} : memref<256x128xf32, #tpu.memory_space<vmem>>, vector<256x128xf32>,
    %c2_135 = arith.constant 2 : index
    %c1_136 = arith.constant 1 : index
    %c0_137 = arith.constant 0 : index
    %110 = vector.load %arg8[%c2_135, %c1_136, %c0_137] : memref<18x18x128xbf16, #tpu.memory_space<vmem>>, vector<16x16x128xbf16>
    %111 = vector.shape_cast %110 : vector<16x16x128xbf16> to vector<256x128xbf16>
    %c0_138 = arith.constant 0 : index
    %c0_139 = arith.constant 0 : index
    %112 = vector.load %arg9[%c0_138, %c0_139] : memref<256x128xf32, #tpu.memory_space<vmem>>, vector<256x128xf32>
    %c7 = arith.constant 7 : index
    %c0_140 = arith.constant 0 : index
    %c0_141 = arith.constant 0 : index
    %113 = vector.load %arg4[%c7, %c0_140, %c0_141] : memref<9x128x128xbf16, #tpu.memory_space<vmem>>, vector<1x128x128xbf16>
    %114 = vector.shape_cast %113 : vector<1x128x128xbf16> to vector<128x128xbf16>
    %cst_142 = arith.constant dense<0.000000e+00> : vector<256x128xf32>
    %115 = tpu.matmul %111, %114, %cst_142 {dimension_numbers = #tpu.dot_dimension_numbers<[1], [0], [0], [1], [0, 0, 1, 1], [], []>} : vector<256x128xbf16>, vector<128x128xbf16>, vector<256x128xf32> -> vector<256x128xf32>
    %116 = arith.addf %112, %115 : vector<256x128xf32>
    %c0_143 = arith.constant 0 : index
    %c0_144 = arith.constant 0 : index
    %117 = vector.load %arg9[%c0_143, %c0_144] : memref<256x128xf32, #tpu.memory_space<vmem>>, vector<256x128xf32>
    tpu.vector_store %arg9[%c0_143, %c0_144], %116 {strides = array<i32>} : memref<256x128xf32, #tpu.memory_space<vmem>>, vector<256x128xf32>,
    %c2_145 = arith.constant 2 : index
    %c2_146 = arith.constant 2 : index
    %c0_147 = arith.constant 0 : index
    %118 = vector.load %arg8[%c2_145, %c2_146, %c0_147] : memref<18x18x128xbf16, #tpu.memory_space<vmem>>, vector<16x16x128xbf16>
    %119 = vector.shape_cast %118 : vector<16x16x128xbf16> to vector<256x128xbf16>
    %c0_148 = arith.constant 0 : index
    %c0_149 = arith.constant 0 : index
    %120 = vector.load %arg9[%c0_148, %c0_149] : memref<256x128xf32, #tpu.memory_space<vmem>>, vector<256x128xf32>
    %c8_150 = arith.constant 8 : index
    %c0_151 = arith.constant 0 : index
    %c0_152 = arith.constant 0 : index
    %121 = vector.load %arg4[%c8_150, %c0_151, %c0_152] : memref<9x128x128xbf16, #tpu.memory_space<vmem>>, vector<1x128x128xbf16>
    %122 = vector.shape_cast %121 : vector<1x128x128xbf16> to vector<128x128xbf16>
    %cst_153 = arith.constant dense<0.000000e+00> : vector<256x128xf32>
    %123 = tpu.matmul %119, %122, %cst_153 {dimension_numbers = #tpu.dot_dimension_numbers<[1], [0], [0], [1], [0, 0, 1, 1], [], []>} : vector<256x128xbf16>, vector<128x128xbf16>, vector<256x128xf32> -> vector<256x128xf32>
    %124 = arith.addf %120, %123 : vector<256x128xf32>
    %c0_154 = arith.constant 0 : index
    %c0_155 = arith.constant 0 : index
    %125 = vector.load %arg9[%c0_154, %c0_155] : memref<256x128xf32, #tpu.memory_space<vmem>>, vector<256x128xf32>
    tpu.vector_store %arg9[%c0_154, %c0_155], %124 {strides = array<i32>} : memref<256x128xf32, #tpu.memory_space<vmem>>, vector<256x128xf32>,
    %c0_156 = arith.constant 0 : index
    %c0_157 = arith.constant 0 : index
    %126 = vector.load %arg9[%c0_156, %c0_157] : memref<256x128xf32, #tpu.memory_space<vmem>>, vector<256x128xf32>
    %cst_158 = arith.constant 2.000000e-01 : f32
    %127 = vector.broadcast %cst_158 : f32 to vector<256x128xf32>
    %128 = arith.mulf %127, %126 : vector<256x128xf32>
    %129 = arith.maximumf %126, %128 : vector<256x128xf32>
    %130 = vector.shape_cast %129 : vector<256x128xf32> to vector<16x16x128xf32>
    %c0_159 = arith.constant 0 : index
    %c0_160 = arith.constant 0 : index
    %c0_161 = arith.constant 0 : index
    %c0_162 = arith.constant 0 : index
    %131 = vector.load %arg6[%c0_159, %c0_160, %c0_161, %c0_162] : memref<1x16x16x128xf32, #tpu.memory_space<vmem>>, vector<1x16x16x128xf32>
    %132 = vector.shape_cast %131 : vector<1x16x16x128xf32> to vector<16x16x128xf32>
    %133 = vector.shape_cast %130 : vector<16x16x128xf32> to vector<1x16x16x128xf32>
    tpu.vector_store %arg6[%c0_159, %c0_160, %c0_161, %c0_162], %133 {strides = array<i32>} : memref<1x16x16x128xf32, #tpu.memory_space<vmem>>, vector<1x16x16x128xf32>,
    return
  }
  func.func @transform_0(%arg0: i32) -> (i32, i32, i32, i32) {
    %c0_i32 = arith.constant 0 : i32
    %c0_i32_0 = arith.constant 0 : i32
    %c0_i32_1 = arith.constant 0 : i32
    %c0_i32_2 = arith.constant 0 : i32
    return %arg0, %c0_i32, %c0_i32_0, %c0_i32_1 : i32, i32, i32, i32
  }
  func.func @transform_1(%arg0: i32) -> (i32, i32) {
    %c0_i32 = arith.constant 0 : i32
    %c0_i32_0 = arith.constant 0 : i32
    %c0_i32_1 = arith.constant 0 : i32
    return %c0_i32, %c0_i32_0 : i32, i32
  }
  func.func @transform_2(%arg0: i32) -> (i32, i32) {
    %c0_i32 = arith.constant 0 : i32
    %c0_i32_0 = arith.constant 0 : i32
    %c0_i32_1 = arith.constant 0 : i32
    return %c0_i32, %c0_i32_0 : i32, i32
  }
  func.func @transform_3(%arg0: i32) -> (i32, i32, i32) {
    %c0_i32 = arith.constant 0 : i32
    %c0_i32_0 = arith.constant 0 : i32
    %c0_i32_1 = arith.constant 0 : i32
    %c0_i32_2 = arith.constant 0 : i32
    return %c0_i32, %c0_i32_0, %c0_i32_1 : i32, i32, i32
  }
  func.func @transform_4(%arg0: i32) -> (i32, i32) {
    %c0_i32 = arith.constant 0 : i32
    %c0_i32_0 = arith.constant 0 : i32
    %c0_i32_1 = arith.constant 0 : i32
    return %c0_i32, %c0_i32_0 : i32, i32
  }
  func.func @transform_5(%arg0: i32) -> (i32, i32, i32, i32) {
    %c0_i32 = arith.constant 0 : i32
    %c0_i32_0 = arith.constant 0 : i32
    %c0_i32_1 = arith.constant 0 : i32
    %c0_i32_2 = arith.constant 0 : i32
    return %arg0, %c0_i32, %c0_i32_0, %c0_i32_1 : i32, i32, i32, i32
  }
}

</mosaic_0001>

<llo_original>
// kernel: conv_block_forward.1
$region0: #{conv_block_forward.1}
  #allocation0 [shape = 'u32[]', space=smem, size = 0x4, offset = 0x4, fixed_abs, tag = 'smem constant byte address 0x4 - core index']
  #allocation1 [shape = 'u32[144,128]{1,0:T(1,128)}', space=vmem, size = 0x12000, scoped, tag = 'internal scratch']
  #allocation2 [shape = 'bf16[256,36]{1,0:T(8,128)(2,1)}', space=vmem, size = 0x10000, scoped, tag = 'scratch operand']
  #allocation3 [shape = 'bf16[18,18,128]{2,1,0:T(8,128)(2,1)}', space=vmem, size = 0x1b000, scoped, tag = 'scratch operand']
  #allocation4 [shape = 'f32[256,128]{1,0:T(8,128)}', space=vmem, size = 0x20000, scoped, tag = 'scratch operand']
  %s0 = inlined_call_operand.vmem [shape: bf16[2,18,18,4], index: 0, kind: input, shape index: {}]
  %s1 = inlined_call_operand.vmem [shape: bf16[36,128], index: 1, kind: input, shape index: {}]
  %s2 = inlined_call_operand.vmem [shape: f32[1,128], index: 2, kind: input, shape index: {}]
  %s3 = inlined_call_operand.vmem [shape: bf16[9,128,128], index: 3, kind: input, shape index: {}]
  %s4 = inlined_call_operand.vmem [shape: f32[1,128], index: 4, kind: input, shape index: {}]
  %s5 = inlined_call_operand.vmem [shape: f32[2,16,16,128], index: 5, kind: output, shape index: {}]
  %s6 = sld [smem:[#allocation0]]
  $region53: #{conv_block_forward.1} parent=0
    _
  %s8 = ssub.s32 1, %s6
  %s9 = scalar_select 0, %s8, %s6
  loop: start=0, step=1, limit=4
  $region2: #{conv_block_forward.1} parent=0 // loop_pre_header
    _
  $region3: #{conv_block_forward.1} parent=0 // loop_header
    %s11 = sphi 0, %s15
    %p12 = scmp.ge.s32.totalorder %s11, 4
    %s21 = sphi 0, %s23
    %s24 = sphi 0, %s21
    %s25 = sphi 0, %s24
    %s41 = sphi 0, %s25
    %s45 = sphi 0, %s45
    %s47 = sphi 0, %s45
    %s48 = sphi 0, %s47
    %s62 = sphi 0, %s48
    %s66 = sphi 0, %s66
    %s68 = sphi 0, %s66
    %s69 = sphi 0, %s68
    %s83 = sphi 0, %s69
    %s87 = sphi 0, %s87
    %s89 = sphi 0, %s87
    %s90 = sphi 0, %s89
    %s104 = sphi 0, %s90
    %s108 = sphi 0, %s108
    %s110 = sphi 0, %s108
    %s111 = sphi 0, %s110
    %s125 = sphi 0, %s111
    %s131 = sphi 0, %s133
    %s134 = sphi 0, %s131
    %s135 = sphi 0, %s134
    %s151 = sphi 0, %s135
  $region4: #{conv_block_forward.1} parent=0 // loop_header_branch
    %14 = sbr.rel (%p12) target = $region8
  $region5: #{conv_block_forward.1} parent=0 // loop_body
    %s16 = ssub.s32 %s11, 1
    %s17 = ssub.s32 %s11, 2
    %s18 = sadd.s32 %s11, 1
    %s19 = ssub.s32 %s11, %s18
    %p20 = scmp.eq.s32.totalorder %s19, 0
    %s22 = sadd.s32 %s21, 1
    %s23 = scalar_select %p20, %s21, %s22
    %p26 = pneg %p20
    %p27 = scmp.eq.s32.totalorder %s11, 1
    %p28 = por %p26, %p27
    %p29 = scmp.ne.s32.totalorder %s21, %s24
    %p30 = scmp.eq.s32.totalorder %s11, 0
    %p31 = por %p29, %p30
    %p32 = scmp.ne.s32.totalorder %s21, %s24
    %p33 = scmp.eq.s32.totalorder %s16, 1
    %p34 = por %p32, %p33
    %p35 = scmp.ne.s32.totalorder %s24, %s25
    %p36 = scmp.eq.s32.totalorder %s16, 0
    %p37 = por %p35, %p36
    %p38 = scmp.ne.s32.totalorder %s24, %s25
    %p39 = scmp.eq.s32.totalorder %s17, 1
    %p40 = por %p38, %p39
    %p42 = scmp.ne.s32.totalorder %s25, %s41
    %p43 = scmp.eq.s32.totalorder %s17, 0
    %p44 = por %p42, %p43
    %s46 = sadd.s32 %s45, 1
    %p49 = scmp.eq.s32.totalorder %s11, 1
    %p50 = scmp.ne.s32.totalorder %s45, %s47
    %p51 = scmp.eq.s32.totalorder %s11, 0
    %p52 = por %p50, %p51
    %p53 = scmp.ne.s32.totalorder %s45, %s47
    %p54 = scmp.eq.s32.totalorder %s16, 1
    %p55 = por %p53, %p54
    %p56 = scmp.ne.s32.totalorder %s47, %s48
    %p57 = scmp.eq.s32.totalorder %s16, 0
    %p58 = por %p56, %p57
    %p59 = scmp.ne.s32.totalorder %s47, %s48
    %p60 = scmp.eq.s32.totalorder %s17, 1
    %p61 = por %p59, %p60
    %p63 = scmp.ne.s32.totalorder %s48, %s62
    %p64 = scmp.eq.s32.totalorder %s17, 0
    %p65 = por %p63, %p64
    %s67 = sadd.s32 %s66, 1
    %p70 = scmp.eq.s32.totalorder %s11, 1
    %p71 = scmp.ne.s32.totalorder %s66, %s68
    %p72 = scmp.eq.s32.totalorder %s11, 0
    %p73 = por %p71, %p72
    %p74 = scmp.ne.s32.totalorder %s66, %s68
    %p75 = scmp.eq.s32.totalorder %s16, 1
    %p76 = por %p74, %p75
    %p77 = scmp.ne.s32.totalorder %s68, %s69
    %p78 = scmp.eq.s32.totalorder %s16, 0
    %p79 = por %p77, %p78
    %p80 = scmp.ne.s32.totalorder %s68, %s69
    %p81 = scmp.eq.s32.totalorder %s17, 1
    %p82 = por %p80, %p81
    %p84 = scmp.ne.s32.totalorder %s69, %s83
    %p85 = scmp.eq.s32.totalorder %s17, 0
    %p86 = por %p84, %p85
    %s88 = sadd.s32 %s87, 1
    %p91 = scmp.eq.s32.totalorder %s11, 1
    %p92 = scmp.ne.s32.totalorder %s87, %s89
    %p93 = scmp.eq.s32.totalorder %s11, 0
    %p94 = por %p92, %p93
    %p95 = scmp.ne.s32.totalorder %s87, %s89
    %p96 = scmp.eq.s32.totalorder %s16, 1
    %p97 = por %p95, %p96
    %p98 = scmp.ne.s32.totalorder %s89, %s90
    %p99 = scmp.eq.s32.totalorder %s16, 0
    %p100 = por %p98, %p99
    %p101 = scmp.ne.s32.totalorder %s89, %s90
    %p102 = scmp.eq.s32.totalorder %s17, 1
    %p103 = por %p101, %p102
    %p105 = scmp.ne.s32.totalorder %s90, %s104
    %p106 = scmp.eq.s32.totalorder %s17, 0
    %p107 = por %p105, %p106
    %s109 = sadd.s32 %s108, 1
    %p112 = scmp.eq.s32.totalorder %s11, 1
    %p113 = scmp.ne.s32.totalorder %s108, %s110
    %p114 = scmp.eq.s32.totalorder %s11, 0
    %p115 = por %p113, %p114
    %p116 = scmp.ne.s32.totalorder %s108, %s110
    %p117 = scmp.eq.s32.totalorder %s16, 1
    %p118 = por %p116, %p117
    %p119 = scmp.ne.s32.totalorder %s110, %s111
    %p120 = scmp.eq.s32.totalorder %s16, 0
    %p121 = por %p119, %p120
    %p122 = scmp.ne.s32.totalorder %s110, %s111
    %p123 = scmp.eq.s32.totalorder %s17, 1
    %p124 = por %p122, %p123
    %p126 = scmp.ne.s32.totalorder %s111, %s125
    %p127 = scmp.eq.s32.totalorder %s17, 0
    %p128 = por %p126, %p127
    %s129 = ssub.s32 %s11, %s18
    %p130 = scmp.eq.s32.totalorder %s129, 0
    %s132 = sadd.s32 %s131, 1
    %s133 = scalar_select %p130, %s131, %s132
    %p136 = pneg %p130
    %p137 = scmp.eq.s32.totalorder %s11, 1
    %p138 = por %p136, %p137
    %p139 = scmp.ne.s32.totalorder %s131, %s134
    %p140 = scmp.eq.s32.totalorder %s11, 0
    %p141 = por %p139, %p140
    %p142 = scmp.ne.s32.totalorder %s131, %s134
    %p143 = scmp.eq.s32.totalorder %s16, 1
    %p144 = por %p142, %p143
    %p145 = scmp.ne.s32.totalorder %s134, %s135
    %p146 = scmp.eq.s32.totalorder %s16, 0
    %p147 = por %p145, %p146
    %p148 = scmp.ne.s32.totalorder %s134, %s135
    %p149 = scmp.eq.s32.totalorder %s17, 1
    %p150 = por %p148, %p149
    %p152 = scmp.ne.s32.totalorder %s135, %s151
    %p153 = scmp.eq.s32.totalorder %s17, 0
    %p154 = por %p152, %p153
    %p155 = scmp.le.s32.totalorder 1, %s11
    %p156 = scmp.lt.s32.totalorder %s11, 3
    %p157 = pnand %p155, %p156
    %p158 = pneg %p157
    // Predicated region
    $region9: #{conv_block_forward.1} parent=5 // pred_check
      _
    $region10: #{conv_block_forward.1} parent=5 // pred_check_branch
      %160 = sbr.rel (%p157) target = $region12
    $region11: #{conv_block_forward.1} parent=5 // pred_region
      %s161 = ssub.s32 %s11, 1
      // Predicated region
      $region13: #{conv_block_forward.1} parent=11 // pred_check
        %p162 = pneg %p58
      $region14: #{conv_block_forward.1} parent=11 // pred_check_branch
        %164 = sbr.rel (%p162) target = $region16
      $region15: #{conv_block_forward.1} parent=11 // pred_region
        _
      $region16: #{conv_block_forward.1} parent=11 // pred_fallthru
        _
      // Predicated region
      $region17: #{conv_block_forward.1} parent=11 // pred_check
        %p165 = pneg %p79
      $region18: #{conv_block_forward.1} parent=11 // pred_check_branch
        %167 = sbr.rel (%p165) target = $region20
      $region19: #{conv_block_forward.1} parent=11 // pred_region
        _
      $region20: #{conv_block_forward.1} parent=11 // pred_fallthru
        _
      // Predicated region
      $region21: #{conv_block_forward.1} parent=11 // pred_check
        %p168 = pneg %p100
      $region22: #{conv_block_forward.1} parent=11 // pred_check_branch
        %170 = sbr.rel (%p168) target = $region24
      $region23: #{conv_block_forward.1} parent=11 // pred_region
        _
      $region24: #{conv_block_forward.1} parent=11 // pred_fallthru
        _
      // Predicated region
      $region25: #{conv_block_forward.1} parent=11 // pred_check
        %p171 = pneg %p121
      $region26: #{conv_block_forward.1} parent=11 // pred_check_branch
        %173 = sbr.rel (%p171) target = $region28
      $region27: #{conv_block_forward.1} parent=11 // pred_region
        _
      $region28: #{conv_block_forward.1} parent=11 // pred_fallthru
        _
    $region12: #{conv_block_forward.1} parent=5 // pred_fallthru
      _
    %p174 = scmp.lt.s32.totalorder %s11, 2
    // Predicated region
    $region29: #{conv_block_forward.1} parent=5 // pred_check
      %p175 = pneg %p174
    $region30: #{conv_block_forward.1} parent=5 // pred_check_branch
      %177 = sbr.rel (%p175) target = $region32
    $region31: #{conv_block_forward.1} parent=5 // pred_region
      // Predicated region
      $region33: #{conv_block_forward.1} parent=31 // pred_check
        %p178 = pneg %p31
      $region34: #{conv_block_forward.1} parent=31 // pred_check_branch
        %180 = sbr.rel (%p178) target = $region36
      $region35: #{conv_block_forward.1} parent=31 // pred_region
        %p181 = scmp.lt.s32.totalorder %s11, 1
        %s182 = scalar_select %p181, %s11, 1
        %s183 = smul.addr %s182, 54
        %s184 = smul.addr %s183, 4
        %s185 = scalar_lea.vmem %s0, %s184
      $region36: #{conv_block_forward.1} parent=31 // pred_fallthru
        _
    $region32: #{conv_block_forward.1} parent=5 // pred_fallthru
      _
    %p186 = scmp.le.s32.totalorder 1, %s11
    %p187 = scmp.lt.s32.totalorder %s11, 3
    %p188 = pnand %p186, %p187
    %p189 = pneg %p188
    // Predicated region
    $region37: #{conv_block_forward.1} parent=5 // pred_check
      _
    $region38: #{conv_block_forward.1} parent=5 // pred_check_branch
      %191 = sbr.rel (%p188) target = $region40
    $region39: #{conv_block_forward.1} parent=5 // pred_region
      %s192 = ssub.s32 %s11, 1
      %p193 = scmp.lt.s32.totalorder %s16, 1
      %s194 = scalar_select %p193, %s16, 1
      %s195 = smul.addr %s194, 54
      %s196 = smul.addr %s195, 4
      %s197 = scalar_lea.vmem %s0, %s196
      %p198 = pneg %p37
      %p199 = pneg %p34
      %p200 = pneg %p58
      %p201 = pneg %p55
      %p202 = pneg %p79
      %p203 = pneg %p76
      %p204 = pneg %p100
      %p205 = pneg %p97
      %p206 = pneg %p121
      %p207 = pneg %p118
      %p208 = pneg %p147
      %p209 = pneg %p144
      %p210 = scmp.lt.s32.totalorder %s16, 1
      %s211 = scalar_select %p210, %s16, 1
      %s212 = smul.addr %s211, 32
      %s213 = smul.addr %s212, 8
      %s214 = scalar_lea.vmem %s5, %s213
      %p215 = scmp.lt.s32.totalorder %s16, 1
      %s216 = scalar_select %p215, %s16, 1
      %s217 = smul.addr %s216, 54
      %s218 = smul.addr %s217, 4
      %s219 = scalar_lea.vmem %s0, %s218
      %p220 = scmp.lt.s32.totalorder %s16, 1
      %s221 = scalar_select %p220, %s16, 1
      %s222 = smul.addr %s221, 32
      %s223 = smul.addr %s222, 8
      %s224 = scalar_lea.vmem %s5, %s223
      %v226 = vld [vmem:[%s219] sm:$0xf]
      %v227 = vld [vmem:[%s219 + $0x4] sm:$0xf]
      %v228 = vld [vmem:[%s219 + $0xc] sm:$0xf]
      %v229 = vld [vmem:[%s219 + $0x10] sm:$0xf]
      %v230 = vld [vmem:[%s219 + $0x18] sm:$0xf]
      %v231 = vld [vmem:[%s219 + $0x1c] sm:$0xf]
      %v232 = vld [vmem:[%s219 + $0x24] sm:$0xf]
      %v233 = vld [vmem:[%s219 + $0x28] sm:$0xf]
      %v234 = vld [vmem:[%s219 + $0x30] sm:$0xf]
      %v235 = vld [vmem:[%s219 + $0x34] sm:$0xf]
      %v236 = vld [vmem:[%s219 + $0x3c] sm:$0xf]
      %v237 = vld [vmem:[%s219 + $0x40] sm:$0xf]
      %v238 = vld [vmem:[%s219 + $0x48] sm:$0xf]
      %v239 = vld [vmem:[%s219 + $0x4c] sm:$0xf]
      %v240 = vld [vmem:[%s219 + $0x54] sm:$0xf]
      %v241 = vld [vmem:[%s219 + $0x58] sm:$0xf]
      %v242 = vld [vmem:[%s219 + $0x60] sm:$0xf]
      %v243 = vld [vmem:[%s219 + $0x64] sm:$0xf]
      %v244 = vld [vmem:[%s219 + $0x6c] sm:$0xf]
      %v245 = vld [vmem:[%s219 + $0x70] sm:$0xf]
      %v246 = vld [vmem:[%s219 + $0x78] sm:$0xf]
      %v247 = vld [vmem:[%s219 + $0x7c] sm:$0xf]
      %v248 = vld [vmem:[%s219 + $0x84] sm:$0xf]
      %v249 = vld [vmem:[%s219 + $0x88] sm:$0xf]
      %v250 = vld [vmem:[%s219 + $0x90] sm:$0xf]
      %v251 = vld [vmem:[%s219 + $0x94] sm:$0xf]
      %v252 = vld [vmem:[%s219 + $0x9c] sm:$0xf]
      %v253 = vld [vmem:[%s219 + $0xa0] sm:$0xf]
      %v254 = vld [vmem:[%s219 + $0xa8] sm:$0xf]
      %v255 = vld [vmem:[%s219 + $0xac] sm:$0xf]
      %v256 = vld [vmem:[%s219 + $0xb4] sm:$0xf]
      %v257 = vld [vmem:[%s219 + $0xb8] sm:$0xf]
      %vm258 = vcmask 27648
      %259 = vst.msk [vmem:[#allocation2] sm:$0xf] %vm258, %v226
      %260 = vst.msk [vmem:[#allocation2 + $0x4] sm:$0xf] %vm258, %v227
      %261 = vst.msk [vmem:[#allocation2 + $0x8] sm:$0xf] %vm258, %v228
      %262 = vst.msk [vmem:[#allocation2 + $0xc] sm:$0xf] %vm258, %v229
      %263 = vst.msk [vmem:[#allocation2 + $0x10] sm:$0xf] %vm258, %v230
      %264 = vst.msk [vmem:[#allocation2 + $0x14] sm:$0xf] %vm258, %v231
      %265 = vst.msk [vmem:[#allocation2 + $0x18] sm:$0xf] %vm258, %v232
      %266 = vst.msk [vmem:[#allocation2 + $0x1c] sm:$0xf] %vm258, %v233
      %267 = vst.msk [vmem:[#allocation2 + $0x20] sm:$0xf] %vm258, %v234
      %268 = vst.msk [vmem:[#allocation2 + $0x24] sm:$0xf] %vm258, %v235
      %269 = vst.msk [vmem:[#allocation2 + $0x28] sm:$0xf] %vm258, %v236
      %270 = vst.msk [vmem:[#allocation2 + $0x2c] sm:$0xf] %vm258, %v237
      %271 = vst.msk [vmem:[#allocation2 + $0x30] sm:$0xf] %vm258, %v238
      %272 = vst.msk [vmem:[#allocation2 + $0x34] sm:$0xf] %vm258, %v239
      %273 = vst.msk [vmem:[#allocation2 + $0x38] sm:$0xf] %vm258, %v240
      %274 = vst.msk [vmem:[#allocation2 + $0x3c] sm:$0xf] %vm258, %v241
      %275 = vst.msk [vmem:[#allocation2 + $0x40] sm:$0xf] %vm258, %v242
      %276 = vst.msk [vmem:[#allocation2 + $0x44] sm:$0xf] %vm258, %v243
      %277 = vst.msk [vmem:[#allocation2 + $0x48] sm:$0xf] %vm258, %v244
      %278 = vst.msk [vmem:[#allocation2 + $0x4c] sm:$0xf] %vm258, %v245
      %279 = vst.msk [vmem:[#allocation2 + $0x50] sm:$0xf] %vm258, %v246
      %280 = vst.msk [vmem:[#allocation2 + $0x54] sm:$0xf] %vm258, %v247
      %281 = vst.msk [vmem:[#allocation2 + $0x58] sm:$0xf] %vm258, %v248
      %282 = vst.msk [vmem:[#allocation2 + $0x5c] sm:$0xf] %vm258, %v249
      %283 = vst.msk [vmem:[#allocation2 + $0x60] sm:$0xf] %vm258, %v250
      %284 = vst.msk [vmem:[#allocation2 + $0x64] sm:$0xf] %vm258, %v251
      %285 = vst.msk [vmem:[#allocation2 + $0x68] sm:$0xf] %vm258, %v252
      %286 = vst.msk [vmem:[#allocation2 + $0x6c] sm:$0xf] %vm258, %v253
      %287 = vst.msk [vmem:[#allocation2 + $0x70] sm:$0xf] %vm258, %v254
      %288 = vst.msk [vmem:[#allocation2 + $0x74] sm:$0xf] %vm258, %v255
      %289 = vst.msk [vmem:[#allocation2 + $0x78] sm:$0xf] %vm258, %v256
      %290 = vst.msk [vmem:[#allocation2 + $0x7c] sm:$0xf] %vm258, %v257
      %v291 = vld [vmem:[%s219] sm:$0xf]
      %v292 = vld [vmem:[%s219 + $0x4] sm:$0xf]
      %v293 = vld [vmem:[%s219 + $0x8] sm:$0x1]
      %v294 = vld [vmem:[%s219 + $0xc] sm:$0xf]
      %v295 = vld [vmem:[%s219 + $0x10] sm:$0xf]
      %v296 = vld [vmem:[%s219 + $0x14] sm:$0x1]
      %v297 = vld [vmem:[%s219 + $0x18] sm:$0xf]
      %v298 = vld [vmem:[%s219 + $0x1c] sm:$0xf]
      %v299 = vld [vmem:[%s219 + $0x20] sm:$0x1]
      %v300 = vld [vmem:[%s219 + $0x24] sm:$0xf]
      %v301 = vld [vmem:[%s219 + $0x28] sm:$0xf]
      %v302 = vld [vmem:[%s219 + $0x2c] sm:$0x1]
      %v303 = vld [vmem:[%s219 + $0x30] sm:$0xf]
      %v304 = vld [vmem:[%s219 + $0x34] sm:$0xf]
      %v305 = vld [vmem:[%s219 + $0x38] sm:$0x1]
      %v306 = vld [vmem:[%s219 + $0x3c] sm:$0xf]
      %v307 = vld [vmem:[%s219 + $0x40] sm:$0xf]
      %v308 = vld [vmem:[%s219 + $0x44] sm:$0x1]
      %v309 = vld [vmem:[%s219 + $0x48] sm:$0xf]
      %v310 = vld [vmem:[%s219 + $0x4c] sm:$0xf]
      %v311 = vld [vmem:[%s219 + $0x50] sm:$0x1]
      %v312 = vld [vmem:[%s219 + $0x54] sm:$0xf]
      %v313 = vld [vmem:[%s219 + $0x58] sm:$0xf]
      %v314 = vld [vmem:[%s219 + $0x5c] sm:$0x1]
      %v315 = vld [vmem:[%s219 + $0x60] sm:$0xf]
      %v316 = vld [vmem:[%s219 + $0x64] sm:$0xf]
      %v317 = vld [vmem:[%s219 + $0x68] sm:$0x1]
      %v318 = vld [vmem:[%s219 + $0x6c] sm:$0xf]
      %v319 = vld [vmem:[%s219 + $0x70] sm:$0xf]
      %v320 = vld [vmem:[%s219 + $0x74] sm:$0x1]
      %v321 = vld [vmem:[%s219 + $0x78] sm:$0xf]
      %v322 = vld [vmem:[%s219 + $0x7c] sm:$0xf]
      %v323 = vld [vmem:[%s219 + $0x80] sm:$0x1]
      %v324 = vld [vmem:[%s219 + $0x84] sm:$0xf]
      %v325 = vld [vmem:[%s219 + $0x88] sm:$0xf]
      %v326 = vld [vmem:[%s219 + $0x8c] sm:$0x1]
      %v327 = vld [vmem:[%s219 + $0x90] sm:$0xf]
      %v328 = vld [vmem:[%s219 + $0x94] sm:$0xf]
      %v329 = vld [vmem:[%s219 + $0x98] sm:$0x1]
      %v330 = vld [vmem:[%s219 + $0x9c] sm:$0xf]
      %v331 = vld [vmem:[%s219 + $0xa0] sm:$0xf]
      %v332 = vld [vmem:[%s219 + $0xa4] sm:$0x1]
      %v333 = vld [vmem:[%s219 + $0xa8] sm:$0xf]
      %v334 = vld [vmem:[%s219 + $0xac] sm:$0xf]
      %v335 = vld [vmem:[%s219 + $0xb0] sm:$0x1]
      %v336 = vld [vmem:[%s219 + $0xb4] sm:$0xf]
      %v337 = vld [vmem:[%s219 + $0xb8] sm:$0xf]
      %v338 = vld [vmem:[%s219 + $0xbc] sm:$0x1]
      %vm339 = vsmask.f32 3328
      %vm340 = vsmask.f32 7440
      %vm341 = vmor %vm339, %vm340
      %v343 = vshrl.u32 %v291, 16
      %v345 = vrot.slane %v343, 4
      %v346 = vshll.u32 %v291, 16
      %v348 = vrot.slane %v346, 5
      %v349 = vor.u32 %v345, %v348
      %v350 = vrot.slane %v349, 4
      %v352 = vshll.u32 %v292, 16
      %v354 = vrot.slane %v352, 5
      %v355 = vsel %vm341, %v350, %v354
      %v356 = vshrl.u32 %v292, 16
      %v358 = vrot.slane %v356, 4
      %v359 = vor.u32 %v358, %v354
      %v360 = vrot.slane %v359, 4
      %v362 = vshll.u32 %v293, 16
      %v364 = vrot.slane %v362, 5
      %v365 = vsel %vm341, %v360, %v364
      %v367 = vshrl.u32 %v294, 16
      %v369 = vrot.slane %v367, 4
      %v370 = vshll.u32 %v294, 16
      %v372 = vrot.slane %v370, 5
      %v373 = vor.u32 %v369, %v372
      %v374 = vrot.slane %v373, 4
      %v376 = vshll.u32 %v295, 16
      %v378 = vrot.slane %v376, 5
      %v379 = vsel %vm341, %v374, %v378
      %v380 = vshrl.u32 %v295, 16
      %v382 = vrot.slane %v380, 4
      %v383 = vor.u32 %v382, %v378
      %v384 = vrot.slane %v383, 4
      %v386 = vshll.u32 %v296, 16
      %v388 = vrot.slane %v386, 5
      %v389 = vsel %vm341, %v384, %v388
      %v391 = vshrl.u32 %v297, 16
      %v393 = vrot.slane %v391, 4
      %v394 = vshll.u32 %v297, 16
      %v396 = vrot.slane %v394, 5
      %v397 = vor.u32 %v393, %v396
      %v398 = vrot.slane %v397, 4
      %v400 = vshll.u32 %v298, 16
      %v402 = vrot.slane %v400, 5
      %v403 = vsel %vm341, %v398, %v402
      %v404 = vshrl.u32 %v298, 16
      %v406 = vrot.slane %v404, 4
      %v407 = vor.u32 %v406, %v402
      %v408 = vrot.slane %v407, 4
      %v410 = vshll.u32 %v299, 16
      %v412 = vrot.slane %v410, 5
      %v413 = vsel %vm341, %v408, %v412
      %v415 = vshrl.u32 %v300, 16
      %v417 = vrot.slane %v415, 4
      %v418 = vshll.u32 %v300, 16
      %v420 = vrot.slane %v418, 5
      %v421 = vor.u32 %v417, %v420
      %v422 = vrot.slane %v421, 4
      %v424 = vshll.u32 %v301, 16
      %v426 = vrot.slane %v424, 5
      %v427 = vsel %vm341, %v422, %v426
      %v428 = vshrl.u32 %v301, 16
      %v430 = vrot.slane %v428, 4
      %v431 = vor.u32 %v430, %v426
      %v432 = vrot.slane %v431, 4
      %v434 = vshll.u32 %v302, 16
      %v436 = vrot.slane %v434, 5
      %v437 = vsel %vm341, %v432, %v436
      %v439 = vshrl.u32 %v303, 16
      %v441 = vrot.slane %v439, 4
      %v442 = vshll.u32 %v303, 16
      %v444 = vrot.slane %v442, 5
      %v445 = vor.u32 %v441, %v444
      %v446 = vrot.slane %v445, 4
      %v448 = vshll.u32 %v304, 16
      %v450 = vrot.slane %v448, 5
      %v451 = vsel %vm341, %v446, %v450
      %v452 = vshrl.u32 %v304, 16
      %v454 = vrot.slane %v452, 4
      %v455 = vor.u32 %v454, %v450
      %v456 = vrot.slane %v455, 4
      %v458 = vshll.u32 %v305, 16
      %v460 = vrot.slane %v458, 5
      %v461 = vsel %vm341, %v456, %v460
      %v463 = vshrl.u32 %v306, 16
      %v465 = vrot.slane %v463, 4
      %v466 = vshll.u32 %v306, 16
      %v468 = vrot.slane %v466, 5
      %v469 = vor.u32 %v465, %v468
      %v470 = vrot.slane %v469, 4
      %v472 = vshll.u32 %v307, 16
      %v474 = vrot.slane %v472, 5
      %v475 = vsel %vm341, %v470, %v474
      %v476 = vshrl.u32 %v307, 16
      %v478 = vrot.slane %v476, 4
      %v479 = vor.u32 %v478, %v474
      %v480 = vrot.slane %v479, 4
      %v482 = vshll.u32 %v308, 16
      %v484 = vrot.slane %v482, 5
      %v485 = vsel %vm341, %v480, %v484
      %v487 = vshrl.u32 %v309, 16
      %v489 = vrot.slane %v487, 4
      %v490 = vshll.u32 %v309, 16
      %v492 = vrot.slane %v490, 5
      %v493 = vor.u32 %v489, %v492
      %v494 = vrot.slane %v493, 4
      %v496 = vshll.u32 %v310, 16
      %v498 = vrot.slane %v496, 5
      %v499 = vsel %vm341, %v494, %v498
      %v500 = vshrl.u32 %v310, 16
      %v502 = vrot.slane %v500, 4
      %v503 = vor.u32 %v502, %v498
      %v504 = vrot.slane %v503, 4
      %v506 = vshll.u32 %v311, 16
      %v508 = vrot.slane %v506, 5
      %v509 = vsel %vm341, %v504, %v508
      %v511 = vshrl.u32 %v312, 16
      %v513 = vrot.slane %v511, 4
      %v514 = vshll.u32 %v312, 16
      %v516 = vrot.slane %v514, 5
      %v517 = vor.u32 %v513, %v516
      %v518 = vrot.slane %v517, 4
      %v520 = vshll.u32 %v313, 16
      %v522 = vrot.slane %v520, 5
      %v523 = vsel %vm341, %v518, %v522
      %v524 = vshrl.u32 %v313, 16
      %v526 = vrot.slane %v524, 4
      %v527 = vor.u32 %v526, %v522
      %v528 = vrot.slane %v527, 4
      %v530 = vshll.u32 %v314, 16
      %v532 = vrot.slane %v530, 5
      %v533 = vsel %vm341, %v528, %v532
      %v535 = vshrl.u32 %v315, 16
      %v537 = vrot.slane %v535, 4
      %v538 = vshll.u32 %v315, 16
      %v540 = vrot.slane %v538, 5
      %v541 = vor.u32 %v537, %v540
      %v542 = vrot.slane %v541, 4
      %v544 = vshll.u32 %v316, 16
      %v546 = vrot.slane %v544, 5
      %v547 = vsel %vm341, %v542, %v546
      %v548 = vshrl.u32 %v316, 16
      %v550 = vrot.slane %v548, 4
      %v551 = vor.u32 %v550, %v546
      %v552 = vrot.slane %v551, 4
      %v554 = vshll.u32 %v317, 16
      %v556 = vrot.slane %v554, 5
      %v557 = vsel %vm341, %v552, %v556
      %v559 = vshrl.u32 %v318, 16
      %v561 = vrot.slane %v559, 4
      %v562 = vshll.u32 %v318, 16
      %v564 = vrot.slane %v562, 5
      %v565 = vor.u32 %v561, %v564
      %v566 = vrot.slane %v565, 4
      %v568 = vshll.u32 %v319, 16
      %v570 = vrot.slane %v568, 5
      %v571 = vsel %vm341, %v566, %v570
      %v572 = vshrl.u32 %v319, 16
      %v574 = vrot.slane %v572, 4
      %v575 = vor.u32 %v574, %v570
      %v576 = vrot.slane %v575, 4
      %v578 = vshll.u32 %v320, 16
      %v580 = vrot.slane %v578, 5
      %v581 = vsel %vm341, %v576, %v580
      %v583 = vshrl.u32 %v321, 16
      %v585 = vrot.slane %v583, 4
      %v586 = vshll.u32 %v321, 16
      %v588 = vrot.slane %v586, 5
      %v589 = vor.u32 %v585, %v588
      %v590 = vrot.slane %v589, 4
      %v592 = vshll.u32 %v322, 16
      %v594 = vrot.slane %v592, 5
      %v595 = vsel %vm341, %v590, %v594
      %v596 = vshrl.u32 %v322, 16
      %v598 = vrot.slane %v596, 4
      %v599 = vor.u32 %v598, %v594
      %v600 = vrot.slane %v599, 4
      %v602 = vshll.u32 %v323, 16
      %v604 = vrot.slane %v602, 5
      %v605 = vsel %vm341, %v600, %v604
      %v607 = vshrl.u32 %v324, 16
      %v609 = vrot.slane %v607, 4
      %v610 = vshll.u32 %v324, 16
      %v612 = vrot.slane %v610, 5
      %v613 = vor.u32 %v609, %v612
      %v614 = vrot.slane %v613, 4
      %v616 = vshll.u32 %v325, 16
      %v618 = vrot.slane %v616, 5
      %v619 = vsel %vm341, %v614, %v618
      %v620 = vshrl.u32 %v325, 16
      %v622 = vrot.slane %v620, 4
      %v623 = vor.u32 %v622, %v618
      %v624 = vrot.slane %v623, 4
      %v626 = vshll.u32 %v326, 16
      %v628 = vrot.slane %v626, 5
      %v629 = vsel %vm341, %v624, %v628
      %v631 = vshrl.u32 %v327, 16
      %v633 = vrot.slane %v631, 4
      %v634 = vshll.u32 %v327, 16
      %v636 = vrot.slane %v634, 5
      %v637 = vor.u32 %v633, %v636
      %v638 = vrot.slane %v637, 4
      %v640 = vshll.u32 %v328, 16
      %v642 = vrot.slane %v640, 5
      %v643 = vsel %vm341, %v638, %v642
      %v644 = vshrl.u32 %v328, 16
      %v646 = vrot.slane %v644, 4
      %v647 = vor.u32 %v646, %v642
      %v648 = vrot.slane %v647, 4
      %v650 = vshll.u32 %v329, 16
      %v652 = vrot.slane %v650, 5
      %v653 = vsel %vm341, %v648, %v652
      %v655 = vshrl.u32 %v330, 16
      %v657 = vrot.slane %v655, 4
      %v658 = vshll.u32 %v330, 16
      %v660 = vrot.slane %v658, 5
      %v661 = vor.u32 %v657, %v660
      %v662 = vrot.slane %v661, 4
      %v664 = vshll.u32 %v331, 16
      %v666 = vrot.slane %v664, 5
      %v667 = vsel %vm341, %v662, %v666
      %v668 = vshrl.u32 %v331, 16
      %v670 = vrot.slane %v668, 4
      %v671 = vor.u32 %v670, %v666
      %v672 = vrot.slane %v671, 4
      %v674 = vshll.u32 %v332, 16
      %v676 = vrot.slane %v674, 5
      %v677 = vsel %vm341, %v672, %v676
      %v679 = vshrl.u32 %v333, 16
      %v681 = vrot.slane %v679, 4
      %v682 = vshll.u32 %v333, 16
      %v684 = vrot.slane %v682, 5
      %v685 = vor.u32 %v681, %v684
      %v686 = vrot.slane %v685, 4
      %v688 = vshll.u32 %v334, 16
      %v690 = vrot.slane %v688, 5
      %v691 = vsel %vm341, %v686, %v690
      %v692 = vshrl.u32 %v334, 16
      %v694 = vrot.slane %v692, 4
      %v695 = vor.u32 %v694, %v690
      %v696 = vrot.slane %v695, 4
      %v698 = vshll.u32 %v335, 16
      %v700 = vrot.slane %v698, 5
      %v701 = vsel %vm341, %v696, %v700
      %v703 = vshrl.u32 %v336, 16
      %v705 = vrot.slane %v703, 4
      %v706 = vshll.u32 %v336, 16
      %v708 = vrot.slane %v706, 5
      %v709 = vor.u32 %v705, %v708
      %v710 = vrot.slane %v709, 4
      %v712 = vshll.u32 %v337, 16
      %v714 = vrot.slane %v712, 5
      %v715 = vsel %vm341, %v710, %v714
      %v716 = vshrl.u32 %v337, 16
      %v718 = vrot.slane %v716, 4
      %v719 = vor.u32 %v718, %v714
      %v720 = vrot.slane %v719, 4
      %v722 = vshll.u32 %v338, 16
      %v724 = vrot.slane %v722, 5
      %v725 = vsel %vm341, %v720, %v724
      %726 = vrot.lane.b32.xlu0 %v355, 4
      %v727 = vpop.permute.xlu0 %726
      %728 = vrot.lane.b32.xlu0 %v365, 4
      %v729 = vpop.permute.xlu0 %728
      %730 = vrot.lane.b32.xlu0 %v379, 4
      %v731 = vpop.permute.xlu0 %730
      %732 = vrot.lane.b32.xlu0 %v389, 4
      %v733 = vpop.permute.xlu0 %732
      %734 = vrot.lane.b32.xlu0 %v403, 4
      %v735 = vpop.permute.xlu0 %734
      %736 = vrot.lane.b32.xlu0 %v413, 4
      %v737 = vpop.permute.xlu0 %736
      %738 = vrot.lane.b32.xlu0 %v427, 4
      %v739 = vpop.permute.xlu0 %738
      %740 = vrot.lane.b32.xlu0 %v437, 4
      %v741 = vpop.permute.xlu0 %740
      %742 = vrot.lane.b32.xlu0 %v451, 4
      %v743 = vpop.permute.xlu0 %742
      %744 = vrot.lane.b32.xlu0 %v461, 4
      %v745 = vpop.permute.xlu0 %744
      %746 = vrot.lane.b32.xlu0 %v475, 4
      %v747 = vpop.permute.xlu0 %746
      %748 = vrot.lane.b32.xlu0 %v485, 4
      %v749 = vpop.permute.xlu0 %748
      %750 = vrot.lane.b32.xlu0 %v499, 4
      %v751 = vpop.permute.xlu0 %750
      %752 = vrot.lane.b32.xlu0 %v509, 4
      %v753 = vpop.permute.xlu0 %752
      %754 = vrot.lane.b32.xlu0 %v523, 4
      %v755 = vpop.permute.xlu0 %754
      %756 = vrot.lane.b32.xlu0 %v533, 4
      %v757 = vpop.permute.xlu0 %756
      %758 = vrot.lane.b32.xlu0 %v547, 4
      %v759 = vpop.permute.xlu0 %758
      %760 = vrot.lane.b32.xlu0 %v557, 4
      %v761 = vpop.permute.xlu0 %760
      %762 = vrot.lane.b32.xlu0 %v571, 4
      %v763 = vpop.permute.xlu0 %762
      %764 = vrot.lane.b32.xlu0 %v581, 4
      %v765 = vpop.permute.xlu0 %764
      %766 = vrot.lane.b32.xlu0 %v595, 4
      %v767 = vpop.permute.xlu0 %766
      %768 = vrot.lane.b32.xlu0 %v605, 4
      %v769 = vpop.permute.xlu0 %768
      %770 = vrot.lane.b32.xlu0 %v619, 4
      %v771 = vpop.permute.xlu0 %770
      %772 = vrot.lane.b32.xlu0 %v629, 4
      %v773 = vpop.permute.xlu0 %772
      %774 = vrot.lane.b32.xlu0 %v643, 4
      %v775 = vpop.permute.xlu0 %774
      %776 = vrot.lane.b32.xlu0 %v653, 4
      %v777 = vpop.permute.xlu0 %776
      %778 = vrot.lane.b32.xlu0 %v667, 4
      %v779 = vpop.permute.xlu0 %778
      %780 = vrot.lane.b32.xlu0 %v677, 4
      %v781 = vpop.permute.xlu0 %780
      %782 = vrot.lane.b32.xlu0 %v691, 4
      %v783 = vpop.permute.xlu0 %782
      %784 = vrot.lane.b32.xlu0 %v701, 4
      %v785 = vpop.permute.xlu0 %784
      %786 = vrot.lane.b32.xlu0 %v715, 4
      %v787 = vpop.permute.xlu0 %786
      %788 = vrot.lane.b32.xlu0 %v725, 4
      %v789 = vpop.permute.xlu0 %788
      %vm822 = vcmask 60448
      %823 = vst.msk [vmem:[#allocation2] sm:$0xf] %vm822, %v727
      %824 = vst.msk [vmem:[#allocation2 + $0x4] sm:$0xf] %vm822, %v729
      %825 = vst.msk [vmem:[#allocation2 + $0x8] sm:$0xf] %vm822, %v731
      %826 = vst.msk [vmem:[#allocation2 + $0xc] sm:$0xf] %vm822, %v733
      %827 = vst.msk [vmem:[#allocation2 + $0x10] sm:$0xf] %vm822, %v735
      %828 = vst.msk [vmem:[#allocation2 + $0x14] sm:$0xf] %vm822, %v737
      %829 = vst.msk [vmem:[#allocation2 + $0x18] sm:$0xf] %vm822, %v739
      %830 = vst.msk [vmem:[#allocation2 + $0x1c] sm:$0xf] %vm822, %v741
      %831 = vst.msk [vmem:[#allocation2 + $0x20] sm:$0xf] %vm822, %v743
      %832 = vst.msk [vmem:[#allocation2 + $0x24] sm:$0xf] %vm822, %v745
      %833 = vst.msk [vmem:[#allocation2 + $0x28] sm:$0xf] %vm822, %v747
      %834 = vst.msk [vmem:[#allocation2 + $0x2c] sm:$0xf] %vm822, %v749
      %835 = vst.msk [vmem:[#allocation2 + $0x30] sm:$0xf] %vm822, %v751
      %836 = vst.msk [vmem:[#allocation2 + $0x34] sm:$0xf] %vm822, %v753
      %837 = vst.msk [vmem:[#allocation2 + $0x38] sm:$0xf] %vm822, %v755
      %838 = vst.msk [vmem:[#allocation2 + $0x3c] sm:$0xf] %vm822, %v757
      %839 = vst.msk [vmem:[#allocation2 + $0x40] sm:$0xf] %vm822, %v759
      %840 = vst.msk [vmem:[#allocation2 + $0x44] sm:$0xf] %vm822, %v761
      %841 = vst.msk [vmem:[#allocation2 + $0x48] sm:$0xf] %vm822, %v763
      %842 = vst.msk [vmem:[#allocation2 + $0x4c] sm:$0xf] %vm822, %v765
      %843 = vst.msk [vmem:[#allocation2 + $0x50] sm:$0xf] %vm822, %v767
      %844 = vst.msk [vmem:[#allocation2 + $0x54] sm:$0xf] %vm822, %v769
      %845 = vst.msk [vmem:[#allocation2 + $0x58] sm:$0xf] %vm822, %v771
      %846 = vst.msk [vmem:[#allocation2 + $0x5c] sm:$0xf] %vm822, %v773
      %847 = vst.msk [vmem:[#allocation2 + $0x60] sm:$0xf] %vm822, %v775
      %848 = vst.msk [vmem:[#allocation2 + $0x64] sm:$0xf] %vm822, %v777
      %849 = vst.msk [vmem:[#allocation2 + $0x68] sm:$0xf] %vm822, %v779
      %850 = vst.msk [vmem:[#allocation2 + $0x6c] sm:$0xf] %vm822, %v781
      %851 = vst.msk [vmem:[#allocation2 + $0x70] sm:$0xf] %vm822, %v783
      %852 = vst.msk [vmem:[#allocation2 + $0x74] sm:$0xf] %vm822, %v785
      %853 = vst.msk [vmem:[#allocation2 + $0x78] sm:$0xf] %vm822, %v787
      %854 = vst.msk [vmem:[#allocation2 + $0x7c] sm:$0xf] %vm822, %v789
      %v855 = vld [vmem:[%s219] sm:$0xe]
      %v856 = vld [vmem:[%s219 + $0x4] sm:$0xf]
      %v857 = vld [vmem:[%s219 + $0x8] sm:$0x1]
      %v858 = vld [vmem:[%s219 + $0xc] sm:$0xe]
      %v859 = vld [vmem:[%s219 + $0x10] sm:$0xf]
      %v860 = vld [vmem:[%s219 + $0x14] sm:$0x1]
      %v861 = vld [vmem:[%s219 + $0x18] sm:$0xe]
      %v862 = vld [vmem:[%s219 + $0x1c] sm:$0xf]
      %v863 = vld [vmem:[%s219 + $0x20] sm:$0x1]
      %v864 = vld [vmem:[%s219 + $0x24] sm:$0xe]
      %v865 = vld [vmem:[%s219 + $0x28] sm:$0xf]
      %v866 = vld [vmem:[%s219 + $0x2c] sm:$0x1]
      %v867 = vld [vmem:[%s219 + $0x30] sm:$0xe]
      %v868 = vld [vmem:[%s219 + $0x34] sm:$0xf]
      %v869 = vld [vmem:[%s219 + $0x38] sm:$0x1]
      %v870 = vld [vmem:[%s219 + $0x3c] sm:$0xe]
      %v871 = vld [vmem:[%s219 + $0x40] sm:$0xf]
      %v872 = vld [vmem:[%s219 + $0x44] sm:$0x1]
      %v873 = vld [vmem:[%s219 + $0x48] sm:$0xe]
      %v874 = vld [vmem:[%s219 + $0x4c] sm:$0xf]
      %v875 = vld [vmem:[%s219 + $0x50] sm:$0x1]
      %v876 = vld [vmem:[%s219 + $0x54] sm:$0xe]
      %v877 = vld [vmem:[%s219 + $0x58] sm:$0xf]
      %v878 = vld [vmem:[%s219 + $0x5c] sm:$0x1]
      %v879 = vld [vmem:[%s219 + $0x60] sm:$0xe]
      %v880 = vld [vmem:[%s219 + $0x64] sm:$0xf]
      %v881 = vld [vmem:[%s219 + $0x68] sm:$0x1]
      %v882 = vld [vmem:[%s219 + $0x6c] sm:$0xe]
      %v883 = vld [vmem:[%s219 + $0x70] sm:$0xf]
      %v884 = vld [vmem:[%s219 + $0x74] sm:$0x1]
      %v885 = vld [vmem:[%s219 + $0x78] sm:$0xe]
      %v886 = vld [vmem:[%s219 + $0x7c] sm:$0xf]
      %v887 = vld [vmem:[%s219 + $0x80] sm:$0x1]
      %v888 = vld [vmem:[%s219 + $0x84] sm:$0xe]
      %v889 = vld [vmem:[%s219 + $0x88] sm:$0xf]
      %v890 = vld [vmem:[%s219 + $0x8c] sm:$0x1]
      %v891 = vld [vmem:[%s219 + $0x90] sm:$0xe]
      %v892 = vld [vmem:[%s219 + $0x94] sm:$0xf]
      %v893 = vld [vmem:[%s219 + $0x98] sm:$0x1]
      %v894 = vld [vmem:[%s219 + $0x9c] sm:$0xe]
      %v895 = vld [vmem:[%s219 + $0xa0] sm:$0xf]
      %v896 = vld [vmem:[%s219 + $0xa4] sm:$0x1]
      %v897 = vld [vmem:[%s219 + $0xa8] sm:$0xe]
      %v898 = vld [vmem:[%s219 + $0xac] sm:$0xf]
      %v899 = vld [vmem:[%s219 + $0xb0] sm:$0x1]
      %v900 = vld [vmem:[%s219 + $0xb4] sm:$0xe]
      %v901 = vld [vmem:[%s219 + $0xb8] sm:$0xf]
      %v902 = vld [vmem:[%s219 + $0xbc] sm:$0x1]
      %vm951 = vcmask 1042432
      %vm952 = vcmask 1046532
      %vm953 = vmor %vm951, %vm952
      %v954 = vrot.slane %v855, 5
      %v955 = vrot.slane %v954, 4
      %v956 = vrot.slane %v856, 5
      %v957 = vsel %vm953, %v955, %v956
      %v958 = vrot.slane %v956, 4
      %v959 = vrot.slane %v857, 5
      %v960 = vsel %vm953, %v958, %v959
      %v961 = vrot.slane %v858, 5
      %v962 = vrot.slane %v961, 4
      %v963 = vrot.slane %v859, 5
      %v964 = vsel %vm953, %v962, %v963
      %v965 = vrot.slane %v963, 4
      %v966 = vrot.slane %v860, 5
      %v967 = vsel %vm953, %v965, %v966
      %v968 = vrot.slane %v861, 5
      %v969 = vrot.slane %v968, 4
      %v970 = vrot.slane %v862, 5
      %v971 = vsel %vm953, %v969, %v970
      %v972 = vrot.slane %v970, 4
      %v973 = vrot.slane %v863, 5
      %v974 = vsel %vm953, %v972, %v973
      %v975 = vrot.slane %v864, 5
      %v976 = vrot.slane %v975, 4
      %v977 = vrot.slane %v865, 5
      %v978 = vsel %vm953, %v976, %v977
      %v979 = vrot.slane %v977, 4
      %v980 = vrot.slane %v866, 5
      %v981 = vsel %vm953, %v979, %v980
      %v982 = vrot.slane %v867, 5
      %v983 = vrot.slane %v982, 4
      %v984 = vrot.slane %v868, 5
      %v985 = vsel %vm953, %v983, %v984
      %v986 = vrot.slane %v984, 4
      %v987 = vrot.slane %v869, 5
      %v988 = vsel %vm953, %v986, %v987
      %v989 = vrot.slane %v870, 5
      %v990 = vrot.slane %v989, 4
      %v991 = vrot.slane %v871, 5
      %v992 = vsel %vm953, %v990, %v991
      %v993 = vrot.slane %v991, 4
      %v994 = vrot.slane %v872, 5
      %v995 = vsel %vm953, %v993, %v994
      %v996 = vrot.slane %v873, 5
      %v997 = vrot.slane %v996, 4
      %v998 = vrot.slane %v874, 5
      %v999 = vsel %vm953, %v997, %v998
      %v1000 = vrot.slane %v998, 4
      %v1001 = vrot.slane %v875, 5
      %v1002 = vsel %vm953, %v1000, %v1001
      %v1003 = vrot.slane %v876, 5
      %v1004 = vrot.slane %v1003, 4
      %v1005 = vrot.slane %v877, 5
      %v1006 = vsel %vm953, %v1004, %v1005
      %v1007 = vrot.slane %v1005, 4
      %v1008 = vrot.slane %v878, 5
      %v1009 = vsel %vm953, %v1007, %v1008
      %v1010 = vrot.slane %v879, 5
      %v1011 = vrot.slane %v1010, 4
      %v1012 = vrot.slane %v880, 5
      %v1013 = vsel %vm953, %v1011, %v1012
      %v1014 = vrot.slane %v1012, 4
      %v1015 = vrot.slane %v881, 5
      %v1016 = vsel %vm953, %v1014, %v1015
      %v1017 = vrot.slane %v882, 5
      %v1018 = vrot.slane %v1017, 4
      %v1019 = vrot.slane %v883, 5
      %v1020 = vsel %vm953, %v1018, %v1019
      %v1021 = vrot.slane %v1019, 4
      %v1022 = vrot.slane %v884, 5
      %v1023 = vsel %vm953, %v1021, %v1022
      %v1024 = vrot.slane %v885, 5
      %v1025 = vrot.slane %v1024, 4
      %v1026 = vrot.slane %v886, 5
      %v1027 = vsel %vm953, %v1025, %v1026
      %v1028 = vrot.slane %v1026, 4
      %v1029 = vrot.slane %v887, 5
      %v1030 = vsel %vm953, %v1028, %v1029
      %v1031 = vrot.slane %v888, 5
      %v1032 = vrot.slane %v1031, 4
      %v1033 = vrot.slane %v889, 5
      %v1034 = vsel %vm953, %v1032, %v1033
      %v1035 = vrot.slane %v1033, 4
      %v1036 = vrot.slane %v890, 5
      %v1037 = vsel %vm953, %v1035, %v1036
      %v1038 = vrot.slane %v891, 5
      %v1039 = vrot.slane %v1038, 4
      %v1040 = vrot.slane %v892, 5
      %v1041 = vsel %vm953, %v1039, %v1040
      %v1042 = vrot.slane %v1040, 4
      %v1043 = vrot.slane %v893, 5
      %v1044 = vsel %vm953, %v1042, %v1043
      %v1045 = vrot.slane %v894, 5
      %v1046 = vrot.slane %v1045, 4
      %v1047 = vrot.slane %v895, 5
      %v1048 = vsel %vm953, %v1046, %v1047
      %v1049 = vrot.slane %v1047, 4
      %v1050 = vrot.slane %v896, 5
      %v1051 = vsel %vm953, %v1049, %v1050
      %v1052 = vrot.slane %v897, 5
      %v1053 = vrot.slane %v1052, 4
      %v1054 = vrot.slane %v898, 5
      %v1055 = vsel %vm953, %v1053, %v1054
      %v1056 = vrot.slane %v1054, 4
      %v1057 = vrot.slane %v899, 5
      %v1058 = vsel %vm953, %v1056, %v1057
      %v1059 = vrot.slane %v900, 5
      %v1060 = vrot.slane %v1059, 4
      %v1061 = vrot.slane %v901, 5
      %v1062 = vsel %vm953, %v1060, %v1061
      %v1063 = vrot.slane %v1061, 4
      %v1064 = vrot.slane %v902, 5
      %v1065 = vsel %vm953, %v1063, %v1064
      %1066 = vrot.lane.b32.xlu0 %v957, 8
      %v1067 = vpop.permute.xlu0 %1066
      %1068 = vrot.lane.b32.xlu0 %v960, 8
      %v1069 = vpop.permute.xlu0 %1068
      %1070 = vrot.lane.b32.xlu0 %v964, 8
      %v1071 = vpop.permute.xlu0 %1070
      %1072 = vrot.lane.b32.xlu0 %v967, 8
      %v1073 = vpop.permute.xlu0 %1072
      %1074 = vrot.lane.b32.xlu0 %v971, 8
      %v1075 = vpop.permute.xlu0 %1074
      %1076 = vrot.lane.b32.xlu0 %v974, 8
      %v1077 = vpop.permute.xlu0 %1076
      %1078 = vrot.lane.b32.xlu0 %v978, 8
      %v1079 = vpop.permute.xlu0 %1078
      %1080 = vrot.lane.b32.xlu0 %v981, 8
      %v1081 = vpop.permute.xlu0 %1080
      %1082 = vrot.lane.b32.xlu0 %v985, 8
      %v1083 = vpop.permute.xlu0 %1082
      %1084 = vrot.lane.b32.xlu0 %v988, 8
      %v1085 = vpop.permute.xlu0 %1084
      %1086 = vrot.lane.b32.xlu0 %v992, 8
      %v1087 = vpop.permute.xlu0 %1086
      %1088 = vrot.lane.b32.xlu0 %v995, 8
      %v1089 = vpop.permute.xlu0 %1088
      %1090 = vrot.lane.b32.xlu0 %v999, 8
      %v1091 = vpop.permute.xlu0 %1090
      %1092 = vrot.lane.b32.xlu0 %v1002, 8
      %v1093 = vpop.permute.xlu0 %1092
      %1094 = vrot.lane.b32.xlu0 %v1006, 8
      %v1095 = vpop.permute.xlu0 %1094
      %1096 = vrot.lane.b32.xlu0 %v1009, 8
      %v1097 = vpop.permute.xlu0 %1096
      %1098 = vrot.lane.b32.xlu0 %v1013, 8
      %v1099 = vpop.permute.xlu0 %1098
      %1100 = vrot.lane.b32.xlu0 %v1016, 8
      %v1101 = vpop.permute.xlu0 %1100
      %1102 = vrot.lane.b32.xlu0 %v1020, 8
      %v1103 = vpop.permute.xlu0 %1102
      %1104 = vrot.lane.b32.xlu0 %v1023, 8
      %v1105 = vpop.permute.xlu0 %1104
      %1106 = vrot.lane.b32.xlu0 %v1027, 8
      %v1107 = vpop.permute.xlu0 %1106
      %1108 = vrot.lane.b32.xlu0 %v1030, 8
      %v1109 = vpop.permute.xlu0 %1108
      %1110 = vrot.lane.b32.xlu0 %v1034, 8
      %v1111 = vpop.permute.xlu0 %1110
      %1112 = vrot.lane.b32.xlu0 %v1037, 8
      %v1113 = vpop.permute.xlu0 %1112
      %1114 = vrot.lane.b32.xlu0 %v1041, 8
      %v1115 = vpop.permute.xlu0 %1114
      %1116 = vrot.lane.b32.xlu0 %v1044, 8
      %v1117 = vpop.permute.xlu0 %1116
      %1118 = vrot.lane.b32.xlu0 %v1048, 8
      %v1119 = vpop.permute.xlu0 %1118
      %1120 = vrot.lane.b32.xlu0 %v1051, 8
      %v1121 = vpop.permute.xlu0 %1120
      %1122 = vrot.lane.b32.xlu0 %v1055, 8
      %v1123 = vpop.permute.xlu0 %1122
      %1124 = vrot.lane.b32.xlu0 %v1058, 8
      %v1125 = vpop.permute.xlu0 %1124
      %1126 = vrot.lane.b32.xlu0 %v1062, 8
      %v1127 = vpop.permute.xlu0 %1126
      %1128 = vrot.lane.b32.xlu0 %v1065, 8
      %v1129 = vpop.permute.xlu0 %1128
      %vm1162 = vcmask 93248
      %1163 = vst.msk [vmem:[#allocation2] sm:$0xf] %vm1162, %v1067
      %1164 = vst.msk [vmem:[#allocation2 + $0x4] sm:$0xf] %vm1162, %v1069
      %1165 = vst.msk [vmem:[#allocation2 + $0x8] sm:$0xf] %vm1162, %v1071
      %1166 = vst.msk [vmem:[#allocation2 + $0xc] sm:$0xf] %vm1162, %v1073
      %1167 = vst.msk [vmem:[#allocation2 + $0x10] sm:$0xf] %vm1162, %v1075
      %1168 = vst.msk [vmem:[#allocation2 + $0x14] sm:$0xf] %vm1162, %v1077
      %1169 = vst.msk [vmem:[#allocation2 + $0x18] sm:$0xf] %vm1162, %v1079
      %1170 = vst.msk [vmem:[#allocation2 + $0x1c] sm:$0xf] %vm1162, %v1081
      %1171 = vst.msk [vmem:[#allocation2 + $0x20] sm:$0xf] %vm1162, %v1083
      %1172 = vst.msk [vmem:[#allocation2 + $0x24] sm:$0xf] %vm1162, %v1085
      %1173 = vst.msk [vmem:[#allocation2 + $0x28] sm:$0xf] %vm1162, %v1087
      %1174 = vst.msk [vmem:[#allocation2 + $0x2c] sm:$0xf] %vm1162, %v1089
      %1175 = vst.msk [vmem:[#allocation2 + $0x30] sm:$0xf] %vm1162, %v1091
      %1176 = vst.msk [vmem:[#allocation2 + $0x34] sm:$0xf] %vm1162, %v1093
      %1177 = vst.msk [vmem:[#allocation2 + $0x38] sm:$0xf] %vm1162, %v1095
      %1178 = vst.msk [vmem:[#allocation2 + $0x3c] sm:$0xf] %vm1162, %v1097
      %1179 = vst.msk [vmem:[#allocation2 + $0x40] sm:$0xf] %vm1162, %v1099
      %1180 = vst.msk [vmem:[#allocation2 + $0x44] sm:$0xf] %vm1162, %v1101
      %1181 = vst.msk [vmem:[#allocation2 + $0x48] sm:$0xf] %vm1162, %v1103
      %1182 = vst.msk [vmem:[#allocation2 + $0x4c] sm:$0xf] %vm1162, %v1105
      %1183 = vst.msk [vmem:[#allocation2 + $0x50] sm:$0xf] %vm1162, %v1107
      %1184 = vst.msk [vmem:[#allocation2 + $0x54] sm:$0xf] %vm1162, %v1109
      %1185 = vst.msk [vmem:[#allocation2 + $0x58] sm:$0xf] %vm1162, %v1111
      %1186 = vst.msk [vmem:[#allocation2 + $0x5c] sm:$0xf] %vm1162, %v1113
      %1187 = vst.msk [vmem:[#allocation2 + $0x60] sm:$0xf] %vm1162, %v1115
      %1188 = vst.msk [vmem:[#allocation2 + $0x64] sm:$0xf] %vm1162, %v1117
      %1189 = vst.msk [vmem:[#allocation2 + $0x68] sm:$0xf] %vm1162, %v1119
      %1190 = vst.msk [vmem:[#allocation2 + $0x6c] sm:$0xf] %vm1162, %v1121
      %1191 = vst.msk [vmem:[#allocation2 + $0x70] sm:$0xf] %vm1162, %v1123
      %1192 = vst.msk [vmem:[#allocation2 + $0x74] sm:$0xf] %vm1162, %v1125
      %1193 = vst.msk [vmem:[#allocation2 + $0x78] sm:$0xf] %vm1162, %v1127
      %1194 = vst.msk [vmem:[#allocation2 + $0x7c] sm:$0xf] %vm1162, %v1129
      %s1195 = scalar_lea.vmem %s219, 12
      %v1196 = vld [vmem:[%s1195] sm:$0xf]
      %v1197 = vld [vmem:[%s1195 + $0x4] sm:$0xf]
      %v1198 = vld [vmem:[%s1195 + $0xc] sm:$0xf]
      %v1199 = vld [vmem:[%s1195 + $0x10] sm:$0xf]
      %v1200 = vld [vmem:[%s1195 + $0x18] sm:$0xf]
      %v1201 = vld [vmem:[%s1195 + $0x1c] sm:$0xf]
      %v1202 = vld [vmem:[%s1195 + $0x24] sm:$0xf]
      %v1203 = vld [vmem:[%s1195 + $0x28] sm:$0xf]
      %v1204 = vld [vmem:[%s1195 + $0x30] sm:$0xf]
      %v1205 = vld [vmem:[%s1195 + $0x34] sm:$0xf]
      %v1206 = vld [vmem:[%s1195 + $0x3c] sm:$0xf]
      %v1207 = vld [vmem:[%s1195 + $0x40] sm:$0xf]
      %v1208 = vld [vmem:[%s1195 + $0x48] sm:$0xf]
      %v1209 = vld [vmem:[%s1195 + $0x4c] sm:$0xf]
      %v1210 = vld [vmem:[%s1195 + $0x54] sm:$0xf]
      %v1211 = vld [vmem:[%s1195 + $0x58] sm:$0xf]
      %v1212 = vld [vmem:[%s1195 + $0x60] sm:$0xf]
      %v1213 = vld [vmem:[%s1195 + $0x64] sm:$0xf]
      %v1214 = vld [vmem:[%s1195 + $0x6c] sm:$0xf]
      %v1215 = vld [vmem:[%s1195 + $0x70] sm:$0xf]
      %v1216 = vld [vmem:[%s1195 + $0x78] sm:$0xf]
      %v1217 = vld [vmem:[%s1195 + $0x7c] sm:$0xf]
      %v1218 = vld [vmem:[%s1195 + $0x84] sm:$0xf]
      %v1219 = vld [vmem:[%s1195 + $0x88] sm:$0xf]
      %v1220 = vld [vmem:[%s1195 + $0x90] sm:$0xf]
      %v1221 = vld [vmem:[%s1195 + $0x94] sm:$0xf]
      %v1222 = vld [vmem:[%s1195 + $0x9c] sm:$0xf]
      %v1223 = vld [vmem:[%s1195 + $0xa0] sm:$0xf]
      %v1224 = vld [vmem:[%s1195 + $0xa8] sm:$0xf]
      %v1225 = vld [vmem:[%s1195 + $0xac] sm:$0xf]
      %v1226 = vld [vmem:[%s1195 + $0xb4] sm:$0xf]
      %v1227 = vld [vmem:[%s1195 + $0xb8] sm:$0xf]
      %1260 = vrot.lane.b32.xlu0 %v1196, 12
      %v1261 = vpop.permute.xlu0 %1260
      %1262 = vrot.lane.b32.xlu0 %v1197, 12
      %v1263 = vpop.permute.xlu0 %1262
      %1264 = vrot.lane.b32.xlu0 %v1198, 12
      %v1265 = vpop.permute.xlu0 %1264
      %1266 = vrot.lane.b32.xlu0 %v1199, 12
      %v1267 = vpop.permute.xlu0 %1266
      %1268 = vrot.lane.b32.xlu0 %v1200, 12
      %v1269 = vpop.permute.xlu0 %1268
      %1270 = vrot.lane.b32.xlu0 %v1201, 12
      %v1271 = vpop.permute.xlu0 %1270
      %1272 = vrot.lane.b32.xlu0 %v1202, 12
      %v1273 = vpop.permute.xlu0 %1272
      %1274 = vrot.lane.b32.xlu0 %v1203, 12
      %v1275 = vpop.permute.xlu0 %1274
      %1276 = vrot.lane.b32.xlu0 %v1204, 12
      %v1277 = vpop.permute.xlu0 %1276
      %1278 = vrot.lane.b32.xlu0 %v1205, 12
      %v1279 = vpop.permute.xlu0 %1278
      %1280 = vrot.lane.b32.xlu0 %v1206, 12
      %v1281 = vpop.permute.xlu0 %1280
      %1282 = vrot.lane.b32.xlu0 %v1207, 12
      %v1283 = vpop.permute.xlu0 %1282
      %1284 = vrot.lane.b32.xlu0 %v1208, 12
      %v1285 = vpop.permute.xlu0 %1284
      %1286 = vrot.lane.b32.xlu0 %v1209, 12
      %v1287 = vpop.permute.xlu0 %1286
      %1288 = vrot.lane.b32.xlu0 %v1210, 12
      %v1289 = vpop.permute.xlu0 %1288
      %1290 = vrot.lane.b32.xlu0 %v1211, 12
      %v1291 = vpop.permute.xlu0 %1290
      %1292 = vrot.lane.b32.xlu0 %v1212, 12
      %v1293 = vpop.permute.xlu0 %1292
      %1294 = vrot.lane.b32.xlu0 %v1213, 12
      %v1295 = vpop.permute.xlu0 %1294
      %1296 = vrot.lane.b32.xlu0 %v1214, 12
      %v1297 = vpop.permute.xlu0 %1296
      %1298 = vrot.lane.b32.xlu0 %v1215, 12
      %v1299 = vpop.permute.xlu0 %1298
      %1300 = vrot.lane.b32.xlu0 %v1216, 12
      %v1301 = vpop.permute.xlu0 %1300
      %1302 = vrot.lane.b32.xlu0 %v1217, 12
      %v1303 = vpop.permute.xlu0 %1302
      %1304 = vrot.lane.b32.xlu0 %v1218, 12
      %v1305 = vpop.permute.xlu0 %1304
      %1306 = vrot.lane.b32.xlu0 %v1219, 12
      %v1307 = vpop.permute.xlu0 %1306
      %1308 = vrot.lane.b32.xlu0 %v1220, 12
      %v1309 = vpop.permute.xlu0 %1308
      %1310 = vrot.lane.b32.xlu0 %v1221, 12
      %v1311 = vpop.permute.xlu0 %1310
      %1312 = vrot.lane.b32.xlu0 %v1222, 12
      %v1313 = vpop.permute.xlu0 %1312
      %1314 = vrot.lane.b32.xlu0 %v1223, 12
      %v1315 = vpop.permute.xlu0 %1314
      %1316 = vrot.lane.b32.xlu0 %v1224, 12
      %v1317 = vpop.permute.xlu0 %1316
      %1318 = vrot.lane.b32.xlu0 %v1225, 12
      %v1319 = vpop.permute.xlu0 %1318
      %1320 = vrot.lane.b32.xlu0 %v1226, 12
      %v1321 = vpop.permute.xlu0 %1320
      %1322 = vrot.lane.b32.xlu0 %v1227, 12
      %v1323 = vpop.permute.xlu0 %1322
      %vm1356 = vcmask 126048
      %1357 = vst.msk [vmem:[#allocation2] sm:$0xf] %vm1356, %v1261
      %1358 = vst.msk [vmem:[#allocation2 + $0x4] sm:$0xf] %vm1356, %v1263
      %1359 = vst.msk [vmem:[#allocation2 + $0x8] sm:$0xf] %vm1356, %v1265
      %1360 = vst.msk [vmem:[#allocation2 + $0xc] sm:$0xf] %vm1356, %v1267
      %1361 = vst.msk [vmem:[#allocation2 + $0x10] sm:$0xf] %vm1356, %v1269
      %1362 = vst.msk [vmem:[#allocation2 + $0x14] sm:$0xf] %vm1356, %v1271
      %1363 = vst.msk [vmem:[#allocation2 + $0x18] sm:$0xf] %vm1356, %v1273
      %1364 = vst.msk [vmem:[#allocation2 + $0x1c] sm:$0xf] %vm1356, %v1275
      %1365 = vst.msk [vmem:[#allocation2 + $0x20] sm:$0xf] %vm1356, %v1277
      %1366 = vst.msk [vmem:[#allocation2 + $0x24] sm:$0xf] %vm1356, %v1279
      %1367 = vst.msk [vmem:[#allocation2 + $0x28] sm:$0xf] %vm1356, %v1281
      %1368 = vst.msk [vmem:[#allocation2 + $0x2c] sm:$0xf] %vm1356, %v1283
      %1369 = vst.msk [vmem:[#allocation2 + $0x30] sm:$0xf] %vm1356, %v1285
      %1370 = vst.msk [vmem:[#allocation2 + $0x34] sm:$0xf] %vm1356, %v1287
      %1371 = vst.msk [vmem:[#allocation2 + $0x38] sm:$0xf] %vm1356, %v1289
      %1372 = vst.msk [vmem:[#allocation2 + $0x3c] sm:$0xf] %vm1356, %v1291
      %1373 = vst.msk [vmem:[#allocation2 + $0x40] sm:$0xf] %vm1356, %v1293
      %1374 = vst.msk [vmem:[#allocation2 + $0x44] sm:$0xf] %vm1356, %v1295
      %1375 = vst.msk [vmem:[#allocation2 + $0x48] sm:$0xf] %vm1356, %v1297
      %1376 = vst.msk [vmem:[#allocation2 + $0x4c] sm:$0xf] %vm1356, %v1299
      %1377 = vst.msk [vmem:[#allocation2 + $0x50] sm:$0xf] %vm1356, %v1301
      %1378 = vst.msk [vmem:[#allocation2 + $0x54] sm:$0xf] %vm1356, %v1303
      %1379 = vst.msk [vmem:[#allocation2 + $0x58] sm:$0xf] %vm1356, %v1305
      %1380 = vst.msk [vmem:[#allocation2 + $0x5c] sm:$0xf] %vm1356, %v1307
      %1381 = vst.msk [vmem:[#allocation2 + $0x60] sm:$0xf] %vm1356, %v1309
      %1382 = vst.msk [vmem:[#allocation2 + $0x64] sm:$0xf] %vm1356, %v1311
      %1383 = vst.msk [vmem:[#allocation2 + $0x68] sm:$0xf] %vm1356, %v1313
      %1384 = vst.msk [vmem:[#allocation2 + $0x6c] sm:$0xf] %vm1356, %v1315
      %1385 = vst.msk [vmem:[#allocation2 + $0x70] sm:$0xf] %vm1356, %v1317
      %1386 = vst.msk [vmem:[#allocation2 + $0x74] sm:$0xf] %vm1356, %v1319
      %1387 = vst.msk [vmem:[#allocation2 + $0x78] sm:$0xf] %vm1356, %v1321
      %1388 = vst.msk [vmem:[#allocation2 + $0x7c] sm:$0xf] %vm1356, %v1323
      %v1389 = vld [vmem:[%s1195] sm:$0xf]
      %v1390 = vld [vmem:[%s1195 + $0x4] sm:$0xf]
      %v1391 = vld [vmem:[%s1195 + $0x8] sm:$0x1]
      %v1392 = vld [vmem:[%s1195 + $0xc] sm:$0xf]
      %v1393 = vld [vmem:[%s1195 + $0x10] sm:$0xf]
      %v1394 = vld [vmem:[%s1195 + $0x14] sm:$0x1]
      %v1395 = vld [vmem:[%s1195 + $0x18] sm:$0xf]
      %v1396 = vld [vmem:[%s1195 + $0x1c] sm:$0xf]
      %v1397 = vld [vmem:[%s1195 + $0x20] sm:$0x1]
      %v1398 = vld [vmem:[%s1195 + $0x24] sm:$0xf]
      %v1399 = vld [vmem:[%s1195 + $0x28] sm:$0xf]
      %v1400 = vld [vmem:[%s1195 + $0x2c] sm:$0x1]
      %v1401 = vld [vmem:[%s1195 + $0x30] sm:$0xf]
      %v1402 = vld [vmem:[%s1195 + $0x34] sm:$0xf]
      %v1403 = vld [vmem:[%s1195 + $0x38] sm:$0x1]
      %v1404 = vld [vmem:[%s1195 + $0x3c] sm:$0xf]
      %v1405 = vld [vmem:[%s1195 + $0x40] sm:$0xf]
      %v1406 = vld [vmem:[%s1195 + $0x44] sm:$0x1]
      %v1407 = vld [vmem:[%s1195 + $0x48] sm:$0xf]
      %v1408 = vld [vmem:[%s1195 + $0x4c] sm:$0xf]
      %v1409 = vld [vmem:[%s1195 + $0x50] sm:$0x1]
      %v1410 = vld [vmem:[%s1195 + $0x54] sm:$0xf]
      %v1411 = vld [vmem:[%s1195 + $0x58] sm:$0xf]
      %v1412 = vld [vmem:[%s1195 + $0x5c] sm:$0x1]
      %v1413 = vld [vmem:[%s1195 + $0x60] sm:$0xf]
      %v1414 = vld [vmem:[%s1195 + $0x64] sm:$0xf]
      %v1415 = vld [vmem:[%s1195 + $0x68] sm:$0x1]
      %v1416 = vld [vmem:[%s1195 + $0x6c] sm:$0xf]
      %v1417 = vld [vmem:[%s1195 + $0x70] sm:$0xf]
      %v1418 = vld [vmem:[%s1195 + $0x74] sm:$0x1]
      %v1419 = vld [vmem:[%s1195 + $0x78] sm:$0xf]
      %v1420 = vld [vmem:[%s1195 + $0x7c] sm:$0xf]
      %v1421 = vld [vmem:[%s1195 + $0x80] sm:$0x1]
      %v1422 = vld [vmem:[%s1195 + $0x84] sm:$0xf]
      %v1423 = vld [vmem:[%s1195 + $0x88] sm:$0xf]
      %v1424 = vld [vmem:[%s1195 + $0x8c] sm:$0x1]
      %v1425 = vld [vmem:[%s1195 + $0x90] sm:$0xf]
      %v1426 = vld [vmem:[%s1195 + $0x94] sm:$0xf]
      %v1427 = vld [vmem:[%s1195 + $0x98] sm:$0x1]
      %v1428 = vld [vmem:[%s1195 + $0x9c] sm:$0xf]
      %v1429 = vld [vmem:[%s1195 + $0xa0] sm:$0xf]
      %v1430 = vld [vmem:[%s1195 + $0xa4] sm:$0x1]
      %v1431 = vld [vmem:[%s1195 + $0xa8] sm:$0xf]
      %v1432 = vld [vmem:[%s1195 + $0xac] sm:$0xf]
      %v1433 = vld [vmem:[%s1195 + $0xb0] sm:$0x1]
      %v1434 = vld [vmem:[%s1195 + $0xb4] sm:$0xf]
      %v1435 = vld [vmem:[%s1195 + $0xb8] sm:$0xf]
      %v1436 = vld [vmem:[%s1195 + $0xbc] sm:$0x1]
      %v1438 = vshrl.u32 %v1389, 16
      %v1440 = vrot.slane %v1438, 4
      %v1441 = vshll.u32 %v1389, 16
      %v1443 = vrot.slane %v1441, 5
      %v1444 = vor.u32 %v1440, %v1443
      %v1445 = vrot.slane %v1444, 4
      %v1447 = vshll.u32 %v1390, 16
      %v1449 = vrot.slane %v1447, 5
      %v1450 = vsel %vm341, %v1445, %v1449
      %v1451 = vshrl.u32 %v1390, 16
      %v1453 = vrot.slane %v1451, 4
      %v1454 = vor.u32 %v1453, %v1449
      %v1455 = vrot.slane %v1454, 4
      %v1457 = vshll.u32 %v1391, 16
      %v1459 = vrot.slane %v1457, 5
      %v1460 = vsel %vm341, %v1455, %v1459
      %v1462 = vshrl.u32 %v1392, 16
      %v1464 = vrot.slane %v1462, 4
      %v1465 = vshll.u32 %v1392, 16
      %v1467 = vrot.slane %v1465, 5
      %v1468 = vor.u32 %v1464, %v1467
      %v1469 = vrot.slane %v1468, 4
      %v1471 = vshll.u32 %v1393, 16
      %v1473 = vrot.slane %v1471, 5
      %v1474 = vsel %vm341, %v1469, %v1473
      %v1475 = vshrl.u32 %v1393, 16
      %v1477 = vrot.slane %v1475, 4
      %v1478 = vor.u32 %v1477, %v1473
      %v1479 = vrot.slane %v1478, 4
      %v1481 = vshll.u32 %v1394, 16
      %v1483 = vrot.slane %v1481, 5
      %v1484 = vsel %vm341, %v1479, %v1483
      %v1486 = vshrl.u32 %v1395, 16
      %v1488 = vrot.slane %v1486, 4
      %v1489 = vshll.u32 %v1395, 16
      %v1491 = vrot.slane %v1489, 5
      %v1492 = vor.u32 %v1488, %v1491
      %v1493 = vrot.slane %v1492, 4
      %v1495 = vshll.u32 %v1396, 16
      %v1497 = vrot.slane %v1495, 5
      %v1498 = vsel %vm341, %v1493, %v1497
      %v1499 = vshrl.u32 %v1396, 16
      %v1501 = vrot.slane %v1499, 4
      %v1502 = vor.u32 %v1501, %v1497
      %v1503 = vrot.slane %v1502, 4
      %v1505 = vshll.u32 %v1397, 16
      %v1507 = vrot.slane %v1505, 5
      %v1508 = vsel %vm341, %v1503, %v1507
      %v1510 = vshrl.u32 %v1398, 16
      %v1512 = vrot.slane %v1510, 4
      %v1513 = vshll.u32 %v1398, 16
      %v1515 = vrot.slane %v1513, 5
      %v1516 = vor.u32 %v1512, %v1515
      %v1517 = vrot.slane %v1516, 4
      %v1519 = vshll.u32 %v1399, 16
      %v1521 = vrot.slane %v1519, 5
      %v1522 = vsel %vm341, %v1517, %v1521
      %v1523 = vshrl.u32 %v1399, 16
      %v1525 = vrot.slane %v1523, 4
      %v1526 = vor.u32 %v1525, %v1521
      %v1527 = vrot.slane %v1526, 4
      %v1529 = vshll.u32 %v1400, 16
      %v1531 = vrot.slane %v1529, 5
      %v1532 = vsel %vm341, %v1527, %v1531
      %v1534 = vshrl.u32 %v1401, 16
      %v1536 = vrot.slane %v1534, 4
      %v1537 = vshll.u32 %v1401, 16
      %v1539 = vrot.slane %v1537, 5
      %v1540 = vor.u32 %v1536, %v1539
      %v1541 = vrot.slane %v1540, 4
      %v1543 = vshll.u32 %v1402, 16
      %v1545 = vrot.slane %v1543, 5
      %v1546 = vsel %vm341, %v1541, %v1545
      %v1547 = vshrl.u32 %v1402, 16
      %v1549 = vrot.slane %v1547, 4
      %v1550 = vor.u32 %v1549, %v1545
      %v1551 = vrot.slane %v1550, 4
      %v1553 = vshll.u32 %v1403, 16
      %v1555 = vrot.slane %v1553, 5
      %v1556 = vsel %vm341, %v1551, %v1555
      %v1558 = vshrl.u32 %v1404, 16
      %v1560 = vrot.slane %v1558, 4
      %v1561 = vshll.u32 %v1404, 16
      %v1563 = vrot.slane %v1561, 5
      %v1564 = vor.u32 %v1560, %v1563
      %v1565 = vrot.slane %v1564, 4
      %v1567 = vshll.u32 %v1405, 16
      %v1569 = vrot.slane %v1567, 5
      %v1570 = vsel %vm341, %v1565, %v1569
      %v1571 = vshrl.u32 %v1405, 16
      %v1573 = vrot.slane %v1571, 4
      %v1574 = vor.u32 %v1573, %v1569
      %v1575 = vrot.slane %v1574, 4
      %v1577 = vshll.u32 %v1406, 16
      %v1579 = vrot.slane %v1577, 5
      %v1580 = vsel %vm341, %v1575, %v1579
      %v1582 = vshrl.u32 %v1407, 16
      %v1584 = vrot.slane %v1582, 4
      %v1585 = vshll.u32 %v1407, 16
      %v1587 = vrot.slane %v1585, 5
      %v1588 = vor.u32 %v1584, %v1587
      %v1589 = vrot.slane %v1588, 4
      %v1591 = vshll.u32 %v1408, 16
      %v1593 = vrot.slane %v1591, 5
      %v1594 = vsel %vm341, %v1589, %v1593
      %v1595 = vshrl.u32 %v1408, 16
      %v1597 = vrot.slane %v1595, 4
      %v1598 = vor.u32 %v1597, %v1593
      %v1599 = vrot.slane %v1598, 4
      %v1601 = vshll.u32 %v1409, 16
      %v1603 = vrot.slane %v1601, 5
      %v1604 = vsel %vm341, %v1599, %v1603
      %v1606 = vshrl.u32 %v1410, 16
      %v1608 = vrot.slane %v1606, 4
      %v1609 = vshll.u32 %v1410, 16
      %v1611 = vrot.slane %v1609, 5
      %v1612 = vor.u32 %v1608, %v1611
      %v1613 = vrot.slane %v1612, 4
      %v1615 = vshll.u32 %v1411, 16
      %v1617 = vrot.slane %v1615, 5
      %v1618 = vsel %vm341, %v1613, %v1617
      %v1619 = vshrl.u32 %v1411, 16
      %v1621 = vrot.slane %v1619, 4
      %v1622 = vor.u32 %v1621, %v1617
      %v1623 = vrot.slane %v1622, 4
      %v1625 = vshll.u32 %v1412, 16
      %v1627 = vrot.slane %v1625, 5
      %v1628 = vsel %vm341, %v1623, %v1627
      %v1630 = vshrl.u32 %v1413, 16
      %v1632 = vrot.slane %v1630, 4
      %v1633 = vshll.u32 %v1413, 16
      %v1635 = vrot.slane %v1633, 5
      %v1636 = vor.u32 %v1632, %v1635
      %v1637 = vrot.slane %v1636, 4
      %v1639 = vshll.u32 %v1414, 16
      %v1641 = vrot.slane %v1639, 5
      %v1642 = vsel %vm341, %v1637, %v1641
      %v1643 = vshrl.u32 %v1414, 16
      %v1645 = vrot.slane %v1643, 4
      %v1646 = vor.u32 %v1645, %v1641
      %v1647 = vrot.slane %v1646, 4
      %v1649 = vshll.u32 %v1415, 16
      %v1651 = vrot.slane %v1649, 5
      %v1652 = vsel %vm341, %v1647, %v1651
      %v1654 = vshrl.u32 %v1416, 16
      %v1656 = vrot.slane %v1654, 4
      %v1657 = vshll.u32 %v1416, 16
      %v1659 = vrot.slane %v1657, 5
      %v1660 = vor.u32 %v1656, %v1659
      %v1661 = vrot.slane %v1660, 4
      %v1663 = vshll.u32 %v1417, 16
      %v1665 = vrot.slane %v1663, 5
      %v1666 = vsel %vm341, %v1661, %v1665
      %v1667 = vshrl.u32 %v1417, 16
      %v1669 = vrot.slane %v1667, 4
      %v1670 = vor.u32 %v1669, %v1665
      %v1671 = vrot.slane %v1670, 4
      %v1673 = vshll.u32 %v1418, 16
      %v1675 = vrot.slane %v1673, 5
      %v1676 = vsel %vm341, %v1671, %v1675
      %v1678 = vshrl.u32 %v1419, 16
      %v1680 = vrot.slane %v1678, 4
      %v1681 = vshll.u32 %v1419, 16
      %v1683 = vrot.slane %v1681, 5
      %v1684 = vor.u32 %v1680, %v1683
      %v1685 = vrot.slane %v1684, 4
      %v1687 = vshll.u32 %v1420, 16
      %v1689 = vrot.slane %v1687, 5
      %v1690 = vsel %vm341, %v1685, %v1689
      %v1691 = vshrl.u32 %v1420, 16
      %v1693 = vrot.slane %v1691, 4
      %v1694 = vor.u32 %v1693, %v1689
      %v1695 = vrot.slane %v1694, 4
      %v1697 = vshll.u32 %v1421, 16
      %v1699 = vrot.slane %v1697, 5
      %v1700 = vsel %vm341, %v1695, %v1699
      %v1702 = vshrl.u32 %v1422, 16
      %v1704 = vrot.slane %v1702, 4
      %v1705 = vshll.u32 %v1422, 16
      %v1707 = vrot.slane %v1705, 5
      %v1708 = vor.u32 %v1704, %v1707
      %v1709 = vrot.slane %v1708, 4
      %v1711 = vshll.u32 %v1423, 16
      %v1713 = vrot.slane %v1711, 5
      %v1714 = vsel %vm341, %v1709, %v1713
      %v1715 = vshrl.u32 %v1423, 16
      %v1717 = vrot.slane %v1715, 4
      %v1718 = vor.u32 %v1717, %v1713
      %v1719 = vrot.slane %v1718, 4
      %v1721 = vshll.u32 %v1424, 16
      %v1723 = vrot.slane %v1721, 5
      %v1724 = vsel %vm341, %v1719, %v1723
      %v1726 = vshrl.u32 %v1425, 16
      %v1728 = vrot.slane %v1726, 4
      %v1729 = vshll.u32 %v1425, 16
      %v1731 = vrot.slane %v1729, 5
      %v1732 = vor.u32 %v1728, %v1731
      %v1733 = vrot.slane %v1732, 4
      %v1735 = vshll.u32 %v1426, 16
      %v1737 = vrot.slane %v1735, 5
      %v1738 = vsel %vm341, %v1733, %v1737
      %v1739 = vshrl.u32 %v1426, 16
      %v1741 = vrot.slane %v1739, 4
      %v1742 = vor.u32 %v1741, %v1737
      %v1743 = vrot.slane %v1742, 4
      %v1745 = vshll.u32 %v1427, 16
      %v1747 = vrot.slane %v1745, 5
      %v1748 = vsel %vm341, %v1743, %v1747
      %v1750 = vshrl.u32 %v1428, 16
      %v1752 = vrot.slane %v1750, 4
      %v1753 = vshll.u32 %v1428, 16
      %v1755 = vrot.slane %v1753, 5
      %v1756 = vor.u32 %v1752, %v1755
      %v1757 = vrot.slane %v1756, 4
      %v1759 = vshll.u32 %v1429, 16
      %v1761 = vrot.slane %v1759, 5
      %v1762 = vsel %vm341, %v1757, %v1761
      %v1763 = vshrl.u32 %v1429, 16
      %v1765 = vrot.slane %v1763, 4
      %v1766 = vor.u32 %v1765, %v1761
      %v1767 = vrot.slane %v1766, 4
      %v1769 = vshll.u32 %v1430, 16
      %v1771 = vrot.slane %v1769, 5
      %v1772 = vsel %vm341, %v1767, %v1771
      %v1774 = vshrl.u32 %v1431, 16
      %v1776 = vrot.slane %v1774, 4
      %v1777 = vshll.u32 %v1431, 16
      %v1779 = vrot.slane %v1777, 5
      %v1780 = vor.u32 %v1776, %v1779
      %v1781 = vrot.slane %v1780, 4
      %v1783 = vshll.u32 %v1432, 16
      %v1785 = vrot.slane %v1783, 5
      %v1786 = vsel %vm341, %v1781, %v1785
      %v1787 = vshrl.u32 %v1432, 16
      %v1789 = vrot.slane %v1787, 4
      %v1790 = vor.u32 %v1789, %v1785
      %v1791 = vrot.slane %v1790, 4
      %v1793 = vshll.u32 %v1433, 16
      %v1795 = vrot.slane %v1793, 5
      %v1796 = vsel %vm341, %v1791, %v1795
      %v1798 = vshrl.u32 %v1434, 16
      %v1800 = vrot.slane %v1798, 4
      %v1801 = vshll.u32 %v1434, 16
      %v1803 = vrot.slane %v1801, 5
      %v1804 = vor.u32 %v1800, %v1803
      %v1805 = vrot.slane %v1804, 4
      %v1807 = vshll.u32 %v1435, 16
      %v1809 = vrot.slane %v1807, 5
      %v1810 = vsel %vm341, %v1805, %v1809
      %v1811 = vshrl.u32 %v1435, 16
      %v1813 = vrot.slane %v1811, 4
      %v1814 = vor.u32 %v1813, %v1809
      %v1815 = vrot.slane %v1814, 4
      %v1817 = vshll.u32 %v1436, 16
      %v1819 = vrot.slane %v1817, 5
      %v1820 = vsel %vm341, %v1815, %v1819
      %1821 = vrot.lane.b32.xlu0 %v1450, 16
      %v1822 = vpop.permute.xlu0 %1821
      %1823 = vrot.lane.b32.xlu0 %v1460, 16
      %v1824 = vpop.permute.xlu0 %1823
      %1825 = vrot.lane.b32.xlu0 %v1474, 16
      %v1826 = vpop.permute.xlu0 %1825
      %1827 = vrot.lane.b32.xlu0 %v1484, 16
      %v1828 = vpop.permute.xlu0 %1827
      %1829 = vrot.lane.b32.xlu0 %v1498, 16
      %v1830 = vpop.permute.xlu0 %1829
      %1831 = vrot.lane.b32.xlu0 %v1508, 16
      %v1832 = vpop.permute.xlu0 %1831
      %1833 = vrot.lane.b32.xlu0 %v1522, 16
      %v1834 = vpop.permute.xlu0 %1833
      %1835 = vrot.lane.b32.xlu0 %v1532, 16
      %v1836 = vpop.permute.xlu0 %1835
      %1837 = vrot.lane.b32.xlu0 %v1546, 16
      %v1838 = vpop.permute.xlu0 %1837
      %1839 = vrot.lane.b32.xlu0 %v1556, 16
      %v1840 = vpop.permute.xlu0 %1839
      %1841 = vrot.lane.b32.xlu0 %v1570, 16
      %v1842 = vpop.permute.xlu0 %1841
      %1843 = vrot.lane.b32.xlu0 %v1580, 16
      %v1844 = vpop.permute.xlu0 %1843
      %1845 = vrot.lane.b32.xlu0 %v1594, 16
      %v1846 = vpop.permute.xlu0 %1845
      %1847 = vrot.lane.b32.xlu0 %v1604, 16
      %v1848 = vpop.permute.xlu0 %1847
      %1849 = vrot.lane.b32.xlu0 %v1618, 16
      %v1850 = vpop.permute.xlu0 %1849
      %1851 = vrot.lane.b32.xlu0 %v1628, 16
      %v1852 = vpop.permute.xlu0 %1851
      %1853 = vrot.lane.b32.xlu0 %v1642, 16
      %v1854 = vpop.permute.xlu0 %1853
      %1855 = vrot.lane.b32.xlu0 %v1652, 16
      %v1856 = vpop.permute.xlu0 %1855
      %1857 = vrot.lane.b32.xlu0 %v1666, 16
      %v1858 = vpop.permute.xlu0 %1857
      %1859 = vrot.lane.b32.xlu0 %v1676, 16
      %v1860 = vpop.permute.xlu0 %1859
      %1861 = vrot.lane.b32.xlu0 %v1690, 16
      %v1862 = vpop.permute.xlu0 %1861
      %1863 = vrot.lane.b32.xlu0 %v1700, 16
      %v1864 = vpop.permute.xlu0 %1863
      %1865 = vrot.lane.b32.xlu0 %v1714, 16
      %v1866 = vpop.permute.xlu0 %1865
      %1867 = vrot.lane.b32.xlu0 %v1724, 16
      %v1868 = vpop.permute.xlu0 %1867
      %1869 = vrot.lane.b32.xlu0 %v1738, 16
      %v1870 = vpop.permute.xlu0 %1869
      %1871 = vrot.lane.b32.xlu0 %v1748, 16
      %v1872 = vpop.permute.xlu0 %1871
      %1873 = vrot.lane.b32.xlu0 %v1762, 16
      %v1874 = vpop.permute.xlu0 %1873
      %1875 = vrot.lane.b32.xlu0 %v1772, 16
      %v1876 = vpop.permute.xlu0 %1875
      %1877 = vrot.lane.b32.xlu0 %v1786, 16
      %v1878 = vpop.permute.xlu0 %1877
      %1879 = vrot.lane.b32.xlu0 %v1796, 16
      %v1880 = vpop.permute.xlu0 %1879
      %1881 = vrot.lane.b32.xlu0 %v1810, 16
      %v1882 = vpop.permute.xlu0 %1881
      %1883 = vrot.lane.b32.xlu0 %v1820, 16
      %v1884 = vpop.permute.xlu0 %1883
      %vm1917 = vcmask 158848
      %1918 = vst.msk [vmem:[#allocation2] sm:$0xf] %vm1917, %v1822
      %1919 = vst.msk [vmem:[#allocation2 + $0x4] sm:$0xf] %vm1917, %v1824
      %1920 = vst.msk [vmem:[#allocation2 + $0x8] sm:$0xf] %vm1917, %v1826
      %1921 = vst.msk [vmem:[#allocation2 + $0xc] sm:$0xf] %vm1917, %v1828
      %1922 = vst.msk [vmem:[#allocation2 + $0x10] sm:$0xf] %vm1917, %v1830
      %1923 = vst.msk [vmem:[#allocation2 + $0x14] sm:$0xf] %vm1917, %v1832
      %1924 = vst.msk [vmem:[#allocation2 + $0x18] sm:$0xf] %vm1917, %v1834
      %1925 = vst.msk [vmem:[#allocation2 + $0x1c] sm:$0xf] %vm1917, %v1836
      %1926 = vst.msk [vmem:[#allocation2 + $0x20] sm:$0xf] %vm1917, %v1838
      %1927 = vst.msk [vmem:[#allocation2 + $0x24] sm:$0xf] %vm1917, %v1840
      %1928 = vst.msk [vmem:[#allocation2 + $0x28] sm:$0xf] %vm1917, %v1842
      %1929 = vst.msk [vmem:[#allocation2 + $0x2c] sm:$0xf] %vm1917, %v1844
      %1930 = vst.msk [vmem:[#allocation2 + $0x30] sm:$0xf] %vm1917, %v1846
      %1931 = vst.msk [vmem:[#allocation2 + $0x34] sm:$0xf] %vm1917, %v1848
      %1932 = vst.msk [vmem:[#allocation2 + $0x38] sm:$0xf] %vm1917, %v1850
      %1933 = vst.msk [vmem:[#allocation2 + $0x3c] sm:$0xf] %vm1917, %v1852
      %1934 = vst.msk [vmem:[#allocation2 + $0x40] sm:$0xf] %vm1917, %v1854
      %1935 = vst.msk [vmem:[#allocation2 + $0x44] sm:$0xf] %vm1917, %v1856
      %1936 = vst.msk [vmem:[#allocation2 + $0x48] sm:$0xf] %vm1917, %v1858
      %1937 = vst.msk [vmem:[#allocation2 + $0x4c] sm:$0xf] %vm1917, %v1860
      %1938 = vst.msk [vmem:[#allocation2 + $0x50] sm:$0xf] %vm1917, %v1862
      %1939 = vst.msk [vmem:[#allocation2 + $0x54] sm:$0xf] %vm1917, %v1864
      %1940 = vst.msk [vmem:[#allocation2 + $0x58] sm:$0xf] %vm1917, %v1866
      %1941 = vst.msk [vmem:[#allocation2 + $0x5c] sm:$0xf] %vm1917, %v1868
      %1942 = vst.msk [vmem:[#allocation2 + $0x60] sm:$0xf] %vm1917, %v1870
      %1943 = vst.msk [vmem:[#allocation2 + $0x64] sm:$0xf] %vm1917, %v1872
      %1944 = vst.msk [vmem:[#allocation2 + $0x68] sm:$0xf] %vm1917, %v1874
      %1945 = vst.msk [vmem:[#allocation2 + $0x6c] sm:$0xf] %vm1917, %v1876
      %1946 = vst.msk [vmem:[#allocation2 + $0x70] sm:$0xf] %vm1917, %v1878
      %1947 = vst.msk [vmem:[#allocation2 + $0x74] sm:$0xf] %vm1917, %v1880
      %1948 = vst.msk [vmem:[#allocation2 + $0x78] sm:$0xf] %vm1917, %v1882
      %1949 = vst.msk [vmem:[#allocation2 + $0x7c] sm:$0xf] %vm1917, %v1884
      %v1950 = vld [vmem:[%s1195] sm:$0xe]
      %v1951 = vld [vmem:[%s1195 + $0x4] sm:$0xf]
      %v1952 = vld [vmem:[%s1195 + $0x8] sm:$0x1]
      %v1953 = vld [vmem:[%s1195 + $0xc] sm:$0xe]
      %v1954 = vld [vmem:[%s1195 + $0x10] sm:$0xf]
      %v1955 = vld [vmem:[%s1195 + $0x14] sm:$0x1]
      %v1956 = vld [vmem:[%s1195 + $0x18] sm:$0xe]
      %v1957 = vld [vmem:[%s1195 + $0x1c] sm:$0xf]
      %v1958 = vld [vmem:[%s1195 + $0x20] sm:$0x1]
      %v1959 = vld [vmem:[%s1195 + $0x24] sm:$0xe]
      %v1960 = vld [vmem:[%s1195 + $0x28] sm:$0xf]
      %v1961 = vld [vmem:[%s1195 + $0x2c] sm:$0x1]
      %v1962 = vld [vmem:[%s1195 + $0x30] sm:$0xe]
      %v1963 = vld [vmem:[%s1195 + $0x34] sm:$0xf]
      %v1964 = vld [vmem:[%s1195 + $0x38] sm:$0x1]
      %v1965 = vld [vmem:[%s1195 + $0x3c] sm:$0xe]
      %v1966 = vld [vmem:[%s1195 + $0x40] sm:$0xf]
      %v1967 = vld [vmem:[%s1195 + $0x44] sm:$0x1]
      %v1968 = vld [vmem:[%s1195 + $0x48] sm:$0xe]
      %v1969 = vld [vmem:[%s1195 + $0x4c] sm:$0xf]
      %v1970 = vld [vmem:[%s1195 + $0x50] sm:$0x1]
      %v1971 = vld [vmem:[%s1195 + $0x54] sm:$0xe]
      %v1972 = vld [vmem:[%s1195 + $0x58] sm:$0xf]
      %v1973 = vld [vmem:[%s1195 + $0x5c] sm:$0x1]
      %v1974 = vld [vmem:[%s1195 + $0x60] sm:$0xe]
      %v1975 = vld [vmem:[%s1195 + $0x64] sm:$0xf]
      %v1976 = vld [vmem:[%s1195 + $0x68] sm:$0x1]
      %v1977 = vld [vmem:[%s1195 + $0x6c] sm:$0xe]
      %v1978 = vld [vmem:[%s1195 + $0x70] sm:$0xf]
      %v1979 = vld [vmem:[%s1195 + $0x74] sm:$0x1]
      %v1980 = vld [vmem:[%s1195 + $0x78] sm:$0xe]
      %v1981 = vld [vmem:[%s1195 + $0x7c] sm:$0xf]
      %v1982 = vld [vmem:[%s1195 + $0x80] sm:$0x1]
      %v1983 = vld [vmem:[%s1195 + $0x84] sm:$0xe]
      %v1984 = vld [vmem:[%s1195 + $0x88] sm:$0xf]
      %v1985 = vld [vmem:[%s1195 + $0x8c] sm:$0x1]
      %v1986 = vld [vmem:[%s1195 + $0x90] sm:$0xe]
      %v1987 = vld [vmem:[%s1195 + $0x94] sm:$0xf]
      %v1988 = vld [vmem:[%s1195 + $0x98] sm:$0x1]
      %v1989 = vld [vmem:[%s1195 + $0x9c] sm:$0xe]
      %v1990 = vld [vmem:[%s1195 + $0xa0] sm:$0xf]
      %v1991 = vld [vmem:[%s1195 + $0xa4] sm:$0x1]
      %v1992 = vld [vmem:[%s1195 + $0xa8] sm:$0xe]
      %v1993 = vld [vmem:[%s1195 + $0xac] sm:$0xf]
      %v1994 = vld [vmem:[%s1195 + $0xb0] sm:$0x1]
      %v1995 = vld [vmem:[%s1195 + $0xb4] sm:$0xe]
      %v1996 = vld [vmem:[%s1195 + $0xb8] sm:$0xf]
      %v1997 = vld [vmem:[%s1195 + $0xbc] sm:$0x1]
      %v2046 = vrot.slane %v1950, 5
      %v2047 = vrot.slane %v2046, 4
      %v2048 = vrot.slane %v1951, 5
      %v2049 = vsel %vm953, %v2047, %v2048
      %v2050 = vrot.slane %v2048, 4
      %v2051 = vrot.slane %v1952, 5
      %v2052 = vsel %vm953, %v2050, %v2051
      %v2053 = vrot.slane %v1953, 5
      %v2054 = vrot.slane %v2053, 4
      %v2055 = vrot.slane %v1954, 5
      %v2056 = vsel %vm953, %v2054, %v2055
      %v2057 = vrot.slane %v2055, 4
      %v2058 = vrot.slane %v1955, 5
      %v2059 = vsel %vm953, %v2057, %v2058
      %v2060 = vrot.slane %v1956, 5
      %v2061 = vrot.slane %v2060, 4
      %v2062 = vrot.slane %v1957, 5
      %v2063 = vsel %vm953, %v2061, %v2062
      %v2064 = vrot.slane %v2062, 4
      %v2065 = vrot.slane %v1958, 5
      %v2066 = vsel %vm953, %v2064, %v2065
      %v2067 = vrot.slane %v1959, 5
      %v2068 = vrot.slane %v2067, 4
      %v2069 = vrot.slane %v1960, 5
      %v2070 = vsel %vm953, %v2068, %v2069
      %v2071 = vrot.slane %v2069, 4
      %v2072 = vrot.slane %v1961, 5
      %v2073 = vsel %vm953, %v2071, %v2072
      %v2074 = vrot.slane %v1962, 5
      %v2075 = vrot.slane %v2074, 4
      %v2076 = vrot.slane %v1963, 5
      %v2077 = vsel %vm953, %v2075, %v2076
      %v2078 = vrot.slane %v2076, 4
      %v2079 = vrot.slane %v1964, 5
      %v2080 = vsel %vm953, %v2078, %v2079
      %v2081 = vrot.slane %v1965, 5
      %v2082 = vrot.slane %v2081, 4
      %v2083 = vrot.slane %v1966, 5
      %v2084 = vsel %vm953, %v2082, %v2083
      %v2085 = vrot.slane %v2083, 4
      %v2086 = vrot.slane %v1967, 5
      %v2087 = vsel %vm953, %v2085, %v2086
      %v2088 = vrot.slane %v1968, 5
      %v2089 = vrot.slane %v2088, 4
      %v2090 = vrot.slane %v1969, 5
      %v2091 = vsel %vm953, %v2089, %v2090
      %v2092 = vrot.slane %v2090, 4
      %v2093 = vrot.slane %v1970, 5
      %v2094 = vsel %vm953, %v2092, %v2093
      %v2095 = vrot.slane %v1971, 5
      %v2096 = vrot.slane %v2095, 4
      %v2097 = vrot.slane %v1972, 5
      %v2098 = vsel %vm953, %v2096, %v2097
      %v2099 = vrot.slane %v2097, 4
      %v2100 = vrot.slane %v1973, 5
      %v2101 = vsel %vm953, %v2099, %v2100
      %v2102 = vrot.slane %v1974, 5
      %v2103 = vrot.slane %v2102, 4
      %v2104 = vrot.slane %v1975, 5
      %v2105 = vsel %vm953, %v2103, %v2104
      %v2106 = vrot.slane %v2104, 4
      %v2107 = vrot.slane %v1976, 5
      %v2108 = vsel %vm953, %v2106, %v2107
      %v2109 = vrot.slane %v1977, 5
      %v2110 = vrot.slane %v2109, 4
      %v2111 = vrot.slane %v1978, 5
      %v2112 = vsel %vm953, %v2110, %v2111
      %v2113 = vrot.slane %v2111, 4
      %v2114 = vrot.slane %v1979, 5
      %v2115 = vsel %vm953, %v2113, %v2114
      %v2116 = vrot.slane %v1980, 5
      %v2117 = vrot.slane %v2116, 4
      %v2118 = vrot.slane %v1981, 5
      %v2119 = vsel %vm953, %v2117, %v2118
      %v2120 = vrot.slane %v2118, 4
      %v2121 = vrot.slane %v1982, 5
      %v2122 = vsel %vm953, %v2120, %v2121
      %v2123 = vrot.slane %v1983, 5
      %v2124 = vrot.slane %v2123, 4
      %v2125 = vrot.slane %v1984, 5
      %v2126 = vsel %vm953, %v2124, %v2125
      %v2127 = vrot.slane %v2125, 4
      %v2128 = vrot.slane %v1985, 5
      %v2129 = vsel %vm953, %v2127, %v2128
      %v2130 = vrot.slane %v1986, 5
      %v2131 = vrot.slane %v2130, 4
      %v2132 = vrot.slane %v1987, 5
      %v2133 = vsel %vm953, %v2131, %v2132
      %v2134 = vrot.slane %v2132, 4
      %v2135 = vrot.slane %v1988, 5
      %v2136 = vsel %vm953, %v2134, %v2135
      %v2137 = vrot.slane %v1989, 5
      %v2138 = vrot.slane %v2137, 4
      %v2139 = vrot.slane %v1990, 5
      %v2140 = vsel %vm953, %v2138, %v2139
      %v2141 = vrot.slane %v2139, 4
      %v2142 = vrot.slane %v1991, 5
      %v2143 = vsel %vm953, %v2141, %v2142
      %v2144 = vrot.slane %v1992, 5
      %v2145 = vrot.slane %v2144, 4
      %v2146 = vrot.slane %v1993, 5
      %v2147 = vsel %vm953, %v2145, %v2146
      %v2148 = vrot.slane %v2146, 4
      %v2149 = vrot.slane %v1994, 5
      %v2150 = vsel %vm953, %v2148, %v2149
      %v2151 = vrot.slane %v1995, 5
      %v2152 = vrot.slane %v2151, 4
      %v2153 = vrot.slane %v1996, 5
      %v2154 = vsel %vm953, %v2152, %v2153
      %v2155 = vrot.slane %v2153, 4
      %v2156 = vrot.slane %v1997, 5
      %v2157 = vsel %vm953, %v2155, %v2156
      %2158 = vrot.lane.b32.xlu0 %v2049, 20
      %v2159 = vpop.permute.xlu0 %2158
      %2160 = vrot.lane.b32.xlu0 %v2052, 20
      %v2161 = vpop.permute.xlu0 %2160
      %2162 = vrot.lane.b32.xlu0 %v2056, 20
      %v2163 = vpop.permute.xlu0 %2162
      %2164 = vrot.lane.b32.xlu0 %v2059, 20
      %v2165 = vpop.permute.xlu0 %2164
      %2166 = vrot.lane.b32.xlu0 %v2063, 20
      %v2167 = vpop.permute.xlu0 %2166
      %2168 = vrot.lane.b32.xlu0 %v2066, 20
      %v2169 = vpop.permute.xlu0 %2168
      %2170 = vrot.lane.b32.xlu0 %v2070, 20
      %v2171 = vpop.permute.xlu0 %2170
      %2172 = vrot.lane.b32.xlu0 %v2073, 20
      %v2173 = vpop.permute.xlu0 %2172
      %2174 = vrot.lane.b32.xlu0 %v2077, 20
      %v2175 = vpop.permute.xlu0 %2174
      %2176 = vrot.lane.b32.xlu0 %v2080, 20
      %v2177 = vpop.permute.xlu0 %2176
      %2178 = vrot.lane.b32.xlu0 %v2084, 20
      %v2179 = vpop.permute.xlu0 %2178
      %2180 = vrot.lane.b32.xlu0 %v2087, 20
      %v2181 = vpop.permute.xlu0 %2180
      %2182 = vrot.lane.b32.xlu0 %v2091, 20
      %v2183 = vpop.permute.xlu0 %2182
      %2184 = vrot.lane.b32.xlu0 %v2094, 20
      %v2185 = vpop.permute.xlu0 %2184
      %2186 = vrot.lane.b32.xlu0 %v2098, 20
      %v2187 = vpop.permute.xlu0 %2186
      %2188 = vrot.lane.b32.xlu0 %v2101, 20
      %v2189 = vpop.permute.xlu0 %2188
      %2190 = vrot.lane.b32.xlu0 %v2105, 20
      %v2191 = vpop.permute.xlu0 %2190
      %2192 = vrot.lane.b32.xlu0 %v2108, 20
      %v2193 = vpop.permute.xlu0 %2192
      %2194 = vrot.lane.b32.xlu0 %v2112, 20
      %v2195 = vpop.permute.xlu0 %2194
      %2196 = vrot.lane.b32.xlu0 %v2115, 20
      %v2197 = vpop.permute.xlu0 %2196
      %2198 = vrot.lane.b32.xlu0 %v2119, 20
      %v2199 = vpop.permute.xlu0 %2198
      %2200 = vrot.lane.b32.xlu0 %v2122, 20
      %v2201 = vpop.permute.xlu0 %2200
      %2202 = vrot.lane.b32.xlu0 %v2126, 20
      %v2203 = vpop.permute.xlu0 %2202
      %2204 = vrot.lane.b32.xlu0 %v2129, 20
      %v2205 = vpop.permute.xlu0 %2204
      %2206 = vrot.lane.b32.xlu0 %v2133, 20
      %v2207 = vpop.permute.xlu0 %2206
      %2208 = vrot.lane.b32.xlu0 %v2136, 20
      %v2209 = vpop.permute.xlu0 %2208
      %2210 = vrot.lane.b32.xlu0 %v2140, 20
      %v2211 = vpop.permute.xlu0 %2210
      %2212 = vrot.lane.b32.xlu0 %v2143, 20
      %v2213 = vpop.permute.xlu0 %2212
      %2214 = vrot.lane.b32.xlu0 %v2147, 20
      %v2215 = vpop.permute.xlu0 %2214
      %2216 = vrot.lane.b32.xlu0 %v2150, 20
      %v2217 = vpop.permute.xlu0 %2216
      %2218 = vrot.lane.b32.xlu0 %v2154, 20
      %v2219 = vpop.permute.xlu0 %2218
      %2220 = vrot.lane.b32.xlu0 %v2157, 20
      %v2221 = vpop.permute.xlu0 %2220
      %vm2254 = vcmask 191648
      %2255 = vst.msk [vmem:[#allocation2] sm:$0xf] %vm2254, %v2159
      %2256 = vst.msk [vmem:[#allocation2 + $0x4] sm:$0xf] %vm2254, %v2161
      %2257 = vst.msk [vmem:[#allocation2 + $0x8] sm:$0xf] %vm2254, %v2163
      %2258 = vst.msk [vmem:[#allocation2 + $0xc] sm:$0xf] %vm2254, %v2165
      %2259 = vst.msk [vmem:[#allocation2 + $0x10] sm:$0xf] %vm2254, %v2167
      %2260 = vst.msk [vmem:[#allocation2 + $0x14] sm:$0xf] %vm2254, %v2169
      %2261 = vst.msk [vmem:[#allocation2 + $0x18] sm:$0xf] %vm2254, %v2171
      %2262 = vst.msk [vmem:[#allocation2 + $0x1c] sm:$0xf] %vm2254, %v2173
      %2263 = vst.msk [vmem:[#allocation2 + $0x20] sm:$0xf] %vm2254, %v2175
      %2264 = vst.msk [vmem:[#allocation2 + $0x24] sm:$0xf] %vm2254, %v2177
      %2265 = vst.msk [vmem:[#allocation2 + $0x28] sm:$0xf] %vm2254, %v2179
      %2266 = vst.msk [vmem:[#allocation2 + $0x2c] sm:$0xf] %vm2254, %v2181
      %2267 = vst.msk [vmem:[#allocation2 + $0x30] sm:$0xf] %vm2254, %v2183
      %2268 = vst.msk [vmem:[#allocation2 + $0x34] sm:$0xf] %vm2254, %v2185
      %2269 = vst.msk [vmem:[#allocation2 + $0x38] sm:$0xf] %vm2254, %v2187
      %2270 = vst.msk [vmem:[#allocation2 + $0x3c] sm:$0xf] %vm2254, %v2189
      %2271 = vst.msk [vmem:[#allocation2 + $0x40] sm:$0xf] %vm2254, %v2191
      %2272 = vst.msk [vmem:[#allocation2 + $0x44] sm:$0xf] %vm2254, %v2193
      %2273 = vst.msk [vmem:[#allocation2 + $0x48] sm:$0xf] %vm2254, %v2195
      %2274 = vst.msk [vmem:[#allocation2 + $0x4c] sm:$0xf] %vm2254, %v2197
      %2275 = vst.msk [vmem:[#allocation2 + $0x50] sm:$0xf] %vm2254, %v2199
      %2276 = vst.msk [vmem:[#allocation2 + $0x54] sm:$0xf] %vm2254, %v2201
      %2277 = vst.msk [vmem:[#allocation2 + $0x58] sm:$0xf] %vm2254, %v2203
      %2278 = vst.msk [vmem:[#allocation2 + $0x5c] sm:$0xf] %vm2254, %v2205
      %2279 = vst.msk [vmem:[#allocation2 + $0x60] sm:$0xf] %vm2254, %v2207
      %2280 = vst.msk [vmem:[#allocation2 + $0x64] sm:$0xf] %vm2254, %v2209
      %2281 = vst.msk [vmem:[#allocation2 + $0x68] sm:$0xf] %vm2254, %v2211
      %2282 = vst.msk [vmem:[#allocation2 + $0x6c] sm:$0xf] %vm2254, %v2213
      %2283 = vst.msk [vmem:[#allocation2 + $0x70] sm:$0xf] %vm2254, %v2215
      %2284 = vst.msk [vmem:[#allocation2 + $0x74] sm:$0xf] %vm2254, %v2217
      %2285 = vst.msk [vmem:[#allocation2 + $0x78] sm:$0xf] %vm2254, %v2219
      %2286 = vst.msk [vmem:[#allocation2 + $0x7c] sm:$0xf] %vm2254, %v2221
      %s2287 = scalar_lea.vmem %s219, 24
      %v2288 = vld [vmem:[%s2287] sm:$0xf]
      %v2289 = vld [vmem:[%s2287 + $0x4] sm:$0xf]
      %v2290 = vld [vmem:[%s2287 + $0xc] sm:$0xf]
      %v2291 = vld [vmem:[%s2287 + $0x10] sm:$0xf]
      %v2292 = vld [vmem:[%s2287 + $0x18] sm:$0xf]
      %v2293 = vld [vmem:[%s2287 + $0x1c] sm:$0xf]
      %v2294 = vld [vmem:[%s2287 + $0x24] sm:$0xf]
      %v2295 = vld [vmem:[%s2287 + $0x28] sm:$0xf]
      %v2296 = vld [vmem:[%s2287 + $0x30] sm:$0xf]
      %v2297 = vld [vmem:[%s2287 + $0x34] sm:$0xf]
      %v2298 = vld [vmem:[%s2287 + $0x3c] sm:$0xf]
      %v2299 = vld [vmem:[%s2287 + $0x40] sm:$0xf]
      %v2300 = vld [vmem:[%s2287 + $0x48] sm:$0xf]
      %v2301 = vld [vmem:[%s2287 + $0x4c] sm:$0xf]
      %v2302 = vld [vmem:[%s2287 + $0x54] sm:$0xf]
      %v2303 = vld [vmem:[%s2287 + $0x58] sm:$0xf]
      %v2304 = vld [vmem:[%s2287 + $0x60] sm:$0xf]
      %v2305 = vld [vmem:[%s2287 + $0x64] sm:$0xf]
      %v2306 = vld [vmem:[%s2287 + $0x6c] sm:$0xf]
      %v2307 = vld [vmem:[%s2287 + $0x70] sm:$0xf]
      %v2308 = vld [vmem:[%s2287 + $0x78] sm:$0xf]
      %v2309 = vld [vmem:[%s2287 + $0x7c] sm:$0xf]
      %v2310 = vld [vmem:[%s2287 + $0x84] sm:$0xf]
      %v2311 = vld [vmem:[%s2287 + $0x88] sm:$0xf]
      %v2312 = vld [vmem:[%s2287 + $0x90] sm:$0xf]
      %v2313 = vld [vmem:[%s2287 + $0x94] sm:$0xf]
      %v2314 = vld [vmem:[%s2287 + $0x9c] sm:$0xf]
      %v2315 = vld [vmem:[%s2287 + $0xa0] sm:$0xf]
      %v2316 = vld [vmem:[%s2287 + $0xa8] sm:$0xf]
      %v2317 = vld [vmem:[%s2287 + $0xac] sm:$0xf]
      %v2318 = vld [vmem:[%s2287 + $0xb4] sm:$0xf]
      %v2319 = vld [vmem:[%s2287 + $0xb8] sm:$0xf]
      %2352 = vrot.lane.b32.xlu0 %v2288, 24
      %v2353 = vpop.permute.xlu0 %2352
      %2354 = vrot.lane.b32.xlu0 %v2289, 24
      %v2355 = vpop.permute.xlu0 %2354
      %2356 = vrot.lane.b32.xlu0 %v2290, 24
      %v2357 = vpop.permute.xlu0 %2356
      %2358 = vrot.lane.b32.xlu0 %v2291, 24
      %v2359 = vpop.permute.xlu0 %2358
      %2360 = vrot.lane.b32.xlu0 %v2292, 24
      %v2361 = vpop.permute.xlu0 %2360
      %2362 = vrot.lane.b32.xlu0 %v2293, 24
      %v2363 = vpop.permute.xlu0 %2362
      %2364 = vrot.lane.b32.xlu0 %v2294, 24
      %v2365 = vpop.permute.xlu0 %2364
      %2366 = vrot.lane.b32.xlu0 %v2295, 24
      %v2367 = vpop.permute.xlu0 %2366
      %2368 = vrot.lane.b32.xlu0 %v2296, 24
      %v2369 = vpop.permute.xlu0 %2368
      %2370 = vrot.lane.b32.xlu0 %v2297, 24
      %v2371 = vpop.permute.xlu0 %2370
      %2372 = vrot.lane.b32.xlu0 %v2298, 24
      %v2373 = vpop.permute.xlu0 %2372
      %2374 = vrot.lane.b32.xlu0 %v2299, 24
      %v2375 = vpop.permute.xlu0 %2374
      %2376 = vrot.lane.b32.xlu0 %v2300, 24
      %v2377 = vpop.permute.xlu0 %2376
      %2378 = vrot.lane.b32.xlu0 %v2301, 24
      %v2379 = vpop.permute.xlu0 %2378
      %2380 = vrot.lane.b32.xlu0 %v2302, 24
      %v2381 = vpop.permute.xlu0 %2380
      %2382 = vrot.lane.b32.xlu0 %v2303, 24
      %v2383 = vpop.permute.xlu0 %2382
      %2384 = vrot.lane.b32.xlu0 %v2304, 24
      %v2385 = vpop.permute.xlu0 %2384
      %2386 = vrot.lane.b32.xlu0 %v2305, 24
      %v2387 = vpop.permute.xlu0 %2386
      %2388 = vrot.lane.b32.xlu0 %v2306, 24
      %v2389 = vpop.permute.xlu0 %2388
      %2390 = vrot.lane.b32.xlu0 %v2307, 24
      %v2391 = vpop.permute.xlu0 %2390
      %2392 = vrot.lane.b32.xlu0 %v2308, 24
      %v2393 = vpop.permute.xlu0 %2392
      %2394 = vrot.lane.b32.xlu0 %v2309, 24
      %v2395 = vpop.permute.xlu0 %2394
      %2396 = vrot.lane.b32.xlu0 %v2310, 24
      %v2397 = vpop.permute.xlu0 %2396
      %2398 = vrot.lane.b32.xlu0 %v2311, 24
      %v2399 = vpop.permute.xlu0 %2398
      %2400 = vrot.lane.b32.xlu0 %v2312, 24
      %v2401 = vpop.permute.xlu0 %2400
      %2402 = vrot.lane.b32.xlu0 %v2313, 24
      %v2403 = vpop.permute.xlu0 %2402
      %2404 = vrot.lane.b32.xlu0 %v2314, 24
      %v2405 = vpop.permute.xlu0 %2404
      %2406 = vrot.lane.b32.xlu0 %v2315, 24
      %v2407 = vpop.permute.xlu0 %2406
      %2408 = vrot.lane.b32.xlu0 %v2316, 24
      %v2409 = vpop.permute.xlu0 %2408
      %2410 = vrot.lane.b32.xlu0 %v2317, 24
      %v2411 = vpop.permute.xlu0 %2410
      %2412 = vrot.lane.b32.xlu0 %v2318, 24
      %v2413 = vpop.permute.xlu0 %2412
      %2414 = vrot.lane.b32.xlu0 %v2319, 24
      %v2415 = vpop.permute.xlu0 %2414
      %vm2448 = vcmask 224448
      %2449 = vst.msk [vmem:[#allocation2] sm:$0xf] %vm2448, %v2353
      %2450 = vst.msk [vmem:[#allocation2 + $0x4] sm:$0xf] %vm2448, %v2355
      %2451 = vst.msk [vmem:[#allocation2 + $0x8] sm:$0xf] %vm2448, %v2357
      %2452 = vst.msk [vmem:[#allocation2 + $0xc] sm:$0xf] %vm2448, %v2359
      %2453 = vst.msk [vmem:[#allocation2 + $0x10] sm:$0xf] %vm2448, %v2361
      %2454 = vst.msk [vmem:[#allocation2 + $0x14] sm:$0xf] %vm2448, %v2363
      %2455 = vst.msk [vmem:[#allocation2 + $0x18] sm:$0xf] %vm2448, %v2365
      %2456 = vst.msk [vmem:[#allocation2 + $0x1c] sm:$0xf] %vm2448, %v2367
      %2457 = vst.msk [vmem:[#allocation2 + $0x20] sm:$0xf] %vm2448, %v2369
      %2458 = vst.msk [vmem:[#allocation2 + $0x24] sm:$0xf] %vm2448, %v2371
      %2459 = vst.msk [vmem:[#allocation2 + $0x28] sm:$0xf] %vm2448, %v2373
      %2460 = vst.msk [vmem:[#allocation2 + $0x2c] sm:$0xf] %vm2448, %v2375
      %2461 = vst.msk [vmem:[#allocation2 + $0x30] sm:$0xf] %vm2448, %v2377
      %2462 = vst.msk [vmem:[#allocation2 + $0x34] sm:$0xf] %vm2448, %v2379
      %2463 = vst.msk [vmem:[#allocation2 + $0x38] sm:$0xf] %vm2448, %v2381
      %2464 = vst.msk [vmem:[#allocation2 + $0x3c] sm:$0xf] %vm2448, %v2383
      %2465 = vst.msk [vmem:[#allocation2 + $0x40] sm:$0xf] %vm2448, %v2385
      %2466 = vst.msk [vmem:[#allocation2 + $0x44] sm:$0xf] %vm2448, %v2387
      %2467 = vst.msk [vmem:[#allocation2 + $0x48] sm:$0xf] %vm2448, %v2389
      %2468 = vst.msk [vmem:[#allocation2 + $0x4c] sm:$0xf] %vm2448, %v2391
      %2469 = vst.msk [vmem:[#allocation2 + $0x50] sm:$0xf] %vm2448, %v2393
      %2470 = vst.msk [vmem:[#allocation2 + $0x54] sm:$0xf] %vm2448, %v2395
      %2471 = vst.msk [vmem:[#allocation2 + $0x58] sm:$0xf] %vm2448, %v2397
      %2472 = vst.msk [vmem:[#allocation2 + $0x5c] sm:$0xf] %vm2448, %v2399
      %2473 = vst.msk [vmem:[#allocation2 + $0x60] sm:$0xf] %vm2448, %v2401
      %2474 = vst.msk [vmem:[#allocation2 + $0x64] sm:$0xf] %vm2448, %v2403
      %2475 = vst.msk [vmem:[#allocation2 + $0x68] sm:$0xf] %vm2448, %v2405
      %2476 = vst.msk [vmem:[#allocation2 + $0x6c] sm:$0xf] %vm2448, %v2407
      %2477 = vst.msk [vmem:[#allocation2 + $0x70] sm:$0xf] %vm2448, %v2409
      %2478 = vst.msk [vmem:[#allocation2 + $0x74] sm:$0xf] %vm2448, %v2411
      %2479 = vst.msk [vmem:[#allocation2 + $0x78] sm:$0xf] %vm2448, %v2413
      %2480 = vst.msk [vmem:[#allocation2 + $0x7c] sm:$0xf] %vm2448, %v2415
      %v2481 = vld [vmem:[%s2287] sm:$0xf]
      %v2482 = vld [vmem:[%s2287 + $0x4] sm:$0xf]
      %v2483 = vld [vmem:[%s2287 + $0x8] sm:$0x1]
      %v2484 = vld [vmem:[%s2287 + $0xc] sm:$0xf]
      %v2485 = vld [vmem:[%s2287 + $0x10] sm:$0xf]
      %v2486 = vld [vmem:[%s2287 + $0x14] sm:$0x1]
      %v2487 = vld [vmem:[%s2287 + $0x18] sm:$0xf]
      %v2488 = vld [vmem:[%s2287 + $0x1c] sm:$0xf]
      %v2489 = vld [vmem:[%s2287 + $0x20] sm:$0x1]
      %v2490 = vld [vmem:[%s2287 + $0x24] sm:$0xf]
      %v2491 = vld [vmem:[%s2287 + $0x28] sm:$0xf]
      %v2492 = vld [vmem:[%s2287 + $0x2c] sm:$0x1]
      %v2493 = vld [vmem:[%s2287 + $0x30] sm:$0xf]
      %v2494 = vld [vmem:[%s2287 + $0x34] sm:$0xf]
      %v2495 = vld [vmem:[%s2287 + $0x38] sm:$0x1]
      %v2496 = vld [vmem:[%s2287 + $0x3c] sm:$0xf]
      %v2497 = vld [vmem:[%s2287 + $0x40] sm:$0xf]
      %v2498 = vld [vmem:[%s2287 + $0x44] sm:$0x1]
      %v2499 = vld [vmem:[%s2287 + $0x48] sm:$0xf]
      %v2500 = vld [vmem:[%s2287 + $0x4c] sm:$0xf]
      %v2501 = vld [vmem:[%s2287 + $0x50] sm:$0x1]
      %v2502 = vld [vmem:[%s2287 + $0x54] sm:$0xf]
      %v2503 = vld [vmem:[%s2287 + $0x58] sm:$0xf]
      %v2504 = vld [vmem:[%s2287 + $0x5c] sm:$0x1]
      %v2505 = vld [vmem:[%s2287 + $0x60] sm:$0xf]
      %v2506 = vld [vmem:[%s2287 + $0x64] sm:$0xf]
      %v2507 = vld [vmem:[%s2287 + $0x68] sm:$0x1]
      %v2508 = vld [vmem:[%s2287 + $0x6c] sm:$0xf]
      %v2509 = vld [vmem:[%s2287 + $0x70] sm:$0xf]
      %v2510 = vld [vmem:[%s2287 + $0x74] sm:$0x1]
      %v2511 = vld [vmem:[%s2287 + $0x78] sm:$0xf]
      %v2512 = vld [vmem:[%s2287 + $0x7c] sm:$0xf]
      %v2513 = vld [vmem:[%s2287 + $0x80] sm:$0x1]
      %v2514 = vld [vmem:[%s2287 + $0x84] sm:$0xf]
      %v2515 = vld [vmem:[%s2287 + $0x88] sm:$0xf]
      %v2516 = vld [vmem:[%s2287 + $0x8c] sm:$0x1]
      %v2517 = vld [vmem:[%s2287 + $0x90] sm:$0xf]
      %v2518 = vld [vmem:[%s2287 + $0x94] sm:$0xf]
      %v2519 = vld [vmem:[%s2287 + $0x98] sm:$0x1]
      %v2520 = vld [vmem:[%s2287 + $0x9c] sm:$0xf]
      %v2521 = vld [vmem:[%s2287 + $0xa0] sm:$0xf]
      %v2522 = vld [vmem:[%s2287 + $0xa4] sm:$0x1]
      %v2523 = vld [vmem:[%s2287 + $0xa8] sm:$0xf]
      %v2524 = vld [vmem:[%s2287 + $0xac] sm:$0xf]
      %v2525 = vld [vmem:[%s2287 + $0xb0] sm:$0x1]
      %v2526 = vld [vmem:[%s2287 + $0xb4] sm:$0xf]
      %v2527 = vld [vmem:[%s2287 + $0xb8] sm:$0xf]
      %v2528 = vld [vmem:[%s2287 + $0xbc] sm:$0x1]
      %v2530 = vshrl.u32 %v2481, 16
      %v2532 = vrot.slane %v2530, 4
      %v2533 = vshll.u32 %v2481, 16
      %v2535 = vrot.slane %v2533, 5
      %v2536 = vor.u32 %v2532, %v2535
      %v2537 = vrot.slane %v2536, 4
      %v2539 = vshll.u32 %v2482, 16
      %v2541 = vrot.slane %v2539, 5
      %v2542 = vsel %vm341, %v2537, %v2541
      %v2543 = vshrl.u32 %v2482, 16
      %v2545 = vrot.slane %v2543, 4
      %v2546 = vor.u32 %v2545, %v2541
      %v2547 = vrot.slane %v2546, 4
      %v2549 = vshll.u32 %v2483, 16
      %v2551 = vrot.slane %v2549, 5
      %v2552 = vsel %vm341, %v2547, %v2551
      %v2554 = vshrl.u32 %v2484, 16
      %v2556 = vrot.slane %v2554, 4
      %v2557 = vshll.u32 %v2484, 16
      %v2559 = vrot.slane %v2557, 5
      %v2560 = vor.u32 %v2556, %v2559
      %v2561 = vrot.slane %v2560, 4
      %v2563 = vshll.u32 %v2485, 16
      %v2565 = vrot.slane %v2563, 5
      %v2566 = vsel %vm341, %v2561, %v2565
      %v2567 = vshrl.u32 %v2485, 16
      %v2569 = vrot.slane %v2567, 4
      %v2570 = vor.u32 %v2569, %v2565
      %v2571 = vrot.slane %v2570, 4
      %v2573 = vshll.u32 %v2486, 16
      %v2575 = vrot.slane %v2573, 5
      %v2576 = vsel %vm341, %v2571, %v2575
      %v2578 = vshrl.u32 %v2487, 16
      %v2580 = vrot.slane %v2578, 4
      %v2581 = vshll.u32 %v2487, 16
      %v2583 = vrot.slane %v2581, 5
      %v2584 = vor.u32 %v2580, %v2583
      %v2585 = vrot.slane %v2584, 4
      %v2587 = vshll.u32 %v2488, 16
      %v2589 = vrot.slane %v2587, 5
      %v2590 = vsel %vm341, %v2585, %v2589
      %v2591 = vshrl.u32 %v2488, 16
      %v2593 = vrot.slane %v2591, 4
      %v2594 = vor.u32 %v2593, %v2589
      %v2595 = vrot.slane %v2594, 4
      %v2597 = vshll.u32 %v2489, 16
      %v2599 = vrot.slane %v2597, 5
      %v2600 = vsel %vm341, %v2595, %v2599
      %v2602 = vshrl.u32 %v2490, 16
      %v2604 = vrot.slane %v2602, 4
      %v2605 = vshll.u32 %v2490, 16
      %v2607 = vrot.slane %v2605, 5
      %v2608 = vor.u32 %v2604, %v2607
      %v2609 = vrot.slane %v2608, 4
      %v2611 = vshll.u32 %v2491, 16
      %v2613 = vrot.slane %v2611, 5
      %v2614 = vsel %vm341, %v2609, %v2613
      %v2615 = vshrl.u32 %v2491, 16
      %v2617 = vrot.slane %v2615, 4
      %v2618 = vor.u32 %v2617, %v2613
      %v2619 = vrot.slane %v2618, 4
      %v2621 = vshll.u32 %v2492, 16
      %v2623 = vrot.slane %v2621, 5
      %v2624 = vsel %vm341, %v2619, %v2623
      %v2626 = vshrl.u32 %v2493, 16
      %v2628 = vrot.slane %v2626, 4
      %v2629 = vshll.u32 %v2493, 16
      %v2631 = vrot.slane %v2629, 5
      %v2632 = vor.u32 %v2628, %v2631
      %v2633 = vrot.slane %v2632, 4
      %v2635 = vshll.u32 %v2494, 16
      %v2637 = vrot.slane %v2635, 5
      %v2638 = vsel %vm341, %v2633, %v2637
      %v2639 = vshrl.u32 %v2494, 16
      %v2641 = vrot.slane %v2639, 4
      %v2642 = vor.u32 %v2641, %v2637
      %v2643 = vrot.slane %v2642, 4
      %v2645 = vshll.u32 %v2495, 16
      %v2647 = vrot.slane %v2645, 5
      %v2648 = vsel %vm341, %v2643, %v2647
      %v2650 = vshrl.u32 %v2496, 16
      %v2652 = vrot.slane %v2650, 4
      %v2653 = vshll.u32 %v2496, 16
      %v2655 = vrot.slane %v2653, 5
      %v2656 = vor.u32 %v2652, %v2655
      %v2657 = vrot.slane %v2656, 4
      %v2659 = vshll.u32 %v2497, 16
      %v2661 = vrot.slane %v2659, 5
      %v2662 = vsel %vm341, %v2657, %v2661
      %v2663 = vshrl.u32 %v2497, 16
      %v2665 = vrot.slane %v2663, 4
      %v2666 = vor.u32 %v2665, %v2661
      %v2667 = vrot.slane %v2666, 4
      %v2669 = vshll.u32 %v2498, 16
      %v2671 = vrot.slane %v2669, 5
      %v2672 = vsel %vm341, %v2667, %v2671
      %v2674 = vshrl.u32 %v2499, 16
      %v2676 = vrot.slane %v2674, 4
      %v2677 = vshll.u32 %v2499, 16
      %v2679 = vrot.slane %v2677, 5
      %v2680 = vor.u32 %v2676, %v2679
      %v2681 = vrot.slane %v2680, 4
      %v2683 = vshll.u32 %v2500, 16
      %v2685 = vrot.slane %v2683, 5
      %v2686 = vsel %vm341, %v2681, %v2685
      %v2687 = vshrl.u32 %v2500, 16
      %v2689 = vrot.slane %v2687, 4
      %v2690 = vor.u32 %v2689, %v2685
      %v2691 = vrot.slane %v2690, 4
      %v2693 = vshll.u32 %v2501, 16
      %v2695 = vrot.slane %v2693, 5
      %v2696 = vsel %vm341, %v2691, %v2695
      %v2698 = vshrl.u32 %v2502, 16
      %v2700 = vrot.slane %v2698, 4
      %v2701 = vshll.u32 %v2502, 16
      %v2703 = vrot.slane %v2701, 5
      %v2704 = vor.u32 %v2700, %v2703
      %v2705 = vrot.slane %v2704, 4
      %v2707 = vshll.u32 %v2503, 16
      %v2709 = vrot.slane %v2707, 5
      %v2710 = vsel %vm341, %v2705, %v2709
      %v2711 = vshrl.u32 %v2503, 16
      %v2713 = vrot.slane %v2711, 4
      %v2714 = vor.u32 %v2713, %v2709
      %v2715 = vrot.slane %v2714, 4
      %v2717 = vshll.u32 %v2504, 16
      %v2719 = vrot.slane %v2717, 5
      %v2720 = vsel %vm341, %v2715, %v2719
      %v2722 = vshrl.u32 %v2505, 16
      %v2724 = vrot.slane %v2722, 4
      %v2725 = vshll.u32 %v2505, 16
      %v2727 = vrot.slane %v2725, 5
      %v2728 = vor.u32 %v2724, %v2727
      %v2729 = vrot.slane %v2728, 4
      %v2731 = vshll.u32 %v2506, 16
      %v2733 = vrot.slane %v2731, 5
      %v2734 = vsel %vm341, %v2729, %v2733
      %v2735 = vshrl.u32 %v2506, 16
      %v2737 = vrot.slane %v2735, 4
      %v2738 = vor.u32 %v2737, %v2733
      %v2739 = vrot.slane %v2738, 4
      %v2741 = vshll.u32 %v2507, 16
      %v2743 = vrot.slane %v2741, 5
      %v2744 = vsel %vm341, %v2739, %v2743
      %v2746 = vshrl.u32 %v2508, 16
      %v2748 = vrot.slane %v2746, 4
      %v2749 = vshll.u32 %v2508, 16
      %v2751 = vrot.slane %v2749, 5
      %v2752 = vor.u32 %v2748, %v2751
      %v2753 = vrot.slane %v2752, 4
      %v2755 = vshll.u32 %v2509, 16
      %v2757 = vrot.slane %v2755, 5
      %v2758 = vsel %vm341, %v2753, %v2757
      %v2759 = vshrl.u32 %v2509, 16
      %v2761 = vrot.slane %v2759, 4
      %v2762 = vor.u32 %v2761, %v2757
      %v2763 = vrot.slane %v2762, 4
      %v2765 = vshll.u32 %v2510, 16
      %v2767 = vrot.slane %v2765, 5
      %v2768 = vsel %vm341, %v2763, %v2767
      %v2770 = vshrl.u32 %v2511, 16
      %v2772 = vrot.slane %v2770, 4
      %v2773 = vshll.u32 %v2511, 16
      %v2775 = vrot.slane %v2773, 5
      %v2776 = vor.u32 %v2772, %v2775
      %v2777 = vrot.slane %v2776, 4
      %v2779 = vshll.u32 %v2512, 16
      %v2781 = vrot.slane %v2779, 5
      %v2782 = vsel %vm341, %v2777, %v2781
      %v2783 = vshrl.u32 %v2512, 16
      %v2785 = vrot.slane %v2783, 4
      %v2786 = vor.u32 %v2785, %v2781
      %v2787 = vrot.slane %v2786, 4
      %v2789 = vshll.u32 %v2513, 16
      %v2791 = vrot.slane %v2789, 5
      %v2792 = vsel %vm341, %v2787, %v2791
      %v2794 = vshrl.u32 %v2514, 16
      %v2796 = vrot.slane %v2794, 4
      %v2797 = vshll.u32 %v2514, 16
      %v2799 = vrot.slane %v2797, 5
      %v2800 = vor.u32 %v2796, %v2799
      %v2801 = vrot.slane %v2800, 4
      %v2803 = vshll.u32 %v2515, 16
      %v2805 = vrot.slane %v2803, 5
      %v2806 = vsel %vm341, %v2801, %v2805
      %v2807 = vshrl.u32 %v2515, 16
      %v2809 = vrot.slane %v2807, 4
      %v2810 = vor.u32 %v2809, %v2805
      %v2811 = vrot.slane %v2810, 4
      %v2813 = vshll.u32 %v2516, 16
      %v2815 = vrot.slane %v2813, 5
      %v2816 = vsel %vm341, %v2811, %v2815
      %v2818 = vshrl.u32 %v2517, 16
      %v2820 = vrot.slane %v2818, 4
      %v2821 = vshll.u32 %v2517, 16
      %v2823 = vrot.slane %v2821, 5
      %v2824 = vor.u32 %v2820, %v2823
      %v2825 = vrot.slane %v2824, 4
      %v2827 = vshll.u32 %v2518, 16
      %v2829 = vrot.slane %v2827, 5
      %v2830 = vsel %vm341, %v2825, %v2829
      %v2831 = vshrl.u32 %v2518, 16
      %v2833 = vrot.slane %v2831, 4
      %v2834 = vor.u32 %v2833, %v2829
      %v2835 = vrot.slane %v2834, 4
      %v2837 = vshll.u32 %v2519, 16
      %v2839 = vrot.slane %v2837, 5
      %v2840 = vsel %vm341, %v2835, %v2839
      %v2842 = vshrl.u32 %v2520, 16
      %v2844 = vrot.slane %v2842, 4
      %v2845 = vshll.u32 %v2520, 16
      %v2847 = vrot.slane %v2845, 5
      %v2848 = vor.u32 %v2844, %v2847
      %v2849 = vrot.slane %v2848, 4
      %v2851 = vshll.u32 %v2521, 16
      %v2853 = vrot.slane %v2851, 5
      %v2854 = vsel %vm341, %v2849, %v2853
      %v2855 = vshrl.u32 %v2521, 16
      %v2857 = vrot.slane %v2855, 4
      %v2858 = vor.u32 %v2857, %v2853
      %v2859 = vrot.slane %v2858, 4
      %v2861 = vshll.u32 %v2522, 16
      %v2863 = vrot.slane %v2861, 5
      %v2864 = vsel %vm341, %v2859, %v2863
      %v2866 = vshrl.u32 %v2523, 16
      %v2868 = vrot.slane %v2866, 4
      %v2869 = vshll.u32 %v2523, 16
      %v2871 = vrot.slane %v2869, 5
      %v2872 = vor.u32 %v2868, %v2871
      %v2873 = vrot.slane %v2872, 4
      %v2875 = vshll.u32 %v2524, 16
      %v2877 = vrot.slane %v2875, 5
      %v2878 = vsel %vm341, %v2873, %v2877
      %v2879 = vshrl.u32 %v2524, 16
      %v2881 = vrot.slane %v2879, 4
      %v2882 = vor.u32 %v2881, %v2877
      %v2883 = vrot.slane %v2882, 4
      %v2885 = vshll.u32 %v2525, 16
      %v2887 = vrot.slane %v2885, 5
      %v2888 = vsel %vm341, %v2883, %v2887
      %v2890 = vshrl.u32 %v2526, 16
      %v2892 = vrot.slane %v2890, 4
      %v2893 = vshll.u32 %v2526, 16
      %v2895 = vrot.slane %v2893, 5
      %v2896 = vor.u32 %v2892, %v2895
      %v2897 = vrot.slane %v2896, 4
      %v2899 = vshll.u32 %v2527, 16
      %v2901 = vrot.slane %v2899, 5
      %v2902 = vsel %vm341, %v2897, %v2901
      %v2903 = vshrl.u32 %v2527, 16
      %v2905 = vrot.slane %v2903, 4
      %v2906 = vor.u32 %v2905, %v2901
      %v2907 = vrot.slane %v2906, 4
      %v2909 = vshll.u32 %v2528, 16
      %v2911 = vrot.slane %v2909, 5
      %v2912 = vsel %vm341, %v2907, %v2911
      %2913 = vrot.lane.b32.xlu0 %v2542, 28
      %v2914 = vpop.permute.xlu0 %2913
      %2915 = vrot.lane.b32.xlu0 %v2552, 28
      %v2916 = vpop.permute.xlu0 %2915
      %2917 = vrot.lane.b32.xlu0 %v2566, 28
      %v2918 = vpop.permute.xlu0 %2917
      %2919 = vrot.lane.b32.xlu0 %v2576, 28
      %v2920 = vpop.permute.xlu0 %2919
      %2921 = vrot.lane.b32.xlu0 %v2590, 28
      %v2922 = vpop.permute.xlu0 %2921
      %2923 = vrot.lane.b32.xlu0 %v2600, 28
      %v2924 = vpop.permute.xlu0 %2923
      %2925 = vrot.lane.b32.xlu0 %v2614, 28
      %v2926 = vpop.permute.xlu0 %2925
      %2927 = vrot.lane.b32.xlu0 %v2624, 28
      %v2928 = vpop.permute.xlu0 %2927
      %2929 = vrot.lane.b32.xlu0 %v2638, 28
      %v2930 = vpop.permute.xlu0 %2929
      %2931 = vrot.lane.b32.xlu0 %v2648, 28
      %v2932 = vpop.permute.xlu0 %2931
      %2933 = vrot.lane.b32.xlu0 %v2662, 28
      %v2934 = vpop.permute.xlu0 %2933
      %2935 = vrot.lane.b32.xlu0 %v2672, 28
      %v2936 = vpop.permute.xlu0 %2935
      %2937 = vrot.lane.b32.xlu0 %v2686, 28
      %v2938 = vpop.permute.xlu0 %2937
      %2939 = vrot.lane.b32.xlu0 %v2696, 28
      %v2940 = vpop.permute.xlu0 %2939
      %2941 = vrot.lane.b32.xlu0 %v2710, 28
      %v2942 = vpop.permute.xlu0 %2941
      %2943 = vrot.lane.b32.xlu0 %v2720, 28
      %v2944 = vpop.permute.xlu0 %2943
      %2945 = vrot.lane.b32.xlu0 %v2734, 28
      %v2946 = vpop.permute.xlu0 %2945
      %2947 = vrot.lane.b32.xlu0 %v2744, 28
      %v2948 = vpop.permute.xlu0 %2947
      %2949 = vrot.lane.b32.xlu0 %v2758, 28
      %v2950 = vpop.permute.xlu0 %2949
      %2951 = vrot.lane.b32.xlu0 %v2768, 28
      %v2952 = vpop.permute.xlu0 %2951
      %2953 = vrot.lane.b32.xlu0 %v2782, 28
      %v2954 = vpop.permute.xlu0 %2953
      %2955 = vrot.lane.b32.xlu0 %v2792, 28
      %v2956 = vpop.permute.xlu0 %2955
      %2957 = vrot.lane.b32.xlu0 %v2806, 28
      %v2958 = vpop.permute.xlu0 %2957
      %2959 = vrot.lane.b32.xlu0 %v2816, 28
      %v2960 = vpop.permute.xlu0 %2959
      %2961 = vrot.lane.b32.xlu0 %v2830, 28
      %v2962 = vpop.permute.xlu0 %2961
      %2963 = vrot.lane.b32.xlu0 %v2840, 28
      %v2964 = vpop.permute.xlu0 %2963
      %2965 = vrot.lane.b32.xlu0 %v2854, 28
      %v2966 = vpop.permute.xlu0 %2965
      %2967 = vrot.lane.b32.xlu0 %v2864, 28
      %v2968 = vpop.permute.xlu0 %2967
      %2969 = vrot.lane.b32.xlu0 %v2878, 28
      %v2970 = vpop.permute.xlu0 %2969
      %2971 = vrot.lane.b32.xlu0 %v2888, 28
      %v2972 = vpop.permute.xlu0 %2971
      %2973 = vrot.lane.b32.xlu0 %v2902, 28
      %v2974 = vpop.permute.xlu0 %2973
      %2975 = vrot.lane.b32.xlu0 %v2912, 28
      %v2976 = vpop.permute.xlu0 %2975
      %vm3009 = vcmask 257248
      %3010 = vst.msk [vmem:[#allocation2] sm:$0xf] %vm3009, %v2914
      %3011 = vst.msk [vmem:[#allocation2 + $0x4] sm:$0xf] %vm3009, %v2916
      %3012 = vst.msk [vmem:[#allocation2 + $0x8] sm:$0xf] %vm3009, %v2918
      %3013 = vst.msk [vmem:[#allocation2 + $0xc] sm:$0xf] %vm3009, %v2920
      %3014 = vst.msk [vmem:[#allocation2 + $0x10] sm:$0xf] %vm3009, %v2922
      %3015 = vst.msk [vmem:[#allocation2 + $0x14] sm:$0xf] %vm3009, %v2924
      %3016 = vst.msk [vmem:[#allocation2 + $0x18] sm:$0xf] %vm3009, %v2926
      %3017 = vst.msk [vmem:[#allocation2 + $0x1c] sm:$0xf] %vm3009, %v2928
      %3018 = vst.msk [vmem:[#allocation2 + $0x20] sm:$0xf] %vm3009, %v2930
      %3019 = vst.msk [vmem:[#allocation2 + $0x24] sm:$0xf] %vm3009, %v2932
      %3020 = vst.msk [vmem:[#allocation2 + $0x28] sm:$0xf] %vm3009, %v2934
      %3021 = vst.msk [vmem:[#allocation2 + $0x2c] sm:$0xf] %vm3009, %v2936
      %3022 = vst.msk [vmem:[#allocation2 + $0x30] sm:$0xf] %vm3009, %v2938
      %3023 = vst.msk [vmem:[#allocation2 + $0x34] sm:$0xf] %vm3009, %v2940
      %3024 = vst.msk [vmem:[#allocation2 + $0x38] sm:$0xf] %vm3009, %v2942
      %3025 = vst.msk [vmem:[#allocation2 + $0x3c] sm:$0xf] %vm3009, %v2944
      %3026 = vst.msk [vmem:[#allocation2 + $0x40] sm:$0xf] %vm3009, %v2946
      %3027 = vst.msk [vmem:[#allocation2 + $0x44] sm:$0xf] %vm3009, %v2948
      %3028 = vst.msk [vmem:[#allocation2 + $0x48] sm:$0xf] %vm3009, %v2950
      %3029 = vst.msk [vmem:[#allocation2 + $0x4c] sm:$0xf] %vm3009, %v2952
      %3030 = vst.msk [vmem:[#allocation2 + $0x50] sm:$0xf] %vm3009, %v2954
      %3031 = vst.msk [vmem:[#allocation2 + $0x54] sm:$0xf] %vm3009, %v2956
      %3032 = vst.msk [vmem:[#allocation2 + $0x58] sm:$0xf] %vm3009, %v2958
      %3033 = vst.msk [vmem:[#allocation2 + $0x5c] sm:$0xf] %vm3009, %v2960
      %3034 = vst.msk [vmem:[#allocation2 + $0x60] sm:$0xf] %vm3009, %v2962
      %3035 = vst.msk [vmem:[#allocation2 + $0x64] sm:$0xf] %vm3009, %v2964
      %3036 = vst.msk [vmem:[#allocation2 + $0x68] sm:$0xf] %vm3009, %v2966
      %3037 = vst.msk [vmem:[#allocation2 + $0x6c] sm:$0xf] %vm3009, %v2968
      %3038 = vst.msk [vmem:[#allocation2 + $0x70] sm:$0xf] %vm3009, %v2970
      %3039 = vst.msk [vmem:[#allocation2 + $0x74] sm:$0xf] %vm3009, %v2972
      %3040 = vst.msk [vmem:[#allocation2 + $0x78] sm:$0xf] %vm3009, %v2974
      %3041 = vst.msk [vmem:[#allocation2 + $0x7c] sm:$0xf] %vm3009, %v2976
      %v3042 = vld [vmem:[%s2287] sm:$0xe]
      %v3043 = vld [vmem:[%s2287 + $0x4] sm:$0xf]
      %v3044 = vld [vmem:[%s2287 + $0x8] sm:$0x1]
      %v3045 = vld [vmem:[%s2287 + $0xc] sm:$0xe]
      %v3046 = vld [vmem:[%s2287 + $0x10] sm:$0xf]
      %v3047 = vld [vmem:[%s2287 + $0x14] sm:$0x1]
      %v3048 = vld [vmem:[%s2287 + $0x18] sm:$0xe]
      %v3049 = vld [vmem:[%s2287 + $0x1c] sm:$0xf]
      %v3050 = vld [vmem:[%s2287 + $0x20] sm:$0x1]
      %v3051 = vld [vmem:[%s2287 + $0x24] sm:$0xe]
      %v3052 = vld [vmem:[%s2287 + $0x28] sm:$0xf]
      %v3053 = vld [vmem:[%s2287 + $0x2c] sm:$0x1]
      %v3054 = vld [vmem:[%s2287 + $0x30] sm:$0xe]
      %v3055 = vld [vmem:[%s2287 + $0x34] sm:$0xf]
      %v3056 = vld [vmem:[%s2287 + $0x38] sm:$0x1]
      %v3057 = vld [vmem:[%s2287 + $0x3c] sm:$0xe]
      %v3058 = vld [vmem:[%s2287 + $0x40] sm:$0xf]
      %v3059 = vld [vmem:[%s2287 + $0x44] sm:$0x1]
      %v3060 = vld [vmem:[%s2287 + $0x48] sm:$0xe]
      %v3061 = vld [vmem:[%s2287 + $0x4c] sm:$0xf]
      %v3062 = vld [vmem:[%s2287 + $0x50] sm:$0x1]
      %v3063 = vld [vmem:[%s2287 + $0x54] sm:$0xe]
      %v3064 = vld [vmem:[%s2287 + $0x58] sm:$0xf]
      %v3065 = vld [vmem:[%s2287 + $0x5c] sm:$0x1]
      %v3066 = vld [vmem:[%s2287 + $0x60] sm:$0xe]
      %v3067 = vld [vmem:[%s2287 + $0x64] sm:$0xf]
      %v3068 = vld [vmem:[%s2287 + $0x68] sm:$0x1]
      %v3069 = vld [vmem:[%s2287 + $0x6c] sm:$0xe]
      %v3070 = vld [vmem:[%s2287 + $0x70] sm:$0xf]
      %v3071 = vld [vmem:[%s2287 + $0x74] sm:$0x1]
      %v3072 = vld [vmem:[%s2287 + $0x78] sm:$0xe]
      %v3073 = vld [vmem:[%s2287 + $0x7c] sm:$0xf]
      %v3074 = vld [vmem:[%s2287 + $0x80] sm:$0x1]
      %v3075 = vld [vmem:[%s2287 + $0x84] sm:$0xe]
      %v3076 = vld [vmem:[%s2287 + $0x88] sm:$0xf]
      %v3077 = vld [vmem:[%s2287 + $0x8c] sm:$0x1]
      %v3078 = vld [vmem:[%s2287 + $0x90] sm:$0xe]
      %v3079 = vld [vmem:[%s2287 + $0x94] sm:$0xf]
      %v3080 = vld [vmem:[%s2287 + $0x98] sm:$0x1]
      %v3081 = vld [vmem:[%s2287 + $0x9c] sm:$0xe]
      %v3082 = vld [vmem:[%s2287 + $0xa0] sm:$0xf]
      %v3083 = vld [vmem:[%s2287 + $0xa4] sm:$0x1]
      %v3084 = vld [vmem:[%s2287 + $0xa8] sm:$0xe]
      %v3085 = vld [vmem:[%s2287 + $0xac] sm:$0xf]
      %v3086 = vld [vmem:[%s2287 + $0xb0] sm:$0x1]
      %v3087 = vld [vmem:[%s2287 + $0xb4] sm:$0xe]
      %v3088 = vld [vmem:[%s2287 + $0xb8] sm:$0xf]
      %v3089 = vld [vmem:[%s2287 + $0xbc] sm:$0x1]
      %v3138 = vrot.slane %v3042, 5
      %v3139 = vrot.slane %v3138, 4
      %v3140 = vrot.slane %v3043, 5
      %v3141 = vsel %vm953, %v3139, %v3140
      %v3142 = vrot.slane %v3140, 4
      %v3143 = vrot.slane %v3044, 5
      %v3144 = vsel %vm953, %v3142, %v3143
      %v3145 = vrot.slane %v3045, 5
      %v3146 = vrot.slane %v3145, 4
      %v3147 = vrot.slane %v3046, 5
      %v3148 = vsel %vm953, %v3146, %v3147
      %v3149 = vrot.slane %v3147, 4
      %v3150 = vrot.slane %v3047, 5
      %v3151 = vsel %vm953, %v3149, %v3150
      %v3152 = vrot.slane %v3048, 5
      %v3153 = vrot.slane %v3152, 4
      %v3154 = vrot.slane %v3049, 5
      %v3155 = vsel %vm953, %v3153, %v3154
      %v3156 = vrot.slane %v3154, 4
      %v3157 = vrot.slane %v3050, 5
      %v3158 = vsel %vm953, %v3156, %v3157
      %v3159 = vrot.slane %v3051, 5
      %v3160 = vrot.slane %v3159, 4
      %v3161 = vrot.slane %v3052, 5
      %v3162 = vsel %vm953, %v3160, %v3161
      %v3163 = vrot.slane %v3161, 4
      %v3164 = vrot.slane %v3053, 5
      %v3165 = vsel %vm953, %v3163, %v3164
      %v3166 = vrot.slane %v3054, 5
      %v3167 = vrot.slane %v3166, 4
      %v3168 = vrot.slane %v3055, 5
      %v3169 = vsel %vm953, %v3167, %v3168
      %v3170 = vrot.slane %v3168, 4
      %v3171 = vrot.slane %v3056, 5
      %v3172 = vsel %vm953, %v3170, %v3171
      %v3173 = vrot.slane %v3057, 5
      %v3174 = vrot.slane %v3173, 4
      %v3175 = vrot.slane %v3058, 5
      %v3176 = vsel %vm953, %v3174, %v3175
      %v3177 = vrot.slane %v3175, 4
      %v3178 = vrot.slane %v3059, 5
      %v3179 = vsel %vm953, %v3177, %v3178
      %v3180 = vrot.slane %v3060, 5
      %v3181 = vrot.slane %v3180, 4
      %v3182 = vrot.slane %v3061, 5
      %v3183 = vsel %vm953, %v3181, %v3182
      %v3184 = vrot.slane %v3182, 4
      %v3185 = vrot.slane %v3062, 5
      %v3186 = vsel %vm953, %v3184, %v3185
      %v3187 = vrot.slane %v3063, 5
      %v3188 = vrot.slane %v3187, 4
      %v3189 = vrot.slane %v3064, 5
      %v3190 = vsel %vm953, %v3188, %v3189
      %v3191 = vrot.slane %v3189, 4
      %v3192 = vrot.slane %v3065, 5
      %v3193 = vsel %vm953, %v3191, %v3192
      %v3194 = vrot.slane %v3066, 5
      %v3195 = vrot.slane %v3194, 4
      %v3196 = vrot.slane %v3067, 5
      %v3197 = vsel %vm953, %v3195, %v3196
      %v3198 = vrot.slane %v3196, 4
      %v3199 = vrot.slane %v3068, 5
      %v3200 = vsel %vm953, %v3198, %v3199
      %v3201 = vrot.slane %v3069, 5
      %v3202 = vrot.slane %v3201, 4
      %v3203 = vrot.slane %v3070, 5
      %v3204 = vsel %vm953, %v3202, %v3203
      %v3205 = vrot.slane %v3203, 4
      %v3206 = vrot.slane %v3071, 5
      %v3207 = vsel %vm953, %v3205, %v3206
      %v3208 = vrot.slane %v3072, 5
      %v3209 = vrot.slane %v3208, 4
      %v3210 = vrot.slane %v3073, 5
      %v3211 = vsel %vm953, %v3209, %v3210
      %v3212 = vrot.slane %v3210, 4
      %v3213 = vrot.slane %v3074, 5
      %v3214 = vsel %vm953, %v3212, %v3213
      %v3215 = vrot.slane %v3075, 5
      %v3216 = vrot.slane %v3215, 4
      %v3217 = vrot.slane %v3076, 5
      %v3218 = vsel %vm953, %v3216, %v3217
      %v3219 = vrot.slane %v3217, 4
      %v3220 = vrot.slane %v3077, 5
      %v3221 = vsel %vm953, %v3219, %v3220
      %v3222 = vrot.slane %v3078, 5
      %v3223 = vrot.slane %v3222, 4
      %v3224 = vrot.slane %v3079, 5
      %v3225 = vsel %vm953, %v3223, %v3224
      %v3226 = vrot.slane %v3224, 4
      %v3227 = vrot.slane %v3080, 5
      %v3228 = vsel %vm953, %v3226, %v3227
      %v3229 = vrot.slane %v3081, 5
      %v3230 = vrot.slane %v3229, 4
      %v3231 = vrot.slane %v3082, 5
      %v3232 = vsel %vm953, %v3230, %v3231
      %v3233 = vrot.slane %v3231, 4
      %v3234 = vrot.slane %v3083, 5
      %v3235 = vsel %vm953, %v3233, %v3234
      %v3236 = vrot.slane %v3084, 5
      %v3237 = vrot.slane %v3236, 4
      %v3238 = vrot.slane %v3085, 5
      %v3239 = vsel %vm953, %v3237, %v3238
      %v3240 = vrot.slane %v3238, 4
      %v3241 = vrot.slane %v3086, 5
      %v3242 = vsel %vm953, %v3240, %v3241
      %v3243 = vrot.slane %v3087, 5
      %v3244 = vrot.slane %v3243, 4
      %v3245 = vrot.slane %v3088, 5
      %v3246 = vsel %vm953, %v3244, %v3245
      %v3247 = vrot.slane %v3245, 4
      %v3248 = vrot.slane %v3089, 5
      %v3249 = vsel %vm953, %v3247, %v3248
      %3250 = vrot.lane.b32.xlu0 %v3141, 32
      %v3251 = vpop.permute.xlu0 %3250
      %3252 = vrot.lane.b32.xlu0 %v3144, 32
      %v3253 = vpop.permute.xlu0 %3252
      %3254 = vrot.lane.b32.xlu0 %v3148, 32
      %v3255 = vpop.permute.xlu0 %3254
      %3256 = vrot.lane.b32.xlu0 %v3151, 32
      %v3257 = vpop.permute.xlu0 %3256
      %3258 = vrot.lane.b32.xlu0 %v3155, 32
      %v3259 = vpop.permute.xlu0 %3258
      %3260 = vrot.lane.b32.xlu0 %v3158, 32
      %v3261 = vpop.permute.xlu0 %3260
      %3262 = vrot.lane.b32.xlu0 %v3162, 32
      %v3263 = vpop.permute.xlu0 %3262
      %3264 = vrot.lane.b32.xlu0 %v3165, 32
      %v3265 = vpop.permute.xlu0 %3264
      %3266 = vrot.lane.b32.xlu0 %v3169, 32
      %v3267 = vpop.permute.xlu0 %3266
      %3268 = vrot.lane.b32.xlu0 %v3172, 32
      %v3269 = vpop.permute.xlu0 %3268
      %3270 = vrot.lane.b32.xlu0 %v3176, 32
      %v3271 = vpop.permute.xlu0 %3270
      %3272 = vrot.lane.b32.xlu0 %v3179, 32
      %v3273 = vpop.permute.xlu0 %3272
      %3274 = vrot.lane.b32.xlu0 %v3183, 32
      %v3275 = vpop.permute.xlu0 %3274
      %3276 = vrot.lane.b32.xlu0 %v3186, 32
      %v3277 = vpop.permute.xlu0 %3276
      %3278 = vrot.lane.b32.xlu0 %v3190, 32
      %v3279 = vpop.permute.xlu0 %3278
      %3280 = vrot.lane.b32.xlu0 %v3193, 32
      %v3281 = vpop.permute.xlu0 %3280
      %3282 = vrot.lane.b32.xlu0 %v3197, 32
      %v3283 = vpop.permute.xlu0 %3282
      %3284 = vrot.lane.b32.xlu0 %v3200, 32
      %v3285 = vpop.permute.xlu0 %3284
      %3286 = vrot.lane.b32.xlu0 %v3204, 32
      %v3287 = vpop.permute.xlu0 %3286
      %3288 = vrot.lane.b32.xlu0 %v3207, 32
      %v3289 = vpop.permute.xlu0 %3288
      %3290 = vrot.lane.b32.xlu0 %v3211, 32
      %v3291 = vpop.permute.xlu0 %3290
      %3292 = vrot.lane.b32.xlu0 %v3214, 32
      %v3293 = vpop.permute.xlu0 %3292
      %3294 = vrot.lane.b32.xlu0 %v3218, 32
      %v3295 = vpop.permute.xlu0 %3294
      %3296 = vrot.lane.b32.xlu0 %v3221, 32
      %v3297 = vpop.permute.xlu0 %3296
      %3298 = vrot.lane.b32.xlu0 %v3225, 32
      %v3299 = vpop.permute.xlu0 %3298
      %3300 = vrot.lane.b32.xlu0 %v3228, 32
      %v3301 = vpop.permute.xlu0 %3300
      %3302 = vrot.lane.b32.xlu0 %v3232, 32
      %v3303 = vpop.permute.xlu0 %3302
      %3304 = vrot.lane.b32.xlu0 %v3235, 32
      %v3305 = vpop.permute.xlu0 %3304
      %3306 = vrot.lane.b32.xlu0 %v3239, 32
      %v3307 = vpop.permute.xlu0 %3306
      %3308 = vrot.lane.b32.xlu0 %v3242, 32
      %v3309 = vpop.permute.xlu0 %3308
      %3310 = vrot.lane.b32.xlu0 %v3246, 32
      %v3311 = vpop.permute.xlu0 %3310
      %3312 = vrot.lane.b32.xlu0 %v3249, 32
      %v3313 = vpop.permute.xlu0 %3312
      %vm3346 = vcmask 290048
      %3347 = vst.msk [vmem:[#allocation2] sm:$0xf] %vm3346, %v3251
      %3348 = vst.msk [vmem:[#allocation2 + $0x4] sm:$0xf] %vm3346, %v3253
      %3349 = vst.msk [vmem:[#allocation2 + $0x8] sm:$0xf] %vm3346, %v3255
      %3350 = vst.msk [vmem:[#allocation2 + $0xc] sm:$0xf] %vm3346, %v3257
      %3351 = vst.msk [vmem:[#allocation2 + $0x10] sm:$0xf] %vm3346, %v3259
      %3352 = vst.msk [vmem:[#allocation2 + $0x14] sm:$0xf] %vm3346, %v3261
      %3353 = vst.msk [vmem:[#allocation2 + $0x18] sm:$0xf] %vm3346, %v3263
      %3354 = vst.msk [vmem:[#allocation2 + $0x1c] sm:$0xf] %vm3346, %v3265
      %3355 = vst.msk [vmem:[#allocation2 + $0x20] sm:$0xf] %vm3346, %v3267
      %3356 = vst.msk [vmem:[#allocation2 + $0x24] sm:$0xf] %vm3346, %v3269
      %3357 = vst.msk [vmem:[#allocation2 + $0x28] sm:$0xf] %vm3346, %v3271
      %3358 = vst.msk [vmem:[#allocation2 + $0x2c] sm:$0xf] %vm3346, %v3273
      %3359 = vst.msk [vmem:[#allocation2 + $0x30] sm:$0xf] %vm3346, %v3275
      %3360 = vst.msk [vmem:[#allocation2 + $0x34] sm:$0xf] %vm3346, %v3277
      %3361 = vst.msk [vmem:[#allocation2 + $0x38] sm:$0xf] %vm3346, %v3279
      %3362 = vst.msk [vmem:[#allocation2 + $0x3c] sm:$0xf] %vm3346, %v3281
      %3363 = vst.msk [vmem:[#allocation2 + $0x40] sm:$0xf] %vm3346, %v3283
      %3364 = vst.msk [vmem:[#allocation2 + $0x44] sm:$0xf] %vm3346, %v3285
      %3365 = vst.msk [vmem:[#allocation2 + $0x48] sm:$0xf] %vm3346, %v3287
      %3366 = vst.msk [vmem:[#allocation2 + $0x4c] sm:$0xf] %vm3346, %v3289
      %3367 = vst.msk [vmem:[#allocation2 + $0x50] sm:$0xf] %vm3346, %v3291
      %3368 = vst.msk [vmem:[#allocation2 + $0x54] sm:$0xf] %vm3346, %v3293
      %3369 = vst.msk [vmem:[#allocation2 + $0x58] sm:$0xf] %vm3346, %v3295
      %3370 = vst.msk [vmem:[#allocation2 + $0x5c] sm:$0xf] %vm3346, %v3297
      %3371 = vst.msk [vmem:[#allocation2 + $0x60] sm:$0xf] %vm3346, %v3299
      %3372 = vst.msk [vmem:[#allocation2 + $0x64] sm:$0xf] %vm3346, %v3301
      %3373 = vst.msk [vmem:[#allocation2 + $0x68] sm:$0xf] %vm3346, %v3303
      %3374 = vst.msk [vmem:[#allocation2 + $0x6c] sm:$0xf] %vm3346, %v3305
      %3375 = vst.msk [vmem:[#allocation2 + $0x70] sm:$0xf] %vm3346, %v3307
      %3376 = vst.msk [vmem:[#allocation2 + $0x74] sm:$0xf] %vm3346, %v3309
      %3377 = vst.msk [vmem:[#allocation2 + $0x78] sm:$0xf] %vm3346, %v3311
      %3378 = vst.msk [vmem:[#allocation2 + $0x7c] sm:$0xf] %vm3346, %v3313
      %v3379 = vld [vmem:[#allocation2] sm:$0xf]
      %v3380 = vld [vmem:[#allocation2 + $0x4] sm:$0xf]
      %v3381 = vld [vmem:[#allocation2 + $0x8] sm:$0xf]
      %v3382 = vld [vmem:[#allocation2 + $0xc] sm:$0xf]
      %v3383 = vld [vmem:[#allocation2 + $0x10] sm:$0xf]
      %v3384 = vld [vmem:[#allocation2 + $0x14] sm:$0xf]
      %v3385 = vld [vmem:[#allocation2 + $0x18] sm:$0xf]
      %v3386 = vld [vmem:[#allocation2 + $0x1c] sm:$0xf]
      %v3387 = vld [vmem:[#allocation2 + $0x20] sm:$0xf]
      %v3388 = vld [vmem:[#allocation2 + $0x24] sm:$0xf]
      %v3389 = vld [vmem:[#allocation2 + $0x28] sm:$0xf]
      %v3390 = vld [vmem:[#allocation2 + $0x2c] sm:$0xf]
      %v3391 = vld [vmem:[#allocation2 + $0x30] sm:$0xf]
      %v3392 = vld [vmem:[#allocation2 + $0x34] sm:$0xf]
      %v3393 = vld [vmem:[#allocation2 + $0x38] sm:$0xf]
      %v3394 = vld [vmem:[#allocation2 + $0x3c] sm:$0xf]
      %v3395 = vld [vmem:[#allocation2 + $0x40] sm:$0xf]
      %v3396 = vld [vmem:[#allocation2 + $0x44] sm:$0xf]
      %v3397 = vld [vmem:[#allocation2 + $0x48] sm:$0xf]
      %v3398 = vld [vmem:[#allocation2 + $0x4c] sm:$0xf]
      %v3399 = vld [vmem:[#allocation2 + $0x50] sm:$0xf]
      %v3400 = vld [vmem:[#allocation2 + $0x54] sm:$0xf]
      %v3401 = vld [vmem:[#allocation2 + $0x58] sm:$0xf]
      %v3402 = vld [vmem:[#allocation2 + $0x5c] sm:$0xf]
      %v3403 = vld [vmem:[#allocation2 + $0x60] sm:$0xf]
      %v3404 = vld [vmem:[#allocation2 + $0x64] sm:$0xf]
      %v3405 = vld [vmem:[#allocation2 + $0x68] sm:$0xf]
      %v3406 = vld [vmem:[#allocation2 + $0x6c] sm:$0xf]
      %v3407 = vld [vmem:[#allocation2 + $0x70] sm:$0xf]
      %v3408 = vld [vmem:[#allocation2 + $0x74] sm:$0xf]
      %v3409 = vld [vmem:[#allocation2 + $0x78] sm:$0xf]
      %v3410 = vld [vmem:[#allocation2 + $0x7c] sm:$0xf]
      %v3411 = vld [vmem:[%s1] sm:$0xf]
      %v3412 = vld [vmem:[%s1 + $0x4] sm:$0xf]
      %v3413 = vld [vmem:[%s1 + $0x8] sm:$0xf]
      %v3414 = vld [vmem:[%s1 + $0xc] sm:$0xf]
      %v3415 = vld [vmem:[%s1 + $0x10] sm:$0x3]
      %v3416 = vld [vmem:[%s2] sm:$0x1]
      %v3418 = vlaneseq
      %v3419 = vshrl.u32 %v3418, 7
      %v3420 = vsub.s32 0, %v3419
      %v3421 = vrot.slane %v3416, %v3420
      %v3455 = vunpack.c.l.b16 %v3379
      %v3456 = vunpack.c.l.b16 %v3380
      %v3457 = vunpack.c.l.b16 %v3381
      %v3458 = vunpack.c.l.b16 %v3382
      %v3459 = vunpack.c.l.b16 %v3383
      %v3460 = vunpack.c.l.b16 %v3384
      %v3461 = vunpack.c.l.b16 %v3385
      %v3462 = vunpack.c.l.b16 %v3386
      %v3463 = vunpack.c.l.b16 %v3387
      %v3464 = vunpack.c.l.b16 %v3388
      %v3465 = vunpack.c.l.b16 %v3389
      %v3466 = vunpack.c.l.b16 %v3390
      %v3467 = vunpack.c.l.b16 %v3391
      %v3468 = vunpack.c.l.b16 %v3392
      %v3469 = vunpack.c.l.b16 %v3393
      %v3470 = vunpack.c.l.b16 %v3394
      %v3471 = vunpack.c.l.b16 %v3395
      %v3472 = vunpack.c.l.b16 %v3396
      %v3473 = vunpack.c.l.b16 %v3397
      %v3474 = vunpack.c.l.b16 %v3398
      %v3475 = vunpack.c.l.b16 %v3399
      %v3476 = vunpack.c.l.b16 %v3400
      %v3477 = vunpack.c.l.b16 %v3401
      %v3478 = vunpack.c.l.b16 %v3402
      %v3479 = vunpack.c.l.b16 %v3403
      %v3480 = vunpack.c.l.b16 %v3404
      %v3481 = vunpack.c.l.b16 %v3405
      %v3482 = vunpack.c.l.b16 %v3406
      %v3483 = vunpack.c.l.b16 %v3407
      %v3484 = vunpack.c.l.b16 %v3408
      %v3485 = vunpack.c.l.b16 %v3409
      %v3486 = vunpack.c.l.b16 %v3410
      %v3487 = vpack.c.b16 %v3456, %v3455
      %v3488 = vpack.c.b16 %v3458, %v3457
      %v3489 = vpack.c.b16 %v3460, %v3459
      %v3490 = vpack.c.b16 %v3462, %v3461
      %v3491 = vpack.c.b16 %v3464, %v3463
      %v3492 = vpack.c.b16 %v3466, %v3465
      %v3493 = vpack.c.b16 %v3468, %v3467
      %v3494 = vpack.c.b16 %v3470, %v3469
      %v3495 = vpack.c.b16 %v3472, %v3471
      %v3496 = vpack.c.b16 %v3474, %v3473
      %v3497 = vpack.c.b16 %v3476, %v3475
      %v3498 = vpack.c.b16 %v3478, %v3477
      %v3499 = vpack.c.b16 %v3480, %v3479
      %v3500 = vpack.c.b16 %v3482, %v3481
      %v3501 = vpack.c.b16 %v3484, %v3483
      %v3502 = vpack.c.b16 %v3486, %v3485
      %v3508 = vunpack.c.l.b16 %v3411
      %v3509 = vunpack.c.l.b16 %v3412
      %v3510 = vunpack.c.l.b16 %v3413
      %v3511 = vunpack.c.l.b16 %v3414
      %v3512 = vunpack.c.l.b16 %v3415
      %v3513 = vpack.c.b16 %v3509, %v3508
      %v3514 = vpack.c.b16 %v3511, %v3510
      %v3515 = vpack.c.b16 %v3512, %v3512
      %vm3518 = vcmask 293888
      %v3520 = vsel %vm3518, %v3487, 0
      %v3523 = vsel %vm3518, %v3488, 0
      %v3526 = vsel %vm3518, %v3489, 0
      %v3529 = vsel %vm3518, %v3490, 0
      %v3532 = vsel %vm3518, %v3491, 0
      %v3535 = vsel %vm3518, %v3492, 0
      %v3538 = vsel %vm3518, %v3493, 0
      %v3541 = vsel %vm3518, %v3494, 0
      %v3544 = vsel %vm3518, %v3495, 0
      %v3547 = vsel %vm3518, %v3496, 0
      %v3550 = vsel %vm3518, %v3497, 0
      %v3553 = vsel %vm3518, %v3498, 0
      %v3556 = vsel %vm3518, %v3499, 0
      %v3559 = vsel %vm3518, %v3500, 0
      %v3562 = vsel %vm3518, %v3501, 0
      %v3565 = vsel %vm3518, %v3502, 0
      %vm3567 = vcmask 1041408
      %v3569 = vsel %vm3567, %v3515, 0
      %3571 = vmatprep.subr.bf16.mxu0 0
      %3572 = vmatpush1.bf16.msra.mxu0 0
      %3573 = vmatprep.subr.bf16.mxu0 0
      %3574 = vmatpush1.bf16.msra.mxu0 0
      %3575 = vmatprep.subr.bf16.mxu0 0
      %3576 = vmatpush1.bf16.msra.mxu0 0
      %3577 = vmatprep.subr.bf16.mxu0 0
      %3578 = vmatpush1.bf16.msra.mxu0 0
      %3579 = vmatprep.subr.bf16.mxu0 0
      %3580 = vmatpush1.bf16.msra.mxu0 0
      %3581 = vmatprep.subr.bf16.mxu0 0
      %3582 = vmatpush1.bf16.msra.mxu0 %v3569
      %3583 = vmatprep.subr.bf16.mxu0 0
      %3584 = vmatpush1.bf16.msra.mxu0 %v3514
      %3585 = vmatprep.subr.bf16.mxu0 0
      %3586 = vmatpush1.bf16.msra.mxu0 %v3513
      %3587 = vmatprep.subr.bf16.mxu0 0
      %3588 = vmatpush2.bf16.msra.mxu0 0
      %3589 = vmatprep.subr.bf16.mxu0 0
      %3590 = vmatpush2.bf16.msra.mxu0 0
      %3591 = vmatprep.subr.bf16.mxu0 0
      %3592 = vmatpush2.bf16.msra.mxu0 0
      %3593 = vmatprep.subr.bf16.mxu0 0
      %3594 = vmatpush2.bf16.msra.mxu0 0
      %3595 = vmatprep.subr.bf16.mxu0 0
      %3596 = vmatpush2.bf16.msra.mxu0 0
      %3597 = vmatprep.subr.bf16.mxu0 0
      %3598 = vmatpush2.bf16.msra.mxu0 0
      %3599 = vmatprep.subr.bf16.mxu0 0
      %3600 = vmatpush2.bf16.msra.mxu0 0
      %3601 = vmatprep.subr.bf16.mxu0 0
      %3602 = vmatpush2.bf16.msra.mxu0 0
      %3603 = vmatprep.mubr.bf16.mxu0 0
      %3604 = vmatmul.mubr.bf16.gmra.mxu0 %v3520
      %v3605 = vpop.f32.mrf.mxu0
      %v3606 = vadd.f32 %v3421, %v3605
      %v3607 = vpop.f32.mrf.mxu0
      %v3608 = vpop.f32.mrf.mxu0
      %v3609 = vadd.f32 %v3421, %v3608
      %v3610 = vpop.f32.mrf.mxu0
      %3611 = vmatprep.mubr.bf16.mxu0 0
      %3612 = vmatmul.mubr.bf16.gmra.mxu0 %v3523
      %v3613 = vpop.f32.mrf.mxu0
      %v3614 = vadd.f32 %v3421, %v3613
      %v3615 = vpop.f32.mrf.mxu0
      %v3616 = vpop.f32.mrf.mxu0
      %v3617 = vadd.f32 %v3421, %v3616
      %v3618 = vpop.f32.mrf.mxu0
      %3619 = vmatprep.mubr.bf16.mxu0 0
      %3620 = vmatmul.mubr.bf16.gmra.mxu0 %v3526
      %v3621 = vpop.f32.mrf.mxu0
      %v3622 = vadd.f32 %v3421, %v3621
      %v3623 = vpop.f32.mrf.mxu0
      %v3624 = vpop.f32.mrf.mxu0
      %v3625 = vadd.f32 %v3421, %v3624
      %v3626 = vpop.f32.mrf.mxu0
      %3627 = vmatprep.mubr.bf16.mxu0 0
      %3628 = vmatmul.mubr.bf16.gmra.mxu0 %v3529
      %v3629 = vpop.f32.mrf.mxu0
      %v3630 = vadd.f32 %v3421, %v3629
      %v3631 = vpop.f32.mrf.mxu0
      %v3632 = vpop.f32.mrf.mxu0
      %v3633 = vadd.f32 %v3421, %v3632
      %v3634 = vpop.f32.mrf.mxu0
      %3635 = vmatprep.mubr.bf16.mxu0 0
      %3636 = vmatmul.mubr.bf16.gmra.mxu0 %v3532
      %v3637 = vpop.f32.mrf.mxu0
      %v3638 = vadd.f32 %v3421, %v3637
      %v3639 = vpop.f32.mrf.mxu0
      %v3640 = vpop.f32.mrf.mxu0
      %v3641 = vadd.f32 %v3421, %v3640
      %v3642 = vpop.f32.mrf.mxu0
      %3643 = vmatprep.mubr.bf16.mxu0 0
      %3644 = vmatmul.mubr.bf16.gmra.mxu0 %v3535
      %v3645 = vpop.f32.mrf.mxu0
      %v3646 = vadd.f32 %v3421, %v3645
      %v3647 = vpop.f32.mrf.mxu0
      %v3648 = vpop.f32.mrf.mxu0
      %v3649 = vadd.f32 %v3421, %v3648
      %v3650 = vpop.f32.mrf.mxu0
      %3651 = vmatprep.mubr.bf16.mxu0 0
      %3652 = vmatmul.mubr.bf16.gmra.mxu0 %v3538
      %v3653 = vpop.f32.mrf.mxu0
      %v3654 = vadd.f32 %v3421, %v3653
      %v3655 = vpop.f32.mrf.mxu0
      %v3656 = vpop.f32.mrf.mxu0
      %v3657 = vadd.f32 %v3421, %v3656
      %v3658 = vpop.f32.mrf.mxu0
      %3659 = vmatprep.mubr.bf16.mxu0 0
      %3660 = vmatmul.mubr.bf16.gmra.mxu0 %v3541
      %v3661 = vpop.f32.mrf.mxu0
      %v3662 = vadd.f32 %v3421, %v3661
      %v3663 = vpop.f32.mrf.mxu0
      %v3664 = vpop.f32.mrf.mxu0
      %v3665 = vadd.f32 %v3421, %v3664
      %v3666 = vpop.f32.mrf.mxu0
      %3667 = vmatprep.mubr.bf16.mxu0 0
      %3668 = vmatmul.mubr.bf16.gmra.mxu0 %v3544
      %v3669 = vpop.f32.mrf.mxu0
      %v3670 = vadd.f32 %v3421, %v3669
      %v3671 = vpop.f32.mrf.mxu0
      %v3672 = vpop.f32.mrf.mxu0
      %v3673 = vadd.f32 %v3421, %v3672
      %v3674 = vpop.f32.mrf.mxu0
      %3675 = vmatprep.mubr.bf16.mxu0 0
      %3676 = vmatmul.mubr.bf16.gmra.mxu0 %v3547
      %v3677 = vpop.f32.mrf.mxu0
      %v3678 = vadd.f32 %v3421, %v3677
      %v3679 = vpop.f32.mrf.mxu0
      %v3680 = vpop.f32.mrf.mxu0
      %v3681 = vadd.f32 %v3421, %v3680
      %v3682 = vpop.f32.mrf.mxu0
      %3683 = vmatprep.mubr.bf16.mxu0 0
      %3684 = vmatmul.mubr.bf16.gmra.mxu0 %v3550
      %v3685 = vpop.f32.mrf.mxu0
      %v3686 = vadd.f32 %v3421, %v3685
      %v3687 = vpop.f32.mrf.mxu0
      %v3688 = vpop.f32.mrf.mxu0
      %v3689 = vadd.f32 %v3421, %v3688
      %v3690 = vpop.f32.mrf.mxu0
      %3691 = vmatprep.mubr.bf16.mxu0 0
      %3692 = vmatmul.mubr.bf16.gmra.mxu0 %v3553
      %v3693 = vpop.f32.mrf.mxu0
      %v3694 = vadd.f32 %v3421, %v3693
      %v3695 = vpop.f32.mrf.mxu0
      %v3696 = vpop.f32.mrf.mxu0
      %v3697 = vadd.f32 %v3421, %v3696
      %v3698 = vpop.f32.mrf.mxu0
      %3699 = vmatprep.mubr.bf16.mxu0 0
      %3700 = vmatmul.mubr.bf16.gmra.mxu0 %v3556
      %v3701 = vpop.f32.mrf.mxu0
      %v3702 = vadd.f32 %v3421, %v3701
      %v3703 = vpop.f32.mrf.mxu0
      %v3704 = vpop.f32.mrf.mxu0
      %v3705 = vadd.f32 %v3421, %v3704
      %v3706 = vpop.f32.mrf.mxu0
      %3707 = vmatprep.mubr.bf16.mxu0 0
      %3708 = vmatmul.mubr.bf16.gmra.mxu0 %v3559
      %v3709 = vpop.f32.mrf.mxu0
      %v3710 = vadd.f32 %v3421, %v3709
      %v3711 = vpop.f32.mrf.mxu0
      %v3712 = vpop.f32.mrf.mxu0
      %v3713 = vadd.f32 %v3421, %v3712
      %v3714 = vpop.f32.mrf.mxu0
      %3715 = vmatprep.mubr.bf16.mxu0 0
      %3716 = vmatmul.mubr.bf16.gmra.mxu0 %v3562
      %v3717 = vpop.f32.mrf.mxu0
      %v3718 = vadd.f32 %v3421, %v3717
      %v3719 = vpop.f32.mrf.mxu0
      %v3720 = vpop.f32.mrf.mxu0
      %v3721 = vadd.f32 %v3421, %v3720
      %v3722 = vpop.f32.mrf.mxu0
      %3723 = vmatprep.mubr.bf16.mxu0 0
      %3724 = vmatmul.mubr.bf16.gmra.mxu0 %v3565
      %v3725 = vpop.f32.mrf.mxu0
      %v3726 = vadd.f32 %v3421, %v3725
      %v3727 = vpop.f32.mrf.mxu0
      %v3728 = vpop.f32.mrf.mxu0
      %v3729 = vadd.f32 %v3421, %v3728
      %v3730 = vpop.f32.mrf.mxu0
      %3731 = vdwg.mxu0
      %v3732 = vmul.f32 %v3606, 0.2
      %v3733 = vmul.f32 %v3609, 0.2
      %v3734 = vmul.f32 %v3614, 0.2
      %v3735 = vmul.f32 %v3617, 0.2
      %v3736 = vmul.f32 %v3622, 0.2
      %v3737 = vmul.f32 %v3625, 0.2
      %v3738 = vmul.f32 %v3630, 0.2
      %v3739 = vmul.f32 %v3633, 0.2
      %v3740 = vmul.f32 %v3638, 0.2
      %v3741 = vmul.f32 %v3641, 0.2
      %v3742 = vmul.f32 %v3646, 0.2
      %v3743 = vmul.f32 %v3649, 0.2
      %v3744 = vmul.f32 %v3654, 0.2
      %v3745 = vmul.f32 %v3657, 0.2
      %v3746 = vmul.f32 %v3662, 0.2
      %v3747 = vmul.f32 %v3665, 0.2
      %v3748 = vmul.f32 %v3670, 0.2
      %v3749 = vmul.f32 %v3673, 0.2
      %v3750 = vmul.f32 %v3678, 0.2
      %v3751 = vmul.f32 %v3681, 0.2
      %v3752 = vmul.f32 %v3686, 0.2
      %v3753 = vmul.f32 %v3689, 0.2
      %v3754 = vmul.f32 %v3694, 0.2
      %v3755 = vmul.f32 %v3697, 0.2
      %v3756 = vmul.f32 %v3702, 0.2
      %v3757 = vmul.f32 %v3705, 0.2
      %v3758 = vmul.f32 %v3710, 0.2
      %v3759 = vmul.f32 %v3713, 0.2
      %v3760 = vmul.f32 %v3718, 0.2
      %v3761 = vmul.f32 %v3721, 0.2
      %v3762 = vmul.f32 %v3726, 0.2
      %v3763 = vmul.f32 %v3729, 0.2
      %v3764 = vmax.f32 %v3606, %v3732
      %v3765 = vmax.f32 %v3609, %v3733
      %v3766 = vmax.f32 %v3614, %v3734
      %v3767 = vmax.f32 %v3617, %v3735
      %v3768 = vmax.f32 %v3622, %v3736
      %v3769 = vmax.f32 %v3625, %v3737
      %v3770 = vmax.f32 %v3630, %v3738
      %v3771 = vmax.f32 %v3633, %v3739
      %v3772 = vmax.f32 %v3638, %v3740
      %v3773 = vmax.f32 %v3641, %v3741
      %v3774 = vmax.f32 %v3646, %v3742
      %v3775 = vmax.f32 %v3649, %v3743
      %v3776 = vmax.f32 %v3654, %v3744
      %v3777 = vmax.f32 %v3657, %v3745
      %v3778 = vmax.f32 %v3662, %v3746
      %v3779 = vmax.f32 %v3665, %v3747
      %v3780 = vmax.f32 %v3670, %v3748
      %v3781 = vmax.f32 %v3673, %v3749
      %v3782 = vmax.f32 %v3678, %v3750
      %v3783 = vmax.f32 %v3681, %v3751
      %v3784 = vmax.f32 %v3686, %v3752
      %v3785 = vmax.f32 %v3689, %v3753
      %v3786 = vmax.f32 %v3694, %v3754
      %v3787 = vmax.f32 %v3697, %v3755
      %v3788 = vmax.f32 %v3702, %v3756
      %v3789 = vmax.f32 %v3705, %v3757
      %v3790 = vmax.f32 %v3710, %v3758
      %v3791 = vmax.f32 %v3713, %v3759
      %v3792 = vmax.f32 %v3718, %v3760
      %v3793 = vmax.f32 %v3721, %v3761
      %v3794 = vmax.f32 %v3726, %v3762
      %v3795 = vmax.f32 %v3729, %v3763
      %3796 = vst [vmem:[#allocation3] sm:$0xf] 0
      %3797 = vst [vmem:[#allocation3 + $0x4] sm:$0xf] 0
      %3798 = vst [vmem:[#allocation3 + $0x8] sm:$0x1] 0
      %3799 = vst [vmem:[#allocation3 + $0xc] sm:$0xf] 0
      %3800 = vst [vmem:[#allocation3 + $0x10] sm:$0xf] 0
      %3801 = vst [vmem:[#allocation3 + $0x14] sm:$0x1] 0
      %3802 = vst [vmem:[#allocation3 + $0x18] sm:$0xf] 0
      %3803 = vst [vmem:[#allocation3 + $0x1c] sm:$0xf] 0
      %3804 = vst [vmem:[#allocation3 + $0x20] sm:$0x1] 0
      %3805 = vst [vmem:[#allocation3 + $0x24] sm:$0xf] 0
      %3806 = vst [vmem:[#allocation3 + $0x28] sm:$0xf] 0
      %3807 = vst [vmem:[#allocation3 + $0x2c] sm:$0x1] 0
      %3808 = vst [vmem:[#allocation3 + $0x30] sm:$0xf] 0
      %3809 = vst [vmem:[#allocation3 + $0x34] sm:$0xf] 0
      %3810 = vst [vmem:[#allocation3 + $0x38] sm:$0x1] 0
      %3811 = vst [vmem:[#allocation3 + $0x3c] sm:$0xf] 0
      %3812 = vst [vmem:[#allocation3 + $0x40] sm:$0xf] 0
      %3813 = vst [vmem:[#allocation3 + $0x44] sm:$0x1] 0
      %3814 = vst [vmem:[#allocation3 + $0x48] sm:$0xf] 0
      %3815 = vst [vmem:[#allocation3 + $0x4c] sm:$0xf] 0
      %3816 = vst [vmem:[#allocation3 + $0x50] sm:$0x1] 0
      %3817 = vst [vmem:[#allocation3 + $0x54] sm:$0xf] 0
      %3818 = vst [vmem:[#allocation3 + $0x58] sm:$0xf] 0
      %3819 = vst [vmem:[#allocation3 + $0x5c] sm:$0x1] 0
      %3820 = vst [vmem:[#allocation3 + $0x60] sm:$0xf] 0
      %3821 = vst [vmem:[#allocation3 + $0x64] sm:$0xf] 0
      %3822 = vst [vmem:[#allocation3 + $0x68] sm:$0x1] 0
      %3823 = vst [vmem:[#allocation3 + $0x6c] sm:$0xf] 0
      %3824 = vst [vmem:[#allocation3 + $0x70] sm:$0xf] 0
      %3825 = vst [vmem:[#allocation3 + $0x74] sm:$0x1] 0
      %3826 = vst [vmem:[#allocation3 + $0x78] sm:$0xf] 0
      %3827 = vst [vmem:[#allocation3 + $0x7c] sm:$0xf] 0
      %3828 = vst [vmem:[#allocation3 + $0x80] sm:$0x1] 0
      %3829 = vst [vmem:[#allocation3 + $0x84] sm:$0xf] 0
      %3830 = vst [vmem:[#allocation3 + $0x88] sm:$0xf] 0
      %3831 = vst [vmem:[#allocation3 + $0x8c] sm:$0x1] 0
      %3832 = vst [vmem:[#allocation3 + $0x90] sm:$0xf] 0
      %3833 = vst [vmem:[#allocation3 + $0x94] sm:$0xf] 0
      %3834 = vst [vmem:[#allocation3 + $0x98] sm:$0x1] 0
      %3835 = vst [vmem:[#allocation3 + $0x9c] sm:$0xf] 0
      %3836 = vst [vmem:[#allocation3 + $0xa0] sm:$0xf] 0
      %3837 = vst [vmem:[#allocation3 + $0xa4] sm:$0x1] 0
      %3838 = vst [vmem:[#allocation3 + $0xa8] sm:$0xf] 0
      %3839 = vst [vmem:[#allocation3 + $0xac] sm:$0xf] 0
      %3840 = vst [vmem:[#allocation3 + $0xb0] sm:$0x1] 0
      %3841 = vst [vmem:[#allocation3 + $0xb4] sm:$0xf] 0
      %3842 = vst [vmem:[#allocation3 + $0xb8] sm:$0xf] 0
      %3843 = vst [vmem:[#allocation3 + $0xbc] sm:$0x1] 0
      %3844 = vst [vmem:[#allocation3 + $0xc0] sm:$0xf] 0
      %3845 = vst [vmem:[#allocation3 + $0xc4] sm:$0xf] 0
      %3846 = vst [vmem:[#allocation3 + $0xc8] sm:$0x1] 0
      %3847 = vst [vmem:[#allocation3 + $0xcc] sm:$0xf] 0
      %3848 = vst [vmem:[#allocation3 + $0xd0] sm:$0xf] 0
      %3849 = vst [vmem:[#allocation3 + $0xd4] sm:$0x1] 0
      %v3850 = vpack.c.bf16 %v3765, %v3764
      %v3851 = vpack.c.bf16 %v3767, %v3766
      %v3852 = vpack.c.bf16 %v3769, %v3768
      %v3853 = vpack.c.bf16 %v3771, %v3770
      %v3854 = vpack.c.bf16 %v3773, %v3772
      %v3855 = vpack.c.bf16 %v3775, %v3774
      %v3856 = vpack.c.bf16 %v3777, %v3776
      %v3857 = vpack.c.bf16 %v3779, %v3778
      %v3858 = vpack.c.bf16 %v3781, %v3780
      %v3859 = vpack.c.bf16 %v3783, %v3782
      %v3860 = vpack.c.bf16 %v3785, %v3784
      %v3861 = vpack.c.bf16 %v3787, %v3786
      %v3862 = vpack.c.bf16 %v3789, %v3788
      %v3863 = vpack.c.bf16 %v3791, %v3790
      %v3864 = vpack.c.bf16 %v3793, %v3792
      %v3865 = vpack.c.bf16 %v3795, %v3794
      %v3882 = vunpack.c.l.b16 %v3850
      %v3883 = vunpack.c.h.b16 %v3850
      %v3884 = vunpack.c.l.b16 %v3851
      %v3885 = vunpack.c.h.b16 %v3851
      %v3886 = vunpack.c.l.b16 %v3852
      %v3887 = vunpack.c.h.b16 %v3852
      %v3888 = vunpack.c.l.b16 %v3853
      %v3889 = vunpack.c.h.b16 %v3853
      %v3890 = vunpack.c.l.b16 %v3854
      %v3891 = vunpack.c.h.b16 %v3854
      %v3892 = vunpack.c.l.b16 %v3855
      %v3893 = vunpack.c.h.b16 %v3855
      %v3894 = vunpack.c.l.b16 %v3856
      %v3895 = vunpack.c.h.b16 %v3856
      %v3896 = vunpack.c.l.b16 %v3857
      %v3897 = vunpack.c.h.b16 %v3857
      %v3898 = vunpack.c.l.b16 %v3858
      %v3899 = vunpack.c.h.b16 %v3858
      %v3900 = vunpack.c.l.b16 %v3859
      %v3901 = vunpack.c.h.b16 %v3859
      %v3902 = vunpack.c.l.b16 %v3860
      %v3903 = vunpack.c.h.b16 %v3860
      %v3904 = vunpack.c.l.b16 %v3861
      %v3905 = vunpack.c.h.b16 %v3861
      %v3906 = vunpack.c.l.b16 %v3862
      %v3907 = vunpack.c.h.b16 %v3862
      %v3908 = vunpack.c.l.b16 %v3863
      %v3909 = vunpack.c.h.b16 %v3863
      %v3910 = vunpack.c.l.b16 %v3864
      %v3911 = vunpack.c.h.b16 %v3864
      %v3912 = vunpack.c.l.b16 %v3865
      %v3913 = vunpack.c.h.b16 %v3865
      %v3914 = vpack.c.b16 %v3882, %v3882
      %v3915 = vpack.c.b16 %v3883, %v3883
      %v3916 = vpack.c.b16 %v3884, %v3884
      %v3917 = vpack.c.b16 %v3885, %v3885
      %v3918 = vpack.c.b16 %v3886, %v3886
      %v3919 = vpack.c.b16 %v3887, %v3887
      %v3920 = vpack.c.b16 %v3888, %v3888
      %v3921 = vpack.c.b16 %v3889, %v3889
      %v3922 = vpack.c.b16 %v3890, %v3890
      %v3923 = vpack.c.b16 %v3891, %v3891
      %v3924 = vpack.c.b16 %v3892, %v3892
      %v3925 = vpack.c.b16 %v3893, %v3893
      %v3926 = vpack.c.b16 %v3894, %v3894
      %v3927 = vpack.c.b16 %v3895, %v3895
      %v3928 = vpack.c.b16 %v3896, %v3896
      %v3929 = vpack.c.b16 %v3897, %v3897
      %v3930 = vpack.c.b16 %v3898, %v3898
      %v3931 = vpack.c.b16 %v3899, %v3899
      %v3932 = vpack.c.b16 %v3900, %v3900
      %v3933 = vpack.c.b16 %v3901, %v3901
      %v3934 = vpack.c.b16 %v3902, %v3902
      %v3935 = vpack.c.b16 %v3903, %v3903
      %v3936 = vpack.c.b16 %v3904, %v3904
      %v3937 = vpack.c.b16 %v3905, %v3905
      %v3938 = vpack.c.b16 %v3906, %v3906
      %v3939 = vpack.c.b16 %v3907, %v3907
      %v3940 = vpack.c.b16 %v3908, %v3908
      %v3941 = vpack.c.b16 %v3909, %v3909
      %v3942 = vpack.c.b16 %v3910, %v3910
      %v3943 = vpack.c.b16 %v3911, %v3911
      %v3944 = vpack.c.b16 %v3912, %v3912
      %v3945 = vpack.c.b16 %v3913, %v3913
      %vm3946 = vsmask.f32 256
      %vm3947 = vsmask.f32 4368
      %vm3948 = vmor %vm3946, %vm3947
      %v3950 = vshrl.u32 %v3914, 16
      %v3952 = vrot.slane %v3950, 7
      %v3953 = vshll.u32 %v3914, 16
      %v3955 = vor.u32 %v3952, %v3953
      %v3956 = vrot.slane %v3952, 4
      %v3958 = vshrl.u32 %v3915, 16
      %v3960 = vrot.slane %v3958, 7
      %v3961 = vshll.u32 %v3915, 16
      %v3963 = vor.u32 %v3960, %v3961
      %v3964 = vsel %vm3948, %v3956, %v3963
      %v3965 = vrot.slane %v3960, 4
      %v3967 = vshrl.u32 %v3916, 16
      %v3969 = vrot.slane %v3967, 7
      %v3970 = vshll.u32 %v3916, 16
      %v3972 = vor.u32 %v3969, %v3970
      %v3973 = vrot.slane %v3969, 4
      %v3975 = vshrl.u32 %v3917, 16
      %v3977 = vrot.slane %v3975, 7
      %v3978 = vshll.u32 %v3917, 16
      %v3980 = vor.u32 %v3977, %v3978
      %v3981 = vsel %vm3948, %v3973, %v3980
      %v3982 = vrot.slane %v3977, 4
      %v3984 = vshrl.u32 %v3918, 16
      %v3986 = vrot.slane %v3984, 7
      %v3987 = vshll.u32 %v3918, 16
      %v3989 = vor.u32 %v3986, %v3987
      %v3990 = vrot.slane %v3986, 4
      %v3992 = vshrl.u32 %v3919, 16
      %v3994 = vrot.slane %v3992, 7
      %v3995 = vshll.u32 %v3919, 16
      %v3997 = vor.u32 %v3994, %v3995
      %v3998 = vsel %vm3948, %v3990, %v3997
      %v3999 = vrot.slane %v3994, 4
      %v4001 = vshrl.u32 %v3920, 16
      %v4003 = vrot.slane %v4001, 7
      %v4004 = vshll.u32 %v3920, 16
      %v4006 = vor.u32 %v4003, %v4004
      %v4007 = vrot.slane %v4003, 4
      %v4009 = vshrl.u32 %v3921, 16
      %v4011 = vrot.slane %v4009, 7
      %v4012 = vshll.u32 %v3921, 16
      %v4014 = vor.u32 %v4011, %v4012
      %v4015 = vsel %vm3948, %v4007, %v4014
      %v4016 = vrot.slane %v4011, 4
      %v4018 = vshrl.u32 %v3922, 16
      %v4020 = vrot.slane %v4018, 7
      %v4021 = vshll.u32 %v3922, 16
      %v4023 = vor.u32 %v4020, %v4021
      %v4024 = vrot.slane %v4020, 4
      %v4026 = vshrl.u32 %v3923, 16
      %v4028 = vrot.slane %v4026, 7
      %v4029 = vshll.u32 %v3923, 16
      %v4031 = vor.u32 %v4028, %v4029
      %v4032 = vsel %vm3948, %v4024, %v4031
      %v4033 = vrot.slane %v4028, 4
      %v4035 = vshrl.u32 %v3924, 16
      %v4037 = vrot.slane %v4035, 7
      %v4038 = vshll.u32 %v3924, 16
      %v4040 = vor.u32 %v4037, %v4038
      %v4041 = vrot.slane %v4037, 4
      %v4043 = vshrl.u32 %v3925, 16
      %v4045 = vrot.slane %v4043, 7
      %v4046 = vshll.u32 %v3925, 16
      %v4048 = vor.u32 %v4045, %v4046
      %v4049 = vsel %vm3948, %v4041, %v4048
      %v4050 = vrot.slane %v4045, 4
      %v4052 = vshrl.u32 %v3926, 16
      %v4054 = vrot.slane %v4052, 7
      %v4055 = vshll.u32 %v3926, 16
      %v4057 = vor.u32 %v4054, %v4055
      %v4058 = vrot.slane %v4054, 4
      %v4060 = vshrl.u32 %v3927, 16
      %v4062 = vrot.slane %v4060, 7
      %v4063 = vshll.u32 %v3927, 16
      %v4065 = vor.u32 %v4062, %v4063
      %v4066 = vsel %vm3948, %v4058, %v4065
      %v4067 = vrot.slane %v4062, 4
      %v4069 = vshrl.u32 %v3928, 16
      %v4071 = vrot.slane %v4069, 7
      %v4072 = vshll.u32 %v3928, 16
      %v4074 = vor.u32 %v4071, %v4072
      %v4075 = vrot.slane %v4071, 4
      %v4077 = vshrl.u32 %v3929, 16
      %v4079 = vrot.slane %v4077, 7
      %v4080 = vshll.u32 %v3929, 16
      %v4082 = vor.u32 %v4079, %v4080
      %v4083 = vsel %vm3948, %v4075, %v4082
      %v4084 = vrot.slane %v4079, 4
      %v4086 = vshrl.u32 %v3930, 16
      %v4088 = vrot.slane %v4086, 7
      %v4089 = vshll.u32 %v3930, 16
      %v4091 = vor.u32 %v4088, %v4089
      %v4092 = vrot.slane %v4088, 4
      %v4094 = vshrl.u32 %v3931, 16
      %v4096 = vrot.slane %v4094, 7
      %v4097 = vshll.u32 %v3931, 16
      %v4099 = vor.u32 %v4096, %v4097
      %v4100 = vsel %vm3948, %v4092, %v4099
      %v4101 = vrot.slane %v4096, 4
      %v4103 = vshrl.u32 %v3932, 16
      %v4105 = vrot.slane %v4103, 7
      %v4106 = vshll.u32 %v3932, 16
      %v4108 = vor.u32 %v4105, %v4106
      %v4109 = vrot.slane %v4105, 4
      %v4111 = vshrl.u32 %v3933, 16
      %v4113 = vrot.slane %v4111, 7
      %v4114 = vshll.u32 %v3933, 16
      %v4116 = vor.u32 %v4113, %v4114
      %v4117 = vsel %vm3948, %v4109, %v4116
      %v4118 = vrot.slane %v4113, 4
      %v4120 = vshrl.u32 %v3934, 16
      %v4122 = vrot.slane %v4120, 7
      %v4123 = vshll.u32 %v3934, 16
      %v4125 = vor.u32 %v4122, %v4123
      %v4126 = vrot.slane %v4122, 4
      %v4128 = vshrl.u32 %v3935, 16
      %v4130 = vrot.slane %v4128, 7
      %v4131 = vshll.u32 %v3935, 16
      %v4133 = vor.u32 %v4130, %v4131
      %v4134 = vsel %vm3948, %v4126, %v4133
      %v4135 = vrot.slane %v4130, 4
      %v4137 = vshrl.u32 %v3936, 16
      %v4139 = vrot.slane %v4137, 7
      %v4140 = vshll.u32 %v3936, 16
      %v4142 = vor.u32 %v4139, %v4140
      %v4143 = vrot.slane %v4139, 4
      %v4145 = vshrl.u32 %v3937, 16
      %v4147 = vrot.slane %v4145, 7
      %v4148 = vshll.u32 %v3937, 16
      %v4150 = vor.u32 %v4147, %v4148
      %v4151 = vsel %vm3948, %v4143, %v4150
      %v4152 = vrot.slane %v4147, 4
      %v4154 = vshrl.u32 %v3938, 16
      %v4156 = vrot.slane %v4154, 7
      %v4157 = vshll.u32 %v3938, 16
      %v4159 = vor.u32 %v4156, %v4157
      %v4160 = vrot.slane %v4156, 4
      %v4162 = vshrl.u32 %v3939, 16
      %v4164 = vrot.slane %v4162, 7
      %v4165 = vshll.u32 %v3939, 16
      %v4167 = vor.u32 %v4164, %v4165
      %v4168 = vsel %vm3948, %v4160, %v4167
      %v4169 = vrot.slane %v4164, 4
      %v4171 = vshrl.u32 %v3940, 16
      %v4173 = vrot.slane %v4171, 7
      %v4174 = vshll.u32 %v3940, 16
      %v4176 = vor.u32 %v4173, %v4174
      %v4177 = vrot.slane %v4173, 4
      %v4179 = vshrl.u32 %v3941, 16
      %v4181 = vrot.slane %v4179, 7
      %v4182 = vshll.u32 %v3941, 16
      %v4184 = vor.u32 %v4181, %v4182
      %v4185 = vsel %vm3948, %v4177, %v4184
      %v4186 = vrot.slane %v4181, 4
      %v4188 = vshrl.u32 %v3942, 16
      %v4190 = vrot.slane %v4188, 7
      %v4191 = vshll.u32 %v3942, 16
      %v4193 = vor.u32 %v4190, %v4191
      %v4194 = vrot.slane %v4190, 4
      %v4196 = vshrl.u32 %v3943, 16
      %v4198 = vrot.slane %v4196, 7
      %v4199 = vshll.u32 %v3943, 16
      %v4201 = vor.u32 %v4198, %v4199
      %v4202 = vsel %vm3948, %v4194, %v4201
      %v4203 = vrot.slane %v4198, 4
      %v4205 = vshrl.u32 %v3944, 16
      %v4207 = vrot.slane %v4205, 7
      %v4208 = vshll.u32 %v3944, 16
      %v4210 = vor.u32 %v4207, %v4208
      %v4211 = vrot.slane %v4207, 4
      %v4213 = vshrl.u32 %v3945, 16
      %v4215 = vrot.slane %v4213, 7
      %v4216 = vshll.u32 %v3945, 16
      %v4218 = vor.u32 %v4215, %v4216
      %v4219 = vsel %vm3948, %v4211, %v4218
      %v4220 = vrot.slane %v4215, 4
      %s4269 = scalar_lea.vmem [#allocation3], 12
      %vm4270 = vcmask 1043456
      %vm4271 = vsmask.f32 7938
      %vm4272 = vmand %vm4270, %vm4271
      %v4273 = vld [vmem:[%s4269] sm:$0xf]
      %v4274 = vsel %vm4272, %v3955, %v4273
      %4275 = vst [vmem:[%s4269] sm:$0xf] %v4274
      %4276 = vst [vmem:[%s4269 + $0x4] sm:$0xf] %v3964
      %vm4277 = vcmask 1040384
      %vm4278 = vmand %vm4277, %vm3946
      %v4279 = vld [vmem:[%s4269 + $0x8] sm:$0x1]
      %v4280 = vsel %vm4278, %v3965, %v4279
      %4281 = vst [vmem:[%s4269 + $0x8] sm:$0x1] %v4280
      %v4282 = vld [vmem:[%s4269 + $0xc] sm:$0xf]
      %v4283 = vsel %vm4272, %v3972, %v4282
      %4284 = vst [vmem:[%s4269 + $0xc] sm:$0xf] %v4283
      %4285 = vst [vmem:[%s4269 + $0x10] sm:$0xf] %v3981
      %v4286 = vld [vmem:[%s4269 + $0x14] sm:$0x1]
      %v4287 = vsel %vm4278, %v3982, %v4286
      %4288 = vst [vmem:[%s4269 + $0x14] sm:$0x1] %v4287
      %v4289 = vld [vmem:[%s4269 + $0x18] sm:$0xf]
      %v4290 = vsel %vm4272, %v3989, %v4289
      %4291 = vst [vmem:[%s4269 + $0x18] sm:$0xf] %v4290
      %4292 = vst [vmem:[%s4269 + $0x1c] sm:$0xf] %v3998
      %v4293 = vld [vmem:[%s4269 + $0x20] sm:$0x1]
      %v4294 = vsel %vm4278, %v3999, %v4293
      %4295 = vst [vmem:[%s4269 + $0x20] sm:$0x1] %v4294
      %v4296 = vld [vmem:[%s4269 + $0x24] sm:$0xf]
      %v4297 = vsel %vm4272, %v4006, %v4296
      %4298 = vst [vmem:[%s4269 + $0x24] sm:$0xf] %v4297
      %4299 = vst [vmem:[%s4269 + $0x28] sm:$0xf] %v4015
      %v4300 = vld [vmem:[%s4269 + $0x2c] sm:$0x1]
      %v4301 = vsel %vm4278, %v4016, %v4300
      %4302 = vst [vmem:[%s4269 + $0x2c] sm:$0x1] %v4301
      %v4303 = vld [vmem:[%s4269 + $0x30] sm:$0xf]
      %v4304 = vsel %vm4272, %v4023, %v4303
      %4305 = vst [vmem:[%s4269 + $0x30] sm:$0xf] %v4304
      %4306 = vst [vmem:[%s4269 + $0x34] sm:$0xf] %v4032
      %v4307 = vld [vmem:[%s4269 + $0x38] sm:$0x1]
      %v4308 = vsel %vm4278, %v4033, %v4307
      %4309 = vst [vmem:[%s4269 + $0x38] sm:$0x1] %v4308
      %v4310 = vld [vmem:[%s4269 + $0x3c] sm:$0xf]
      %v4311 = vsel %vm4272, %v4040, %v4310
      %4312 = vst [vmem:[%s4269 + $0x3c] sm:$0xf] %v4311
      %4313 = vst [vmem:[%s4269 + $0x40] sm:$0xf] %v4049
      %v4314 = vld [vmem:[%s4269 + $0x44] sm:$0x1]
      %v4315 = vsel %vm4278, %v4050, %v4314
      %4316 = vst [vmem:[%s4269 + $0x44] sm:$0x1] %v4315
      %v4317 = vld [vmem:[%s4269 + $0x48] sm:$0xf]
      %v4318 = vsel %vm4272, %v4057, %v4317
      %4319 = vst [vmem:[%s4269 + $0x48] sm:$0xf] %v4318
      %4320 = vst [vmem:[%s4269 + $0x4c] sm:$0xf] %v4066
      %v4321 = vld [vmem:[%s4269 + $0x50] sm:$0x1]
      %v4322 = vsel %vm4278, %v4067, %v4321
      %4323 = vst [vmem:[%s4269 + $0x50] sm:$0x1] %v4322
      %v4324 = vld [vmem:[%s4269 + $0x54] sm:$0xf]
      %v4325 = vsel %vm4272, %v4074, %v4324
      %4326 = vst [vmem:[%s4269 + $0x54] sm:$0xf] %v4325
      %4327 = vst [vmem:[%s4269 + $0x58] sm:$0xf] %v4083
      %v4328 = vld [vmem:[%s4269 + $0x5c] sm:$0x1]
      %v4329 = vsel %vm4278, %v4084, %v4328
      %4330 = vst [vmem:[%s4269 + $0x5c] sm:$0x1] %v4329
      %v4331 = vld [vmem:[%s4269 + $0x60] sm:$0xf]
      %v4332 = vsel %vm4272, %v4091, %v4331
      %4333 = vst [vmem:[%s4269 + $0x60] sm:$0xf] %v4332
      %4334 = vst [vmem:[%s4269 + $0x64] sm:$0xf] %v4100
      %v4335 = vld [vmem:[%s4269 + $0x68] sm:$0x1]
      %v4336 = vsel %vm4278, %v4101, %v4335
      %4337 = vst [vmem:[%s4269 + $0x68] sm:$0x1] %v4336
      %v4338 = vld [vmem:[%s4269 + $0x6c] sm:$0xf]
      %v4339 = vsel %vm4272, %v4108, %v4338
      %4340 = vst [vmem:[%s4269 + $0x6c] sm:$0xf] %v4339
      %4341 = vst [vmem:[%s4269 + $0x70] sm:$0xf] %v4117
      %v4342 = vld [vmem:[%s4269 + $0x74] sm:$0x1]
      %v4343 = vsel %vm4278, %v4118, %v4342
      %4344 = vst [vmem:[%s4269 + $0x74] sm:$0x1] %v4343
      %v4345 = vld [vmem:[%s4269 + $0x78] sm:$0xf]
      %v4346 = vsel %vm4272, %v4125, %v4345
      %4347 = vst [vmem:[%s4269 + $0x78] sm:$0xf] %v4346
      %4348 = vst [vmem:[%s4269 + $0x7c] sm:$0xf] %v4134
      %v4349 = vld [vmem:[%s4269 + $0x80] sm:$0x1]
      %v4350 = vsel %vm4278, %v4135, %v4349
      %4351 = vst [vmem:[%s4269 + $0x80] sm:$0x1] %v4350
      %v4352 = vld [vmem:[%s4269 + $0x84] sm:$0xf]
      %v4353 = vsel %vm4272, %v4142, %v4352
      %4354 = vst [vmem:[%s4269 + $0x84] sm:$0xf] %v4353
      %4355 = vst [vmem:[%s4269 + $0x88] sm:$0xf] %v4151
      %v4356 = vld [vmem:[%s4269 + $0x8c] sm:$0x1]
      %v4357 = vsel %vm4278, %v4152, %v4356
      %4358 = vst [vmem:[%s4269 + $0x8c] sm:$0x1] %v4357
      %v4359 = vld [vmem:[%s4269 + $0x90] sm:$0xf]
      %v4360 = vsel %vm4272, %v4159, %v4359
      %4361 = vst [vmem:[%s4269 + $0x90] sm:$0xf] %v4360
      %4362 = vst [vmem:[%s4269 + $0x94] sm:$0xf] %v4168
      %v4363 = vld [vmem:[%s4269 + $0x98] sm:$0x1]
      %v4364 = vsel %vm4278, %v4169, %v4363
      %4365 = vst [vmem:[%s4269 + $0x98] sm:$0x1] %v4364
      %v4366 = vld [vmem:[%s4269 + $0x9c] sm:$0xf]
      %v4367 = vsel %vm4272, %v4176, %v4366
      %4368 = vst [vmem:[%s4269 + $0x9c] sm:$0xf] %v4367
      %4369 = vst [vmem:[%s4269 + $0xa0] sm:$0xf] %v4185
      %v4370 = vld [vmem:[%s4269 + $0xa4] sm:$0x1]
      %v4371 = vsel %vm4278, %v4186, %v4370
      %4372 = vst [vmem:[%s4269 + $0xa4] sm:$0x1] %v4371
      %v4373 = vld [vmem:[%s4269 + $0xa8] sm:$0xf]
      %v4374 = vsel %vm4272, %v4193, %v4373
      %4375 = vst [vmem:[%s4269 + $0xa8] sm:$0xf] %v4374
      %4376 = vst [vmem:[%s4269 + $0xac] sm:$0xf] %v4202
      %v4377 = vld [vmem:[%s4269 + $0xb0] sm:$0x1]
      %v4378 = vsel %vm4278, %v4203, %v4377
      %4379 = vst [vmem:[%s4269 + $0xb0] sm:$0x1] %v4378
      %v4380 = vld [vmem:[%s4269 + $0xb4] sm:$0xf]
      %v4381 = vsel %vm4272, %v4210, %v4380
      %4382 = vst [vmem:[%s4269 + $0xb4] sm:$0xf] %v4381
      %4383 = vst [vmem:[%s4269 + $0xb8] sm:$0xf] %v4219
      %v4384 = vld [vmem:[%s4269 + $0xbc] sm:$0x1]
      %v4385 = vsel %vm4278, %v4220, %v4384
      %4386 = vst [vmem:[%s4269 + $0xbc] sm:$0x1] %v4385
      %v4387 = vld [vmem:[%s4] sm:$0x1]
      %v4389 = vlaneseq
      %v4390 = vshrl.u32 %v4389, 7
      %v4391 = vsub.s32 0, %v4390
      %v4392 = vrot.slane %v4387, %v4391
      %4394 = vst [vmem:[#allocation4] sm:$0xff] %v4392
      %4395 = vst [vmem:[#allocation4 + $0x8] sm:$0xff] %v4392
      %4396 = vst [vmem:[#allocation4 + $0x10] sm:$0xff] %v4392
      %4397 = vst [vmem:[#allocation4 + $0x18] sm:$0xff] %v4392
      %4398 = vst [vmem:[#allocation4 + $0x20] sm:$0xff] %v4392
      %4399 = vst [vmem:[#allocation4 + $0x28] sm:$0xff] %v4392
      %4400 = vst [vmem:[#allocation4 + $0x30] sm:$0xff] %v4392
      %4401 = vst [vmem:[#allocation4 + $0x38] sm:$0xff] %v4392
      %4402 = vst [vmem:[#allocation4 + $0x40] sm:$0xff] %v4392
      %4403 = vst [vmem:[#allocation4 + $0x48] sm:$0xff] %v4392
      %4404 = vst [vmem:[#allocation4 + $0x50] sm:$0xff] %v4392
      %4405 = vst [vmem:[#allocation4 + $0x58] sm:$0xff] %v4392
      %4406 = vst [vmem:[#allocation4 + $0x60] sm:$0xff] %v4392
      %4407 = vst [vmem:[#allocation4 + $0x68] sm:$0xff] %v4392
      %4408 = vst [vmem:[#allocation4 + $0x70] sm:$0xff] %v4392
      %4409 = vst [vmem:[#allocation4 + $0x78] sm:$0xff] %v4392
      %4410 = vst [vmem:[#allocation4 + $0x80] sm:$0xff] %v4392
      %4411 = vst [vmem:[#allocation4 + $0x88] sm:$0xff] %v4392
      %4412 = vst [vmem:[#allocation4 + $0x90] sm:$0xff] %v4392
      %4413 = vst [vmem:[#allocation4 + $0x98] sm:$0xff] %v4392
      %4414 = vst [vmem:[#allocation4 + $0xa0] sm:$0xff] %v4392
      %4415 = vst [vmem:[#allocation4 + $0xa8] sm:$0xff] %v4392
      %4416 = vst [vmem:[#allocation4 + $0xb0] sm:$0xff] %v4392
      %4417 = vst [vmem:[#allocation4 + $0xb8] sm:$0xff] %v4392
      %4418 = vst [vmem:[#allocation4 + $0xc0] sm:$0xff] %v4392
      %4419 = vst [vmem:[#allocation4 + $0xc8] sm:$0xff] %v4392
      %4420 = vst [vmem:[#allocation4 + $0xd0] sm:$0xff] %v4392
      %4421 = vst [vmem:[#allocation4 + $0xd8] sm:$0xff] %v4392
      %4422 = vst [vmem:[#allocation4 + $0xe0] sm:$0xff] %v4392
      %4423 = vst [vmem:[#allocation4 + $0xe8] sm:$0xff] %v4392
      %4424 = vst [vmem:[#allocation4 + $0xf0] sm:$0xff] %v4392
      %4425 = vst [vmem:[#allocation4 + $0xf8] sm:$0xff] %v4392
      %v4426 = vld [vmem:[#allocation3] sm:$0xf]
      %v4427 = vld [vmem:[#allocation3 + $0x4] sm:$0xf]
      %v4428 = vld [vmem:[#allocation3 + $0xc] sm:$0xf]
      %v4429 = vld [vmem:[#allocation3 + $0x10] sm:$0xf]
      %v4430 = vld [vmem:[#allocation3 + $0x18] sm:$0xf]
      %v4431 = vld [vmem:[#allocation3 + $0x1c] sm:$0xf]
      %v4432 = vld [vmem:[#allocation3 + $0x24] sm:$0xf]
      %v4433 = vld [vmem:[#allocation3 + $0x28] sm:$0xf]
      %v4434 = vld [vmem:[#allocation3 + $0x30] sm:$0xf]
      %v4435 = vld [vmem:[#allocation3 + $0x34] sm:$0xf]
      %v4436 = vld [vmem:[#allocation3 + $0x3c] sm:$0xf]
      %v4437 = vld [vmem:[#allocation3 + $0x40] sm:$0xf]
      %v4438 = vld [vmem:[#allocation3 + $0x48] sm:$0xf]
      %v4439 = vld [vmem:[#allocation3 + $0x4c] sm:$0xf]
      %v4440 = vld [vmem:[#allocation3 + $0x54] sm:$0xf]
      %v4441 = vld [vmem:[#allocation3 + $0x58] sm:$0xf]
      %v4442 = vld [vmem:[#allocation3 + $0x60] sm:$0xf]
      %v4443 = vld [vmem:[#allocation3 + $0x64] sm:$0xf]
      %v4444 = vld [vmem:[#allocation3 + $0x6c] sm:$0xf]
      %v4445 = vld [vmem:[#allocation3 + $0x70] sm:$0xf]
      %v4446 = vld [vmem:[#allocation3 + $0x78] sm:$0xf]
      %v4447 = vld [vmem:[#allocation3 + $0x7c] sm:$0xf]
      %v4448 = vld [vmem:[#allocation3 + $0x84] sm:$0xf]
      %v4449 = vld [vmem:[#allocation3 + $0x88] sm:$0xf]
      %v4450 = vld [vmem:[#allocation3 + $0x90] sm:$0xf]
      %v4451 = vld [vmem:[#allocation3 + $0x94] sm:$0xf]
      %v4452 = vld [vmem:[#allocation3 + $0x9c] sm:$0xf]
      %v4453 = vld [vmem:[#allocation3 + $0xa0] sm:$0xf]
      %v4454 = vld [vmem:[#allocation3 + $0xa8] sm:$0xf]
      %v4455 = vld [vmem:[#allocation3 + $0xac] sm:$0xf]
      %v4456 = vld [vmem:[#allocation3 + $0xb4] sm:$0xf]
      %v4457 = vld [vmem:[#allocation3 + $0xb8] sm:$0xf]
      %v4458 = vld [vmem:[#allocation4] sm:$0xff]
      %v4459 = vld [vmem:[#allocation4 + $0x8] sm:$0xff]
      %v4460 = vld [vmem:[#allocation4 + $0x10] sm:$0xff]
      %v4461 = vld [vmem:[#allocation4 + $0x18] sm:$0xff]
      %v4462 = vld [vmem:[#allocation4 + $0x20] sm:$0xff]
      %v4463 = vld [vmem:[#allocation4 + $0x28] sm:$0xff]
      %v4464 = vld [vmem:[#allocation4 + $0x30] sm:$0xff]
      %v4465 = vld [vmem:[#allocation4 + $0x38] sm:$0xff]
      %v4466 = vld [vmem:[#allocation4 + $0x40] sm:$0xff]
      %v4467 = vld [vmem:[#allocation4 + $0x48] sm:$0xff]
      %v4468 = vld [vmem:[#allocation4 + $0x50] sm:$0xff]
      %v4469 = vld [vmem:[#allocation4 + $0x58] sm:$0xff]
      %v4470 = vld [vmem:[#allocation4 + $0x60] sm:$0xff]
      %v4471 = vld [vmem:[#allocation4 + $0x68] sm:$0xff]
      %v4472 = vld [vmem:[#allocation4 + $0x70] sm:$0xff]
      %v4473 = vld [vmem:[#allocation4 + $0x78] sm:$0xff]
      %v4474 = vld [vmem:[#allocation4 + $0x80] sm:$0xff]
      %v4475 = vld [vmem:[#allocation4 + $0x88] sm:$0xff]
      %v4476 = vld [vmem:[#allocation4 + $0x90] sm:$0xff]
      %v4477 = vld [vmem:[#allocation4 + $0x98] sm:$0xff]
      %v4478 = vld [vmem:[#allocation4 + $0xa0] sm:$0xff]
      %v4479 = vld [vmem:[#allocation4 + $0xa8] sm:$0xff]
      %v4480 = vld [vmem:[#allocation4 + $0xb0] sm:$0xff]
      %v4481 = vld [vmem:[#allocation4 + $0xb8] sm:$0xff]
      %v4482 = vld [vmem:[#allocation4 + $0xc0] sm:$0xff]
      %v4483 = vld [vmem:[#allocation4 + $0xc8] sm:$0xff]
      %v4484 = vld [vmem:[#allocation4 + $0xd0] sm:$0xff]
      %v4485 = vld [vmem:[#allocation4 + $0xd8] sm:$0xff]
      %v4486 = vld [vmem:[#allocation4 + $0xe0] sm:$0xff]
      %v4487 = vld [vmem:[#allocation4 + $0xe8] sm:$0xff]
      %v4488 = vld [vmem:[#allocation4 + $0xf0] sm:$0xff]
      %v4489 = vld [vmem:[#allocation4 + $0xf8] sm:$0xff]
      %v4490 = vld [vmem:[%s3] sm:$0xf]
      %v4491 = vld [vmem:[%s3 + $0x4] sm:$0xf]
      %v4492 = vld [vmem:[%s3 + $0x8] sm:$0xf]
      %v4493 = vld [vmem:[%s3 + $0xc] sm:$0xf]
      %v4494 = vld [vmem:[%s3 + $0x10] sm:$0xf]
      %v4495 = vld [vmem:[%s3 + $0x14] sm:$0xf]
      %v4496 = vld [vmem:[%s3 + $0x18] sm:$0xf]
      %v4497 = vld [vmem:[%s3 + $0x1c] sm:$0xf]
      %v4498 = vld [vmem:[%s3 + $0x20] sm:$0xf]
      %v4499 = vld [vmem:[%s3 + $0x24] sm:$0xf]
      %v4500 = vld [vmem:[%s3 + $0x28] sm:$0xf]
      %v4501 = vld [vmem:[%s3 + $0x2c] sm:$0xf]
      %v4502 = vld [vmem:[%s3 + $0x30] sm:$0xf]
      %v4503 = vld [vmem:[%s3 + $0x34] sm:$0xf]
      %v4504 = vld [vmem:[%s3 + $0x38] sm:$0xf]
      %v4505 = vld [vmem:[%s3 + $0x3c] sm:$0xf]
      %v4538 = vunpack.c.l.b16 %v4426
      %v4539 = vunpack.c.l.b16 %v4427
      %v4540 = vunpack.c.l.b16 %v4428
      %v4541 = vunpack.c.l.b16 %v4429
      %v4542 = vunpack.c.l.b16 %v4430
      %v4543 = vunpack.c.l.b16 %v4431
      %v4544 = vunpack.c.l.b16 %v4432
      %v4545 = vunpack.c.l.b16 %v4433
      %v4546 = vunpack.c.l.b16 %v4434
      %v4547 = vunpack.c.l.b16 %v4435
      %v4548 = vunpack.c.l.b16 %v4436
      %v4549 = vunpack.c.l.b16 %v4437
      %v4550 = vunpack.c.l.b16 %v4438
      %v4551 = vunpack.c.l.b16 %v4439
      %v4552 = vunpack.c.l.b16 %v4440
      %v4553 = vunpack.c.l.b16 %v4441
      %v4554 = vunpack.c.l.b16 %v4442
      %v4555 = vunpack.c.l.b16 %v4443
      %v4556 = vunpack.c.l.b16 %v4444
      %v4557 = vunpack.c.l.b16 %v4445
      %v4558 = vunpack.c.l.b16 %v4446
      %v4559 = vunpack.c.l.b16 %v4447
      %v4560 = vunpack.c.l.b16 %v4448
      %v4561 = vunpack.c.l.b16 %v4449
      %v4562 = vunpack.c.l.b16 %v4450
      %v4563 = vunpack.c.l.b16 %v4451
      %v4564 = vunpack.c.l.b16 %v4452
      %v4565 = vunpack.c.l.b16 %v4453
      %v4566 = vunpack.c.l.b16 %v4454
      %v4567 = vunpack.c.l.b16 %v4455
      %v4568 = vunpack.c.l.b16 %v4456
      %v4569 = vunpack.c.l.b16 %v4457
      %v4570 = vpack.c.b16 %v4539, %v4538
      %v4571 = vpack.c.b16 %v4541, %v4540
      %v4572 = vpack.c.b16 %v4543, %v4542
      %v4573 = vpack.c.b16 %v4545, %v4544
      %v4574 = vpack.c.b16 %v4547, %v4546
      %v4575 = vpack.c.b16 %v4549, %v4548
      %v4576 = vpack.c.b16 %v4551, %v4550
      %v4577 = vpack.c.b16 %v4553, %v4552
      %v4578 = vpack.c.b16 %v4555, %v4554
      %v4579 = vpack.c.b16 %v4557, %v4556
      %v4580 = vpack.c.b16 %v4559, %v4558
      %v4581 = vpack.c.b16 %v4561, %v4560
      %v4582 = vpack.c.b16 %v4563, %v4562
      %v4583 = vpack.c.b16 %v4565, %v4564
      %v4584 = vpack.c.b16 %v4567, %v4566
      %v4585 = vpack.c.b16 %v4569, %v4568
      %v4618 = vunpack.c.l.b16 %v4490
      %v4619 = vunpack.c.l.b16 %v4491
      %v4620 = vunpack.c.l.b16 %v4492
      %v4621 = vunpack.c.l.b16 %v4493
      %v4622 = vunpack.c.l.b16 %v4494
      %v4623 = vunpack.c.l.b16 %v4495
      %v4624 = vunpack.c.l.b16 %v4496
      %v4625 = vunpack.c.l.b16 %v4497
      %v4626 = vunpack.c.l.b16 %v4498
      %v4627 = vunpack.c.l.b16 %v4499
      %v4628 = vunpack.c.l.b16 %v4500
      %v4629 = vunpack.c.l.b16 %v4501
      %v4630 = vunpack.c.l.b16 %v4502
      %v4631 = vunpack.c.l.b16 %v4503
      %v4632 = vunpack.c.l.b16 %v4504
      %v4633 = vunpack.c.l.b16 %v4505
      %v4634 = vpack.c.b16 %v4619, %v4618
      %v4635 = vpack.c.b16 %v4621, %v4620
      %v4636 = vpack.c.b16 %v4623, %v4622
      %v4637 = vpack.c.b16 %v4625, %v4624
      %v4638 = vpack.c.b16 %v4627, %v4626
      %v4639 = vpack.c.b16 %v4629, %v4628
      %v4640 = vpack.c.b16 %v4631, %v4630
      %v4641 = vpack.c.b16 %v4633, %v4632
      %4650 = vmatprep.subr.bf16.mxu0 0
      %4651 = vmatpush1.bf16.msra.mxu0 %v4641
      %4652 = vmatprep.subr.bf16.mxu0 0
      %4653 = vmatpush1.bf16.msra.mxu0 %v4640
      %4654 = vmatprep.subr.bf16.mxu0 0
      %4655 = vmatpush1.bf16.msra.mxu0 %v4639
      %4656 = vmatprep.subr.bf16.mxu0 0
      %4657 = vmatpush1.bf16.msra.mxu0 %v4638
      %4658 = vmatprep.subr.bf16.mxu0 0
      %4659 = vmatpush1.bf16.msra.mxu0 %v4637
      %4660 = vmatprep.subr.bf16.mxu0 0
      %4661 = vmatpush1.bf16.msra.mxu0 %v4636
      %4662 = vmatprep.subr.bf16.mxu0 0
      %4663 = vmatpush1.bf16.msra.mxu0 %v4635
      %4664 = vmatprep.subr.bf16.mxu0 0
      %4665 = vmatpush1.bf16.msra.mxu0 %v4634
      %4666 = vmatprep.subr.bf16.mxu0 0
      %4667 = vmatpush2.bf16.msra.mxu0 0
      %4668 = vmatprep.subr.bf16.mxu0 0
      %4669 = vmatpush2.bf16.msra.mxu0 0
      %4670 = vmatprep.subr.bf16.mxu0 0
      %4671 = vmatpush2.bf16.msra.mxu0 0
      %4672 = vmatprep.subr.bf16.mxu0 0
      %4673 = vmatpush2.bf16.msra.mxu0 0
      %4674 = vmatprep.subr.bf16.mxu0 0
      %4675 = vmatpush2.bf16.msra.mxu0 0
      %4676 = vmatprep.subr.bf16.mxu0 0
      %4677 = vmatpush2.bf16.msra.mxu0 0
      %4678 = vmatprep.subr.bf16.mxu0 0
      %4679 = vmatpush2.bf16.msra.mxu0 0
      %4680 = vmatprep.subr.bf16.mxu0 0
      %4681 = vmatpush2.bf16.msra.mxu0 0
      %4682 = vmatprep.mubr.bf16.mxu0 0
      %4683 = vmatmul.mubr.bf16.gmra.mxu0 %v4570
      %v4684 = vpop.f32.mrf.mxu0
      %v4685 = vadd.f32 0.0, %v4684
      %v4686 = vpop.f32.mrf.mxu0
      %v4687 = vpop.f32.mrf.mxu0
      %v4688 = vadd.f32 0.0, %v4687
      %v4689 = vpop.f32.mrf.mxu0
      %4690 = vmatprep.mubr.bf16.mxu0 0
      %4691 = vmatmul.mubr.bf16.gmra.mxu0 %v4571
      %v4692 = vpop.f32.mrf.mxu0
      %v4693 = vadd.f32 0.0, %v4692
      %v4694 = vpop.f32.mrf.mxu0
      %v4695 = vpop.f32.mrf.mxu0
      %v4696 = vadd.f32 0.0, %v4695
      %v4697 = vpop.f32.mrf.mxu0
      %4698 = vmatprep.mubr.bf16.mxu0 0
      %4699 = vmatmul.mubr.bf16.gmra.mxu0 %v4572
      %v4700 = vpop.f32.mrf.mxu0
      %v4701 = vadd.f32 0.0, %v4700
      %v4702 = vpop.f32.mrf.mxu0
      %v4703 = vpop.f32.mrf.mxu0
      %v4704 = vadd.f32 0.0, %v4703
      %v4705 = vpop.f32.mrf.mxu0
      %4706 = vmatprep.mubr.bf16.mxu0 0
      %4707 = vmatmul.mubr.bf16.gmra.mxu0 %v4573
      %v4708 = vpop.f32.mrf.mxu0
      %v4709 = vadd.f32 0.0, %v4708
      %v4710 = vpop.f32.mrf.mxu0
      %v4711 = vpop.f32.mrf.mxu0
      %v4712 = vadd.f32 0.0, %v4711
      %v4713 = vpop.f32.mrf.mxu0
      %4714 = vmatprep.mubr.bf16.mxu0 0
      %4715 = vmatmul.mubr.bf16.gmra.mxu0 %v4574
      %v4716 = vpop.f32.mrf.mxu0
      %v4717 = vadd.f32 0.0, %v4716
      %v4718 = vpop.f32.mrf.mxu0
      %v4719 = vpop.f32.mrf.mxu0
      %v4720 = vadd.f32 0.0, %v4719
      %v4721 = vpop.f32.mrf.mxu0
      %4722 = vmatprep.mubr.bf16.mxu0 0
      %4723 = vmatmul.mubr.bf16.gmra.mxu0 %v4575
      %v4724 = vpop.f32.mrf.mxu0
      %v4725 = vadd.f32 0.0, %v4724
      %v4726 = vpop.f32.mrf.mxu0
      %v4727 = vpop.f32.mrf.mxu0
      %v4728 = vadd.f32 0.0, %v4727
      %v4729 = vpop.f32.mrf.mxu0
      %4730 = vmatprep.mubr.bf16.mxu0 0
      %4731 = vmatmul.mubr.bf16.gmra.mxu0 %v4576
      %v4732 = vpop.f32.mrf.mxu0
      %v4733 = vadd.f32 0.0, %v4732
      %v4734 = vpop.f32.mrf.mxu0
      %v4735 = vpop.f32.mrf.mxu0
      %v4736 = vadd.f32 0.0, %v4735
      %v4737 = vpop.f32.mrf.mxu0
      %4738 = vmatprep.mubr.bf16.mxu0 0
      %4739 = vmatmul.mubr.bf16.gmra.mxu0 %v4577
      %v4740 = vpop.f32.mrf.mxu0
      %v4741 = vadd.f32 0.0, %v4740
      %v4742 = vpop.f32.mrf.mxu0
      %v4743 = vpop.f32.mrf.mxu0
      %v4744 = vadd.f32 0.0, %v4743
      %v4745 = vpop.f32.mrf.mxu0
      %4746 = vmatprep.mubr.bf16.mxu0 0
      %4747 = vmatmul.mubr.bf16.gmra.mxu0 %v4578
      %v4748 = vpop.f32.mrf.mxu0
      %v4749 = vadd.f32 0.0, %v4748
      %v4750 = vpop.f32.mrf.mxu0
      %v4751 = vpop.f32.mrf.mxu0
      %v4752 = vadd.f32 0.0, %v4751
      %v4753 = vpop.f32.mrf.mxu0
      %4754 = vmatprep.mubr.bf16.mxu0 0
      %4755 = vmatmul.mubr.bf16.gmra.mxu0 %v4579
      %v4756 = vpop.f32.mrf.mxu0
      %v4757 = vadd.f32 0.0, %v4756
      %v4758 = vpop.f32.mrf.mxu0
      %v4759 = vpop.f32.mrf.mxu0
      %v4760 = vadd.f32 0.0, %v4759
      %v4761 = vpop.f32.mrf.mxu0
      %4762 = vmatprep.mubr.bf16.mxu0 0
      %4763 = vmatmul.mubr.bf16.gmra.mxu0 %v4580
      %v4764 = vpop.f32.mrf.mxu0
      %v4765 = vadd.f32 0.0, %v4764
      %v4766 = vpop.f32.mrf.mxu0
      %v4767 = vpop.f32.mrf.mxu0
      %v4768 = vadd.f32 0.0, %v4767
      %v4769 = vpop.f32.mrf.mxu0
      %4770 = vmatprep.mubr.bf16.mxu0 0
      %4771 = vmatmul.mubr.bf16.gmra.mxu0 %v4581
      %v4772 = vpop.f32.mrf.mxu0
      %v4773 = vadd.f32 0.0, %v4772
      %v4774 = vpop.f32.mrf.mxu0
      %v4775 = vpop.f32.mrf.mxu0
      %v4776 = vadd.f32 0.0, %v4775
      %v4777 = vpop.f32.mrf.mxu0
      %4778 = vmatprep.mubr.bf16.mxu0 0
      %4779 = vmatmul.mubr.bf16.gmra.mxu0 %v4582
      %v4780 = vpop.f32.mrf.mxu0
      %v4781 = vadd.f32 0.0, %v4780
      %v4782 = vpop.f32.mrf.mxu0
      %v4783 = vpop.f32.mrf.mxu0
      %v4784 = vadd.f32 0.0, %v4783
      %v4785 = vpop.f32.mrf.mxu0
      %4786 = vmatprep.mubr.bf16.mxu0 0
      %4787 = vmatmul.mubr.bf16.gmra.mxu0 %v4583
      %v4788 = vpop.f32.mrf.mxu0
      %v4789 = vadd.f32 0.0, %v4788
      %v4790 = vpop.f32.mrf.mxu0
      %v4791 = vpop.f32.mrf.mxu0
      %v4792 = vadd.f32 0.0, %v4791
      %v4793 = vpop.f32.mrf.mxu0
      %4794 = vmatprep.mubr.bf16.mxu0 0
      %4795 = vmatmul.mubr.bf16.gmra.mxu0 %v4584
      %v4796 = vpop.f32.mrf.mxu0
      %v4797 = vadd.f32 0.0, %v4796
      %v4798 = vpop.f32.mrf.mxu0
      %v4799 = vpop.f32.mrf.mxu0
      %v4800 = vadd.f32 0.0, %v4799
      %v4801 = vpop.f32.mrf.mxu0
      %4802 = vmatprep.mubr.bf16.mxu0 0
      %4803 = vmatmul.mubr.bf16.gmra.mxu0 %v4585
      %v4804 = vpop.f32.mrf.mxu0
      %v4805 = vadd.f32 0.0, %v4804
      %v4806 = vpop.f32.mrf.mxu0
      %v4807 = vpop.f32.mrf.mxu0
      %v4808 = vadd.f32 0.0, %v4807
      %v4809 = vpop.f32.mrf.mxu0
      %4810 = vdwg.mxu0
      %v4811 = vadd.f32 %v4458, %v4685
      %v4812 = vadd.f32 %v4459, %v4688
      %v4813 = vadd.f32 %v4460, %v4693
      %v4814 = vadd.f32 %v4461, %v4696
      %v4815 = vadd.f32 %v4462, %v4701
      %v4816 = vadd.f32 %v4463, %v4704
      %v4817 = vadd.f32 %v4464, %v4709
      %v4818 = vadd.f32 %v4465, %v4712
      %v4819 = vadd.f32 %v4466, %v4717
      %v4820 = vadd.f32 %v4467, %v4720
      %v4821 = vadd.f32 %v4468, %v4725
      %v4822 = vadd.f32 %v4469, %v4728
      %v4823 = vadd.f32 %v4470, %v4733
      %v4824 = vadd.f32 %v4471, %v4736
      %v4825 = vadd.f32 %v4472, %v4741
      %v4826 = vadd.f32 %v4473, %v4744
      %v4827 = vadd.f32 %v4474, %v4749
      %v4828 = vadd.f32 %v4475, %v4752
      %v4829 = vadd.f32 %v4476, %v4757
      %v4830 = vadd.f32 %v4477, %v4760
      %v4831 = vadd.f32 %v4478, %v4765
      %v4832 = vadd.f32 %v4479, %v4768
      %v4833 = vadd.f32 %v4480, %v4773
      %v4834 = vadd.f32 %v4481, %v4776
      %v4835 = vadd.f32 %v4482, %v4781
      %v4836 = vadd.f32 %v4483, %v4784
      %v4837 = vadd.f32 %v4484, %v4789
      %v4838 = vadd.f32 %v4485, %v4792
      %v4839 = vadd.f32 %v4486, %v4797
      %v4840 = vadd.f32 %v4487, %v4800
      %v4841 = vadd.f32 %v4488, %v4805
      %v4842 = vadd.f32 %v4489, %v4808
      %4843 = vst [vmem:[#allocation4] sm:$0xff] %v4811
      %4844 = vst [vmem:[#allocation4 + $0x8] sm:$0xff] %v4812
      %4845 = vst [vmem:[#allocation4 + $0x10] sm:$0xff] %v4813
      %4846 = vst [vmem:[#allocation4 + $0x18] sm:$0xff] %v4814
      %4847 = vst [vmem:[#allocation4 + $0x20] sm:$0xff] %v4815
      %4848 = vst [vmem:[#allocation4 + $0x28] sm:$0xff] %v4816
      %4849 = vst [vmem:[#allocation4 + $0x30] sm:$0xff] %v4817
      %4850 = vst [vmem:[#allocation4 + $0x38] sm:$0xff] %v4818
      %4851 = vst [vmem:[#allocation4 + $0x40] sm:$0xff] %v4819
      %4852 = vst [vmem:[#allocation4 + $0x48] sm:$0xff] %v4820
      %4853 = vst [vmem:[#allocation4 + $0x50] sm:$0xff] %v4821
      %4854 = vst [vmem:[#allocation4 + $0x58] sm:$0xff] %v4822
      %4855 = vst [vmem:[#allocation4 + $0x60] sm:$0xff] %v4823
      %4856 = vst [vmem:[#allocation4 + $0x68] sm:$0xff] %v4824
      %4857 = vst [vmem:[#allocation4 + $0x70] sm:$0xff] %v4825
      %4858 = vst [vmem:[#allocation4 + $0x78] sm:$0xff] %v4826
      %4859 = vst [vmem:[#allocation4 + $0x80] sm:$0xff] %v4827
      %4860 = vst [vmem:[#allocation4 + $0x88] sm:$0xff] %v4828
      %4861 = vst [vmem:[#allocation4 + $0x90] sm:$0xff] %v4829
      %4862 = vst [vmem:[#allocation4 + $0x98] sm:$0xff] %v4830
      %4863 = vst [vmem:[#allocation4 + $0xa0] sm:$0xff] %v4831
      %4864 = vst [vmem:[#allocation4 + $0xa8] sm:$0xff] %v4832
      %4865 = vst [vmem:[#allocation4 + $0xb0] sm:$0xff] %v4833
      %4866 = vst [vmem:[#allocation4 + $0xb8] sm:$0xff] %v4834
      %4867 = vst [vmem:[#allocation4 + $0xc0] sm:$0xff] %v4835
      %4868 = vst [vmem:[#allocation4 + $0xc8] sm:$0xff] %v4836
      %4869 = vst [vmem:[#allocation4 + $0xd0] sm:$0xff] %v4837
      %4870 = vst [vmem:[#allocation4 + $0xd8] sm:$0xff] %v4838
      %4871 = vst [vmem:[#allocation4 + $0xe0] sm:$0xff] %v4839
      %4872 = vst [vmem:[#allocation4 + $0xe8] sm:$0xff] %v4840
      %4873 = vst [vmem:[#allocation4 + $0xf0] sm:$0xff] %v4841
      %4874 = vst [vmem:[#allocation4 + $0xf8] sm:$0xff] %v4842
      %v4875 = vld [vmem:[#allocation3] sm:$0xf]
      %v4876 = vld [vmem:[#allocation3 + $0x4] sm:$0xf]
      %v4877 = vld [vmem:[#allocation3 + $0x8] sm:$0x1]
      %v4878 = vld [vmem:[#allocation3 + $0xc] sm:$0xf]
      %v4879 = vld [vmem:[#allocation3 + $0x10] sm:$0xf]
      %v4880 = vld [vmem:[#allocation3 + $0x14] sm:$0x1]
      %v4881 = vld [vmem:[#allocation3 + $0x18] sm:$0xf]
      %v4882 = vld [vmem:[#allocation3 + $0x1c] sm:$0xf]
      %v4883 = vld [vmem:[#allocation3 + $0x20] sm:$0x1]
      %v4884 = vld [vmem:[#allocation3 + $0x24] sm:$0xf]
      %v4885 = vld [vmem:[#allocation3 + $0x28] sm:$0xf]
      %v4886 = vld [vmem:[#allocation3 + $0x2c] sm:$0x1]
      %v4887 = vld [vmem:[#allocation3 + $0x30] sm:$0xf]
      %v4888 = vld [vmem:[#allocation3 + $0x34] sm:$0xf]
      %v4889 = vld [vmem:[#allocation3 + $0x38] sm:$0x1]
      %v4890 = vld [vmem:[#allocation3 + $0x3c] sm:$0xf]
      %v4891 = vld [vmem:[#allocation3 + $0x40] sm:$0xf]
      %v4892 = vld [vmem:[#allocation3 + $0x44] sm:$0x1]
      %v4893 = vld [vmem:[#allocation3 + $0x48] sm:$0xf]
      %v4894 = vld [vmem:[#allocation3 + $0x4c] sm:$0xf]
      %v4895 = vld [vmem:[#allocation3 + $0x50] sm:$0x1]
      %v4896 = vld [vmem:[#allocation3 + $0x54] sm:$0xf]
      %v4897 = vld [vmem:[#allocation3 + $0x58] sm:$0xf]
      %v4898 = vld [vmem:[#allocation3 + $0x5c] sm:$0x1]
      %v4899 = vld [vmem:[#allocation3 + $0x60] sm:$0xf]
      %v4900 = vld [vmem:[#allocation3 + $0x64] sm:$0xf]
      %v4901 = vld [vmem:[#allocation3 + $0x68] sm:$0x1]
      %v4902 = vld [vmem:[#allocation3 + $0x6c] sm:$0xf]
      %v4903 = vld [vmem:[#allocation3 + $0x70] sm:$0xf]
      %v4904 = vld [vmem:[#allocation3 + $0x74] sm:$0x1]
      %v4905 = vld [vmem:[#allocation3 + $0x78] sm:$0xf]
      %v4906 = vld [vmem:[#allocation3 + $0x7c] sm:$0xf]
      %v4907 = vld [vmem:[#allocation3 + $0x80] sm:$0x1]
      %v4908 = vld [vmem:[#allocation3 + $0x84] sm:$0xf]
      %v4909 = vld [vmem:[#allocation3 + $0x88] sm:$0xf]
      %v4910 = vld [vmem:[#allocation3 + $0x8c] sm:$0x1]
      %v4911 = vld [vmem:[#allocation3 + $0x90] sm:$0xf]
      %v4912 = vld [vmem:[#allocation3 + $0x94] sm:$0xf]
      %v4913 = vld [vmem:[#allocation3 + $0x98] sm:$0x1]
      %v4914 = vld [vmem:[#allocation3 + $0x9c] sm:$0xf]
      %v4915 = vld [vmem:[#allocation3 + $0xa0] sm:$0xf]
      %v4916 = vld [vmem:[#allocation3 + $0xa4] sm:$0x1]
      %v4917 = vld [vmem:[#allocation3 + $0xa8] sm:$0xf]
      %v4918 = vld [vmem:[#allocation3 + $0xac] sm:$0xf]
      %v4919 = vld [vmem:[#allocation3 + $0xb0] sm:$0x1]
      %v4920 = vld [vmem:[#allocation3 + $0xb4] sm:$0xf]
      %v4921 = vld [vmem:[#allocation3 + $0xb8] sm:$0xf]
      %v4922 = vld [vmem:[#allocation3 + $0xbc] sm:$0x1]
      %v4924 = vshrl.u32 %v4875, 16
      %v4926 = vrot.slane %v4924, 4
      %v4927 = vshll.u32 %v4875, 16
      %v4929 = vrot.slane %v4927, 5
      %v4930 = vor.u32 %v4926, %v4929
      %v4931 = vrot.slane %v4930, 4
      %v4933 = vshll.u32 %v4876, 16
      %v4935 = vrot.slane %v4933, 5
      %v4936 = vsel %vm341, %v4931, %v4935
      %v4937 = vshrl.u32 %v4876, 16
      %v4939 = vrot.slane %v4937, 4
      %v4940 = vor.u32 %v4939, %v4935
      %v4941 = vrot.slane %v4940, 4
      %v4943 = vshll.u32 %v4877, 16
      %v4945 = vrot.slane %v4943, 5
      %v4946 = vsel %vm341, %v4941, %v4945
      %v4948 = vshrl.u32 %v4878, 16
      %v4950 = vrot.slane %v4948, 4
      %v4951 = vshll.u32 %v4878, 16
      %v4953 = vrot.slane %v4951, 5
      %v4954 = vor.u32 %v4950, %v4953
      %v4955 = vrot.slane %v4954, 4
      %v4957 = vshll.u32 %v4879, 16
      %v4959 = vrot.slane %v4957, 5
      %v4960 = vsel %vm341, %v4955, %v4959
      %v4961 = vshrl.u32 %v4879, 16
      %v4963 = vrot.slane %v4961, 4
      %v4964 = vor.u32 %v4963, %v4959
      %v4965 = vrot.slane %v4964, 4
      %v4967 = vshll.u32 %v4880, 16
      %v4969 = vrot.slane %v4967, 5
      %v4970 = vsel %vm341, %v4965, %v4969
      %v4972 = vshrl.u32 %v4881, 16
      %v4974 = vrot.slane %v4972, 4
      %v4975 = vshll.u32 %v4881, 16
      %v4977 = vrot.slane %v4975, 5
      %v4978 = vor.u32 %v4974, %v4977
      %v4979 = vrot.slane %v4978, 4
      %v4981 = vshll.u32 %v4882, 16
      %v4983 = vrot.slane %v4981, 5
      %v4984 = vsel %vm341, %v4979, %v4983
      %v4985 = vshrl.u32 %v4882, 16
      %v4987 = vrot.slane %v4985, 4
      %v4988 = vor.u32 %v4987, %v4983
      %v4989 = vrot.slane %v4988, 4
      %v4991 = vshll.u32 %v4883, 16
      %v4993 = vrot.slane %v4991, 5
      %v4994 = vsel %vm341, %v4989, %v4993
      %v4996 = vshrl.u32 %v4884, 16
      %v4998 = vrot.slane %v4996, 4
      %v4999 = vshll.u32 %v4884, 16
      %v5001 = vrot.slane %v4999, 5
      %v5002 = vor.u32 %v4998, %v5001
      %v5003 = vrot.slane %v5002, 4
      %v5005 = vshll.u32 %v4885, 16
      %v5007 = vrot.slane %v5005, 5
      %v5008 = vsel %vm341, %v5003, %v5007
      %v5009 = vshrl.u32 %v4885, 16
      %v5011 = vrot.slane %v5009, 4
      %v5012 = vor.u32 %v5011, %v5007
      %v5013 = vrot.slane %v5012, 4
      %v5015 = vshll.u32 %v4886, 16
      %v5017 = vrot.slane %v5015, 5
      %v5018 = vsel %vm341, %v5013, %v5017
      %v5020 = vshrl.u32 %v4887, 16
      %v5022 = vrot.slane %v5020, 4
      %v5023 = vshll.u32 %v4887, 16
      %v5025 = vrot.slane %v5023, 5
      %v5026 = vor.u32 %v5022, %v5025
      %v5027 = vrot.slane %v5026, 4
      %v5029 = vshll.u32 %v4888, 16
      %v5031 = vrot.slane %v5029, 5
      %v5032 = vsel %vm341, %v5027, %v5031
      %v5033 = vshrl.u32 %v4888, 16
      %v5035 = vrot.slane %v5033, 4
      %v5036 = vor.u32 %v5035, %v5031
      %v5037 = vrot.slane %v5036, 4
      %v5039 = vshll.u32 %v4889, 16
      %v5041 = vrot.slane %v5039, 5
      %v5042 = vsel %vm341, %v5037, %v5041
      %v5044 = vshrl.u32 %v4890, 16
      %v5046 = vrot.slane %v5044, 4
      %v5047 = vshll.u32 %v4890, 16
      %v5049 = vrot.slane %v5047, 5
      %v5050 = vor.u32 %v5046, %v5049
      %v5051 = vrot.slane %v5050, 4
      %v5053 = vshll.u32 %v4891, 16
      %v5055 = vrot.slane %v5053, 5
      %v5056 = vsel %vm341, %v5051, %v5055
      %v5057 = vshrl.u32 %v4891, 16
      %v5059 = vrot.slane %v5057, 4
      %v5060 = vor.u32 %v5059, %v5055
      %v5061 = vrot.slane %v5060, 4
      %v5063 = vshll.u32 %v4892, 16
      %v5065 = vrot.slane %v5063, 5
      %v5066 = vsel %vm341, %v5061, %v5065
      %v5068 = vshrl.u32 %v4893, 16
      %v5070 = vrot.slane %v5068, 4
      %v5071 = vshll.u32 %v4893, 16
      %v5073 = vrot.slane %v5071, 5
      %v5074 = vor.u32 %v5070, %v5073
      %v5075 = vrot.slane %v5074, 4
      %v5077 = vshll.u32 %v4894, 16
      %v5079 = vrot.slane %v5077, 5
      %v5080 = vsel %vm341, %v5075, %v5079
      %v5081 = vshrl.u32 %v4894, 16
      %v5083 = vrot.slane %v5081, 4
      %v5084 = vor.u32 %v5083, %v5079
      %v5085 = vrot.slane %v5084, 4
      %v5087 = vshll.u32 %v4895, 16
      %v5089 = vrot.slane %v5087, 5
      %v5090 = vsel %vm341, %v5085, %v5089
      %v5092 = vshrl.u32 %v4896, 16
      %v5094 = vrot.slane %v5092, 4
      %v5095 = vshll.u32 %v4896, 16
      %v5097 = vrot.slane %v5095, 5
      %v5098 = vor.u32 %v5094, %v5097
      %v5099 = vrot.slane %v5098, 4
      %v5101 = vshll.u32 %v4897, 16
      %v5103 = vrot.slane %v5101, 5
      %v5104 = vsel %vm341, %v5099, %v5103
      %v5105 = vshrl.u32 %v4897, 16
      %v5107 = vrot.slane %v5105, 4
      %v5108 = vor.u32 %v5107, %v5103
      %v5109 = vrot.slane %v5108, 4
      %v5111 = vshll.u32 %v4898, 16
      %v5113 = vrot.slane %v5111, 5
      %v5114 = vsel %vm341, %v5109, %v5113
      %v5116 = vshrl.u32 %v4899, 16
      %v5118 = vrot.slane %v5116, 4
      %v5119 = vshll.u32 %v4899, 16
      %v5121 = vrot.slane %v5119, 5
      %v5122 = vor.u32 %v5118, %v5121
      %v5123 = vrot.slane %v5122, 4
      %v5125 = vshll.u32 %v4900, 16
      %v5127 = vrot.slane %v5125, 5
      %v5128 = vsel %vm341, %v5123, %v5127
      %v5129 = vshrl.u32 %v4900, 16
      %v5131 = vrot.slane %v5129, 4
      %v5132 = vor.u32 %v5131, %v5127
      %v5133 = vrot.slane %v5132, 4
      %v5135 = vshll.u32 %v4901, 16
      %v5137 = vrot.slane %v5135, 5
      %v5138 = vsel %vm341, %v5133, %v5137
      %v5140 = vshrl.u32 %v4902, 16
      %v5142 = vrot.slane %v5140, 4
      %v5143 = vshll.u32 %v4902, 16
      %v5145 = vrot.slane %v5143, 5
      %v5146 = vor.u32 %v5142, %v5145
      %v5147 = vrot.slane %v5146, 4
      %v5149 = vshll.u32 %v4903, 16
      %v5151 = vrot.slane %v5149, 5
      %v5152 = vsel %vm341, %v5147, %v5151
      %v5153 = vshrl.u32 %v4903, 16
      %v5155 = vrot.slane %v5153, 4
      %v5156 = vor.u32 %v5155, %v5151
      %v5157 = vrot.slane %v5156, 4
      %v5159 = vshll.u32 %v4904, 16
      %v5161 = vrot.slane %v5159, 5
      %v5162 = vsel %vm341, %v5157, %v5161
      %v5164 = vshrl.u32 %v4905, 16
      %v5166 = vrot.slane %v5164, 4
      %v5167 = vshll.u32 %v4905, 16
      %v5169 = vrot.slane %v5167, 5
      %v5170 = vor.u32 %v5166, %v5169
      %v5171 = vrot.slane %v5170, 4
      %v5173 = vshll.u32 %v4906, 16
      %v5175 = vrot.slane %v5173, 5
      %v5176 = vsel %vm341, %v5171, %v5175
      %v5177 = vshrl.u32 %v4906, 16
      %v5179 = vrot.slane %v5177, 4
      %v5180 = vor.u32 %v5179, %v5175
      %v5181 = vrot.slane %v5180, 4
      %v5183 = vshll.u32 %v4907, 16
      %v5185 = vrot.slane %v5183, 5
      %v5186 = vsel %vm341, %v5181, %v5185
      %v5188 = vshrl.u32 %v4908, 16
      %v5190 = vrot.slane %v5188, 4
      %v5191 = vshll.u32 %v4908, 16
      %v5193 = vrot.slane %v5191, 5
      %v5194 = vor.u32 %v5190, %v5193
      %v5195 = vrot.slane %v5194, 4
      %v5197 = vshll.u32 %v4909, 16
      %v5199 = vrot.slane %v5197, 5
      %v5200 = vsel %vm341, %v5195, %v5199
      %v5201 = vshrl.u32 %v4909, 16
      %v5203 = vrot.slane %v5201, 4
      %v5204 = vor.u32 %v5203, %v5199
      %v5205 = vrot.slane %v5204, 4
      %v5207 = vshll.u32 %v4910, 16
      %v5209 = vrot.slane %v5207, 5
      %v5210 = vsel %vm341, %v5205, %v5209
      %v5212 = vshrl.u32 %v4911, 16
      %v5214 = vrot.slane %v5212, 4
      %v5215 = vshll.u32 %v4911, 16
      %v5217 = vrot.slane %v5215, 5
      %v5218 = vor.u32 %v5214, %v5217
      %v5219 = vrot.slane %v5218, 4
      %v5221 = vshll.u32 %v4912, 16
      %v5223 = vrot.slane %v5221, 5
      %v5224 = vsel %vm341, %v5219, %v5223
      %v5225 = vshrl.u32 %v4912, 16
      %v5227 = vrot.slane %v5225, 4
      %v5228 = vor.u32 %v5227, %v5223
      %v5229 = vrot.slane %v5228, 4
      %v5231 = vshll.u32 %v4913, 16
      %v5233 = vrot.slane %v5231, 5
      %v5234 = vsel %vm341, %v5229, %v5233
      %v5236 = vshrl.u32 %v4914, 16
      %v5238 = vrot.slane %v5236, 4
      %v5239 = vshll.u32 %v4914, 16
      %v5241 = vrot.slane %v5239, 5
      %v5242 = vor.u32 %v5238, %v5241
      %v5243 = vrot.slane %v5242, 4
      %v5245 = vshll.u32 %v4915, 16
      %v5247 = vrot.slane %v5245, 5
      %v5248 = vsel %vm341, %v5243, %v5247
      %v5249 = vshrl.u32 %v4915, 16
      %v5251 = vrot.slane %v5249, 4
      %v5252 = vor.u32 %v5251, %v5247
      %v5253 = vrot.slane %v5252, 4
      %v5255 = vshll.u32 %v4916, 16
      %v5257 = vrot.slane %v5255, 5
      %v5258 = vsel %vm341, %v5253, %v5257
      %v5260 = vshrl.u32 %v4917, 16
      %v5262 = vrot.slane %v5260, 4
      %v5263 = vshll.u32 %v4917, 16
      %v5265 = vrot.slane %v5263, 5
      %v5266 = vor.u32 %v5262, %v5265
      %v5267 = vrot.slane %v5266, 4
      %v5269 = vshll.u32 %v4918, 16
      %v5271 = vrot.slane %v5269, 5
      %v5272 = vsel %vm341, %v5267, %v5271
      %v5273 = vshrl.u32 %v4918, 16
      %v5275 = vrot.slane %v5273, 4
      %v5276 = vor.u32 %v5275, %v5271
      %v5277 = vrot.slane %v5276, 4
      %v5279 = vshll.u32 %v4919, 16
      %v5281 = vrot.slane %v5279, 5
      %v5282 = vsel %vm341, %v5277, %v5281
      %v5284 = vshrl.u32 %v4920, 16
      %v5286 = vrot.slane %v5284, 4
      %v5287 = vshll.u32 %v4920, 16
      %v5289 = vrot.slane %v5287, 5
      %v5290 = vor.u32 %v5286, %v5289
      %v5291 = vrot.slane %v5290, 4
      %v5293 = vshll.u32 %v4921, 16
      %v5295 = vrot.slane %v5293, 5
      %v5296 = vsel %vm341, %v5291, %v5295
      %v5297 = vshrl.u32 %v4921, 16
      %v5299 = vrot.slane %v5297, 4
      %v5300 = vor.u32 %v5299, %v5295
      %v5301 = vrot.slane %v5300, 4
      %v5303 = vshll.u32 %v4922, 16
      %v5305 = vrot.slane %v5303, 5
      %v5306 = vsel %vm341, %v5301, %v5305
      %v5307 = vld [vmem:[#allocation4] sm:$0xff]
      %v5308 = vld [vmem:[#allocation4 + $0x8] sm:$0xff]
      %v5309 = vld [vmem:[#allocation4 + $0x10] sm:$0xff]
      %v5310 = vld [vmem:[#allocation4 + $0x18] sm:$0xff]
      %v5311 = vld [vmem:[#allocation4 + $0x20] sm:$0xff]
      %v5312 = vld [vmem:[#allocation4 + $0x28] sm:$0xff]
      %v5313 = vld [vmem:[#allocation4 + $0x30] sm:$0xff]
      %v5314 = vld [vmem:[#allocation4 + $0x38] sm:$0xff]
      %v5315 = vld [vmem:[#allocation4 + $0x40] sm:$0xff]
      %v5316 = vld [vmem:[#allocation4 + $0x48] sm:$0xff]
      %v5317 = vld [vmem:[#allocation4 + $0x50] sm:$0xff]
      %v5318 = vld [vmem:[#allocation4 + $0x58] sm:$0xff]
      %v5319 = vld [vmem:[#allocation4 + $0x60] sm:$0xff]
      %v5320 = vld [vmem:[#allocation4 + $0x68] sm:$0xff]
      %v5321 = vld [vmem:[#allocation4 + $0x70] sm:$0xff]
      %v5322 = vld [vmem:[#allocation4 + $0x78] sm:$0xff]
      %v5323 = vld [vmem:[#allocation4 + $0x80] sm:$0xff]
      %v5324 = vld [vmem:[#allocation4 + $0x88] sm:$0xff]
      %v5325 = vld [vmem:[#allocation4 + $0x90] sm:$0xff]
      %v5326 = vld [vmem:[#allocation4 + $0x98] sm:$0xff]
      %v5327 = vld [vmem:[#allocation4 + $0xa0] sm:$0xff]
      %v5328 = vld [vmem:[#allocation4 + $0xa8] sm:$0xff]
      %v5329 = vld [vmem:[#allocation4 + $0xb0] sm:$0xff]
      %v5330 = vld [vmem:[#allocation4 + $0xb8] sm:$0xff]
      %v5331 = vld [vmem:[#allocation4 + $0xc0] sm:$0xff]
      %v5332 = vld [vmem:[#allocation4 + $0xc8] sm:$0xff]
      %v5333 = vld [vmem:[#allocation4 + $0xd0] sm:$0xff]
      %v5334 = vld [vmem:[#allocation4 + $0xd8] sm:$0xff]
      %v5335 = vld [vmem:[#allocation4 + $0xe0] sm:$0xff]
      %v5336 = vld [vmem:[#allocation4 + $0xe8] sm:$0xff]
      %v5337 = vld [vmem:[#allocation4 + $0xf0] sm:$0xff]
      %v5338 = vld [vmem:[#allocation4 + $0xf8] sm:$0xff]
      %s5339 = scalar_lea.vmem %s3, 64
      %v5340 = vld [vmem:[%s5339] sm:$0xf]
      %v5341 = vld [vmem:[%s5339 + $0x4] sm:$0xf]
      %v5342 = vld [vmem:[%s5339 + $0x8] sm:$0xf]
      %v5343 = vld [vmem:[%s5339 + $0xc] sm:$0xf]
      %v5344 = vld [vmem:[%s5339 + $0x10] sm:$0xf]
      %v5345 = vld [vmem:[%s5339 + $0x14] sm:$0xf]
      %v5346 = vld [vmem:[%s5339 + $0x18] sm:$0xf]
      %v5347 = vld [vmem:[%s5339 + $0x1c] sm:$0xf]
      %v5348 = vld [vmem:[%s5339 + $0x20] sm:$0xf]
      %v5349 = vld [vmem:[%s5339 + $0x24] sm:$0xf]
      %v5350 = vld [vmem:[%s5339 + $0x28] sm:$0xf]
      %v5351 = vld [vmem:[%s5339 + $0x2c] sm:$0xf]
      %v5352 = vld [vmem:[%s5339 + $0x30] sm:$0xf]
      %v5353 = vld [vmem:[%s5339 + $0x34] sm:$0xf]
      %v5354 = vld [vmem:[%s5339 + $0x38] sm:$0xf]
      %v5355 = vld [vmem:[%s5339 + $0x3c] sm:$0xf]
      %v5356 = vunpack.c.l.b16 %v4936
      %v5357 = vunpack.c.l.b16 %v4946
      %v5358 = vunpack.c.l.b16 %v4960
      %v5359 = vunpack.c.l.b16 %v4970
      %v5360 = vunpack.c.l.b16 %v4984
      %v5361 = vunpack.c.l.b16 %v4994
      %v5362 = vunpack.c.l.b16 %v5008
      %v5363 = vunpack.c.l.b16 %v5018
      %v5364 = vunpack.c.l.b16 %v5032
      %v5365 = vunpack.c.l.b16 %v5042
      %v5366 = vunpack.c.l.b16 %v5056
      %v5367 = vunpack.c.l.b16 %v5066
      %v5368 = vunpack.c.l.b16 %v5080
      %v5369 = vunpack.c.l.b16 %v5090
      %v5370 = vunpack.c.l.b16 %v5104
      %v5371 = vunpack.c.l.b16 %v5114
      %v5372 = vunpack.c.l.b16 %v5128
      %v5373 = vunpack.c.l.b16 %v5138
      %v5374 = vunpack.c.l.b16 %v5152
      %v5375 = vunpack.c.l.b16 %v5162
      %v5376 = vunpack.c.l.b16 %v5176
      %v5377 = vunpack.c.l.b16 %v5186
      %v5378 = vunpack.c.l.b16 %v5200
      %v5379 = vunpack.c.l.b16 %v5210
      %v5380 = vunpack.c.l.b16 %v5224
      %v5381 = vunpack.c.l.b16 %v5234
      %v5382 = vunpack.c.l.b16 %v5248
      %v5383 = vunpack.c.l.b16 %v5258
      %v5384 = vunpack.c.l.b16 %v5272
      %v5385 = vunpack.c.l.b16 %v5282
      %v5386 = vunpack.c.l.b16 %v5296
      %v5387 = vunpack.c.l.b16 %v5306
      %v5388 = vpack.c.b16 %v5357, %v5356
      %v5389 = vpack.c.b16 %v5359, %v5358
      %v5390 = vpack.c.b16 %v5361, %v5360
      %v5391 = vpack.c.b16 %v5363, %v5362
      %v5392 = vpack.c.b16 %v5365, %v5364
      %v5393 = vpack.c.b16 %v5367, %v5366
      %v5394 = vpack.c.b16 %v5369, %v5368
      %v5395 = vpack.c.b16 %v5371, %v5370
      %v5396 = vpack.c.b16 %v5373, %v5372
      %v5397 = vpack.c.b16 %v5375, %v5374
      %v5398 = vpack.c.b16 %v5377, %v5376
      %v5399 = vpack.c.b16 %v5379, %v5378
      %v5400 = vpack.c.b16 %v5381, %v5380
      %v5401 = vpack.c.b16 %v5383, %v5382
      %v5402 = vpack.c.b16 %v5385, %v5384
      %v5403 = vpack.c.b16 %v5387, %v5386
      %v5436 = vunpack.c.l.b16 %v5340
      %v5437 = vunpack.c.l.b16 %v5341
      %v5438 = vunpack.c.l.b16 %v5342
      %v5439 = vunpack.c.l.b16 %v5343
      %v5440 = vunpack.c.l.b16 %v5344
      %v5441 = vunpack.c.l.b16 %v5345
      %v5442 = vunpack.c.l.b16 %v5346
      %v5443 = vunpack.c.l.b16 %v5347
      %v5444 = vunpack.c.l.b16 %v5348
      %v5445 = vunpack.c.l.b16 %v5349
      %v5446 = vunpack.c.l.b16 %v5350
      %v5447 = vunpack.c.l.b16 %v5351
      %v5448 = vunpack.c.l.b16 %v5352
      %v5449 = vunpack.c.l.b16 %v5353
      %v5450 = vunpack.c.l.b16 %v5354
      %v5451 = vunpack.c.l.b16 %v5355
      %v5452 = vpack.c.b16 %v5437, %v5436
      %v5453 = vpack.c.b16 %v5439, %v5438
      %v5454 = vpack.c.b16 %v5441, %v5440
      %v5455 = vpack.c.b16 %v5443, %v5442
      %v5456 = vpack.c.b16 %v5445, %v5444
      %v5457 = vpack.c.b16 %v5447, %v5446
      %v5458 = vpack.c.b16 %v5449, %v5448
      %v5459 = vpack.c.b16 %v5451, %v5450
      %5468 = vmatprep.subr.bf16.mxu0 0
      %5469 = vmatpush1.bf16.msra.mxu0 %v5459
      %5470 = vmatprep.subr.bf16.mxu0 0
      %5471 = vmatpush1.bf16.msra.mxu0 %v5458
      %5472 = vmatprep.subr.bf16.mxu0 0
      %5473 = vmatpush1.bf16.msra.mxu0 %v5457
      %5474 = vmatprep.subr.bf16.mxu0 0
      %5475 = vmatpush1.bf16.msra.mxu0 %v5456
      %5476 = vmatprep.subr.bf16.mxu0 0
      %5477 = vmatpush1.bf16.msra.mxu0 %v5455
      %5478 = vmatprep.subr.bf16.mxu0 0
      %5479 = vmatpush1.bf16.msra.mxu0 %v5454
      %5480 = vmatprep.subr.bf16.mxu0 0
      %5481 = vmatpush1.bf16.msra.mxu0 %v5453
      %5482 = vmatprep.subr.bf16.mxu0 0
      %5483 = vmatpush1.bf16.msra.mxu0 %v5452
      %5484 = vmatprep.subr.bf16.mxu0 0
      %5485 = vmatpush2.bf16.msra.mxu0 0
      %5486 = vmatprep.subr.bf16.mxu0 0
      %5487 = vmatpush2.bf16.msra.mxu0 0
      %5488 = vmatprep.subr.bf16.mxu0 0
      %5489 = vmatpush2.bf16.msra.mxu0 0
      %5490 = vmatprep.subr.bf16.mxu0 0
      %5491 = vmatpush2.bf16.msra.mxu0 0
      %5492 = vmatprep.subr.bf16.mxu0 0
      %5493 = vmatpush2.bf16.msra.mxu0 0
      %5494 = vmatprep.subr.bf16.mxu0 0
      %5495 = vmatpush2.bf16.msra.mxu0 0
      %5496 = vmatprep.subr.bf16.mxu0 0
      %5497 = vmatpush2.bf16.msra.mxu0 0
      %5498 = vmatprep.subr.bf16.mxu0 0
      %5499 = vmatpush2.bf16.msra.mxu0 0
      %5500 = vmatprep.mubr.bf16.mxu0 0
      %5501 = vmatmul.mubr.bf16.gmra.mxu0 %v5388
      %v5502 = vpop.f32.mrf.mxu0
      %v5503 = vadd.f32 0.0, %v5502
      %v5504 = vpop.f32.mrf.mxu0
      %v5505 = vpop.f32.mrf.mxu0
      %v5506 = vadd.f32 0.0, %v5505
      %v5507 = vpop.f32.mrf.mxu0
      %5508 = vmatprep.mubr.bf16.mxu0 0
      %5509 = vmatmul.mubr.bf16.gmra.mxu0 %v5389
      %v5510 = vpop.f32.mrf.mxu0
      %v5511 = vadd.f32 0.0, %v5510
      %v5512 = vpop.f32.mrf.mxu0
      %v5513 = vpop.f32.mrf.mxu0
      %v5514 = vadd.f32 0.0, %v5513
      %v5515 = vpop.f32.mrf.mxu0
      %5516 = vmatprep.mubr.bf16.mxu0 0
      %5517 = vmatmul.mubr.bf16.gmra.mxu0 %v5390
      %v5518 = vpop.f32.mrf.mxu0
      %v5519 = vadd.f32 0.0, %v5518
      %v5520 = vpop.f32.mrf.mxu0
      %v5521 = vpop.f32.mrf.mxu0
      %v5522 = vadd.f32 0.0, %v5521
      %v5523 = vpop.f32.mrf.mxu0
      %5524 = vmatprep.mubr.bf16.mxu0 0
      %5525 = vmatmul.mubr.bf16.gmra.mxu0 %v5391
      %v5526 = vpop.f32.mrf.mxu0
      %v5527 = vadd.f32 0.0, %v5526
      %v5528 = vpop.f32.mrf.mxu0
      %v5529 = vpop.f32.mrf.mxu0
      %v5530 = vadd.f32 0.0, %v5529
      %v5531 = vpop.f32.mrf.mxu0
      %5532 = vmatprep.mubr.bf16.mxu0 0
      %5533 = vmatmul.mubr.bf16.gmra.mxu0 %v5392
      %v5534 = vpop.f32.mrf.mxu0
      %v5535 = vadd.f32 0.0, %v5534
      %v5536 = vpop.f32.mrf.mxu0
      %v5537 = vpop.f32.mrf.mxu0
      %v5538 = vadd.f32 0.0, %v5537
      %v5539 = vpop.f32.mrf.mxu0
      %5540 = vmatprep.mubr.bf16.mxu0 0
      %5541 = vmatmul.mubr.bf16.gmra.mxu0 %v5393
      %v5542 = vpop.f32.mrf.mxu0
      %v5543 = vadd.f32 0.0, %v5542
      %v5544 = vpop.f32.mrf.mxu0
      %v5545 = vpop.f32.mrf.mxu0
      %v5546 = vadd.f32 0.0, %v5545
      %v5547 = vpop.f32.mrf.mxu0
      %5548 = vmatprep.mubr.bf16.mxu0 0
      %5549 = vmatmul.mubr.bf16.gmra.mxu0 %v5394
      %v5550 = vpop.f32.mrf.mxu0
      %v5551 = vadd.f32 0.0, %v5550
      %v5552 = vpop.f32.mrf.mxu0
      %v5553 = vpop.f32.mrf.mxu0
      %v5554 = vadd.f32 0.0, %v5553
      %v5555 = vpop.f32.mrf.mxu0
      %5556 = vmatprep.mubr.bf16.mxu0 0
      %5557 = vmatmul.mubr.bf16.gmra.mxu0 %v5395
      %v5558 = vpop.f32.mrf.mxu0
      %v5559 = vadd.f32 0.0, %v5558
      %v5560 = vpop.f32.mrf.mxu0
      %v5561 = vpop.f32.mrf.mxu0
      %v5562 = vadd.f32 0.0, %v5561
      %v5563 = vpop.f32.mrf.mxu0
      %5564 = vmatprep.mubr.bf16.mxu0 0
      %5565 = vmatmul.mubr.bf16.gmra.mxu0 %v5396
      %v5566 = vpop.f32.mrf.mxu0
      %v5567 = vadd.f32 0.0, %v5566
      %v5568 = vpop.f32.mrf.mxu0
      %v5569 = vpop.f32.mrf.mxu0
      %v5570 = vadd.f32 0.0, %v5569
      %v5571 = vpop.f32.mrf.mxu0
      %5572 = vmatprep.mubr.bf16.mxu0 0
      %5573 = vmatmul.mubr.bf16.gmra.mxu0 %v5397
      %v5574 = vpop.f32.mrf.mxu0
      %v5575 = vadd.f32 0.0, %v5574
      %v5576 = vpop.f32.mrf.mxu0
      %v5577 = vpop.f32.mrf.mxu0
      %v5578 = vadd.f32 0.0, %v5577
      %v5579 = vpop.f32.mrf.mxu0
      %5580 = vmatprep.mubr.bf16.mxu0 0
      %5581 = vmatmul.mubr.bf16.gmra.mxu0 %v5398
      %v5582 = vpop.f32.mrf.mxu0
      %v5583 = vadd.f32 0.0, %v5582
      %v5584 = vpop.f32.mrf.mxu0
      %v5585 = vpop.f32.mrf.mxu0
      %v5586 = vadd.f32 0.0, %v5585
      %v5587 = vpop.f32.mrf.mxu0
      %5588 = vmatprep.mubr.bf16.mxu0 0
      %5589 = vmatmul.mubr.bf16.gmra.mxu0 %v5399
      %v5590 = vpop.f32.mrf.mxu0
      %v5591 = vadd.f32 0.0, %v5590
      %v5592 = vpop.f32.mrf.mxu0
      %v5593 = vpop.f32.mrf.mxu0
      %v5594 = vadd.f32 0.0, %v5593
      %v5595 = vpop.f32.mrf.mxu0
      %5596 = vmatprep.mubr.bf16.mxu0 0
      %5597 = vmatmul.mubr.bf16.gmra.mxu0 %v5400
      %v5598 = vpop.f32.mrf.mxu0
      %v5599 = vadd.f32 0.0, %v5598
      %v5600 = vpop.f32.mrf.mxu0
      %v5601 = vpop.f32.mrf.mxu0
      %v5602 = vadd.f32 0.0, %v5601
      %v5603 = vpop.f32.mrf.mxu0
      %5604 = vmatprep.mubr.bf16.mxu0 0
      %5605 = vmatmul.mubr.bf16.gmra.mxu0 %v5401
      %v5606 = vpop.f32.mrf.mxu0
      %v5607 = vadd.f32 0.0, %v5606
      %v5608 = vpop.f32.mrf.mxu0
      %v5609 = vpop.f32.mrf.mxu0
      %v5610 = vadd.f32 0.0, %v5609
      %v5611 = vpop.f32.mrf.mxu0
      %5612 = vmatprep.mubr.bf16.mxu0 0
      %5613 = vmatmul.mubr.bf16.gmra.mxu0 %v5402
      %v5614 = vpop.f32.mrf.mxu0
      %v5615 = vadd.f32 0.0, %v5614
      %v5616 = vpop.f32.mrf.mxu0
      %v5617 = vpop.f32.mrf.mxu0
      %v5618 = vadd.f32 0.0, %v5617
      %v5619 = vpop.f32.mrf.mxu0
      %5620 = vmatprep.mubr.bf16.mxu0 0
      %5621 = vmatmul.mubr.bf16.gmra.mxu0 %v5403
      %v5622 = vpop.f32.mrf.mxu0
      %v5623 = vadd.f32 0.0, %v5622
      %v5624 = vpop.f32.mrf.mxu0
      %v5625 = vpop.f32.mrf.mxu0
      %v5626 = vadd.f32 0.0, %v5625
      %v5627 = vpop.f32.mrf.mxu0
      %5628 = vdwg.mxu0
      %v5629 = vadd.f32 %v5307, %v5503
      %v5630 = vadd.f32 %v5308, %v5506
      %v5631 = vadd.f32 %v5309, %v5511
      %v5632 = vadd.f32 %v5310, %v5514
      %v5633 = vadd.f32 %v5311, %v5519
      %v5634 = vadd.f32 %v5312, %v5522
      %v5635 = vadd.f32 %v5313, %v5527
      %v5636 = vadd.f32 %v5314, %v5530
      %v5637 = vadd.f32 %v5315, %v5535
      %v5638 = vadd.f32 %v5316, %v5538
      %v5639 = vadd.f32 %v5317, %v5543
      %v5640 = vadd.f32 %v5318, %v5546
      %v5641 = vadd.f32 %v5319, %v5551
      %v5642 = vadd.f32 %v5320, %v5554
      %v5643 = vadd.f32 %v5321, %v5559
      %v5644 = vadd.f32 %v5322, %v5562
      %v5645 = vadd.f32 %v5323, %v5567
      %v5646 = vadd.f32 %v5324, %v5570
      %v5647 = vadd.f32 %v5325, %v5575
      %v5648 = vadd.f32 %v5326, %v5578
      %v5649 = vadd.f32 %v5327, %v5583
      %v5650 = vadd.f32 %v5328, %v5586
      %v5651 = vadd.f32 %v5329, %v5591
      %v5652 = vadd.f32 %v5330, %v5594
      %v5653 = vadd.f32 %v5331, %v5599
      %v5654 = vadd.f32 %v5332, %v5602
      %v5655 = vadd.f32 %v5333, %v5607
      %v5656 = vadd.f32 %v5334, %v5610
      %v5657 = vadd.f32 %v5335, %v5615
      %v5658 = vadd.f32 %v5336, %v5618
      %v5659 = vadd.f32 %v5337, %v5623
      %v5660 = vadd.f32 %v5338, %v5626
      %5661 = vst [vmem:[#allocation4] sm:$0xff] %v5629
      %5662 = vst [vmem:[#allocation4 + $0x8] sm:$0xff] %v5630
      %5663 = vst [vmem:[#allocation4 + $0x10] sm:$0xff] %v5631
      %5664 = vst [vmem:[#allocation4 + $0x18] sm:$0xff] %v5632
      %5665 = vst [vmem:[#allocation4 + $0x20] sm:$0xff] %v5633
      %5666 = vst [vmem:[#allocation4 + $0x28] sm:$0xff] %v5634
      %5667 = vst [vmem:[#allocation4 + $0x30] sm:$0xff] %v5635
      %5668 = vst [vmem:[#allocation4 + $0x38] sm:$0xff] %v5636
      %5669 = vst [vmem:[#allocation4 + $0x40] sm:$0xff] %v5637
      %5670 = vst [vmem:[#allocation4 + $0x48] sm:$0xff] %v5638
      %5671 = vst [vmem:[#allocation4 + $0x50] sm:$0xff] %v5639
      %5672 = vst [vmem:[#allocation4 + $0x58] sm:$0xff] %v5640
      %5673 = vst [vmem:[#allocation4 + $0x60] sm:$0xff] %v5641
      %5674 = vst [vmem:[#allocation4 + $0x68] sm:$0xff] %v5642
      %5675 = vst [vmem:[#allocation4 + $0x70] sm:$0xff] %v5643
      %5676 = vst [vmem:[#allocation4 + $0x78] sm:$0xff] %v5644
      %5677 = vst [vmem:[#allocation4 + $0x80] sm:$0xff] %v5645
      %5678 = vst [vmem:[#allocation4 + $0x88] sm:$0xff] %v5646
      %5679 = vst [vmem:[#allocation4 + $0x90] sm:$0xff] %v5647
      %5680 = vst [vmem:[#allocation4 + $0x98] sm:$0xff] %v5648
      %5681 = vst [vmem:[#allocation4 + $0xa0] sm:$0xff] %v5649
      %5682 = vst [vmem:[#allocation4 + $0xa8] sm:$0xff] %v5650
      %5683 = vst [vmem:[#allocation4 + $0xb0] sm:$0xff] %v5651
      %5684 = vst [vmem:[#allocation4 + $0xb8] sm:$0xff] %v5652
      %5685 = vst [vmem:[#allocation4 + $0xc0] sm:$0xff] %v5653
      %5686 = vst [vmem:[#allocation4 + $0xc8] sm:$0xff] %v5654
      %5687 = vst [vmem:[#allocation4 + $0xd0] sm:$0xff] %v5655
      %5688 = vst [vmem:[#allocation4 + $0xd8] sm:$0xff] %v5656
      %5689 = vst [vmem:[#allocation4 + $0xe0] sm:$0xff] %v5657
      %5690 = vst [vmem:[#allocation4 + $0xe8] sm:$0xff] %v5658
      %5691 = vst [vmem:[#allocation4 + $0xf0] sm:$0xff] %v5659
      %5692 = vst [vmem:[#allocation4 + $0xf8] sm:$0xff] %v5660
      %v5693 = vld [vmem:[#allocation3] sm:$0xe]
      %v5694 = vld [vmem:[#allocation3 + $0x4] sm:$0xf]
      %v5695 = vld [vmem:[#allocation3 + $0x8] sm:$0x1]
      %v5696 = vld [vmem:[#allocation3 + $0xc] sm:$0xe]
      %v5697 = vld [vmem:[#allocation3 + $0x10] sm:$0xf]
      %v5698 = vld [vmem:[#allocation3 + $0x14] sm:$0x1]
      %v5699 = vld [vmem:[#allocation3 + $0x18] sm:$0xe]
      %v5700 = vld [vmem:[#allocation3 + $0x1c] sm:$0xf]
      %v5701 = vld [vmem:[#allocation3 + $0x20] sm:$0x1]
      %v5702 = vld [vmem:[#allocation3 + $0x24] sm:$0xe]
      %v5703 = vld [vmem:[#allocation3 + $0x28] sm:$0xf]
      %v5704 = vld [vmem:[#allocation3 + $0x2c] sm:$0x1]
      %v5705 = vld [vmem:[#allocation3 + $0x30] sm:$0xe]
      %v5706 = vld [vmem:[#allocation3 + $0x34] sm:$0xf]
      %v5707 = vld [vmem:[#allocation3 + $0x38] sm:$0x1]
      %v5708 = vld [vmem:[#allocation3 + $0x3c] sm:$0xe]
      %v5709 = vld [vmem:[#allocation3 + $0x40] sm:$0xf]
      %v5710 = vld [vmem:[#allocation3 + $0x44] sm:$0x1]
      %v5711 = vld [vmem:[#allocation3 + $0x48] sm:$0xe]
      %v5712 = vld [vmem:[#allocation3 + $0x4c] sm:$0xf]
      %v5713 = vld [vmem:[#allocation3 + $0x50] sm:$0x1]
      %v5714 = vld [vmem:[#allocation3 + $0x54] sm:$0xe]
      %v5715 = vld [vmem:[#allocation3 + $0x58] sm:$0xf]
      %v5716 = vld [vmem:[#allocation3 + $0x5c] sm:$0x1]
      %v5717 = vld [vmem:[#allocation3 + $0x60] sm:$0xe]
      %v5718 = vld [vmem:[#allocation3 + $0x64] sm:$0xf]
      %v5719 = vld [vmem:[#allocation3 + $0x68] sm:$0x1]
      %v5720 = vld [vmem:[#allocation3 + $0x6c] sm:$0xe]
      %v5721 = vld [vmem:[#allocation3 + $0x70] sm:$0xf]
      %v5722 = vld [vmem:[#allocation3 + $0x74] sm:$0x1]
      %v5723 = vld [vmem:[#allocation3 + $0x78] sm:$0xe]
      %v5724 = vld [vmem:[#allocation3 + $0x7c] sm:$0xf]
      %v5725 = vld [vmem:[#allocation3 + $0x80] sm:$0x1]
      %v5726 = vld [vmem:[#allocation3 + $0x84] sm:$0xe]
      %v5727 = vld [vmem:[#allocation3 + $0x88] sm:$0xf]
      %v5728 = vld [vmem:[#allocation3 + $0x8c] sm:$0x1]
      %v5729 = vld [vmem:[#allocation3 + $0x90] sm:$0xe]
      %v5730 = vld [vmem:[#allocation3 + $0x94] sm:$0xf]
      %v5731 = vld [vmem:[#allocation3 + $0x98] sm:$0x1]
      %v5732 = vld [vmem:[#allocation3 + $0x9c] sm:$0xe]
      %v5733 = vld [vmem:[#allocation3 + $0xa0] sm:$0xf]
      %v5734 = vld [vmem:[#allocation3 + $0xa4] sm:$0x1]
      %v5735 = vld [vmem:[#allocation3 + $0xa8] sm:$0xe]
      %v5736 = vld [vmem:[#allocation3 + $0xac] sm:$0xf]
      %v5737 = vld [vmem:[#allocation3 + $0xb0] sm:$0x1]
      %v5738 = vld [vmem:[#allocation3 + $0xb4] sm:$0xe]
      %v5739 = vld [vmem:[#allocation3 + $0xb8] sm:$0xf]
      %v5740 = vld [vmem:[#allocation3 + $0xbc] sm:$0x1]
      %v5789 = vrot.slane %v5693, 5
      %v5790 = vrot.slane %v5789, 4
      %v5791 = vrot.slane %v5694, 5
      %v5792 = vsel %vm953, %v5790, %v5791
      %v5793 = vrot.slane %v5791, 4
      %v5794 = vrot.slane %v5695, 5
      %v5795 = vsel %vm953, %v5793, %v5794
      %v5796 = vrot.slane %v5696, 5
      %v5797 = vrot.slane %v5796, 4
      %v5798 = vrot.slane %v5697, 5
      %v5799 = vsel %vm953, %v5797, %v5798
      %v5800 = vrot.slane %v5798, 4
      %v5801 = vrot.slane %v5698, 5
      %v5802 = vsel %vm953, %v5800, %v5801
      %v5803 = vrot.slane %v5699, 5
      %v5804 = vrot.slane %v5803, 4
      %v5805 = vrot.slane %v5700, 5
      %v5806 = vsel %vm953, %v5804, %v5805
      %v5807 = vrot.slane %v5805, 4
      %v5808 = vrot.slane %v5701, 5
      %v5809 = vsel %vm953, %v5807, %v5808
      %v5810 = vrot.slane %v5702, 5
      %v5811 = vrot.slane %v5810, 4
      %v5812 = vrot.slane %v5703, 5
      %v5813 = vsel %vm953, %v5811, %v5812
      %v5814 = vrot.slane %v5812, 4
      %v5815 = vrot.slane %v5704, 5
      %v5816 = vsel %vm953, %v5814, %v5815
      %v5817 = vrot.slane %v5705, 5
      %v5818 = vrot.slane %v5817, 4
      %v5819 = vrot.slane %v5706, 5
      %v5820 = vsel %vm953, %v5818, %v5819
      %v5821 = vrot.slane %v5819, 4
      %v5822 = vrot.slane %v5707, 5
      %v5823 = vsel %vm953, %v5821, %v5822
      %v5824 = vrot.slane %v5708, 5
      %v5825 = vrot.slane %v5824, 4
      %v5826 = vrot.slane %v5709, 5
      %v5827 = vsel %vm953, %v5825, %v5826
      %v5828 = vrot.slane %v5826, 4
      %v5829 = vrot.slane %v5710, 5
      %v5830 = vsel %vm953, %v5828, %v5829
      %v5831 = vrot.slane %v5711, 5
      %v5832 = vrot.slane %v5831, 4
      %v5833 = vrot.slane %v5712, 5
      %v5834 = vsel %vm953, %v5832, %v5833
      %v5835 = vrot.slane %v5833, 4
      %v5836 = vrot.slane %v5713, 5
      %v5837 = vsel %vm953, %v5835, %v5836
      %v5838 = vrot.slane %v5714, 5
      %v5839 = vrot.slane %v5838, 4
      %v5840 = vrot.slane %v5715, 5
      %v5841 = vsel %vm953, %v5839, %v5840
      %v5842 = vrot.slane %v5840, 4
      %v5843 = vrot.slane %v5716, 5
      %v5844 = vsel %vm953, %v5842, %v5843
      %v5845 = vrot.slane %v5717, 5
      %v5846 = vrot.slane %v5845, 4
      %v5847 = vrot.slane %v5718, 5
      %v5848 = vsel %vm953, %v5846, %v5847
      %v5849 = vrot.slane %v5847, 4
      %v5850 = vrot.slane %v5719, 5
      %v5851 = vsel %vm953, %v5849, %v5850
      %v5852 = vrot.slane %v5720, 5
      %v5853 = vrot.slane %v5852, 4
      %v5854 = vrot.slane %v5721, 5
      %v5855 = vsel %vm953, %v5853, %v5854
      %v5856 = vrot.slane %v5854, 4
      %v5857 = vrot.slane %v5722, 5
      %v5858 = vsel %vm953, %v5856, %v5857
      %v5859 = vrot.slane %v5723, 5
      %v5860 = vrot.slane %v5859, 4
      %v5861 = vrot.slane %v5724, 5
      %v5862 = vsel %vm953, %v5860, %v5861
      %v5863 = vrot.slane %v5861, 4
      %v5864 = vrot.slane %v5725, 5
      %v5865 = vsel %vm953, %v5863, %v5864
      %v5866 = vrot.slane %v5726, 5
      %v5867 = vrot.slane %v5866, 4
      %v5868 = vrot.slane %v5727, 5
      %v5869 = vsel %vm953, %v5867, %v5868
      %v5870 = vrot.slane %v5868, 4
      %v5871 = vrot.slane %v5728, 5
      %v5872 = vsel %vm953, %v5870, %v5871
      %v5873 = vrot.slane %v5729, 5
      %v5874 = vrot.slane %v5873, 4
      %v5875 = vrot.slane %v5730, 5
      %v5876 = vsel %vm953, %v5874, %v5875
      %v5877 = vrot.slane %v5875, 4
      %v5878 = vrot.slane %v5731, 5
      %v5879 = vsel %vm953, %v5877, %v5878
      %v5880 = vrot.slane %v5732, 5
      %v5881 = vrot.slane %v5880, 4
      %v5882 = vrot.slane %v5733, 5
      %v5883 = vsel %vm953, %v5881, %v5882
      %v5884 = vrot.slane %v5882, 4
      %v5885 = vrot.slane %v5734, 5
      %v5886 = vsel %vm953, %v5884, %v5885
      %v5887 = vrot.slane %v5735, 5
      %v5888 = vrot.slane %v5887, 4
      %v5889 = vrot.slane %v5736, 5
      %v5890 = vsel %vm953, %v5888, %v5889
      %v5891 = vrot.slane %v5889, 4
      %v5892 = vrot.slane %v5737, 5
      %v5893 = vsel %vm953, %v5891, %v5892
      %v5894 = vrot.slane %v5738, 5
      %v5895 = vrot.slane %v5894, 4
      %v5896 = vrot.slane %v5739, 5
      %v5897 = vsel %vm953, %v5895, %v5896
      %v5898 = vrot.slane %v5896, 4
      %v5899 = vrot.slane %v5740, 5
      %v5900 = vsel %vm953, %v5898, %v5899
      %v5901 = vld [vmem:[#allocation4] sm:$0xff]
      %v5902 = vld [vmem:[#allocation4 + $0x8] sm:$0xff]
      %v5903 = vld [vmem:[#allocation4 + $0x10] sm:$0xff]
      %v5904 = vld [vmem:[#allocation4 + $0x18] sm:$0xff]
      %v5905 = vld [vmem:[#allocation4 + $0x20] sm:$0xff]
      %v5906 = vld [vmem:[#allocation4 + $0x28] sm:$0xff]
      %v5907 = vld [vmem:[#allocation4 + $0x30] sm:$0xff]
      %v5908 = vld [vmem:[#allocation4 + $0x38] sm:$0xff]
      %v5909 = vld [vmem:[#allocation4 + $0x40] sm:$0xff]
      %v5910 = vld [vmem:[#allocation4 + $0x48] sm:$0xff]
      %v5911 = vld [vmem:[#allocation4 + $0x50] sm:$0xff]
      %v5912 = vld [vmem:[#allocation4 + $0x58] sm:$0xff]
      %v5913 = vld [vmem:[#allocation4 + $0x60] sm:$0xff]
      %v5914 = vld [vmem:[#allocation4 + $0x68] sm:$0xff]
      %v5915 = vld [vmem:[#allocation4 + $0x70] sm:$0xff]
      %v5916 = vld [vmem:[#allocation4 + $0x78] sm:$0xff]
      %v5917 = vld [vmem:[#allocation4 + $0x80] sm:$0xff]
      %v5918 = vld [vmem:[#allocation4 + $0x88] sm:$0xff]
      %v5919 = vld [vmem:[#allocation4 + $0x90] sm:$0xff]
      %v5920 = vld [vmem:[#allocation4 + $0x98] sm:$0xff]
      %v5921 = vld [vmem:[#allocation4 + $0xa0] sm:$0xff]
      %v5922 = vld [vmem:[#allocation4 + $0xa8] sm:$0xff]
      %v5923 = vld [vmem:[#allocation4 + $0xb0] sm:$0xff]
      %v5924 = vld [vmem:[#allocation4 + $0xb8] sm:$0xff]
      %v5925 = vld [vmem:[#allocation4 + $0xc0] sm:$0xff]
      %v5926 = vld [vmem:[#allocation4 + $0xc8] sm:$0xff]
      %v5927 = vld [vmem:[#allocation4 + $0xd0] sm:$0xff]
      %v5928 = vld [vmem:[#allocation4 + $0xd8] sm:$0xff]
      %v5929 = vld [vmem:[#allocation4 + $0xe0] sm:$0xff]
      %v5930 = vld [vmem:[#allocation4 + $0xe8] sm:$0xff]
      %v5931 = vld [vmem:[#allocation4 + $0xf0] sm:$0xff]
      %v5932 = vld [vmem:[#allocation4 + $0xf8] sm:$0xff]
      %s5933 = scalar_lea.vmem %s3, 128
      %v5934 = vld [vmem:[%s5933] sm:$0xf]
      %v5935 = vld [vmem:[%s5933 + $0x4] sm:$0xf]
      %v5936 = vld [vmem:[%s5933 + $0x8] sm:$0xf]
      %v5937 = vld [vmem:[%s5933 + $0xc] sm:$0xf]
      %v5938 = vld [vmem:[%s5933 + $0x10] sm:$0xf]
      %v5939 = vld [vmem:[%s5933 + $0x14] sm:$0xf]
      %v5940 = vld [vmem:[%s5933 + $0x18] sm:$0xf]
      %v5941 = vld [vmem:[%s5933 + $0x1c] sm:$0xf]
      %v5942 = vld [vmem:[%s5933 + $0x20] sm:$0xf]
      %v5943 = vld [vmem:[%s5933 + $0x24] sm:$0xf]
      %v5944 = vld [vmem:[%s5933 + $0x28] sm:$0xf]
      %v5945 = vld [vmem:[%s5933 + $0x2c] sm:$0xf]
      %v5946 = vld [vmem:[%s5933 + $0x30] sm:$0xf]
      %v5947 = vld [vmem:[%s5933 + $0x34] sm:$0xf]
      %v5948 = vld [vmem:[%s5933 + $0x38] sm:$0xf]
      %v5949 = vld [vmem:[%s5933 + $0x3c] sm:$0xf]
      %v5950 = vunpack.c.l.b16 %v5792
      %v5951 = vunpack.c.l.b16 %v5795
      %v5952 = vunpack.c.l.b16 %v5799
      %v5953 = vunpack.c.l.b16 %v5802
      %v5954 = vunpack.c.l.b16 %v5806
      %v5955 = vunpack.c.l.b16 %v5809
      %v5956 = vunpack.c.l.b16 %v5813
      %v5957 = vunpack.c.l.b16 %v5816
      %v5958 = vunpack.c.l.b16 %v5820
      %v5959 = vunpack.c.l.b16 %v5823
      %v5960 = vunpack.c.l.b16 %v5827
      %v5961 = vunpack.c.l.b16 %v5830
      %v5962 = vunpack.c.l.b16 %v5834
      %v5963 = vunpack.c.l.b16 %v5837
      %v5964 = vunpack.c.l.b16 %v5841
      %v5965 = vunpack.c.l.b16 %v5844
      %v5966 = vunpack.c.l.b16 %v5848
      %v5967 = vunpack.c.l.b16 %v5851
      %v5968 = vunpack.c.l.b16 %v5855
      %v5969 = vunpack.c.l.b16 %v5858
      %v5970 = vunpack.c.l.b16 %v5862
      %v5971 = vunpack.c.l.b16 %v5865
      %v5972 = vunpack.c.l.b16 %v5869
      %v5973 = vunpack.c.l.b16 %v5872
      %v5974 = vunpack.c.l.b16 %v5876
      %v5975 = vunpack.c.l.b16 %v5879
      %v5976 = vunpack.c.l.b16 %v5883
      %v5977 = vunpack.c.l.b16 %v5886
      %v5978 = vunpack.c.l.b16 %v5890
      %v5979 = vunpack.c.l.b16 %v5893
      %v5980 = vunpack.c.l.b16 %v5897
      %v5981 = vunpack.c.l.b16 %v5900
      %v5982 = vpack.c.b16 %v5951, %v5950
      %v5983 = vpack.c.b16 %v5953, %v5952
      %v5984 = vpack.c.b16 %v5955, %v5954
      %v5985 = vpack.c.b16 %v5957, %v5956
      %v5986 = vpack.c.b16 %v5959, %v5958
      %v5987 = vpack.c.b16 %v5961, %v5960
      %v5988 = vpack.c.b16 %v5963, %v5962
      %v5989 = vpack.c.b16 %v5965, %v5964
      %v5990 = vpack.c.b16 %v5967, %v5966
      %v5991 = vpack.c.b16 %v5969, %v5968
      %v5992 = vpack.c.b16 %v5971, %v5970
      %v5993 = vpack.c.b16 %v5973, %v5972
      %v5994 = vpack.c.b16 %v5975, %v5974
      %v5995 = vpack.c.b16 %v5977, %v5976
      %v5996 = vpack.c.b16 %v5979, %v5978
      %v5997 = vpack.c.b16 %v5981, %v5980
      %v6030 = vunpack.c.l.b16 %v5934
      %v6031 = vunpack.c.l.b16 %v5935
      %v6032 = vunpack.c.l.b16 %v5936
      %v6033 = vunpack.c.l.b16 %v5937
      %v6034 = vunpack.c.l.b16 %v5938
      %v6035 = vunpack.c.l.b16 %v5939
      %v6036 = vunpack.c.l.b16 %v5940
      %v6037 = vunpack.c.l.b16 %v5941
      %v6038 = vunpack.c.l.b16 %v5942
      %v6039 = vunpack.c.l.b16 %v5943
      %v6040 = vunpack.c.l.b16 %v5944
      %v6041 = vunpack.c.l.b16 %v5945
      %v6042 = vunpack.c.l.b16 %v5946
      %v6043 = vunpack.c.l.b16 %v5947
      %v6044 = vunpack.c.l.b16 %v5948
      %v6045 = vunpack.c.l.b16 %v5949
      %v6046 = vpack.c.b16 %v6031, %v6030
      %v6047 = vpack.c.b16 %v6033, %v6032
      %v6048 = vpack.c.b16 %v6035, %v6034
      %v6049 = vpack.c.b16 %v6037, %v6036
      %v6050 = vpack.c.b16 %v6039, %v6038
      %v6051 = vpack.c.b16 %v6041, %v6040
      %v6052 = vpack.c.b16 %v6043, %v6042
      %v6053 = vpack.c.b16 %v6045, %v6044
      %6062 = vmatprep.subr.bf16.mxu0 0
      %6063 = vmatpush1.bf16.msra.mxu0 %v6053
      %6064 = vmatprep.subr.bf16.mxu0 0
      %6065 = vmatpush1.bf16.msra.mxu0 %v6052
      %6066 = vmatprep.subr.bf16.mxu0 0
      %6067 = vmatpush1.bf16.msra.mxu0 %v6051
      %6068 = vmatprep.subr.bf16.mxu0 0
      %6069 = vmatpush1.bf16.msra.mxu0 %v6050
      %6070 = vmatprep.subr.bf16.mxu0 0
      %6071 = vmatpush1.bf16.msra.mxu0 %v6049
      %6072 = vmatprep.subr.bf16.mxu0 0
      %6073 = vmatpush1.bf16.msra.mxu0 %v6048
      %6074 = vmatprep.subr.bf16.mxu0 0
      %6075 = vmatpush1.bf16.msra.mxu0 %v6047
      %6076 = vmatprep.subr.bf16.mxu0 0
      %6077 = vmatpush1.bf16.msra.mxu0 %v6046
      %6078 = vmatprep.subr.bf16.mxu0 0
      %6079 = vmatpush2.bf16.msra.mxu0 0
      %6080 = vmatprep.subr.bf16.mxu0 0
      %6081 = vmatpush2.bf16.msra.mxu0 0
      %6082 = vmatprep.subr.bf16.mxu0 0
      %6083 = vmatpush2.bf16.msra.mxu0 0
      %6084 = vmatprep.subr.bf16.mxu0 0
      %6085 = vmatpush2.bf16.msra.mxu0 0
      %6086 = vmatprep.subr.bf16.mxu0 0
      %6087 = vmatpush2.bf16.msra.mxu0 0
      %6088 = vmatprep.subr.bf16.mxu0 0
      %6089 = vmatpush2.bf16.msra.mxu0 0
      %6090 = vmatprep.subr.bf16.mxu0 0
      %6091 = vmatpush2.bf16.msra.mxu0 0
      %6092 = vmatprep.subr.bf16.mxu0 0
      %6093 = vmatpush2.bf16.msra.mxu0 0
      %6094 = vmatprep.mubr.bf16.mxu0 0
      %6095 = vmatmul.mubr.bf16.gmra.mxu0 %v5982
      %v6096 = vpop.f32.mrf.mxu0
      %v6097 = vadd.f32 0.0, %v6096
      %v6098 = vpop.f32.mrf.mxu0
      %v6099 = vpop.f32.mrf.mxu0
      %v6100 = vadd.f32 0.0, %v6099
      %v6101 = vpop.f32.mrf.mxu0
      %6102 = vmatprep.mubr.bf16.mxu0 0
      %6103 = vmatmul.mubr.bf16.gmra.mxu0 %v5983
      %v6104 = vpop.f32.mrf.mxu0
      %v6105 = vadd.f32 0.0, %v6104
      %v6106 = vpop.f32.mrf.mxu0
      %v6107 = vpop.f32.mrf.mxu0
      %v6108 = vadd.f32 0.0, %v6107
      %v6109 = vpop.f32.mrf.mxu0
      %6110 = vmatprep.mubr.bf16.mxu0 0
      %6111 = vmatmul.mubr.bf16.gmra.mxu0 %v5984
      %v6112 = vpop.f32.mrf.mxu0
      %v6113 = vadd.f32 0.0, %v6112
      %v6114 = vpop.f32.mrf.mxu0
      %v6115 = vpop.f32.mrf.mxu0
      %v6116 = vadd.f32 0.0, %v6115
      %v6117 = vpop.f32.mrf.mxu0
      %6118 = vmatprep.mubr.bf16.mxu0 0
      %6119 = vmatmul.mubr.bf16.gmra.mxu0 %v5985
      %v6120 = vpop.f32.mrf.mxu0
      %v6121 = vadd.f32 0.0, %v6120
      %v6122 = vpop.f32.mrf.mxu0
      %v6123 = vpop.f32.mrf.mxu0
      %v6124 = vadd.f32 0.0, %v6123
      %v6125 = vpop.f32.mrf.mxu0
      %6126 = vmatprep.mubr.bf16.mxu0 0
      %6127 = vmatmul.mubr.bf16.gmra.mxu0 %v5986
      %v6128 = vpop.f32.mrf.mxu0
      %v6129 = vadd.f32 0.0, %v6128
      %v6130 = vpop.f32.mrf.mxu0
      %v6131 = vpop.f32.mrf.mxu0
      %v6132 = vadd.f32 0.0, %v6131
      %v6133 = vpop.f32.mrf.mxu0
      %6134 = vmatprep.mubr.bf16.mxu0 0
      %6135 = vmatmul.mubr.bf16.gmra.mxu0 %v5987
      %v6136 = vpop.f32.mrf.mxu0
      %v6137 = vadd.f32 0.0, %v6136
      %v6138 = vpop.f32.mrf.mxu0
      %v6139 = vpop.f32.mrf.mxu0
      %v6140 = vadd.f32 0.0, %v6139
      %v6141 = vpop.f32.mrf.mxu0
      %6142 = vmatprep.mubr.bf16.mxu0 0
      %6143 = vmatmul.mubr.bf16.gmra.mxu0 %v5988
      %v6144 = vpop.f32.mrf.mxu0
      %v6145 = vadd.f32 0.0, %v6144
      %v6146 = vpop.f32.mrf.mxu0
      %v6147 = vpop.f32.mrf.mxu0
      %v6148 = vadd.f32 0.0, %v6147
      %v6149 = vpop.f32.mrf.mxu0
      %6150 = vmatprep.mubr.bf16.mxu0 0
      %6151 = vmatmul.mubr.bf16.gmra.mxu0 %v5989
      %v6152 = vpop.f32.mrf.mxu0
      %v6153 = vadd.f32 0.0, %v6152
      %v6154 = vpop.f32.mrf.mxu0
      %v6155 = vpop.f32.mrf.mxu0
      %v6156 = vadd.f32 0.0, %v6155
      %v6157 = vpop.f32.mrf.mxu0
      %6158 = vmatprep.mubr.bf16.mxu0 0
      %6159 = vmatmul.mubr.bf16.gmra.mxu0 %v5990
      %v6160 = vpop.f32.mrf.mxu0
      %v6161 = vadd.f32 0.0, %v6160
      %v6162 = vpop.f32.mrf.mxu0
      %v6163 = vpop.f32.mrf.mxu0
      %v6164 = vadd.f32 0.0, %v6163
      %v6165 = vpop.f32.mrf.mxu0
      %6166 = vmatprep.mubr.bf16.mxu0 0
      %6167 = vmatmul.mubr.bf16.gmra.mxu0 %v5991
      %v6168 = vpop.f32.mrf.mxu0
      %v6169 = vadd.f32 0.0, %v6168
      %v6170 = vpop.f32.mrf.mxu0
      %v6171 = vpop.f32.mrf.mxu0
      %v6172 = vadd.f32 0.0, %v6171
      %v6173 = vpop.f32.mrf.mxu0
      %6174 = vmatprep.mubr.bf16.mxu0 0
      %6175 = vmatmul.mubr.bf16.gmra.mxu0 %v5992
      %v6176 = vpop.f32.mrf.mxu0
      %v6177 = vadd.f32 0.0, %v6176
      %v6178 = vpop.f32.mrf.mxu0
      %v6179 = vpop.f32.mrf.mxu0
      %v6180 = vadd.f32 0.0, %v6179
      %v6181 = vpop.f32.mrf.mxu0
      %6182 = vmatprep.mubr.bf16.mxu0 0
      %6183 = vmatmul.mubr.bf16.gmra.mxu0 %v5993
      %v6184 = vpop.f32.mrf.mxu0
      %v6185 = vadd.f32 0.0, %v6184
      %v6186 = vpop.f32.mrf.mxu0
      %v6187 = vpop.f32.mrf.mxu0
      %v6188 = vadd.f32 0.0, %v6187
      %v6189 = vpop.f32.mrf.mxu0
      %6190 = vmatprep.mubr.bf16.mxu0 0
      %6191 = vmatmul.mubr.bf16.gmra.mxu0 %v5994
      %v6192 = vpop.f32.mrf.mxu0
      %v6193 = vadd.f32 0.0, %v6192
      %v6194 = vpop.f32.mrf.mxu0
      %v6195 = vpop.f32.mrf.mxu0
      %v6196 = vadd.f32 0.0, %v6195
      %v6197 = vpop.f32.mrf.mxu0
      %6198 = vmatprep.mubr.bf16.mxu0 0
      %6199 = vmatmul.mubr.bf16.gmra.mxu0 %v5995
      %v6200 = vpop.f32.mrf.mxu0
      %v6201 = vadd.f32 0.0, %v6200
      %v6202 = vpop.f32.mrf.mxu0
      %v6203 = vpop.f32.mrf.mxu0
      %v6204 = vadd.f32 0.0, %v6203
      %v6205 = vpop.f32.mrf.mxu0
      %6206 = vmatprep.mubr.bf16.mxu0 0
      %6207 = vmatmul.mubr.bf16.gmra.mxu0 %v5996
      %v6208 = vpop.f32.mrf.mxu0
      %v6209 = vadd.f32 0.0, %v6208
      %v6210 = vpop.f32.mrf.mxu0
      %v6211 = vpop.f32.mrf.mxu0
      %v6212 = vadd.f32 0.0, %v6211
      %v6213 = vpop.f32.mrf.mxu0
      %6214 = vmatprep.mubr.bf16.mxu0 0
      %6215 = vmatmul.mubr.bf16.gmra.mxu0 %v5997
      %v6216 = vpop.f32.mrf.mxu0
      %v6217 = vadd.f32 0.0, %v6216
      %v6218 = vpop.f32.mrf.mxu0
      %v6219 = vpop.f32.mrf.mxu0
      %v6220 = vadd.f32 0.0, %v6219
      %v6221 = vpop.f32.mrf.mxu0
      %6222 = vdwg.mxu0
      %v6223 = vadd.f32 %v5901, %v6097
      %v6224 = vadd.f32 %v5902, %v6100
      %v6225 = vadd.f32 %v5903, %v6105
      %v6226 = vadd.f32 %v5904, %v6108
      %v6227 = vadd.f32 %v5905, %v6113
      %v6228 = vadd.f32 %v5906, %v6116
      %v6229 = vadd.f32 %v5907, %v6121
      %v6230 = vadd.f32 %v5908, %v6124
      %v6231 = vadd.f32 %v5909, %v6129
      %v6232 = vadd.f32 %v5910, %v6132
      %v6233 = vadd.f32 %v5911, %v6137
      %v6234 = vadd.f32 %v5912, %v6140
      %v6235 = vadd.f32 %v5913, %v6145
      %v6236 = vadd.f32 %v5914, %v6148
      %v6237 = vadd.f32 %v5915, %v6153
      %v6238 = vadd.f32 %v5916, %v6156
      %v6239 = vadd.f32 %v5917, %v6161
      %v6240 = vadd.f32 %v5918, %v6164
      %v6241 = vadd.f32 %v5919, %v6169
      %v6242 = vadd.f32 %v5920, %v6172
      %v6243 = vadd.f32 %v5921, %v6177
      %v6244 = vadd.f32 %v5922, %v6180
      %v6245 = vadd.f32 %v5923, %v6185
      %v6246 = vadd.f32 %v5924, %v6188
      %v6247 = vadd.f32 %v5925, %v6193
      %v6248 = vadd.f32 %v5926, %v6196
      %v6249 = vadd.f32 %v5927, %v6201
      %v6250 = vadd.f32 %v5928, %v6204
      %v6251 = vadd.f32 %v5929, %v6209
      %v6252 = vadd.f32 %v5930, %v6212
      %v6253 = vadd.f32 %v5931, %v6217
      %v6254 = vadd.f32 %v5932, %v6220
      %6255 = vst [vmem:[#allocation4] sm:$0xff] %v6223
      %6256 = vst [vmem:[#allocation4 + $0x8] sm:$0xff] %v6224
      %6257 = vst [vmem:[#allocation4 + $0x10] sm:$0xff] %v6225
      %6258 = vst [vmem:[#allocation4 + $0x18] sm:$0xff] %v6226
      %6259 = vst [vmem:[#allocation4 + $0x20] sm:$0xff] %v6227
      %6260 = vst [vmem:[#allocation4 + $0x28] sm:$0xff] %v6228
      %6261 = vst [vmem:[#allocation4 + $0x30] sm:$0xff] %v6229
      %6262 = vst [vmem:[#allocation4 + $0x38] sm:$0xff] %v6230
      %6263 = vst [vmem:[#allocation4 + $0x40] sm:$0xff] %v6231
      %6264 = vst [vmem:[#allocation4 + $0x48] sm:$0xff] %v6232
      %6265 = vst [vmem:[#allocation4 + $0x50] sm:$0xff] %v6233
      %6266 = vst [vmem:[#allocation4 + $0x58] sm:$0xff] %v6234
      %6267 = vst [vmem:[#allocation4 + $0x60] sm:$0xff] %v6235
      %6268 = vst [vmem:[#allocation4 + $0x68] sm:$0xff] %v6236
      %6269 = vst [vmem:[#allocation4 + $0x70] sm:$0xff] %v6237
      %6270 = vst [vmem:[#allocation4 + $0x78] sm:$0xff] %v6238
      %6271 = vst [vmem:[#allocation4 + $0x80] sm:$0xff] %v6239
      %6272 = vst [vmem:[#allocation4 + $0x88] sm:$0xff] %v6240
      %6273 = vst [vmem:[#allocation4 + $0x90] sm:$0xff] %v6241
      %6274 = vst [vmem:[#allocation4 + $0x98] sm:$0xff] %v6242
      %6275 = vst [vmem:[#allocation4 + $0xa0] sm:$0xff] %v6243
      %6276 = vst [vmem:[#allocation4 + $0xa8] sm:$0xff] %v6244
      %6277 = vst [vmem:[#allocation4 + $0xb0] sm:$0xff] %v6245
      %6278 = vst [vmem:[#allocation4 + $0xb8] sm:$0xff] %v6246
      %6279 = vst [vmem:[#allocation4 + $0xc0] sm:$0xff] %v6247
      %6280 = vst [vmem:[#allocation4 + $0xc8] sm:$0xff] %v6248
      %6281 = vst [vmem:[#allocation4 + $0xd0] sm:$0xff] %v6249
      %6282 = vst [vmem:[#allocation4 + $0xd8] sm:$0xff] %v6250
      %6283 = vst [vmem:[#allocation4 + $0xe0] sm:$0xff] %v6251
      %6284 = vst [vmem:[#allocation4 + $0xe8] sm:$0xff] %v6252
      %6285 = vst [vmem:[#allocation4 + $0xf0] sm:$0xff] %v6253
      %6286 = vst [vmem:[#allocation4 + $0xf8] sm:$0xff] %v6254
      %v6287 = vld [vmem:[%s4269] sm:$0xf]
      %v6288 = vld [vmem:[%s4269 + $0x4] sm:$0xf]
      %v6289 = vld [vmem:[%s4269 + $0xc] sm:$0xf]
      %v6290 = vld [vmem:[%s4269 + $0x10] sm:$0xf]
      %v6291 = vld [vmem:[%s4269 + $0x18] sm:$0xf]
      %v6292 = vld [vmem:[%s4269 + $0x1c] sm:$0xf]
      %v6293 = vld [vmem:[%s4269 + $0x24] sm:$0xf]
      %v6294 = vld [vmem:[%s4269 + $0x28] sm:$0xf]
      %v6295 = vld [vmem:[%s4269 + $0x30] sm:$0xf]
      %v6296 = vld [vmem:[%s4269 + $0x34] sm:$0xf]
      %v6297 = vld [vmem:[%s4269 + $0x3c] sm:$0xf]
      %v6298 = vld [vmem:[%s4269 + $0x40] sm:$0xf]
      %v6299 = vld [vmem:[%s4269 + $0x48] sm:$0xf]
      %v6300 = vld [vmem:[%s4269 + $0x4c] sm:$0xf]
      %v6301 = vld [vmem:[%s4269 + $0x54] sm:$0xf]
      %v6302 = vld [vmem:[%s4269 + $0x58] sm:$0xf]
      %v6303 = vld [vmem:[%s4269 + $0x60] sm:$0xf]
      %v6304 = vld [vmem:[%s4269 + $0x64] sm:$0xf]
      %v6305 = vld [vmem:[%s4269 + $0x6c] sm:$0xf]
      %v6306 = vld [vmem:[%s4269 + $0x70] sm:$0xf]
      %v6307 = vld [vmem:[%s4269 + $0x78] sm:$0xf]
      %v6308 = vld [vmem:[%s4269 + $0x7c] sm:$0xf]
      %v6309 = vld [vmem:[%s4269 + $0x84] sm:$0xf]
      %v6310 = vld [vmem:[%s4269 + $0x88] sm:$0xf]
      %v6311 = vld [vmem:[%s4269 + $0x90] sm:$0xf]
      %v6312 = vld [vmem:[%s4269 + $0x94] sm:$0xf]
      %v6313 = vld [vmem:[%s4269 + $0x9c] sm:$0xf]
      %v6314 = vld [vmem:[%s4269 + $0xa0] sm:$0xf]
      %v6315 = vld [vmem:[%s4269 + $0xa8] sm:$0xf]
      %v6316 = vld [vmem:[%s4269 + $0xac] sm:$0xf]
      %v6317 = vld [vmem:[%s4269 + $0xb4] sm:$0xf]
      %v6318 = vld [vmem:[%s4269 + $0xb8] sm:$0xf]
      %v6319 = vld [vmem:[#allocation4] sm:$0xff]
      %v6320 = vld [vmem:[#allocation4 + $0x8] sm:$0xff]
      %v6321 = vld [vmem:[#allocation4 + $0x10] sm:$0xff]
      %v6322 = vld [vmem:[#allocation4 + $0x18] sm:$0xff]
      %v6323 = vld [vmem:[#allocation4 + $0x20] sm:$0xff]
      %v6324 = vld [vmem:[#allocation4 + $0x28] sm:$0xff]
      %v6325 = vld [vmem:[#allocation4 + $0x30] sm:$0xff]
      %v6326 = vld [vmem:[#allocation4 + $0x38] sm:$0xff]
      %v6327 = vld [vmem:[#allocation4 + $0x40] sm:$0xff]
      %v6328 = vld [vmem:[#allocation4 + $0x48] sm:$0xff]
      %v6329 = vld [vmem:[#allocation4 + $0x50] sm:$0xff]
      %v6330 = vld [vmem:[#allocation4 + $0x58] sm:$0xff]
      %v6331 = vld [vmem:[#allocation4 + $0x60] sm:$0xff]
      %v6332 = vld [vmem:[#allocation4 + $0x68] sm:$0xff]
      %v6333 = vld [vmem:[#allocation4 + $0x70] sm:$0xff]
      %v6334 = vld [vmem:[#allocation4 + $0x78] sm:$0xff]
      %v6335 = vld [vmem:[#allocation4 + $0x80] sm:$0xff]
      %v6336 = vld [vmem:[#allocation4 + $0x88] sm:$0xff]
      %v6337 = vld [vmem:[#allocation4 + $0x90] sm:$0xff]
      %v6338 = vld [vmem:[#allocation4 + $0x98] sm:$0xff]
      %v6339 = vld [vmem:[#allocation4 + $0xa0] sm:$0xff]
      %v6340 = vld [vmem:[#allocation4 + $0xa8] sm:$0xff]
      %v6341 = vld [vmem:[#allocation4 + $0xb0] sm:$0xff]
      %v6342 = vld [vmem:[#allocation4 + $0xb8] sm:$0xff]
      %v6343 = vld [vmem:[#allocation4 + $0xc0] sm:$0xff]
      %v6344 = vld [vmem:[#allocation4 + $0xc8] sm:$0xff]
      %v6345 = vld [vmem:[#allocation4 + $0xd0] sm:$0xff]
      %v6346 = vld [vmem:[#allocation4 + $0xd8] sm:$0xff]
      %v6347 = vld [vmem:[#allocation4 + $0xe0] sm:$0xff]
      %v6348 = vld [vmem:[#allocation4 + $0xe8] sm:$0xff]
      %v6349 = vld [vmem:[#allocation4 + $0xf0] sm:$0xff]
      %v6350 = vld [vmem:[#allocation4 + $0xf8] sm:$0xff]
      %s6351 = scalar_lea.vmem %s3, 192
      %v6352 = vld [vmem:[%s6351] sm:$0xf]
      %v6353 = vld [vmem:[%s6351 + $0x4] sm:$0xf]
      %v6354 = vld [vmem:[%s6351 + $0x8] sm:$0xf]
      %v6355 = vld [vmem:[%s6351 + $0xc] sm:$0xf]
      %v6356 = vld [vmem:[%s6351 + $0x10] sm:$0xf]
      %v6357 = vld [vmem:[%s6351 + $0x14] sm:$0xf]
      %v6358 = vld [vmem:[%s6351 + $0x18] sm:$0xf]
      %v6359 = vld [vmem:[%s6351 + $0x1c] sm:$0xf]
      %v6360 = vld [vmem:[%s6351 + $0x20] sm:$0xf]
      %v6361 = vld [vmem:[%s6351 + $0x24] sm:$0xf]
      %v6362 = vld [vmem:[%s6351 + $0x28] sm:$0xf]
      %v6363 = vld [vmem:[%s6351 + $0x2c] sm:$0xf]
      %v6364 = vld [vmem:[%s6351 + $0x30] sm:$0xf]
      %v6365 = vld [vmem:[%s6351 + $0x34] sm:$0xf]
      %v6366 = vld [vmem:[%s6351 + $0x38] sm:$0xf]
      %v6367 = vld [vmem:[%s6351 + $0x3c] sm:$0xf]
      %v6400 = vunpack.c.l.b16 %v6287
      %v6401 = vunpack.c.l.b16 %v6288
      %v6402 = vunpack.c.l.b16 %v6289
      %v6403 = vunpack.c.l.b16 %v6290
      %v6404 = vunpack.c.l.b16 %v6291
      %v6405 = vunpack.c.l.b16 %v6292
      %v6406 = vunpack.c.l.b16 %v6293
      %v6407 = vunpack.c.l.b16 %v6294
      %v6408 = vunpack.c.l.b16 %v6295
      %v6409 = vunpack.c.l.b16 %v6296
      %v6410 = vunpack.c.l.b16 %v6297
      %v6411 = vunpack.c.l.b16 %v6298
      %v6412 = vunpack.c.l.b16 %v6299
      %v6413 = vunpack.c.l.b16 %v6300
      %v6414 = vunpack.c.l.b16 %v6301
      %v6415 = vunpack.c.l.b16 %v6302
      %v6416 = vunpack.c.l.b16 %v6303
      %v6417 = vunpack.c.l.b16 %v6304
      %v6418 = vunpack.c.l.b16 %v6305
      %v6419 = vunpack.c.l.b16 %v6306
      %v6420 = vunpack.c.l.b16 %v6307
      %v6421 = vunpack.c.l.b16 %v6308
      %v6422 = vunpack.c.l.b16 %v6309
      %v6423 = vunpack.c.l.b16 %v6310
      %v6424 = vunpack.c.l.b16 %v6311
      %v6425 = vunpack.c.l.b16 %v6312
      %v6426 = vunpack.c.l.b16 %v6313
      %v6427 = vunpack.c.l.b16 %v6314
      %v6428 = vunpack.c.l.b16 %v6315
      %v6429 = vunpack.c.l.b16 %v6316
      %v6430 = vunpack.c.l.b16 %v6317
      %v6431 = vunpack.c.l.b16 %v6318
      %v6432 = vpack.c.b16 %v6401, %v6400
      %v6433 = vpack.c.b16 %v6403, %v6402
      %v6434 = vpack.c.b16 %v6405, %v6404
      %v6435 = vpack.c.b16 %v6407, %v6406
      %v6436 = vpack.c.b16 %v6409, %v6408
      %v6437 = vpack.c.b16 %v6411, %v6410
      %v6438 = vpack.c.b16 %v6413, %v6412
      %v6439 = vpack.c.b16 %v6415, %v6414
      %v6440 = vpack.c.b16 %v6417, %v6416
      %v6441 = vpack.c.b16 %v6419, %v6418
      %v6442 = vpack.c.b16 %v6421, %v6420
      %v6443 = vpack.c.b16 %v6423, %v6422
      %v6444 = vpack.c.b16 %v6425, %v6424
      %v6445 = vpack.c.b16 %v6427, %v6426
      %v6446 = vpack.c.b16 %v6429, %v6428
      %v6447 = vpack.c.b16 %v6431, %v6430
      %v6480 = vunpack.c.l.b16 %v6352
      %v6481 = vunpack.c.l.b16 %v6353
      %v6482 = vunpack.c.l.b16 %v6354
      %v6483 = vunpack.c.l.b16 %v6355
      %v6484 = vunpack.c.l.b16 %v6356
      %v6485 = vunpack.c.l.b16 %v6357
      %v6486 = vunpack.c.l.b16 %v6358
      %v6487 = vunpack.c.l.b16 %v6359
      %v6488 = vunpack.c.l.b16 %v6360
      %v6489 = vunpack.c.l.b16 %v6361
      %v6490 = vunpack.c.l.b16 %v6362
      %v6491 = vunpack.c.l.b16 %v6363
      %v6492 = vunpack.c.l.b16 %v6364
      %v6493 = vunpack.c.l.b16 %v6365
      %v6494 = vunpack.c.l.b16 %v6366
      %v6495 = vunpack.c.l.b16 %v6367
      %v6496 = vpack.c.b16 %v6481, %v6480
      %v6497 = vpack.c.b16 %v6483, %v6482
      %v6498 = vpack.c.b16 %v6485, %v6484
      %v6499 = vpack.c.b16 %v6487, %v6486
      %v6500 = vpack.c.b16 %v6489, %v6488
      %v6501 = vpack.c.b16 %v6491, %v6490
      %v6502 = vpack.c.b16 %v6493, %v6492
      %v6503 = vpack.c.b16 %v6495, %v6494
      %6512 = vmatprep.subr.bf16.mxu0 0
      %6513 = vmatpush1.bf16.msra.mxu0 %v6503
      %6514 = vmatprep.subr.bf16.mxu0 0
      %6515 = vmatpush1.bf16.msra.mxu0 %v6502
      %6516 = vmatprep.subr.bf16.mxu0 0
      %6517 = vmatpush1.bf16.msra.mxu0 %v6501
      %6518 = vmatprep.subr.bf16.mxu0 0
      %6519 = vmatpush1.bf16.msra.mxu0 %v6500
      %6520 = vmatprep.subr.bf16.mxu0 0
      %6521 = vmatpush1.bf16.msra.mxu0 %v6499
      %6522 = vmatprep.subr.bf16.mxu0 0
      %6523 = vmatpush1.bf16.msra.mxu0 %v6498
      %6524 = vmatprep.subr.bf16.mxu0 0
      %6525 = vmatpush1.bf16.msra.mxu0 %v6497
      %6526 = vmatprep.subr.bf16.mxu0 0
      %6527 = vmatpush1.bf16.msra.mxu0 %v6496
      %6528 = vmatprep.subr.bf16.mxu0 0
      %6529 = vmatpush2.bf16.msra.mxu0 0
      %6530 = vmatprep.subr.bf16.mxu0 0
      %6531 = vmatpush2.bf16.msra.mxu0 0
      %6532 = vmatprep.subr.bf16.mxu0 0
      %6533 = vmatpush2.bf16.msra.mxu0 0
      %6534 = vmatprep.subr.bf16.mxu0 0
      %6535 = vmatpush2.bf16.msra.mxu0 0
      %6536 = vmatprep.subr.bf16.mxu0 0
      %6537 = vmatpush2.bf16.msra.mxu0 0
      %6538 = vmatprep.subr.bf16.mxu0 0
      %6539 = vmatpush2.bf16.msra.mxu0 0
      %6540 = vmatprep.subr.bf16.mxu0 0
      %6541 = vmatpush2.bf16.msra.mxu0 0
      %6542 = vmatprep.subr.bf16.mxu0 0
      %6543 = vmatpush2.bf16.msra.mxu0 0
      %6544 = vmatprep.mubr.bf16.mxu0 0
      %6545 = vmatmul.mubr.bf16.gmra.mxu0 %v6432
      %v6546 = vpop.f32.mrf.mxu0
      %v6547 = vadd.f32 0.0, %v6546
      %v6548 = vpop.f32.mrf.mxu0
      %v6549 = vpop.f32.mrf.mxu0
      %v6550 = vadd.f32 0.0, %v6549
      %v6551 = vpop.f32.mrf.mxu0
      %6552 = vmatprep.mubr.bf16.mxu0 0
      %6553 = vmatmul.mubr.bf16.gmra.mxu0 %v6433
      %v6554 = vpop.f32.mrf.mxu0
      %v6555 = vadd.f32 0.0, %v6554
      %v6556 = vpop.f32.mrf.mxu0
      %v6557 = vpop.f32.mrf.mxu0
      %v6558 = vadd.f32 0.0, %v6557
      %v6559 = vpop.f32.mrf.mxu0
      %6560 = vmatprep.mubr.bf16.mxu0 0
      %6561 = vmatmul.mubr.bf16.gmra.mxu0 %v6434
      %v6562 = vpop.f32.mrf.mxu0
      %v6563 = vadd.f32 0.0, %v6562
      %v6564 = vpop.f32.mrf.mxu0
      %v6565 = vpop.f32.mrf.mxu0
      %v6566 = vadd.f32 0.0, %v6565
      %v6567 = vpop.f32.mrf.mxu0
      %6568 = vmatprep.mubr.bf16.mxu0 0
      %6569 = vmatmul.mubr.bf16.gmra.mxu0 %v6435
      %v6570 = vpop.f32.mrf.mxu0
      %v6571 = vadd.f32 0.0, %v6570
      %v6572 = vpop.f32.mrf.mxu0
      %v6573 = vpop.f32.mrf.mxu0
      %v6574 = vadd.f32 0.0, %v6573
      %v6575 = vpop.f32.mrf.mxu0
      %6576 = vmatprep.mubr.bf16.mxu0 0
      %6577 = vmatmul.mubr.bf16.gmra.mxu0 %v6436
      %v6578 = vpop.f32.mrf.mxu0
      %v6579 = vadd.f32 0.0, %v6578
      %v6580 = vpop.f32.mrf.mxu0
      %v6581 = vpop.f32.mrf.mxu0
      %v6582 = vadd.f32 0.0, %v6581
      %v6583 = vpop.f32.mrf.mxu0
      %6584 = vmatprep.mubr.bf16.mxu0 0
      %6585 = vmatmul.mubr.bf16.gmra.mxu0 %v6437
      %v6586 = vpop.f32.mrf.mxu0
      %v6587 = vadd.f32 0.0, %v6586
      %v6588 = vpop.f32.mrf.mxu0
      %v6589 = vpop.f32.mrf.mxu0
      %v6590 = vadd.f32 0.0, %v6589
      %v6591 = vpop.f32.mrf.mxu0
      %6592 = vmatprep.mubr.bf16.mxu0 0
      %6593 = vmatmul.mubr.bf16.gmra.mxu0 %v6438
      %v6594 = vpop.f32.mrf.mxu0
      %v6595 = vadd.f32 0.0, %v6594
      %v6596 = vpop.f32.mrf.mxu0
      %v6597 = vpop.f32.mrf.mxu0
      %v6598 = vadd.f32 0.0, %v6597
      %v6599 = vpop.f32.mrf.mxu0
      %6600 = vmatprep.mubr.bf16.mxu0 0
      %6601 = vmatmul.mubr.bf16.gmra.mxu0 %v6439
      %v6602 = vpop.f32.mrf.mxu0
      %v6603 = vadd.f32 0.0, %v6602
      %v6604 = vpop.f32.mrf.mxu0
      %v6605 = vpop.f32.mrf.mxu0
      %v6606 = vadd.f32 0.0, %v6605
      %v6607 = vpop.f32.mrf.mxu0
      %6608 = vmatprep.mubr.bf16.mxu0 0
      %6609 = vmatmul.mubr.bf16.gmra.mxu0 %v6440
      %v6610 = vpop.f32.mrf.mxu0
      %v6611 = vadd.f32 0.0, %v6610
      %v6612 = vpop.f32.mrf.mxu0
      %v6613 = vpop.f32.mrf.mxu0
      %v6614 = vadd.f32 0.0, %v6613
      %v6615 = vpop.f32.mrf.mxu0
      %6616 = vmatprep.mubr.bf16.mxu0 0
      %6617 = vmatmul.mubr.bf16.gmra.mxu0 %v6441
      %v6618 = vpop.f32.mrf.mxu0
      %v6619 = vadd.f32 0.0, %v6618
      %v6620 = vpop.f32.mrf.mxu0
      %v6621 = vpop.f32.mrf.mxu0
      %v6622 = vadd.f32 0.0, %v6621
      %v6623 = vpop.f32.mrf.mxu0
      %6624 = vmatprep.mubr.bf16.mxu0 0
      %6625 = vmatmul.mubr.bf16.gmra.mxu0 %v6442
      %v6626 = vpop.f32.mrf.mxu0
      %v6627 = vadd.f32 0.0, %v6626
      %v6628 = vpop.f32.mrf.mxu0
      %v6629 = vpop.f32.mrf.mxu0
      %v6630 = vadd.f32 0.0, %v6629
      %v6631 = vpop.f32.mrf.mxu0
      %6632 = vmatprep.mubr.bf16.mxu0 0
      %6633 = vmatmul.mubr.bf16.gmra.mxu0 %v6443
      %v6634 = vpop.f32.mrf.mxu0
      %v6635 = vadd.f32 0.0, %v6634
      %v6636 = vpop.f32.mrf.mxu0
      %v6637 = vpop.f32.mrf.mxu0
      %v6638 = vadd.f32 0.0, %v6637
      %v6639 = vpop.f32.mrf.mxu0
      %6640 = vmatprep.mubr.bf16.mxu0 0
      %6641 = vmatmul.mubr.bf16.gmra.mxu0 %v6444
      %v6642 = vpop.f32.mrf.mxu0
      %v6643 = vadd.f32 0.0, %v6642
      %v6644 = vpop.f32.mrf.mxu0
      %v6645 = vpop.f32.mrf.mxu0
      %v6646 = vadd.f32 0.0, %v6645
      %v6647 = vpop.f32.mrf.mxu0
      %6648 = vmatprep.mubr.bf16.mxu0 0
      %6649 = vmatmul.mubr.bf16.gmra.mxu0 %v6445
      %v6650 = vpop.f32.mrf.mxu0
      %v6651 = vadd.f32 0.0, %v6650
      %v6652 = vpop.f32.mrf.mxu0
      %v6653 = vpop.f32.mrf.mxu0
      %v6654 = vadd.f32 0.0, %v6653
      %v6655 = vpop.f32.mrf.mxu0
      %6656 = vmatprep.mubr.bf16.mxu0 0
      %6657 = vmatmul.mubr.bf16.gmra.mxu0 %v6446
      %v6658 = vpop.f32.mrf.mxu0
      %v6659 = vadd.f32 0.0, %v6658
      %v6660 = vpop.f32.mrf.mxu0
      %v6661 = vpop.f32.mrf.mxu0
      %v6662 = vadd.f32 0.0, %v6661
      %v6663 = vpop.f32.mrf.mxu0
      %6664 = vmatprep.mubr.bf16.mxu0 0
      %6665 = vmatmul.mubr.bf16.gmra.mxu0 %v6447
      %v6666 = vpop.f32.mrf.mxu0
      %v6667 = vadd.f32 0.0, %v6666
      %v6668 = vpop.f32.mrf.mxu0
      %v6669 = vpop.f32.mrf.mxu0
      %v6670 = vadd.f32 0.0, %v6669
      %v6671 = vpop.f32.mrf.mxu0
      %6672 = vdwg.mxu0
      %v6673 = vadd.f32 %v6319, %v6547
      %v6674 = vadd.f32 %v6320, %v6550
      %v6675 = vadd.f32 %v6321, %v6555
      %v6676 = vadd.f32 %v6322, %v6558
      %v6677 = vadd.f32 %v6323, %v6563
      %v6678 = vadd.f32 %v6324, %v6566
      %v6679 = vadd.f32 %v6325, %v6571
      %v6680 = vadd.f32 %v6326, %v6574
      %v6681 = vadd.f32 %v6327, %v6579
      %v6682 = vadd.f32 %v6328, %v6582
      %v6683 = vadd.f32 %v6329, %v6587
      %v6684 = vadd.f32 %v6330, %v6590
      %v6685 = vadd.f32 %v6331, %v6595
      %v6686 = vadd.f32 %v6332, %v6598
      %v6687 = vadd.f32 %v6333, %v6603
      %v6688 = vadd.f32 %v6334, %v6606
      %v6689 = vadd.f32 %v6335, %v6611
      %v6690 = vadd.f32 %v6336, %v6614
      %v6691 = vadd.f32 %v6337, %v6619
      %v6692 = vadd.f32 %v6338, %v6622
      %v6693 = vadd.f32 %v6339, %v6627
      %v6694 = vadd.f32 %v6340, %v6630
      %v6695 = vadd.f32 %v6341, %v6635
      %v6696 = vadd.f32 %v6342, %v6638
      %v6697 = vadd.f32 %v6343, %v6643
      %v6698 = vadd.f32 %v6344, %v6646
      %v6699 = vadd.f32 %v6345, %v6651
      %v6700 = vadd.f32 %v6346, %v6654
      %v6701 = vadd.f32 %v6347, %v6659
      %v6702 = vadd.f32 %v6348, %v6662
      %v6703 = vadd.f32 %v6349, %v6667
      %v6704 = vadd.f32 %v6350, %v6670
      %6705 = vst [vmem:[#allocation4] sm:$0xff] %v6673
      %6706 = vst [vmem:[#allocation4 + $0x8] sm:$0xff] %v6674
      %6707 = vst [vmem:[#allocation4 + $0x10] sm:$0xff] %v6675
      %6708 = vst [vmem:[#allocation4 + $0x18] sm:$0xff] %v6676
      %6709 = vst [vmem:[#allocation4 + $0x20] sm:$0xff] %v6677
      %6710 = vst [vmem:[#allocation4 + $0x28] sm:$0xff] %v6678
      %6711 = vst [vmem:[#allocation4 + $0x30] sm:$0xff] %v6679
      %6712 = vst [vmem:[#allocation4 + $0x38] sm:$0xff] %v6680
      %6713 = vst [vmem:[#allocation4 + $0x40] sm:$0xff] %v6681
      %6714 = vst [vmem:[#allocation4 + $0x48] sm:$0xff] %v6682
      %6715 = vst [vmem:[#allocation4 + $0x50] sm:$0xff] %v6683
      %6716 = vst [vmem:[#allocation4 + $0x58] sm:$0xff] %v6684
      %6717 = vst [vmem:[#allocation4 + $0x60] sm:$0xff] %v6685
      %6718 = vst [vmem:[#allocation4 + $0x68] sm:$0xff] %v6686
      %6719 = vst [vmem:[#allocation4 + $0x70] sm:$0xff] %v6687
      %6720 = vst [vmem:[#allocation4 + $0x78] sm:$0xff] %v6688
      %6721 = vst [vmem:[#allocation4 + $0x80] sm:$0xff] %v6689
      %6722 = vst [vmem:[#allocation4 + $0x88] sm:$0xff] %v6690
      %6723 = vst [vmem:[#allocation4 + $0x90] sm:$0xff] %v6691
      %6724 = vst [vmem:[#allocation4 + $0x98] sm:$0xff] %v6692
      %6725 = vst [vmem:[#allocation4 + $0xa0] sm:$0xff] %v6693
      %6726 = vst [vmem:[#allocation4 + $0xa8] sm:$0xff] %v6694
      %6727 = vst [vmem:[#allocation4 + $0xb0] sm:$0xff] %v6695
      %6728 = vst [vmem:[#allocation4 + $0xb8] sm:$0xff] %v6696
      %6729 = vst [vmem:[#allocation4 + $0xc0] sm:$0xff] %v6697
      %6730 = vst [vmem:[#allocation4 + $0xc8] sm:$0xff] %v6698
      %6731 = vst [vmem:[#allocation4 + $0xd0] sm:$0xff] %v6699
      %6732 = vst [vmem:[#allocation4 + $0xd8] sm:$0xff] %v6700
      %6733 = vst [vmem:[#allocation4 + $0xe0] sm:$0xff] %v6701
      %6734 = vst [vmem:[#allocation4 + $0xe8] sm:$0xff] %v6702
      %6735 = vst [vmem:[#allocation4 + $0xf0] sm:$0xff] %v6703
      %6736 = vst [vmem:[#allocation4 + $0xf8] sm:$0xff] %v6704
      %v6737 = vld [vmem:[%s4269] sm:$0xf]
      %v6738 = vld [vmem:[%s4269 + $0x4] sm:$0xf]
      %v6739 = vld [vmem:[%s4269 + $0x8] sm:$0x1]
      %v6740 = vld [vmem:[%s4269 + $0xc] sm:$0xf]
      %v6741 = vld [vmem:[%s4269 + $0x10] sm:$0xf]
      %v6742 = vld [vmem:[%s4269 + $0x14] sm:$0x1]
      %v6743 = vld [vmem:[%s4269 + $0x18] sm:$0xf]
      %v6744 = vld [vmem:[%s4269 + $0x1c] sm:$0xf]
      %v6745 = vld [vmem:[%s4269 + $0x20] sm:$0x1]
      %v6746 = vld [vmem:[%s4269 + $0x24] sm:$0xf]
      %v6747 = vld [vmem:[%s4269 + $0x28] sm:$0xf]
      %v6748 = vld [vmem:[%s4269 + $0x2c] sm:$0x1]
      %v6749 = vld [vmem:[%s4269 + $0x30] sm:$0xf]
      %v6750 = vld [vmem:[%s4269 + $0x34] sm:$0xf]
      %v6751 = vld [vmem:[%s4269 + $0x38] sm:$0x1]
      %v6752 = vld [vmem:[%s4269 + $0x3c] sm:$0xf]
      %v6753 = vld [vmem:[%s4269 + $0x40] sm:$0xf]
      %v6754 = vld [vmem:[%s4269 + $0x44] sm:$0x1]
      %v6755 = vld [vmem:[%s4269 + $0x48] sm:$0xf]
      %v6756 = vld [vmem:[%s4269 + $0x4c] sm:$0xf]
      %v6757 = vld [vmem:[%s4269 + $0x50] sm:$0x1]
      %v6758 = vld [vmem:[%s4269 + $0x54] sm:$0xf]
      %v6759 = vld [vmem:[%s4269 + $0x58] sm:$0xf]
      %v6760 = vld [vmem:[%s4269 + $0x5c] sm:$0x1]
      %v6761 = vld [vmem:[%s4269 + $0x60] sm:$0xf]
      %v6762 = vld [vmem:[%s4269 + $0x64] sm:$0xf]
      %v6763 = vld [vmem:[%s4269 + $0x68] sm:$0x1]
      %v6764 = vld [vmem:[%s4269 + $0x6c] sm:$0xf]
      %v6765 = vld [vmem:[%s4269 + $0x70] sm:$0xf]
      %v6766 = vld [vmem:[%s4269 + $0x74] sm:$0x1]
      %v6767 = vld [vmem:[%s4269 + $0x78] sm:$0xf]
      %v6768 = vld [vmem:[%s4269 + $0x7c] sm:$0xf]
      %v6769 = vld [vmem:[%s4269 + $0x80] sm:$0x1]
      %v6770 = vld [vmem:[%s4269 + $0x84] sm:$0xf]
      %v6771 = vld [vmem:[%s4269 + $0x88] sm:$0xf]
      %v6772 = vld [vmem:[%s4269 + $0x8c] sm:$0x1]
      %v6773 = vld [vmem:[%s4269 + $0x90] sm:$0xf]
      %v6774 = vld [vmem:[%s4269 + $0x94] sm:$0xf]
      %v6775 = vld [vmem:[%s4269 + $0x98] sm:$0x1]
      %v6776 = vld [vmem:[%s4269 + $0x9c] sm:$0xf]
      %v6777 = vld [vmem:[%s4269 + $0xa0] sm:$0xf]
      %v6778 = vld [vmem:[%s4269 + $0xa4] sm:$0x1]
      %v6779 = vld [vmem:[%s4269 + $0xa8] sm:$0xf]
      %v6780 = vld [vmem:[%s4269 + $0xac] sm:$0xf]
      %v6781 = vld [vmem:[%s4269 + $0xb0] sm:$0x1]
      %v6782 = vld [vmem:[%s4269 + $0xb4] sm:$0xf]
      %v6783 = vld [vmem:[%s4269 + $0xb8] sm:$0xf]
      %v6784 = vld [vmem:[%s4269 + $0xbc] sm:$0x1]
      %v6786 = vshrl.u32 %v6737, 16
      %v6788 = vrot.slane %v6786, 4
      %v6789 = vshll.u32 %v6737, 16
      %v6791 = vrot.slane %v6789, 5
      %v6792 = vor.u32 %v6788, %v6791
      %v6793 = vrot.slane %v6792, 4
      %v6795 = vshll.u32 %v6738, 16
      %v6797 = vrot.slane %v6795, 5
      %v6798 = vsel %vm341, %v6793, %v6797
      %v6799 = vshrl.u32 %v6738, 16
      %v6801 = vrot.slane %v6799, 4
      %v6802 = vor.u32 %v6801, %v6797
      %v6803 = vrot.slane %v6802, 4
      %v6805 = vshll.u32 %v6739, 16
      %v6807 = vrot.slane %v6805, 5
      %v6808 = vsel %vm341, %v6803, %v6807
      %v6810 = vshrl.u32 %v6740, 16
      %v6812 = vrot.slane %v6810, 4
      %v6813 = vshll.u32 %v6740, 16
      %v6815 = vrot.slane %v6813, 5
      %v6816 = vor.u32 %v6812, %v6815
      %v6817 = vrot.slane %v6816, 4
      %v6819 = vshll.u32 %v6741, 16
      %v6821 = vrot.slane %v6819, 5
      %v6822 = vsel %vm341, %v6817, %v6821
      %v6823 = vshrl.u32 %v6741, 16
      %v6825 = vrot.slane %v6823, 4
      %v6826 = vor.u32 %v6825, %v6821
      %v6827 = vrot.slane %v6826, 4
      %v6829 = vshll.u32 %v6742, 16
      %v6831 = vrot.slane %v6829, 5
      %v6832 = vsel %vm341, %v6827, %v6831
      %v6834 = vshrl.u32 %v6743, 16
      %v6836 = vrot.slane %v6834, 4
      %v6837 = vshll.u32 %v6743, 16
      %v6839 = vrot.slane %v6837, 5
      %v6840 = vor.u32 %v6836, %v6839
      %v6841 = vrot.slane %v6840, 4
      %v6843 = vshll.u32 %v6744, 16
      %v6845 = vrot.slane %v6843, 5
      %v6846 = vsel %vm341, %v6841, %v6845
      %v6847 = vshrl.u32 %v6744, 16
      %v6849 = vrot.slane %v6847, 4
      %v6850 = vor.u32 %v6849, %v6845
      %v6851 = vrot.slane %v6850, 4
      %v6853 = vshll.u32 %v6745, 16
      %v6855 = vrot.slane %v6853, 5
      %v6856 = vsel %vm341, %v6851, %v6855
      %v6858 = vshrl.u32 %v6746, 16
      %v6860 = vrot.slane %v6858, 4
      %v6861 = vshll.u32 %v6746, 16
      %v6863 = vrot.slane %v6861, 5
      %v6864 = vor.u32 %v6860, %v6863
      %v6865 = vrot.slane %v6864, 4
      %v6867 = vshll.u32 %v6747, 16
      %v6869 = vrot.slane %v6867, 5
      %v6870 = vsel %vm341, %v6865, %v6869
      %v6871 = vshrl.u32 %v6747, 16
      %v6873 = vrot.slane %v6871, 4
      %v6874 = vor.u32 %v6873, %v6869
      %v6875 = vrot.slane %v6874, 4
      %v6877 = vshll.u32 %v6748, 16
      %v6879 = vrot.slane %v6877, 5
      %v6880 = vsel %vm341, %v6875, %v6879
      %v6882 = vshrl.u32 %v6749, 16
      %v6884 = vrot.slane %v6882, 4
      %v6885 = vshll.u32 %v6749, 16
      %v6887 = vrot.slane %v6885, 5
      %v6888 = vor.u32 %v6884, %v6887
      %v6889 = vrot.slane %v6888, 4
      %v6891 = vshll.u32 %v6750, 16
      %v6893 = vrot.slane %v6891, 5
      %v6894 = vsel %vm341, %v6889, %v6893
      %v6895 = vshrl.u32 %v6750, 16
      %v6897 = vrot.slane %v6895, 4
      %v6898 = vor.u32 %v6897, %v6893
      %v6899 = vrot.slane %v6898, 4
      %v6901 = vshll.u32 %v6751, 16
      %v6903 = vrot.slane %v6901, 5
      %v6904 = vsel %vm341, %v6899, %v6903
      %v6906 = vshrl.u32 %v6752, 16
      %v6908 = vrot.slane %v6906, 4
      %v6909 = vshll.u32 %v6752, 16
      %v6911 = vrot.slane %v6909, 5
      %v6912 = vor.u32 %v6908, %v6911
      %v6913 = vrot.slane %v6912, 4
      %v6915 = vshll.u32 %v6753, 16
      %v6917 = vrot.slane %v6915, 5
      %v6918 = vsel %vm341, %v6913, %v6917
      %v6919 = vshrl.u32 %v6753, 16
      %v6921 = vrot.slane %v6919, 4
      %v6922 = vor.u32 %v6921, %v6917
      %v6923 = vrot.slane %v6922, 4
      %v6925 = vshll.u32 %v6754, 16
      %v6927 = vrot.slane %v6925, 5
      %v6928 = vsel %vm341, %v6923, %v6927
      %v6930 = vshrl.u32 %v6755, 16
      %v6932 = vrot.slane %v6930, 4
      %v6933 = vshll.u32 %v6755, 16
      %v6935 = vrot.slane %v6933, 5
      %v6936 = vor.u32 %v6932, %v6935
      %v6937 = vrot.slane %v6936, 4
      %v6939 = vshll.u32 %v6756, 16
      %v6941 = vrot.slane %v6939, 5
      %v6942 = vsel %vm341, %v6937, %v6941
      %v6943 = vshrl.u32 %v6756, 16
      %v6945 = vrot.slane %v6943, 4
      %v6946 = vor.u32 %v6945, %v6941
      %v6947 = vrot.slane %v6946, 4
      %v6949 = vshll.u32 %v6757, 16
      %v6951 = vrot.slane %v6949, 5
      %v6952 = vsel %vm341, %v6947, %v6951
      %v6954 = vshrl.u32 %v6758, 16
      %v6956 = vrot.slane %v6954, 4
      %v6957 = vshll.u32 %v6758, 16
      %v6959 = vrot.slane %v6957, 5
      %v6960 = vor.u32 %v6956, %v6959
      %v6961 = vrot.slane %v6960, 4
      %v6963 = vshll.u32 %v6759, 16
      %v6965 = vrot.slane %v6963, 5
      %v6966 = vsel %vm341, %v6961, %v6965
      %v6967 = vshrl.u32 %v6759, 16
      %v6969 = vrot.slane %v6967, 4
      %v6970 = vor.u32 %v6969, %v6965
      %v6971 = vrot.slane %v6970, 4
      %v6973 = vshll.u32 %v6760, 16
      %v6975 = vrot.slane %v6973, 5
      %v6976 = vsel %vm341, %v6971, %v6975
      %v6978 = vshrl.u32 %v6761, 16
      %v6980 = vrot.slane %v6978, 4
      %v6981 = vshll.u32 %v6761, 16
      %v6983 = vrot.slane %v6981, 5
      %v6984 = vor.u32 %v6980, %v6983
      %v6985 = vrot.slane %v6984, 4
      %v6987 = vshll.u32 %v6762, 16
      %v6989 = vrot.slane %v6987, 5
      %v6990 = vsel %vm341, %v6985, %v6989
      %v6991 = vshrl.u32 %v6762, 16
      %v6993 = vrot.slane %v6991, 4
      %v6994 = vor.u32 %v6993, %v6989
      %v6995 = vrot.slane %v6994, 4
      %v6997 = vshll.u32 %v6763, 16
      %v6999 = vrot.slane %v6997, 5
      %v7000 = vsel %vm341, %v6995, %v6999
      %v7002 = vshrl.u32 %v6764, 16
      %v7004 = vrot.slane %v7002, 4
      %v7005 = vshll.u32 %v6764, 16
      %v7007 = vrot.slane %v7005, 5
      %v7008 = vor.u32 %v7004, %v7007
      %v7009 = vrot.slane %v7008, 4
      %v7011 = vshll.u32 %v6765, 16
      %v7013 = vrot.slane %v7011, 5
      %v7014 = vsel %vm341, %v7009, %v7013
      %v7015 = vshrl.u32 %v6765, 16
      %v7017 = vrot.slane %v7015, 4
      %v7018 = vor.u32 %v7017, %v7013
      %v7019 = vrot.slane %v7018, 4
      %v7021 = vshll.u32 %v6766, 16
      %v7023 = vrot.slane %v7021, 5
      %v7024 = vsel %vm341, %v7019, %v7023
      %v7026 = vshrl.u32 %v6767, 16
      %v7028 = vrot.slane %v7026, 4
      %v7029 = vshll.u32 %v6767, 16
      %v7031 = vrot.slane %v7029, 5
      %v7032 = vor.u32 %v7028, %v7031
      %v7033 = vrot.slane %v7032, 4
      %v7035 = vshll.u32 %v6768, 16
      %v7037 = vrot.slane %v7035, 5
      %v7038 = vsel %vm341, %v7033, %v7037
      %v7039 = vshrl.u32 %v6768, 16
      %v7041 = vrot.slane %v7039, 4
      %v7042 = vor.u32 %v7041, %v7037
      %v7043 = vrot.slane %v7042, 4
      %v7045 = vshll.u32 %v6769, 16
      %v7047 = vrot.slane %v7045, 5
      %v7048 = vsel %vm341, %v7043, %v7047
      %v7050 = vshrl.u32 %v6770, 16
      %v7052 = vrot.slane %v7050, 4
      %v7053 = vshll.u32 %v6770, 16
      %v7055 = vrot.slane %v7053, 5
      %v7056 = vor.u32 %v7052, %v7055
      %v7057 = vrot.slane %v7056, 4
      %v7059 = vshll.u32 %v6771, 16
      %v7061 = vrot.slane %v7059, 5
      %v7062 = vsel %vm341, %v7057, %v7061
      %v7063 = vshrl.u32 %v6771, 16
      %v7065 = vrot.slane %v7063, 4
      %v7066 = vor.u32 %v7065, %v7061
      %v7067 = vrot.slane %v7066, 4
      %v7069 = vshll.u32 %v6772, 16
      %v7071 = vrot.slane %v7069, 5
      %v7072 = vsel %vm341, %v7067, %v7071
      %v7074 = vshrl.u32 %v6773, 16
      %v7076 = vrot.slane %v7074, 4
      %v7077 = vshll.u32 %v6773, 16
      %v7079 = vrot.slane %v7077, 5
      %v7080 = vor.u32 %v7076, %v7079
      %v7081 = vrot.slane %v7080, 4
      %v7083 = vshll.u32 %v6774, 16
      %v7085 = vrot.slane %v7083, 5
      %v7086 = vsel %vm341, %v7081, %v7085
      %v7087 = vshrl.u32 %v6774, 16
      %v7089 = vrot.slane %v7087, 4
      %v7090 = vor.u32 %v7089, %v7085
      %v7091 = vrot.slane %v7090, 4
      %v7093 = vshll.u32 %v6775, 16
      %v7095 = vrot.slane %v7093, 5
      %v7096 = vsel %vm341, %v7091, %v7095
      %v7098 = vshrl.u32 %v6776, 16
      %v7100 = vrot.slane %v7098, 4
      %v7101 = vshll.u32 %v6776, 16
      %v7103 = vrot.slane %v7101, 5
      %v7104 = vor.u32 %v7100, %v7103
      %v7105 = vrot.slane %v7104, 4
      %v7107 = vshll.u32 %v6777, 16
      %v7109 = vrot.slane %v7107, 5
      %v7110 = vsel %vm341, %v7105, %v7109
      %v7111 = vshrl.u32 %v6777, 16
      %v7113 = vrot.slane %v7111, 4
      %v7114 = vor.u32 %v7113, %v7109
      %v7115 = vrot.slane %v7114, 4
      %v7117 = vshll.u32 %v6778, 16
      %v7119 = vrot.slane %v7117, 5
      %v7120 = vsel %vm341, %v7115, %v7119
      %v7122 = vshrl.u32 %v6779, 16
      %v7124 = vrot.slane %v7122, 4
      %v7125 = vshll.u32 %v6779, 16
      %v7127 = vrot.slane %v7125, 5
      %v7128 = vor.u32 %v7124, %v7127
      %v7129 = vrot.slane %v7128, 4
      %v7131 = vshll.u32 %v6780, 16
      %v7133 = vrot.slane %v7131, 5
      %v7134 = vsel %vm341, %v7129, %v7133
      %v7135 = vshrl.u32 %v6780, 16
      %v7137 = vrot.slane %v7135, 4
      %v7138 = vor.u32 %v7137, %v7133
      %v7139 = vrot.slane %v7138, 4
      %v7141 = vshll.u32 %v6781, 16
      %v7143 = vrot.slane %v7141, 5
      %v7144 = vsel %vm341, %v7139, %v7143
      %v7146 = vshrl.u32 %v6782, 16
      %v7148 = vrot.slane %v7146, 4
      %v7149 = vshll.u32 %v6782, 16
      %v7151 = vrot.slane %v7149, 5
      %v7152 = vor.u32 %v7148, %v7151
      %v7153 = vrot.slane %v7152, 4
      %v7155 = vshll.u32 %v6783, 16
      %v7157 = vrot.slane %v7155, 5
      %v7158 = vsel %vm341, %v7153, %v7157
      %v7159 = vshrl.u32 %v6783, 16
      %v7161 = vrot.slane %v7159, 4
      %v7162 = vor.u32 %v7161, %v7157
      %v7163 = vrot.slane %v7162, 4
      %v7165 = vshll.u32 %v6784, 16
      %v7167 = vrot.slane %v7165, 5
      %v7168 = vsel %vm341, %v7163, %v7167
      %v7169 = vld [vmem:[#allocation4] sm:$0xff]
      %v7170 = vld [vmem:[#allocation4 + $0x8] sm:$0xff]
      %v7171 = vld [vmem:[#allocation4 + $0x10] sm:$0xff]
      %v7172 = vld [vmem:[#allocation4 + $0x18] sm:$0xff]
      %v7173 = vld [vmem:[#allocation4 + $0x20] sm:$0xff]
      %v7174 = vld [vmem:[#allocation4 + $0x28] sm:$0xff]
      %v7175 = vld [vmem:[#allocation4 + $0x30] sm:$0xff]
      %v7176 = vld [vmem:[#allocation4 + $0x38] sm:$0xff]
      %v7177 = vld [vmem:[#allocation4 + $0x40] sm:$0xff]
      %v7178 = vld [vmem:[#allocation4 + $0x48] sm:$0xff]
      %v7179 = vld [vmem:[#allocation4 + $0x50] sm:$0xff]
      %v7180 = vld [vmem:[#allocation4 + $0x58] sm:$0xff]
      %v7181 = vld [vmem:[#allocation4 + $0x60] sm:$0xff]
      %v7182 = vld [vmem:[#allocation4 + $0x68] sm:$0xff]
      %v7183 = vld [vmem:[#allocation4 + $0x70] sm:$0xff]
      %v7184 = vld [vmem:[#allocation4 + $0x78] sm:$0xff]
      %v7185 = vld [vmem:[#allocation4 + $0x80] sm:$0xff]
      %v7186 = vld [vmem:[#allocation4 + $0x88] sm:$0xff]
      %v7187 = vld [vmem:[#allocation4 + $0x90] sm:$0xff]
      %v7188 = vld [vmem:[#allocation4 + $0x98] sm:$0xff]
      %v7189 = vld [vmem:[#allocation4 + $0xa0] sm:$0xff]
      %v7190 = vld [vmem:[#allocation4 + $0xa8] sm:$0xff]
      %v7191 = vld [vmem:[#allocation4 + $0xb0] sm:$0xff]
      %v7192 = vld [vmem:[#allocation4 + $0xb8] sm:$0xff]
      %v7193 = vld [vmem:[#allocation4 + $0xc0] sm:$0xff]
      %v7194 = vld [vmem:[#allocation4 + $0xc8] sm:$0xff]
      %v7195 = vld [vmem:[#allocation4 + $0xd0] sm:$0xff]
      %v7196 = vld [vmem:[#allocation4 + $0xd8] sm:$0xff]
      %v7197 = vld [vmem:[#allocation4 + $0xe0] sm:$0xff]
      %v7198 = vld [vmem:[#allocation4 + $0xe8] sm:$0xff]
      %v7199 = vld [vmem:[#allocation4 + $0xf0] sm:$0xff]
      %v7200 = vld [vmem:[#allocation4 + $0xf8] sm:$0xff]
      %s7201 = scalar_lea.vmem %s3, 256
      %v7202 = vld [vmem:[%s7201] sm:$0xf]
      %v7203 = vld [vmem:[%s7201 + $0x4] sm:$0xf]
      %v7204 = vld [vmem:[%s7201 + $0x8] sm:$0xf]
      %v7205 = vld [vmem:[%s7201 + $0xc] sm:$0xf]
      %v7206 = vld [vmem:[%s7201 + $0x10] sm:$0xf]
      %v7207 = vld [vmem:[%s7201 + $0x14] sm:$0xf]
      %v7208 = vld [vmem:[%s7201 + $0x18] sm:$0xf]
      %v7209 = vld [vmem:[%s7201 + $0x1c] sm:$0xf]
      %v7210 = vld [vmem:[%s7201 + $0x20] sm:$0xf]
      %v7211 = vld [vmem:[%s7201 + $0x24] sm:$0xf]
      %v7212 = vld [vmem:[%s7201 + $0x28] sm:$0xf]
      %v7213 = vld [vmem:[%s7201 + $0x2c] sm:$0xf]
      %v7214 = vld [vmem:[%s7201 + $0x30] sm:$0xf]
      %v7215 = vld [vmem:[%s7201 + $0x34] sm:$0xf]
      %v7216 = vld [vmem:[%s7201 + $0x38] sm:$0xf]
      %v7217 = vld [vmem:[%s7201 + $0x3c] sm:$0xf]
      %v7218 = vunpack.c.l.b16 %v6798
      %v7219 = vunpack.c.l.b16 %v6808
      %v7220 = vunpack.c.l.b16 %v6822
      %v7221 = vunpack.c.l.b16 %v6832
      %v7222 = vunpack.c.l.b16 %v6846
      %v7223 = vunpack.c.l.b16 %v6856
      %v7224 = vunpack.c.l.b16 %v6870
      %v7225 = vunpack.c.l.b16 %v6880
      %v7226 = vunpack.c.l.b16 %v6894
      %v7227 = vunpack.c.l.b16 %v6904
      %v7228 = vunpack.c.l.b16 %v6918
      %v7229 = vunpack.c.l.b16 %v6928
      %v7230 = vunpack.c.l.b16 %v6942
      %v7231 = vunpack.c.l.b16 %v6952
      %v7232 = vunpack.c.l.b16 %v6966
      %v7233 = vunpack.c.l.b16 %v6976
      %v7234 = vunpack.c.l.b16 %v6990
      %v7235 = vunpack.c.l.b16 %v7000
      %v7236 = vunpack.c.l.b16 %v7014
      %v7237 = vunpack.c.l.b16 %v7024
      %v7238 = vunpack.c.l.b16 %v7038
      %v7239 = vunpack.c.l.b16 %v7048
      %v7240 = vunpack.c.l.b16 %v7062
      %v7241 = vunpack.c.l.b16 %v7072
      %v7242 = vunpack.c.l.b16 %v7086
      %v7243 = vunpack.c.l.b16 %v7096
      %v7244 = vunpack.c.l.b16 %v7110
      %v7245 = vunpack.c.l.b16 %v7120
      %v7246 = vunpack.c.l.b16 %v7134
      %v7247 = vunpack.c.l.b16 %v7144
      %v7248 = vunpack.c.l.b16 %v7158
      %v7249 = vunpack.c.l.b16 %v7168
      %v7250 = vpack.c.b16 %v7219, %v7218
      %v7251 = vpack.c.b16 %v7221, %v7220
      %v7252 = vpack.c.b16 %v7223, %v7222
      %v7253 = vpack.c.b16 %v7225, %v7224
      %v7254 = vpack.c.b16 %v7227, %v7226
      %v7255 = vpack.c.b16 %v7229, %v7228
      %v7256 = vpack.c.b16 %v7231, %v7230
      %v7257 = vpack.c.b16 %v7233, %v7232
      %v7258 = vpack.c.b16 %v7235, %v7234
      %v7259 = vpack.c.b16 %v7237, %v7236
      %v7260 = vpack.c.b16 %v7239, %v7238
      %v7261 = vpack.c.b16 %v7241, %v7240
      %v7262 = vpack.c.b16 %v7243, %v7242
      %v7263 = vpack.c.b16 %v7245, %v7244
      %v7264 = vpack.c.b16 %v7247, %v7246
      %v7265 = vpack.c.b16 %v7249, %v7248
      %v7298 = vunpack.c.l.b16 %v7202
      %v7299 = vunpack.c.l.b16 %v7203
      %v7300 = vunpack.c.l.b16 %v7204
      %v7301 = vunpack.c.l.b16 %v7205
      %v7302 = vunpack.c.l.b16 %v7206
      %v7303 = vunpack.c.l.b16 %v7207
      %v7304 = vunpack.c.l.b16 %v7208
      %v7305 = vunpack.c.l.b16 %v7209
      %v7306 = vunpack.c.l.b16 %v7210
      %v7307 = vunpack.c.l.b16 %v7211
      %v7308 = vunpack.c.l.b16 %v7212
      %v7309 = vunpack.c.l.b16 %v7213
      %v7310 = vunpack.c.l.b16 %v7214
      %v7311 = vunpack.c.l.b16 %v7215
      %v7312 = vunpack.c.l.b16 %v7216
      %v7313 = vunpack.c.l.b16 %v7217
      %v7314 = vpack.c.b16 %v7299, %v7298
      %v7315 = vpack.c.b16 %v7301, %v7300
      %v7316 = vpack.c.b16 %v7303, %v7302
      %v7317 = vpack.c.b16 %v7305, %v7304
      %v7318 = vpack.c.b16 %v7307, %v7306
      %v7319 = vpack.c.b16 %v7309, %v7308
      %v7320 = vpack.c.b16 %v7311, %v7310
      %v7321 = vpack.c.b16 %v7313, %v7312
      %7330 = vmatprep.subr.bf16.mxu0 0
      %7331 = vmatpush1.bf16.msra.mxu0 %v7321
      %7332 = vmatprep.subr.bf16.mxu0 0
      %7333 = vmatpush1.bf16.msra.mxu0 %v7320
      %7334 = vmatprep.subr.bf16.mxu0 0
      %7335 = vmatpush1.bf16.msra.mxu0 %v7319
      %7336 = vmatprep.subr.bf16.mxu0 0
      %7337 = vmatpush1.bf16.msra.mxu0 %v7318
      %7338 = vmatprep.subr.bf16.mxu0 0
      %7339 = vmatpush1.bf16.msra.mxu0 %v7317
      %7340 = vmatprep.subr.bf16.mxu0 0
      %7341 = vmatpush1.bf16.msra.mxu0 %v7316
      %7342 = vmatprep.subr.bf16.mxu0 0
      %7343 = vmatpush1.bf16.msra.mxu0 %v7315
      %7344 = vmatprep.subr.bf16.mxu0 0
      %7345 = vmatpush1.bf16.msra.mxu0 %v7314
      %7346 = vmatprep.subr.bf16.mxu0 0
      %7347 = vmatpush2.bf16.msra.mxu0 0
      %7348 = vmatprep.subr.bf16.mxu0 0
      %7349 = vmatpush2.bf16.msra.mxu0 0
      %7350 = vmatprep.subr.bf16.mxu0 0
      %7351 = vmatpush2.bf16.msra.mxu0 0
      %7352 = vmatprep.subr.bf16.mxu0 0
      %7353 = vmatpush2.bf16.msra.mxu0 0
      %7354 = vmatprep.subr.bf16.mxu0 0
      %7355 = vmatpush2.bf16.msra.mxu0 0
      %7356 = vmatprep.subr.bf16.mxu0 0
      %7357 = vmatpush2.bf16.msra.mxu0 0
      %7358 = vmatprep.subr.bf16.mxu0 0
      %7359 = vmatpush2.bf16.msra.mxu0 0
      %7360 = vmatprep.subr.bf16.mxu0 0
      %7361 = vmatpush2.bf16.msra.mxu0 0
      %7362 = vmatprep.mubr.bf16.mxu0 0
      %7363 = vmatmul.mubr.bf16.gmra.mxu0 %v7250
      %v7364 = vpop.f32.mrf.mxu0
      %v7365 = vadd.f32 0.0, %v7364
      %v7366 = vpop.f32.mrf.mxu0
      %v7367 = vpop.f32.mrf.mxu0
      %v7368 = vadd.f32 0.0, %v7367
      %v7369 = vpop.f32.mrf.mxu0
      %7370 = vmatprep.mubr.bf16.mxu0 0
      %7371 = vmatmul.mubr.bf16.gmra.mxu0 %v7251
      %v7372 = vpop.f32.mrf.mxu0
      %v7373 = vadd.f32 0.0, %v7372
      %v7374 = vpop.f32.mrf.mxu0
      %v7375 = vpop.f32.mrf.mxu0
      %v7376 = vadd.f32 0.0, %v7375
      %v7377 = vpop.f32.mrf.mxu0
      %7378 = vmatprep.mubr.bf16.mxu0 0
      %7379 = vmatmul.mubr.bf16.gmra.mxu0 %v7252
      %v7380 = vpop.f32.mrf.mxu0
      %v7381 = vadd.f32 0.0, %v7380
      %v7382 = vpop.f32.mrf.mxu0
      %v7383 = vpop.f32.mrf.mxu0
      %v7384 = vadd.f32 0.0, %v7383
      %v7385 = vpop.f32.mrf.mxu0
      %7386 = vmatprep.mubr.bf16.mxu0 0
      %7387 = vmatmul.mubr.bf16.gmra.mxu0 %v7253
      %v7388 = vpop.f32.mrf.mxu0
      %v7389 = vadd.f32 0.0, %v7388
      %v7390 = vpop.f32.mrf.mxu0
      %v7391 = vpop.f32.mrf.mxu0
      %v7392 = vadd.f32 0.0, %v7391
      %v7393 = vpop.f32.mrf.mxu0
      %7394 = vmatprep.mubr.bf16.mxu0 0
      %7395 = vmatmul.mubr.bf16.gmra.mxu0 %v7254
      %v7396 = vpop.f32.mrf.mxu0
      %v7397 = vadd.f32 0.0, %v7396
      %v7398 = vpop.f32.mrf.mxu0
      %v7399 = vpop.f32.mrf.mxu0
      %v7400 = vadd.f32 0.0, %v7399
      %v7401 = vpop.f32.mrf.mxu0
      %7402 = vmatprep.mubr.bf16.mxu0 0
      %7403 = vmatmul.mubr.bf16.gmra.mxu0 %v7255
      %v7404 = vpop.f32.mrf.mxu0
      %v7405 = vadd.f32 0.0, %v7404
      %v7406 = vpop.f32.mrf.mxu0
      %v7407 = vpop.f32.mrf.mxu0
      %v7408 = vadd.f32 0.0, %v7407
      %v7409 = vpop.f32.mrf.mxu0
      %7410 = vmatprep.mubr.bf16.mxu0 0
      %7411 = vmatmul.mubr.bf16.gmra.mxu0 %v7256
      %v7412 = vpop.f32.mrf.mxu0
      %v7413 = vadd.f32 0.0, %v7412
      %v7414 = vpop.f32.mrf.mxu0
      %v7415 = vpop.f32.mrf.mxu0
      %v7416 = vadd.f32 0.0, %v7415
      %v7417 = vpop.f32.mrf.mxu0
      %7418 = vmatprep.mubr.bf16.mxu0 0
      %7419 = vmatmul.mubr.bf16.gmra.mxu0 %v7257
      %v7420 = vpop.f32.mrf.mxu0
      %v7421 = vadd.f32 0.0, %v7420
      %v7422 = vpop.f32.mrf.mxu0
      %v7423 = vpop.f32.mrf.mxu0
      %v7424 = vadd.f32 0.0, %v7423
      %v7425 = vpop.f32.mrf.mxu0
      %7426 = vmatprep.mubr.bf16.mxu0 0
      %7427 = vmatmul.mubr.bf16.gmra.mxu0 %v7258
      %v7428 = vpop.f32.mrf.mxu0
      %v7429 = vadd.f32 0.0, %v7428
      %v7430 = vpop.f32.mrf.mxu0
      %v7431 = vpop.f32.mrf.mxu0
      %v7432 = vadd.f32 0.0, %v7431
      %v7433 = vpop.f32.mrf.mxu0
      %7434 = vmatprep.mubr.bf16.mxu0 0
      %7435 = vmatmul.mubr.bf16.gmra.mxu0 %v7259
      %v7436 = vpop.f32.mrf.mxu0
      %v7437 = vadd.f32 0.0, %v7436
      %v7438 = vpop.f32.mrf.mxu0
      %v7439 = vpop.f32.mrf.mxu0
      %v7440 = vadd.f32 0.0, %v7439
      %v7441 = vpop.f32.mrf.mxu0
      %7442 = vmatprep.mubr.bf16.mxu0 0
      %7443 = vmatmul.mubr.bf16.gmra.mxu0 %v7260
      %v7444 = vpop.f32.mrf.mxu0
      %v7445 = vadd.f32 0.0, %v7444
      %v7446 = vpop.f32.mrf.mxu0
      %v7447 = vpop.f32.mrf.mxu0
      %v7448 = vadd.f32 0.0, %v7447
      %v7449 = vpop.f32.mrf.mxu0
      %7450 = vmatprep.mubr.bf16.mxu0 0
      %7451 = vmatmul.mubr.bf16.gmra.mxu0 %v7261
      %v7452 = vpop.f32.mrf.mxu0
      %v7453 = vadd.f32 0.0, %v7452
      %v7454 = vpop.f32.mrf.mxu0
      %v7455 = vpop.f32.mrf.mxu0
      %v7456 = vadd.f32 0.0, %v7455
      %v7457 = vpop.f32.mrf.mxu0
      %7458 = vmatprep.mubr.bf16.mxu0 0
      %7459 = vmatmul.mubr.bf16.gmra.mxu0 %v7262
      %v7460 = vpop.f32.mrf.mxu0
      %v7461 = vadd.f32 0.0, %v7460
      %v7462 = vpop.f32.mrf.mxu0
      %v7463 = vpop.f32.mrf.mxu0
      %v7464 = vadd.f32 0.0, %v7463
      %v7465 = vpop.f32.mrf.mxu0
      %7466 = vmatprep.mubr.bf16.mxu0 0
      %7467 = vmatmul.mubr.bf16.gmra.mxu0 %v7263
      %v7468 = vpop.f32.mrf.mxu0
      %v7469 = vadd.f32 0.0, %v7468
      %v7470 = vpop.f32.mrf.mxu0
      %v7471 = vpop.f32.mrf.mxu0
      %v7472 = vadd.f32 0.0, %v7471
      %v7473 = vpop.f32.mrf.mxu0
      %7474 = vmatprep.mubr.bf16.mxu0 0
      %7475 = vmatmul.mubr.bf16.gmra.mxu0 %v7264
      %v7476 = vpop.f32.mrf.mxu0
      %v7477 = vadd.f32 0.0, %v7476
      %v7478 = vpop.f32.mrf.mxu0
      %v7479 = vpop.f32.mrf.mxu0
      %v7480 = vadd.f32 0.0, %v7479
      %v7481 = vpop.f32.mrf.mxu0
      %7482 = vmatprep.mubr.bf16.mxu0 0
      %7483 = vmatmul.mubr.bf16.gmra.mxu0 %v7265
      %v7484 = vpop.f32.mrf.mxu0
      %v7485 = vadd.f32 0.0, %v7484
      %v7486 = vpop.f32.mrf.mxu0
      %v7487 = vpop.f32.mrf.mxu0
      %v7488 = vadd.f32 0.0, %v7487
      %v7489 = vpop.f32.mrf.mxu0
      %7490 = vdwg.mxu0
      %v7491 = vadd.f32 %v7169, %v7365
      %v7492 = vadd.f32 %v7170, %v7368
      %v7493 = vadd.f32 %v7171, %v7373
      %v7494 = vadd.f32 %v7172, %v7376
      %v7495 = vadd.f32 %v7173, %v7381
      %v7496 = vadd.f32 %v7174, %v7384
      %v7497 = vadd.f32 %v7175, %v7389
      %v7498 = vadd.f32 %v7176, %v7392
      %v7499 = vadd.f32 %v7177, %v7397
      %v7500 = vadd.f32 %v7178, %v7400
      %v7501 = vadd.f32 %v7179, %v7405
      %v7502 = vadd.f32 %v7180, %v7408
      %v7503 = vadd.f32 %v7181, %v7413
      %v7504 = vadd.f32 %v7182, %v7416
      %v7505 = vadd.f32 %v7183, %v7421
      %v7506 = vadd.f32 %v7184, %v7424
      %v7507 = vadd.f32 %v7185, %v7429
      %v7508 = vadd.f32 %v7186, %v7432
      %v7509 = vadd.f32 %v7187, %v7437
      %v7510 = vadd.f32 %v7188, %v7440
      %v7511 = vadd.f32 %v7189, %v7445
      %v7512 = vadd.f32 %v7190, %v7448
      %v7513 = vadd.f32 %v7191, %v7453
      %v7514 = vadd.f32 %v7192, %v7456
      %v7515 = vadd.f32 %v7193, %v7461
      %v7516 = vadd.f32 %v7194, %v7464
      %v7517 = vadd.f32 %v7195, %v7469
      %v7518 = vadd.f32 %v7196, %v7472
      %v7519 = vadd.f32 %v7197, %v7477
      %v7520 = vadd.f32 %v7198, %v7480
      %v7521 = vadd.f32 %v7199, %v7485
      %v7522 = vadd.f32 %v7200, %v7488
      %7523 = vst [vmem:[#allocation4] sm:$0xff] %v7491
      %7524 = vst [vmem:[#allocation4 + $0x8] sm:$0xff] %v7492
      %7525 = vst [vmem:[#allocation4 + $0x10] sm:$0xff] %v7493
      %7526 = vst [vmem:[#allocation4 + $0x18] sm:$0xff] %v7494
      %7527 = vst [vmem:[#allocation4 + $0x20] sm:$0xff] %v7495
      %7528 = vst [vmem:[#allocation4 + $0x28] sm:$0xff] %v7496
      %7529 = vst [vmem:[#allocation4 + $0x30] sm:$0xff] %v7497
      %7530 = vst [vmem:[#allocation4 + $0x38] sm:$0xff] %v7498
      %7531 = vst [vmem:[#allocation4 + $0x40] sm:$0xff] %v7499
      %7532 = vst [vmem:[#allocation4 + $0x48] sm:$0xff] %v7500
      %7533 = vst [vmem:[#allocation4 + $0x50] sm:$0xff] %v7501
      %7534 = vst [vmem:[#allocation4 + $0x58] sm:$0xff] %v7502
      %7535 = vst [vmem:[#allocation4 + $0x60] sm:$0xff] %v7503
      %7536 = vst [vmem:[#allocation4 + $0x68] sm:$0xff] %v7504
      %7537 = vst [vmem:[#allocation4 + $0x70] sm:$0xff] %v7505
      %7538 = vst [vmem:[#allocation4 + $0x78] sm:$0xff] %v7506
      %7539 = vst [vmem:[#allocation4 + $0x80] sm:$0xff] %v7507
      %7540 = vst [vmem:[#allocation4 + $0x88] sm:$0xff] %v7508
      %7541 = vst [vmem:[#allocation4 + $0x90] sm:$0xff] %v7509
      %7542 = vst [vmem:[#allocation4 + $0x98] sm:$0xff] %v7510
      %7543 = vst [vmem:[#allocation4 + $0xa0] sm:$0xff] %v7511
      %7544 = vst [vmem:[#allocation4 + $0xa8] sm:$0xff] %v7512
      %7545 = vst [vmem:[#allocation4 + $0xb0] sm:$0xff] %v7513
      %7546 = vst [vmem:[#allocation4 + $0xb8] sm:$0xff] %v7514
      %7547 = vst [vmem:[#allocation4 + $0xc0] sm:$0xff] %v7515
      %7548 = vst [vmem:[#allocation4 + $0xc8] sm:$0xff] %v7516
      %7549 = vst [vmem:[#allocation4 + $0xd0] sm:$0xff] %v7517
      %7550 = vst [vmem:[#allocation4 + $0xd8] sm:$0xff] %v7518
      %7551 = vst [vmem:[#allocation4 + $0xe0] sm:$0xff] %v7519
      %7552 = vst [vmem:[#allocation4 + $0xe8] sm:$0xff] %v7520
      %7553 = vst [vmem:[#allocation4 + $0xf0] sm:$0xff] %v7521
      %7554 = vst [vmem:[#allocation4 + $0xf8] sm:$0xff] %v7522
      %v7555 = vld [vmem:[%s4269] sm:$0xe]
      %v7556 = vld [vmem:[%s4269 + $0x4] sm:$0xf]
      %v7557 = vld [vmem:[%s4269 + $0x8] sm:$0x1]
      %v7558 = vld [vmem:[%s4269 + $0xc] sm:$0xe]
      %v7559 = vld [vmem:[%s4269 + $0x10] sm:$0xf]
      %v7560 = vld [vmem:[%s4269 + $0x14] sm:$0x1]
      %v7561 = vld [vmem:[%s4269 + $0x18] sm:$0xe]
      %v7562 = vld [vmem:[%s4269 + $0x1c] sm:$0xf]
      %v7563 = vld [vmem:[%s4269 + $0x20] sm:$0x1]
      %v7564 = vld [vmem:[%s4269 + $0x24] sm:$0xe]
      %v7565 = vld [vmem:[%s4269 + $0x28] sm:$0xf]
      %v7566 = vld [vmem:[%s4269 + $0x2c] sm:$0x1]
      %v7567 = vld [vmem:[%s4269 + $0x30] sm:$0xe]
      %v7568 = vld [vmem:[%s4269 + $0x34] sm:$0xf]
      %v7569 = vld [vmem:[%s4269 + $0x38] sm:$0x1]
      %v7570 = vld [vmem:[%s4269 + $0x3c] sm:$0xe]
      %v7571 = vld [vmem:[%s4269 + $0x40] sm:$0xf]
      %v7572 = vld [vmem:[%s4269 + $0x44] sm:$0x1]
      %v7573 = vld [vmem:[%s4269 + $0x48] sm:$0xe]
      %v7574 = vld [vmem:[%s4269 + $0x4c] sm:$0xf]
      %v7575 = vld [vmem:[%s4269 + $0x50] sm:$0x1]
      %v7576 = vld [vmem:[%s4269 + $0x54] sm:$0xe]
      %v7577 = vld [vmem:[%s4269 + $0x58] sm:$0xf]
      %v7578 = vld [vmem:[%s4269 + $0x5c] sm:$0x1]
      %v7579 = vld [vmem:[%s4269 + $0x60] sm:$0xe]
      %v7580 = vld [vmem:[%s4269 + $0x64] sm:$0xf]
      %v7581 = vld [vmem:[%s4269 + $0x68] sm:$0x1]
      %v7582 = vld [vmem:[%s4269 + $0x6c] sm:$0xe]
      %v7583 = vld [vmem:[%s4269 + $0x70] sm:$0xf]
      %v7584 = vld [vmem:[%s4269 + $0x74] sm:$0x1]
      %v7585 = vld [vmem:[%s4269 + $0x78] sm:$0xe]
      %v7586 = vld [vmem:[%s4269 + $0x7c] sm:$0xf]
      %v7587 = vld [vmem:[%s4269 + $0x80] sm:$0x1]
      %v7588 = vld [vmem:[%s4269 + $0x84] sm:$0xe]
      %v7589 = vld [vmem:[%s4269 + $0x88] sm:$0xf]
      %v7590 = vld [vmem:[%s4269 + $0x8c] sm:$0x1]
      %v7591 = vld [vmem:[%s4269 + $0x90] sm:$0xe]
      %v7592 = vld [vmem:[%s4269 + $0x94] sm:$0xf]
      %v7593 = vld [vmem:[%s4269 + $0x98] sm:$0x1]
      %v7594 = vld [vmem:[%s4269 + $0x9c] sm:$0xe]
      %v7595 = vld [vmem:[%s4269 + $0xa0] sm:$0xf]
      %v7596 = vld [vmem:[%s4269 + $0xa4] sm:$0x1]
      %v7597 = vld [vmem:[%s4269 + $0xa8] sm:$0xe]
      %v7598 = vld [vmem:[%s4269 + $0xac] sm:$0xf]
      %v7599 = vld [vmem:[%s4269 + $0xb0] sm:$0x1]
      %v7600 = vld [vmem:[%s4269 + $0xb4] sm:$0xe]
      %v7601 = vld [vmem:[%s4269 + $0xb8] sm:$0xf]
      %v7602 = vld [vmem:[%s4269 + $0xbc] sm:$0x1]
      %v7651 = vrot.slane %v7555, 5
      %v7652 = vrot.slane %v7651, 4
      %v7653 = vrot.slane %v7556, 5
      %v7654 = vsel %vm953, %v7652, %v7653
      %v7655 = vrot.slane %v7653, 4
      %v7656 = vrot.slane %v7557, 5
      %v7657 = vsel %vm953, %v7655, %v7656
      %v7658 = vrot.slane %v7558, 5
      %v7659 = vrot.slane %v7658, 4
      %v7660 = vrot.slane %v7559, 5
      %v7661 = vsel %vm953, %v7659, %v7660
      %v7662 = vrot.slane %v7660, 4
      %v7663 = vrot.slane %v7560, 5
      %v7664 = vsel %vm953, %v7662, %v7663
      %v7665 = vrot.slane %v7561, 5
      %v7666 = vrot.slane %v7665, 4
      %v7667 = vrot.slane %v7562, 5
      %v7668 = vsel %vm953, %v7666, %v7667
      %v7669 = vrot.slane %v7667, 4
      %v7670 = vrot.slane %v7563, 5
      %v7671 = vsel %vm953, %v7669, %v7670
      %v7672 = vrot.slane %v7564, 5
      %v7673 = vrot.slane %v7672, 4
      %v7674 = vrot.slane %v7565, 5
      %v7675 = vsel %vm953, %v7673, %v7674
      %v7676 = vrot.slane %v7674, 4
      %v7677 = vrot.slane %v7566, 5
      %v7678 = vsel %vm953, %v7676, %v7677
      %v7679 = vrot.slane %v7567, 5
      %v7680 = vrot.slane %v7679, 4
      %v7681 = vrot.slane %v7568, 5
      %v7682 = vsel %vm953, %v7680, %v7681
      %v7683 = vrot.slane %v7681, 4
      %v7684 = vrot.slane %v7569, 5
      %v7685 = vsel %vm953, %v7683, %v7684
      %v7686 = vrot.slane %v7570, 5
      %v7687 = vrot.slane %v7686, 4
      %v7688 = vrot.slane %v7571, 5
      %v7689 = vsel %vm953, %v7687, %v7688
      %v7690 = vrot.slane %v7688, 4
      %v7691 = vrot.slane %v7572, 5
      %v7692 = vsel %vm953, %v7690, %v7691
      %v7693 = vrot.slane %v7573, 5
      %v7694 = vrot.slane %v7693, 4
      %v7695 = vrot.slane %v7574, 5
      %v7696 = vsel %vm953, %v7694, %v7695
      %v7697 = vrot.slane %v7695, 4
      %v7698 = vrot.slane %v7575, 5
      %v7699 = vsel %vm953, %v7697, %v7698
      %v7700 = vrot.slane %v7576, 5
      %v7701 = vrot.slane %v7700, 4
      %v7702 = vrot.slane %v7577, 5
      %v7703 = vsel %vm953, %v7701, %v7702
      %v7704 = vrot.slane %v7702, 4
      %v7705 = vrot.slane %v7578, 5
      %v7706 = vsel %vm953, %v7704, %v7705
      %v7707 = vrot.slane %v7579, 5
      %v7708 = vrot.slane %v7707, 4
      %v7709 = vrot.slane %v7580, 5
      %v7710 = vsel %vm953, %v7708, %v7709
      %v7711 = vrot.slane %v7709, 4
      %v7712 = vrot.slane %v7581, 5
      %v7713 = vsel %vm953, %v7711, %v7712
      %v7714 = vrot.slane %v7582, 5
      %v7715 = vrot.slane %v7714, 4
      %v7716 = vrot.slane %v7583, 5
      %v7717 = vsel %vm953, %v7715, %v7716
      %v7718 = vrot.slane %v7716, 4
      %v7719 = vrot.slane %v7584, 5
      %v7720 = vsel %vm953, %v7718, %v7719
      %v7721 = vrot.slane %v7585, 5
      %v7722 = vrot.slane %v7721, 4
      %v7723 = vrot.slane %v7586, 5
      %v7724 = vsel %vm953, %v7722, %v7723
      %v7725 = vrot.slane %v7723, 4
      %v7726 = vrot.slane %v7587, 5
      %v7727 = vsel %vm953, %v7725, %v7726
      %v7728 = vrot.slane %v7588, 5
      %v7729 = vrot.slane %v7728, 4
      %v7730 = vrot.slane %v7589, 5
      %v7731 = vsel %vm953, %v7729, %v7730
      %v7732 = vrot.slane %v7730, 4
      %v7733 = vrot.slane %v7590, 5
      %v7734 = vsel %vm953, %v7732, %v7733
      %v7735 = vrot.slane %v7591, 5
      %v7736 = vrot.slane %v7735, 4
      %v7737 = vrot.slane %v7592, 5
      %v7738 = vsel %vm953, %v7736, %v7737
      %v7739 = vrot.slane %v7737, 4
      %v7740 = vrot.slane %v7593, 5
      %v7741 = vsel %vm953, %v7739, %v7740
      %v7742 = vrot.slane %v7594, 5
      %v7743 = vrot.slane %v7742, 4
      %v7744 = vrot.slane %v7595, 5
      %v7745 = vsel %vm953, %v7743, %v7744
      %v7746 = vrot.slane %v7744, 4
      %v7747 = vrot.slane %v7596, 5
      %v7748 = vsel %vm953, %v7746, %v7747
      %v7749 = vrot.slane %v7597, 5
      %v7750 = vrot.slane %v7749, 4
      %v7751 = vrot.slane %v7598, 5
      %v7752 = vsel %vm953, %v7750, %v7751
      %v7753 = vrot.slane %v7751, 4
      %v7754 = vrot.slane %v7599, 5
      %v7755 = vsel %vm953, %v7753, %v7754
      %v7756 = vrot.slane %v7600, 5
      %v7757 = vrot.slane %v7756, 4
      %v7758 = vrot.slane %v7601, 5
      %v7759 = vsel %vm953, %v7757, %v7758
      %v7760 = vrot.slane %v7758, 4
      %v7761 = vrot.slane %v7602, 5
      %v7762 = vsel %vm953, %v7760, %v7761
      %v7763 = vld [vmem:[#allocation4] sm:$0xff]
      %v7764 = vld [vmem:[#allocation4 + $0x8] sm:$0xff]
      %v7765 = vld [vmem:[#allocation4 + $0x10] sm:$0xff]
      %v7766 = vld [vmem:[#allocation4 + $0x18] sm:$0xff]
      %v7767 = vld [vmem:[#allocation4 + $0x20] sm:$0xff]
      %v7768 = vld [vmem:[#allocation4 + $0x28] sm:$0xff]
      %v7769 = vld [vmem:[#allocation4 + $0x30] sm:$0xff]
      %v7770 = vld [vmem:[#allocation4 + $0x38] sm:$0xff]
      %v7771 = vld [vmem:[#allocation4 + $0x40] sm:$0xff]
      %v7772 = vld [vmem:[#allocation4 + $0x48] sm:$0xff]
      %v7773 = vld [vmem:[#allocation4 + $0x50] sm:$0xff]
      %v7774 = vld [vmem:[#allocation4 + $0x58] sm:$0xff]
      %v7775 = vld [vmem:[#allocation4 + $0x60] sm:$0xff]
      %v7776 = vld [vmem:[#allocation4 + $0x68] sm:$0xff]
      %v7777 = vld [vmem:[#allocation4 + $0x70] sm:$0xff]
      %v7778 = vld [vmem:[#allocation4 + $0x78] sm:$0xff]
      %v7779 = vld [vmem:[#allocation4 + $0x80] sm:$0xff]
      %v7780 = vld [vmem:[#allocation4 + $0x88] sm:$0xff]
      %v7781 = vld [vmem:[#allocation4 + $0x90] sm:$0xff]
      %v7782 = vld [vmem:[#allocation4 + $0x98] sm:$0xff]
      %v7783 = vld [vmem:[#allocation4 + $0xa0] sm:$0xff]
      %v7784 = vld [vmem:[#allocation4 + $0xa8] sm:$0xff]
      %v7785 = vld [vmem:[#allocation4 + $0xb0] sm:$0xff]
      %v7786 = vld [vmem:[#allocation4 + $0xb8] sm:$0xff]
      %v7787 = vld [vmem:[#allocation4 + $0xc0] sm:$0xff]
      %v7788 = vld [vmem:[#allocation4 + $0xc8] sm:$0xff]
      %v7789 = vld [vmem:[#allocation4 + $0xd0] sm:$0xff]
      %v7790 = vld [vmem:[#allocation4 + $0xd8] sm:$0xff]
      %v7791 = vld [vmem:[#allocation4 + $0xe0] sm:$0xff]
      %v7792 = vld [vmem:[#allocation4 + $0xe8] sm:$0xff]
      %v7793 = vld [vmem:[#allocation4 + $0xf0] sm:$0xff]
      %v7794 = vld [vmem:[#allocation4 + $0xf8] sm:$0xff]
      %s7795 = scalar_lea.vmem %s3, 320
      %v7796 = vld [vmem:[%s7795] sm:$0xf]
      %v7797 = vld [vmem:[%s7795 + $0x4] sm:$0xf]
      %v7798 = vld [vmem:[%s7795 + $0x8] sm:$0xf]
      %v7799 = vld [vmem:[%s7795 + $0xc] sm:$0xf]
      %v7800 = vld [vmem:[%s7795 + $0x10] sm:$0xf]
      %v7801 = vld [vmem:[%s7795 + $0x14] sm:$0xf]
      %v7802 = vld [vmem:[%s7795 + $0x18] sm:$0xf]
      %v7803 = vld [vmem:[%s7795 + $0x1c] sm:$0xf]
      %v7804 = vld [vmem:[%s7795 + $0x20] sm:$0xf]
      %v7805 = vld [vmem:[%s7795 + $0x24] sm:$0xf]
      %v7806 = vld [vmem:[%s7795 + $0x28] sm:$0xf]
      %v7807 = vld [vmem:[%s7795 + $0x2c] sm:$0xf]
      %v7808 = vld [vmem:[%s7795 + $0x30] sm:$0xf]
      %v7809 = vld [vmem:[%s7795 + $0x34] sm:$0xf]
      %v7810 = vld [vmem:[%s7795 + $0x38] sm:$0xf]
      %v7811 = vld [vmem:[%s7795 + $0x3c] sm:$0xf]
      %v7812 = vunpack.c.l.b16 %v7654
      %v7813 = vunpack.c.l.b16 %v7657
      %v7814 = vunpack.c.l.b16 %v7661
      %v7815 = vunpack.c.l.b16 %v7664
      %v7816 = vunpack.c.l.b16 %v7668
      %v7817 = vunpack.c.l.b16 %v7671
      %v7818 = vunpack.c.l.b16 %v7675
      %v7819 = vunpack.c.l.b16 %v7678
      %v7820 = vunpack.c.l.b16 %v7682
      %v7821 = vunpack.c.l.b16 %v7685
      %v7822 = vunpack.c.l.b16 %v7689
      %v7823 = vunpack.c.l.b16 %v7692
      %v7824 = vunpack.c.l.b16 %v7696
      %v7825 = vunpack.c.l.b16 %v7699
      %v7826 = vunpack.c.l.b16 %v7703
      %v7827 = vunpack.c.l.b16 %v7706
      %v7828 = vunpack.c.l.b16 %v7710
      %v7829 = vunpack.c.l.b16 %v7713
      %v7830 = vunpack.c.l.b16 %v7717
      %v7831 = vunpack.c.l.b16 %v7720
      %v7832 = vunpack.c.l.b16 %v7724
      %v7833 = vunpack.c.l.b16 %v7727
      %v7834 = vunpack.c.l.b16 %v7731
      %v7835 = vunpack.c.l.b16 %v7734
      %v7836 = vunpack.c.l.b16 %v7738
      %v7837 = vunpack.c.l.b16 %v7741
      %v7838 = vunpack.c.l.b16 %v7745
      %v7839 = vunpack.c.l.b16 %v7748
      %v7840 = vunpack.c.l.b16 %v7752
      %v7841 = vunpack.c.l.b16 %v7755
      %v7842 = vunpack.c.l.b16 %v7759
      %v7843 = vunpack.c.l.b16 %v7762
      %v7844 = vpack.c.b16 %v7813, %v7812
      %v7845 = vpack.c.b16 %v7815, %v7814
      %v7846 = vpack.c.b16 %v7817, %v7816
      %v7847 = vpack.c.b16 %v7819, %v7818
      %v7848 = vpack.c.b16 %v7821, %v7820
      %v7849 = vpack.c.b16 %v7823, %v7822
      %v7850 = vpack.c.b16 %v7825, %v7824
      %v7851 = vpack.c.b16 %v7827, %v7826
      %v7852 = vpack.c.b16 %v7829, %v7828
      %v7853 = vpack.c.b16 %v7831, %v7830
      %v7854 = vpack.c.b16 %v7833, %v7832
      %v7855 = vpack.c.b16 %v7835, %v7834
      %v7856 = vpack.c.b16 %v7837, %v7836
      %v7857 = vpack.c.b16 %v7839, %v7838
      %v7858 = vpack.c.b16 %v7841, %v7840
      %v7859 = vpack.c.b16 %v7843, %v7842
      %v7892 = vunpack.c.l.b16 %v7796
      %v7893 = vunpack.c.l.b16 %v7797
      %v7894 = vunpack.c.l.b16 %v7798
      %v7895 = vunpack.c.l.b16 %v7799
      %v7896 = vunpack.c.l.b16 %v7800
      %v7897 = vunpack.c.l.b16 %v7801
      %v7898 = vunpack.c.l.b16 %v7802
      %v7899 = vunpack.c.l.b16 %v7803
      %v7900 = vunpack.c.l.b16 %v7804
      %v7901 = vunpack.c.l.b16 %v7805
      %v7902 = vunpack.c.l.b16 %v7806
      %v7903 = vunpack.c.l.b16 %v7807
      %v7904 = vunpack.c.l.b16 %v7808
      %v7905 = vunpack.c.l.b16 %v7809
      %v7906 = vunpack.c.l.b16 %v7810
      %v7907 = vunpack.c.l.b16 %v7811
      %v7908 = vpack.c.b16 %v7893, %v7892
      %v7909 = vpack.c.b16 %v7895, %v7894
      %v7910 = vpack.c.b16 %v7897, %v7896
      %v7911 = vpack.c.b16 %v7899, %v7898
      %v7912 = vpack.c.b16 %v7901, %v7900
      %v7913 = vpack.c.b16 %v7903, %v7902
      %v7914 = vpack.c.b16 %v7905, %v7904
      %v7915 = vpack.c.b16 %v7907, %v7906
      %7924 = vmatprep.subr.bf16.mxu0 0
      %7925 = vmatpush1.bf16.msra.mxu0 %v7915
      %7926 = vmatprep.subr.bf16.mxu0 0
      %7927 = vmatpush1.bf16.msra.mxu0 %v7914
      %7928 = vmatprep.subr.bf16.mxu0 0
      %7929 = vmatpush1.bf16.msra.mxu0 %v7913
      %7930 = vmatprep.subr.bf16.mxu0 0
      %7931 = vmatpush1.bf16.msra.mxu0 %v7912
      %7932 = vmatprep.subr.bf16.mxu0 0
      %7933 = vmatpush1.bf16.msra.mxu0 %v7911
      %7934 = vmatprep.subr.bf16.mxu0 0
      %7935 = vmatpush1.bf16.msra.mxu0 %v7910
      %7936 = vmatprep.subr.bf16.mxu0 0
      %7937 = vmatpush1.bf16.msra.mxu0 %v7909
      %7938 = vmatprep.subr.bf16.mxu0 0
      %7939 = vmatpush1.bf16.msra.mxu0 %v7908
      %7940 = vmatprep.subr.bf16.mxu0 0
      %7941 = vmatpush2.bf16.msra.mxu0 0
      %7942 = vmatprep.subr.bf16.mxu0 0
      %7943 = vmatpush2.bf16.msra.mxu0 0
      %7944 = vmatprep.subr.bf16.mxu0 0
      %7945 = vmatpush2.bf16.msra.mxu0 0
      %7946 = vmatprep.subr.bf16.mxu0 0
      %7947 = vmatpush2.bf16.msra.mxu0 0
      %7948 = vmatprep.subr.bf16.mxu0 0
      %7949 = vmatpush2.bf16.msra.mxu0 0
      %7950 = vmatprep.subr.bf16.mxu0 0
      %7951 = vmatpush2.bf16.msra.mxu0 0
      %7952 = vmatprep.subr.bf16.mxu0 0
      %7953 = vmatpush2.bf16.msra.mxu0 0
      %7954 = vmatprep.subr.bf16.mxu0 0
      %7955 = vmatpush2.bf16.msra.mxu0 0
      %7956 = vmatprep.mubr.bf16.mxu0 0
      %7957 = vmatmul.mubr.bf16.gmra.mxu0 %v7844
      %v7958 = vpop.f32.mrf.mxu0
      %v7959 = vadd.f32 0.0, %v7958
      %v7960 = vpop.f32.mrf.mxu0
      %v7961 = vpop.f32.mrf.mxu0
      %v7962 = vadd.f32 0.0, %v7961
      %v7963 = vpop.f32.mrf.mxu0
      %7964 = vmatprep.mubr.bf16.mxu0 0
      %7965 = vmatmul.mubr.bf16.gmra.mxu0 %v7845
      %v7966 = vpop.f32.mrf.mxu0
      %v7967 = vadd.f32 0.0, %v7966
      %v7968 = vpop.f32.mrf.mxu0
      %v7969 = vpop.f32.mrf.mxu0
      %v7970 = vadd.f32 0.0, %v7969
      %v7971 = vpop.f32.mrf.mxu0
      %7972 = vmatprep.mubr.bf16.mxu0 0
      %7973 = vmatmul.mubr.bf16.gmra.mxu0 %v7846
      %v7974 = vpop.f32.mrf.mxu0
      %v7975 = vadd.f32 0.0, %v7974
      %v7976 = vpop.f32.mrf.mxu0
      %v7977 = vpop.f32.mrf.mxu0
      %v7978 = vadd.f32 0.0, %v7977
      %v7979 = vpop.f32.mrf.mxu0
      %7980 = vmatprep.mubr.bf16.mxu0 0
      %7981 = vmatmul.mubr.bf16.gmra.mxu0 %v7847
      %v7982 = vpop.f32.mrf.mxu0
      %v7983 = vadd.f32 0.0, %v7982
      %v7984 = vpop.f32.mrf.mxu0
      %v7985 = vpop.f32.mrf.mxu0
      %v7986 = vadd.f32 0.0, %v7985
      %v7987 = vpop.f32.mrf.mxu0
      %7988 = vmatprep.mubr.bf16.mxu0 0
      %7989 = vmatmul.mubr.bf16.gmra.mxu0 %v7848
      %v7990 = vpop.f32.mrf.mxu0
      %v7991 = vadd.f32 0.0, %v7990
      %v7992 = vpop.f32.mrf.mxu0
      %v7993 = vpop.f32.mrf.mxu0
      %v7994 = vadd.f32 0.0, %v7993
      %v7995 = vpop.f32.mrf.mxu0
      %7996 = vmatprep.mubr.bf16.mxu0 0
      %7997 = vmatmul.mubr.bf16.gmra.mxu0 %v7849
      %v7998 = vpop.f32.mrf.mxu0
      %v7999 = vadd.f32 0.0, %v7998
      %v8000 = vpop.f32.mrf.mxu0
      %v8001 = vpop.f32.mrf.mxu0
      %v8002 = vadd.f32 0.0, %v8001
      %v8003 = vpop.f32.mrf.mxu0
      %8004 = vmatprep.mubr.bf16.mxu0 0
      %8005 = vmatmul.mubr.bf16.gmra.mxu0 %v7850
      %v8006 = vpop.f32.mrf.mxu0
      %v8007 = vadd.f32 0.0, %v8006
      %v8008 = vpop.f32.mrf.mxu0
      %v8009 = vpop.f32.mrf.mxu0
      %v8010 = vadd.f32 0.0, %v8009
      %v8011 = vpop.f32.mrf.mxu0
      %8012 = vmatprep.mubr.bf16.mxu0 0
      %8013 = vmatmul.mubr.bf16.gmra.mxu0 %v7851
      %v8014 = vpop.f32.mrf.mxu0
      %v8015 = vadd.f32 0.0, %v8014
      %v8016 = vpop.f32.mrf.mxu0
      %v8017 = vpop.f32.mrf.mxu0
      %v8018 = vadd.f32 0.0, %v8017
      %v8019 = vpop.f32.mrf.mxu0
      %8020 = vmatprep.mubr.bf16.mxu0 0
      %8021 = vmatmul.mubr.bf16.gmra.mxu0 %v7852
      %v8022 = vpop.f32.mrf.mxu0
      %v8023 = vadd.f32 0.0, %v8022
      %v8024 = vpop.f32.mrf.mxu0
      %v8025 = vpop.f32.mrf.mxu0
      %v8026 = vadd.f32 0.0, %v8025
      %v8027 = vpop.f32.mrf.mxu0
      %8028 = vmatprep.mubr.bf16.mxu0 0
      %8029 = vmatmul.mubr.bf16.gmra.mxu0 %v7853
      %v8030 = vpop.f32.mrf.mxu0
      %v8031 = vadd.f32 0.0, %v8030
      %v8032 = vpop.f32.mrf.mxu0
      %v8033 = vpop.f32.mrf.mxu0
      %v8034 = vadd.f32 0.0, %v8033
      %v8035 = vpop.f32.mrf.mxu0
      %8036 = vmatprep.mubr.bf16.mxu0 0
      %8037 = vmatmul.mubr.bf16.gmra.mxu0 %v7854
      %v8038 = vpop.f32.mrf.mxu0
      %v8039 = vadd.f32 0.0, %v8038
      %v8040 = vpop.f32.mrf.mxu0
      %v8041 = vpop.f32.mrf.mxu0
      %v8042 = vadd.f32 0.0, %v8041
      %v8043 = vpop.f32.mrf.mxu0
      %8044 = vmatprep.mubr.bf16.mxu0 0
      %8045 = vmatmul.mubr.bf16.gmra.mxu0 %v7855
      %v8046 = vpop.f32.mrf.mxu0
      %v8047 = vadd.f32 0.0, %v8046
      %v8048 = vpop.f32.mrf.mxu0
      %v8049 = vpop.f32.mrf.mxu0
      %v8050 = vadd.f32 0.0, %v8049
      %v8051 = vpop.f32.mrf.mxu0
      %8052 = vmatprep.mubr.bf16.mxu0 0
      %8053 = vmatmul.mubr.bf16.gmra.mxu0 %v7856
      %v8054 = vpop.f32.mrf.mxu0
      %v8055 = vadd.f32 0.0, %v8054
      %v8056 = vpop.f32.mrf.mxu0
      %v8057 = vpop.f32.mrf.mxu0
      %v8058 = vadd.f32 0.0, %v8057
      %v8059 = vpop.f32.mrf.mxu0
      %8060 = vmatprep.mubr.bf16.mxu0 0
      %8061 = vmatmul.mubr.bf16.gmra.mxu0 %v7857
      %v8062 = vpop.f32.mrf.mxu0
      %v8063 = vadd.f32 0.0, %v8062
      %v8064 = vpop.f32.mrf.mxu0
      %v8065 = vpop.f32.mrf.mxu0
      %v8066 = vadd.f32 0.0, %v8065
      %v8067 = vpop.f32.mrf.mxu0
      %8068 = vmatprep.mubr.bf16.mxu0 0
      %8069 = vmatmul.mubr.bf16.gmra.mxu0 %v7858
      %v8070 = vpop.f32.mrf.mxu0
      %v8071 = vadd.f32 0.0, %v8070
      %v8072 = vpop.f32.mrf.mxu0
      %v8073 = vpop.f32.mrf.mxu0
      %v8074 = vadd.f32 0.0, %v8073
      %v8075 = vpop.f32.mrf.mxu0
      %8076 = vmatprep.mubr.bf16.mxu0 0
      %8077 = vmatmul.mubr.bf16.gmra.mxu0 %v7859
      %v8078 = vpop.f32.mrf.mxu0
      %v8079 = vadd.f32 0.0, %v8078
      %v8080 = vpop.f32.mrf.mxu0
      %v8081 = vpop.f32.mrf.mxu0
      %v8082 = vadd.f32 0.0, %v8081
      %v8083 = vpop.f32.mrf.mxu0
      %8084 = vdwg.mxu0
      %v8085 = vadd.f32 %v7763, %v7959
      %v8086 = vadd.f32 %v7764, %v7962
      %v8087 = vadd.f32 %v7765, %v7967
      %v8088 = vadd.f32 %v7766, %v7970
      %v8089 = vadd.f32 %v7767, %v7975
      %v8090 = vadd.f32 %v7768, %v7978
      %v8091 = vadd.f32 %v7769, %v7983
      %v8092 = vadd.f32 %v7770, %v7986
      %v8093 = vadd.f32 %v7771, %v7991
      %v8094 = vadd.f32 %v7772, %v7994
      %v8095 = vadd.f32 %v7773, %v7999
      %v8096 = vadd.f32 %v7774, %v8002
      %v8097 = vadd.f32 %v7775, %v8007
      %v8098 = vadd.f32 %v7776, %v8010
      %v8099 = vadd.f32 %v7777, %v8015
      %v8100 = vadd.f32 %v7778, %v8018
      %v8101 = vadd.f32 %v7779, %v8023
      %v8102 = vadd.f32 %v7780, %v8026
      %v8103 = vadd.f32 %v7781, %v8031
      %v8104 = vadd.f32 %v7782, %v8034
      %v8105 = vadd.f32 %v7783, %v8039
      %v8106 = vadd.f32 %v7784, %v8042
      %v8107 = vadd.f32 %v7785, %v8047
      %v8108 = vadd.f32 %v7786, %v8050
      %v8109 = vadd.f32 %v7787, %v8055
      %v8110 = vadd.f32 %v7788, %v8058
      %v8111 = vadd.f32 %v7789, %v8063
      %v8112 = vadd.f32 %v7790, %v8066
      %v8113 = vadd.f32 %v7791, %v8071
      %v8114 = vadd.f32 %v7792, %v8074
      %v8115 = vadd.f32 %v7793, %v8079
      %v8116 = vadd.f32 %v7794, %v8082
      %8117 = vst [vmem:[#allocation4] sm:$0xff] %v8085
      %8118 = vst [vmem:[#allocation4 + $0x8] sm:$0xff] %v8086
      %8119 = vst [vmem:[#allocation4 + $0x10] sm:$0xff] %v8087
      %8120 = vst [vmem:[#allocation4 + $0x18] sm:$0xff] %v8088
      %8121 = vst [vmem:[#allocation4 + $0x20] sm:$0xff] %v8089
      %8122 = vst [vmem:[#allocation4 + $0x28] sm:$0xff] %v8090
      %8123 = vst [vmem:[#allocation4 + $0x30] sm:$0xff] %v8091
      %8124 = vst [vmem:[#allocation4 + $0x38] sm:$0xff] %v8092
      %8125 = vst [vmem:[#allocation4 + $0x40] sm:$0xff] %v8093
      %8126 = vst [vmem:[#allocation4 + $0x48] sm:$0xff] %v8094
      %8127 = vst [vmem:[#allocation4 + $0x50] sm:$0xff] %v8095
      %8128 = vst [vmem:[#allocation4 + $0x58] sm:$0xff] %v8096
      %8129 = vst [vmem:[#allocation4 + $0x60] sm:$0xff] %v8097
      %8130 = vst [vmem:[#allocation4 + $0x68] sm:$0xff] %v8098
      %8131 = vst [vmem:[#allocation4 + $0x70] sm:$0xff] %v8099
      %8132 = vst [vmem:[#allocation4 + $0x78] sm:$0xff] %v8100
      %8133 = vst [vmem:[#allocation4 + $0x80] sm:$0xff] %v8101
      %8134 = vst [vmem:[#allocation4 + $0x88] sm:$0xff] %v8102
      %8135 = vst [vmem:[#allocation4 + $0x90] sm:$0xff] %v8103
      %8136 = vst [vmem:[#allocation4 + $0x98] sm:$0xff] %v8104
      %8137 = vst [vmem:[#allocation4 + $0xa0] sm:$0xff] %v8105
      %8138 = vst [vmem:[#allocation4 + $0xa8] sm:$0xff] %v8106
      %8139 = vst [vmem:[#allocation4 + $0xb0] sm:$0xff] %v8107
      %8140 = vst [vmem:[#allocation4 + $0xb8] sm:$0xff] %v8108
      %8141 = vst [vmem:[#allocation4 + $0xc0] sm:$0xff] %v8109
      %8142 = vst [vmem:[#allocation4 + $0xc8] sm:$0xff] %v8110
      %8143 = vst [vmem:[#allocation4 + $0xd0] sm:$0xff] %v8111
      %8144 = vst [vmem:[#allocation4 + $0xd8] sm:$0xff] %v8112
      %8145 = vst [vmem:[#allocation4 + $0xe0] sm:$0xff] %v8113
      %8146 = vst [vmem:[#allocation4 + $0xe8] sm:$0xff] %v8114
      %8147 = vst [vmem:[#allocation4 + $0xf0] sm:$0xff] %v8115
      %8148 = vst [vmem:[#allocation4 + $0xf8] sm:$0xff] %v8116
      %s8149 = scalar_lea.vmem [#allocation3], 24
      %v8150 = vld [vmem:[%s8149] sm:$0xf]
      %v8151 = vld [vmem:[%s8149 + $0x4] sm:$0xf]
      %v8152 = vld [vmem:[%s8149 + $0xc] sm:$0xf]
      %v8153 = vld [vmem:[%s8149 + $0x10] sm:$0xf]
      %v8154 = vld [vmem:[%s8149 + $0x18] sm:$0xf]
      %v8155 = vld [vmem:[%s8149 + $0x1c] sm:$0xf]
      %v8156 = vld [vmem:[%s8149 + $0x24] sm:$0xf]
      %v8157 = vld [vmem:[%s8149 + $0x28] sm:$0xf]
      %v8158 = vld [vmem:[%s8149 + $0x30] sm:$0xf]
      %v8159 = vld [vmem:[%s8149 + $0x34] sm:$0xf]
      %v8160 = vld [vmem:[%s8149 + $0x3c] sm:$0xf]
      %v8161 = vld [vmem:[%s8149 + $0x40] sm:$0xf]
      %v8162 = vld [vmem:[%s8149 + $0x48] sm:$0xf]
      %v8163 = vld [vmem:[%s8149 + $0x4c] sm:$0xf]
      %v8164 = vld [vmem:[%s8149 + $0x54] sm:$0xf]
      %v8165 = vld [vmem:[%s8149 + $0x58] sm:$0xf]
      %v8166 = vld [vmem:[%s8149 + $0x60] sm:$0xf]
      %v8167 = vld [vmem:[%s8149 + $0x64] sm:$0xf]
      %v8168 = vld [vmem:[%s8149 + $0x6c] sm:$0xf]
      %v8169 = vld [vmem:[%s8149 + $0x70] sm:$0xf]
      %v8170 = vld [vmem:[%s8149 + $0x78] sm:$0xf]
      %v8171 = vld [vmem:[%s8149 + $0x7c] sm:$0xf]
      %v8172 = vld [vmem:[%s8149 + $0x84] sm:$0xf]
      %v8173 = vld [vmem:[%s8149 + $0x88] sm:$0xf]
      %v8174 = vld [vmem:[%s8149 + $0x90] sm:$0xf]
      %v8175 = vld [vmem:[%s8149 + $0x94] sm:$0xf]
      %v8176 = vld [vmem:[%s8149 + $0x9c] sm:$0xf]
      %v8177 = vld [vmem:[%s8149 + $0xa0] sm:$0xf]
      %v8178 = vld [vmem:[%s8149 + $0xa8] sm:$0xf]
      %v8179 = vld [vmem:[%s8149 + $0xac] sm:$0xf]
      %v8180 = vld [vmem:[%s8149 + $0xb4] sm:$0xf]
      %v8181 = vld [vmem:[%s8149 + $0xb8] sm:$0xf]
      %v8182 = vld [vmem:[#allocation4] sm:$0xff]
      %v8183 = vld [vmem:[#allocation4 + $0x8] sm:$0xff]
      %v8184 = vld [vmem:[#allocation4 + $0x10] sm:$0xff]
      %v8185 = vld [vmem:[#allocation4 + $0x18] sm:$0xff]
      %v8186 = vld [vmem:[#allocation4 + $0x20] sm:$0xff]
      %v8187 = vld [vmem:[#allocation4 + $0x28] sm:$0xff]
      %v8188 = vld [vmem:[#allocation4 + $0x30] sm:$0xff]
      %v8189 = vld [vmem:[#allocation4 + $0x38] sm:$0xff]
      %v8190 = vld [vmem:[#allocation4 + $0x40] sm:$0xff]
      %v8191 = vld [vmem:[#allocation4 + $0x48] sm:$0xff]
      %v8192 = vld [vmem:[#allocation4 + $0x50] sm:$0xff]
      %v8193 = vld [vmem:[#allocation4 + $0x58] sm:$0xff]
      %v8194 = vld [vmem:[#allocation4 + $0x60] sm:$0xff]
      %v8195 = vld [vmem:[#allocation4 + $0x68] sm:$0xff]
      %v8196 = vld [vmem:[#allocation4 + $0x70] sm:$0xff]
      %v8197 = vld [vmem:[#allocation4 + $0x78] sm:$0xff]
      %v8198 = vld [vmem:[#allocation4 + $0x80] sm:$0xff]
      %v8199 = vld [vmem:[#allocation4 + $0x88] sm:$0xff]
      %v8200 = vld [vmem:[#allocation4 + $0x90] sm:$0xff]
      %v8201 = vld [vmem:[#allocation4 + $0x98] sm:$0xff]
      %v8202 = vld [vmem:[#allocation4 + $0xa0] sm:$0xff]
      %v8203 = vld [vmem:[#allocation4 + $0xa8] sm:$0xff]
      %v8204 = vld [vmem:[#allocation4 + $0xb0] sm:$0xff]
      %v8205 = vld [vmem:[#allocation4 + $0xb8] sm:$0xff]
      %v8206 = vld [vmem:[#allocation4 + $0xc0] sm:$0xff]
      %v8207 = vld [vmem:[#allocation4 + $0xc8] sm:$0xff]
      %v8208 = vld [vmem:[#allocation4 + $0xd0] sm:$0xff]
      %v8209 = vld [vmem:[#allocation4 + $0xd8] sm:$0xff]
      %v8210 = vld [vmem:[#allocation4 + $0xe0] sm:$0xff]
      %v8211 = vld [vmem:[#allocation4 + $0xe8] sm:$0xff]
      %v8212 = vld [vmem:[#allocation4 + $0xf0] sm:$0xff]
      %v8213 = vld [vmem:[#allocation4 + $0xf8] sm:$0xff]
      %s8214 = scalar_lea.vmem %s3, 384
      %v8215 = vld [vmem:[%s8214] sm:$0xf]
      %v8216 = vld [vmem:[%s8214 + $0x4] sm:$0xf]
      %v8217 = vld [vmem:[%s8214 + $0x8] sm:$0xf]
      %v8218 = vld [vmem:[%s8214 + $0xc] sm:$0xf]
      %v8219 = vld [vmem:[%s8214 + $0x10] sm:$0xf]
      %v8220 = vld [vmem:[%s8214 + $0x14] sm:$0xf]
      %v8221 = vld [vmem:[%s8214 + $0x18] sm:$0xf]
      %v8222 = vld [vmem:[%s8214 + $0x1c] sm:$0xf]
      %v8223 = vld [vmem:[%s8214 + $0x20] sm:$0xf]
      %v8224 = vld [vmem:[%s8214 + $0x24] sm:$0xf]
      %v8225 = vld [vmem:[%s8214 + $0x28] sm:$0xf]
      %v8226 = vld [vmem:[%s8214 + $0x2c] sm:$0xf]
      %v8227 = vld [vmem:[%s8214 + $0x30] sm:$0xf]
      %v8228 = vld [vmem:[%s8214 + $0x34] sm:$0xf]
      %v8229 = vld [vmem:[%s8214 + $0x38] sm:$0xf]
      %v8230 = vld [vmem:[%s8214 + $0x3c] sm:$0xf]
      %v8263 = vunpack.c.l.b16 %v8150
      %v8264 = vunpack.c.l.b16 %v8151
      %v8265 = vunpack.c.l.b16 %v8152
      %v8266 = vunpack.c.l.b16 %v8153
      %v8267 = vunpack.c.l.b16 %v8154
      %v8268 = vunpack.c.l.b16 %v8155
      %v8269 = vunpack.c.l.b16 %v8156
      %v8270 = vunpack.c.l.b16 %v8157
      %v8271 = vunpack.c.l.b16 %v8158
      %v8272 = vunpack.c.l.b16 %v8159
      %v8273 = vunpack.c.l.b16 %v8160
      %v8274 = vunpack.c.l.b16 %v8161
      %v8275 = vunpack.c.l.b16 %v8162
      %v8276 = vunpack.c.l.b16 %v8163
      %v8277 = vunpack.c.l.b16 %v8164
      %v8278 = vunpack.c.l.b16 %v8165
      %v8279 = vunpack.c.l.b16 %v8166
      %v8280 = vunpack.c.l.b16 %v8167
      %v8281 = vunpack.c.l.b16 %v8168
      %v8282 = vunpack.c.l.b16 %v8169
      %v8283 = vunpack.c.l.b16 %v8170
      %v8284 = vunpack.c.l.b16 %v8171
      %v8285 = vunpack.c.l.b16 %v8172
      %v8286 = vunpack.c.l.b16 %v8173
      %v8287 = vunpack.c.l.b16 %v8174
      %v8288 = vunpack.c.l.b16 %v8175
      %v8289 = vunpack.c.l.b16 %v8176
      %v8290 = vunpack.c.l.b16 %v8177
      %v8291 = vunpack.c.l.b16 %v8178
      %v8292 = vunpack.c.l.b16 %v8179
      %v8293 = vunpack.c.l.b16 %v8180
      %v8294 = vunpack.c.l.b16 %v8181
      %v8295 = vpack.c.b16 %v8264, %v8263
      %v8296 = vpack.c.b16 %v8266, %v8265
      %v8297 = vpack.c.b16 %v8268, %v8267
      %v8298 = vpack.c.b16 %v8270, %v8269
      %v8299 = vpack.c.b16 %v8272, %v8271
      %v8300 = vpack.c.b16 %v8274, %v8273
      %v8301 = vpack.c.b16 %v8276, %v8275
      %v8302 = vpack.c.b16 %v8278, %v8277
      %v8303 = vpack.c.b16 %v8280, %v8279
      %v8304 = vpack.c.b16 %v8282, %v8281
      %v8305 = vpack.c.b16 %v8284, %v8283
      %v8306 = vpack.c.b16 %v8286, %v8285
      %v8307 = vpack.c.b16 %v8288, %v8287
      %v8308 = vpack.c.b16 %v8290, %v8289
      %v8309 = vpack.c.b16 %v8292, %v8291
      %v8310 = vpack.c.b16 %v8294, %v8293
      %v8343 = vunpack.c.l.b16 %v8215
      %v8344 = vunpack.c.l.b16 %v8216
      %v8345 = vunpack.c.l.b16 %v8217
      %v8346 = vunpack.c.l.b16 %v8218
      %v8347 = vunpack.c.l.b16 %v8219
      %v8348 = vunpack.c.l.b16 %v8220
      %v8349 = vunpack.c.l.b16 %v8221
      %v8350 = vunpack.c.l.b16 %v8222
      %v8351 = vunpack.c.l.b16 %v8223
      %v8352 = vunpack.c.l.b16 %v8224
      %v8353 = vunpack.c.l.b16 %v8225
      %v8354 = vunpack.c.l.b16 %v8226
      %v8355 = vunpack.c.l.b16 %v8227
      %v8356 = vunpack.c.l.b16 %v8228
      %v8357 = vunpack.c.l.b16 %v8229
      %v8358 = vunpack.c.l.b16 %v8230
      %v8359 = vpack.c.b16 %v8344, %v8343
      %v8360 = vpack.c.b16 %v8346, %v8345
      %v8361 = vpack.c.b16 %v8348, %v8347
      %v8362 = vpack.c.b16 %v8350, %v8349
      %v8363 = vpack.c.b16 %v8352, %v8351
      %v8364 = vpack.c.b16 %v8354, %v8353
      %v8365 = vpack.c.b16 %v8356, %v8355
      %v8366 = vpack.c.b16 %v8358, %v8357
      %8375 = vmatprep.subr.bf16.mxu0 0
      %8376 = vmatpush1.bf16.msra.mxu0 %v8366
      %8377 = vmatprep.subr.bf16.mxu0 0
      %8378 = vmatpush1.bf16.msra.mxu0 %v8365
      %8379 = vmatprep.subr.bf16.mxu0 0
      %8380 = vmatpush1.bf16.msra.mxu0 %v8364
      %8381 = vmatprep.subr.bf16.mxu0 0
      %8382 = vmatpush1.bf16.msra.mxu0 %v8363
      %8383 = vmatprep.subr.bf16.mxu0 0
      %8384 = vmatpush1.bf16.msra.mxu0 %v8362
      %8385 = vmatprep.subr.bf16.mxu0 0
      %8386 = vmatpush1.bf16.msra.mxu0 %v8361
      %8387 = vmatprep.subr.bf16.mxu0 0
      %8388 = vmatpush1.bf16.msra.mxu0 %v8360
      %8389 = vmatprep.subr.bf16.mxu0 0
      %8390 = vmatpush1.bf16.msra.mxu0 %v8359
      %8391 = vmatprep.subr.bf16.mxu0 0
      %8392 = vmatpush2.bf16.msra.mxu0 0
      %8393 = vmatprep.subr.bf16.mxu0 0
      %8394 = vmatpush2.bf16.msra.mxu0 0
      %8395 = vmatprep.subr.bf16.mxu0 0
      %8396 = vmatpush2.bf16.msra.mxu0 0
      %8397 = vmatprep.subr.bf16.mxu0 0
      %8398 = vmatpush2.bf16.msra.mxu0 0
      %8399 = vmatprep.subr.bf16.mxu0 0
      %8400 = vmatpush2.bf16.msra.mxu0 0
      %8401 = vmatprep.subr.bf16.mxu0 0
      %8402 = vmatpush2.bf16.msra.mxu0 0
      %8403 = vmatprep.subr.bf16.mxu0 0
      %8404 = vmatpush2.bf16.msra.mxu0 0
      %8405 = vmatprep.subr.bf16.mxu0 0
      %8406 = vmatpush2.bf16.msra.mxu0 0
      %8407 = vmatprep.mubr.bf16.mxu0 0
      %8408 = vmatmul.mubr.bf16.gmra.mxu0 %v8295
      %v8409 = vpop.f32.mrf.mxu0
      %v8410 = vadd.f32 0.0, %v8409
      %v8411 = vpop.f32.mrf.mxu0
      %v8412 = vpop.f32.mrf.mxu0
      %v8413 = vadd.f32 0.0, %v8412
      %v8414 = vpop.f32.mrf.mxu0
      %8415 = vmatprep.mubr.bf16.mxu0 0
      %8416 = vmatmul.mubr.bf16.gmra.mxu0 %v8296
      %v8417 = vpop.f32.mrf.mxu0
      %v8418 = vadd.f32 0.0, %v8417
      %v8419 = vpop.f32.mrf.mxu0
      %v8420 = vpop.f32.mrf.mxu0
      %v8421 = vadd.f32 0.0, %v8420
      %v8422 = vpop.f32.mrf.mxu0
      %8423 = vmatprep.mubr.bf16.mxu0 0
      %8424 = vmatmul.mubr.bf16.gmra.mxu0 %v8297
      %v8425 = vpop.f32.mrf.mxu0
      %v8426 = vadd.f32 0.0, %v8425
      %v8427 = vpop.f32.mrf.mxu0
      %v8428 = vpop.f32.mrf.mxu0
      %v8429 = vadd.f32 0.0, %v8428
      %v8430 = vpop.f32.mrf.mxu0
      %8431 = vmatprep.mubr.bf16.mxu0 0
      %8432 = vmatmul.mubr.bf16.gmra.mxu0 %v8298
      %v8433 = vpop.f32.mrf.mxu0
      %v8434 = vadd.f32 0.0, %v8433
      %v8435 = vpop.f32.mrf.mxu0
      %v8436 = vpop.f32.mrf.mxu0
      %v8437 = vadd.f32 0.0, %v8436
      %v8438 = vpop.f32.mrf.mxu0
      %8439 = vmatprep.mubr.bf16.mxu0 0
      %8440 = vmatmul.mubr.bf16.gmra.mxu0 %v8299
      %v8441 = vpop.f32.mrf.mxu0
      %v8442 = vadd.f32 0.0, %v8441
      %v8443 = vpop.f32.mrf.mxu0
      %v8444 = vpop.f32.mrf.mxu0
      %v8445 = vadd.f32 0.0, %v8444
      %v8446 = vpop.f32.mrf.mxu0
      %8447 = vmatprep.mubr.bf16.mxu0 0
      %8448 = vmatmul.mubr.bf16.gmra.mxu0 %v8300
      %v8449 = vpop.f32.mrf.mxu0
      %v8450 = vadd.f32 0.0, %v8449
      %v8451 = vpop.f32.mrf.mxu0
      %v8452 = vpop.f32.mrf.mxu0
      %v8453 = vadd.f32 0.0, %v8452
      %v8454 = vpop.f32.mrf.mxu0
      %8455 = vmatprep.mubr.bf16.mxu0 0
      %8456 = vmatmul.mubr.bf16.gmra.mxu0 %v8301
      %v8457 = vpop.f32.mrf.mxu0
      %v8458 = vadd.f32 0.0, %v8457
      %v8459 = vpop.f32.mrf.mxu0
      %v8460 = vpop.f32.mrf.mxu0
      %v8461 = vadd.f32 0.0, %v8460
      %v8462 = vpop.f32.mrf.mxu0
      %8463 = vmatprep.mubr.bf16.mxu0 0
      %8464 = vmatmul.mubr.bf16.gmra.mxu0 %v8302
      %v8465 = vpop.f32.mrf.mxu0
      %v8466 = vadd.f32 0.0, %v8465
      %v8467 = vpop.f32.mrf.mxu0
      %v8468 = vpop.f32.mrf.mxu0
      %v8469 = vadd.f32 0.0, %v8468
      %v8470 = vpop.f32.mrf.mxu0
      %8471 = vmatprep.mubr.bf16.mxu0 0
      %8472 = vmatmul.mubr.bf16.gmra.mxu0 %v8303
      %v8473 = vpop.f32.mrf.mxu0
      %v8474 = vadd.f32 0.0, %v8473
      %v8475 = vpop.f32.mrf.mxu0
      %v8476 = vpop.f32.mrf.mxu0
      %v8477 = vadd.f32 0.0, %v8476
      %v8478 = vpop.f32.mrf.mxu0
      %8479 = vmatprep.mubr.bf16.mxu0 0
      %8480 = vmatmul.mubr.bf16.gmra.mxu0 %v8304
      %v8481 = vpop.f32.mrf.mxu0
      %v8482 = vadd.f32 0.0, %v8481
      %v8483 = vpop.f32.mrf.mxu0
      %v8484 = vpop.f32.mrf.mxu0
      %v8485 = vadd.f32 0.0, %v8484
      %v8486 = vpop.f32.mrf.mxu0
      %8487 = vmatprep.mubr.bf16.mxu0 0
      %8488 = vmatmul.mubr.bf16.gmra.mxu0 %v8305
      %v8489 = vpop.f32.mrf.mxu0
      %v8490 = vadd.f32 0.0, %v8489
      %v8491 = vpop.f32.mrf.mxu0
      %v8492 = vpop.f32.mrf.mxu0
      %v8493 = vadd.f32 0.0, %v8492
      %v8494 = vpop.f32.mrf.mxu0
      %8495 = vmatprep.mubr.bf16.mxu0 0
      %8496 = vmatmul.mubr.bf16.gmra.mxu0 %v8306
      %v8497 = vpop.f32.mrf.mxu0
      %v8498 = vadd.f32 0.0, %v8497
      %v8499 = vpop.f32.mrf.mxu0
      %v8500 = vpop.f32.mrf.mxu0
      %v8501 = vadd.f32 0.0, %v8500
      %v8502 = vpop.f32.mrf.mxu0
      %8503 = vmatprep.mubr.bf16.mxu0 0
      %8504 = vmatmul.mubr.bf16.gmra.mxu0 %v8307
      %v8505 = vpop.f32.mrf.mxu0
      %v8506 = vadd.f32 0.0, %v8505
      %v8507 = vpop.f32.mrf.mxu0
      %v8508 = vpop.f32.mrf.mxu0
      %v8509 = vadd.f32 0.0, %v8508
      %v8510 = vpop.f32.mrf.mxu0
      %8511 = vmatprep.mubr.bf16.mxu0 0
      %8512 = vmatmul.mubr.bf16.gmra.mxu0 %v8308
      %v8513 = vpop.f32.mrf.mxu0
      %v8514 = vadd.f32 0.0, %v8513
      %v8515 = vpop.f32.mrf.mxu0
      %v8516 = vpop.f32.mrf.mxu0
      %v8517 = vadd.f32 0.0, %v8516
      %v8518 = vpop.f32.mrf.mxu0
      %8519 = vmatprep.mubr.bf16.mxu0 0
      %8520 = vmatmul.mubr.bf16.gmra.mxu0 %v8309
      %v8521 = vpop.f32.mrf.mxu0
      %v8522 = vadd.f32 0.0, %v8521
      %v8523 = vpop.f32.mrf.mxu0
      %v8524 = vpop.f32.mrf.mxu0
      %v8525 = vadd.f32 0.0, %v8524
      %v8526 = vpop.f32.mrf.mxu0
      %8527 = vmatprep.mubr.bf16.mxu0 0
      %8528 = vmatmul.mubr.bf16.gmra.mxu0 %v8310
      %v8529 = vpop.f32.mrf.mxu0
      %v8530 = vadd.f32 0.0, %v8529
      %v8531 = vpop.f32.mrf.mxu0
      %v8532 = vpop.f32.mrf.mxu0
      %v8533 = vadd.f32 0.0, %v8532
      %v8534 = vpop.f32.mrf.mxu0
      %8535 = vdwg.mxu0
      %v8536 = vadd.f32 %v8182, %v8410
      %v8537 = vadd.f32 %v8183, %v8413
      %v8538 = vadd.f32 %v8184, %v8418
      %v8539 = vadd.f32 %v8185, %v8421
      %v8540 = vadd.f32 %v8186, %v8426
      %v8541 = vadd.f32 %v8187, %v8429
      %v8542 = vadd.f32 %v8188, %v8434
      %v8543 = vadd.f32 %v8189, %v8437
      %v8544 = vadd.f32 %v8190, %v8442
      %v8545 = vadd.f32 %v8191, %v8445
      %v8546 = vadd.f32 %v8192, %v8450
      %v8547 = vadd.f32 %v8193, %v8453
      %v8548 = vadd.f32 %v8194, %v8458
      %v8549 = vadd.f32 %v8195, %v8461
      %v8550 = vadd.f32 %v8196, %v8466
      %v8551 = vadd.f32 %v8197, %v8469
      %v8552 = vadd.f32 %v8198, %v8474
      %v8553 = vadd.f32 %v8199, %v8477
      %v8554 = vadd.f32 %v8200, %v8482
      %v8555 = vadd.f32 %v8201, %v8485
      %v8556 = vadd.f32 %v8202, %v8490
      %v8557 = vadd.f32 %v8203, %v8493
      %v8558 = vadd.f32 %v8204, %v8498
      %v8559 = vadd.f32 %v8205, %v8501
      %v8560 = vadd.f32 %v8206, %v8506
      %v8561 = vadd.f32 %v8207, %v8509
      %v8562 = vadd.f32 %v8208, %v8514
      %v8563 = vadd.f32 %v8209, %v8517
      %v8564 = vadd.f32 %v8210, %v8522
      %v8565 = vadd.f32 %v8211, %v8525
      %v8566 = vadd.f32 %v8212, %v8530
      %v8567 = vadd.f32 %v8213, %v8533
      %8568 = vst [vmem:[#allocation4] sm:$0xff] %v8536
      %8569 = vst [vmem:[#allocation4 + $0x8] sm:$0xff] %v8537
      %8570 = vst [vmem:[#allocation4 + $0x10] sm:$0xff] %v8538
      %8571 = vst [vmem:[#allocation4 + $0x18] sm:$0xff] %v8539
      %8572 = vst [vmem:[#allocation4 + $0x20] sm:$0xff] %v8540
      %8573 = vst [vmem:[#allocation4 + $0x28] sm:$0xff] %v8541
      %8574 = vst [vmem:[#allocation4 + $0x30] sm:$0xff] %v8542
      %8575 = vst [vmem:[#allocation4 + $0x38] sm:$0xff] %v8543
      %8576 = vst [vmem:[#allocation4 + $0x40] sm:$0xff] %v8544
      %8577 = vst [vmem:[#allocation4 + $0x48] sm:$0xff] %v8545
      %8578 = vst [vmem:[#allocation4 + $0x50] sm:$0xff] %v8546
      %8579 = vst [vmem:[#allocation4 + $0x58] sm:$0xff] %v8547
      %8580 = vst [vmem:[#allocation4 + $0x60] sm:$0xff] %v8548
      %8581 = vst [vmem:[#allocation4 + $0x68] sm:$0xff] %v8549
      %8582 = vst [vmem:[#allocation4 + $0x70] sm:$0xff] %v8550
      %8583 = vst [vmem:[#allocation4 + $0x78] sm:$0xff] %v8551
      %8584 = vst [vmem:[#allocation4 + $0x80] sm:$0xff] %v8552
      %8585 = vst [vmem:[#allocation4 + $0x88] sm:$0xff] %v8553
      %8586 = vst [vmem:[#allocation4 + $0x90] sm:$0xff] %v8554
      %8587 = vst [vmem:[#allocation4 + $0x98] sm:$0xff] %v8555
      %8588 = vst [vmem:[#allocation4 + $0xa0] sm:$0xff] %v8556
      %8589 = vst [vmem:[#allocation4 + $0xa8] sm:$0xff] %v8557
      %8590 = vst [vmem:[#allocation4 + $0xb0] sm:$0xff] %v8558
      %8591 = vst [vmem:[#allocation4 + $0xb8] sm:$0xff] %v8559
      %8592 = vst [vmem:[#allocation4 + $0xc0] sm:$0xff] %v8560
      %8593 = vst [vmem:[#allocation4 + $0xc8] sm:$0xff] %v8561
      %8594 = vst [vmem:[#allocation4 + $0xd0] sm:$0xff] %v8562
      %8595 = vst [vmem:[#allocation4 + $0xd8] sm:$0xff] %v8563
      %8596 = vst [vmem:[#allocation4 + $0xe0] sm:$0xff] %v8564
      %8597 = vst [vmem:[#allocation4 + $0xe8] sm:$0xff] %v8565
      %8598 = vst [vmem:[#allocation4 + $0xf0] sm:$0xff] %v8566
      %8599 = vst [vmem:[#allocation4 + $0xf8] sm:$0xff] %v8567
      %v8600 = vld [vmem:[%s8149] sm:$0xf]
      %v8601 = vld [vmem:[%s8149 + $0x4] sm:$0xf]
      %v8602 = vld [vmem:[%s8149 + $0x8] sm:$0x1]
      %v8603 = vld [vmem:[%s8149 + $0xc] sm:$0xf]
      %v8604 = vld [vmem:[%s8149 + $0x10] sm:$0xf]
      %v8605 = vld [vmem:[%s8149 + $0x14] sm:$0x1]
      %v8606 = vld [vmem:[%s8149 + $0x18] sm:$0xf]
      %v8607 = vld [vmem:[%s8149 + $0x1c] sm:$0xf]
      %v8608 = vld [vmem:[%s8149 + $0x20] sm:$0x1]
      %v8609 = vld [vmem:[%s8149 + $0x24] sm:$0xf]
      %v8610 = vld [vmem:[%s8149 + $0x28] sm:$0xf]
      %v8611 = vld [vmem:[%s8149 + $0x2c] sm:$0x1]
      %v8612 = vld [vmem:[%s8149 + $0x30] sm:$0xf]
      %v8613 = vld [vmem:[%s8149 + $0x34] sm:$0xf]
      %v8614 = vld [vmem:[%s8149 + $0x38] sm:$0x1]
      %v8615 = vld [vmem:[%s8149 + $0x3c] sm:$0xf]
      %v8616 = vld [vmem:[%s8149 + $0x40] sm:$0xf]
      %v8617 = vld [vmem:[%s8149 + $0x44] sm:$0x1]
      %v8618 = vld [vmem:[%s8149 + $0x48] sm:$0xf]
      %v8619 = vld [vmem:[%s8149 + $0x4c] sm:$0xf]
      %v8620 = vld [vmem:[%s8149 + $0x50] sm:$0x1]
      %v8621 = vld [vmem:[%s8149 + $0x54] sm:$0xf]
      %v8622 = vld [vmem:[%s8149 + $0x58] sm:$0xf]
      %v8623 = vld [vmem:[%s8149 + $0x5c] sm:$0x1]
      %v8624 = vld [vmem:[%s8149 + $0x60] sm:$0xf]
      %v8625 = vld [vmem:[%s8149 + $0x64] sm:$0xf]
      %v8626 = vld [vmem:[%s8149 + $0x68] sm:$0x1]
      %v8627 = vld [vmem:[%s8149 + $0x6c] sm:$0xf]
      %v8628 = vld [vmem:[%s8149 + $0x70] sm:$0xf]
      %v8629 = vld [vmem:[%s8149 + $0x74] sm:$0x1]
      %v8630 = vld [vmem:[%s8149 + $0x78] sm:$0xf]
      %v8631 = vld [vmem:[%s8149 + $0x7c] sm:$0xf]
      %v8632 = vld [vmem:[%s8149 + $0x80] sm:$0x1]
      %v8633 = vld [vmem:[%s8149 + $0x84] sm:$0xf]
      %v8634 = vld [vmem:[%s8149 + $0x88] sm:$0xf]
      %v8635 = vld [vmem:[%s8149 + $0x8c] sm:$0x1]
      %v8636 = vld [vmem:[%s8149 + $0x90] sm:$0xf]
      %v8637 = vld [vmem:[%s8149 + $0x94] sm:$0xf]
      %v8638 = vld [vmem:[%s8149 + $0x98] sm:$0x1]
      %v8639 = vld [vmem:[%s8149 + $0x9c] sm:$0xf]
      %v8640 = vld [vmem:[%s8149 + $0xa0] sm:$0xf]
      %v8641 = vld [vmem:[%s8149 + $0xa4] sm:$0x1]
      %v8642 = vld [vmem:[%s8149 + $0xa8] sm:$0xf]
      %v8643 = vld [vmem:[%s8149 + $0xac] sm:$0xf]
      %v8644 = vld [vmem:[%s8149 + $0xb0] sm:$0x1]
      %v8645 = vld [vmem:[%s8149 + $0xb4] sm:$0xf]
      %v8646 = vld [vmem:[%s8149 + $0xb8] sm:$0xf]
      %v8647 = vld [vmem:[%s8149 + $0xbc] sm:$0x1]
      %v8649 = vshrl.u32 %v8600, 16
      %v8651 = vrot.slane %v8649, 4
      %v8652 = vshll.u32 %v8600, 16
      %v8654 = vrot.slane %v8652, 5
      %v8655 = vor.u32 %v8651, %v8654
      %v8656 = vrot.slane %v8655, 4
      %v8658 = vshll.u32 %v8601, 16
      %v8660 = vrot.slane %v8658, 5
      %v8661 = vsel %vm341, %v8656, %v8660
      %v8662 = vshrl.u32 %v8601, 16
      %v8664 = vrot.slane %v8662, 4
      %v8665 = vor.u32 %v8664, %v8660
      %v8666 = vrot.slane %v8665, 4
      %v8668 = vshll.u32 %v8602, 16
      %v8670 = vrot.slane %v8668, 5
      %v8671 = vsel %vm341, %v8666, %v8670
      %v8673 = vshrl.u32 %v8603, 16
      %v8675 = vrot.slane %v8673, 4
      %v8676 = vshll.u32 %v8603, 16
      %v8678 = vrot.slane %v8676, 5
      %v8679 = vor.u32 %v8675, %v8678
      %v8680 = vrot.slane %v8679, 4
      %v8682 = vshll.u32 %v8604, 16
      %v8684 = vrot.slane %v8682, 5
      %v8685 = vsel %vm341, %v8680, %v8684
      %v8686 = vshrl.u32 %v8604, 16
      %v8688 = vrot.slane %v8686, 4
      %v8689 = vor.u32 %v8688, %v8684
      %v8690 = vrot.slane %v8689, 4
      %v8692 = vshll.u32 %v8605, 16
      %v8694 = vrot.slane %v8692, 5
      %v8695 = vsel %vm341, %v8690, %v8694
      %v8697 = vshrl.u32 %v8606, 16
      %v8699 = vrot.slane %v8697, 4
      %v8700 = vshll.u32 %v8606, 16
      %v8702 = vrot.slane %v8700, 5
      %v8703 = vor.u32 %v8699, %v8702
      %v8704 = vrot.slane %v8703, 4
      %v8706 = vshll.u32 %v8607, 16
      %v8708 = vrot.slane %v8706, 5
      %v8709 = vsel %vm341, %v8704, %v8708
      %v8710 = vshrl.u32 %v8607, 16
      %v8712 = vrot.slane %v8710, 4
      %v8713 = vor.u32 %v8712, %v8708
      %v8714 = vrot.slane %v8713, 4
      %v8716 = vshll.u32 %v8608, 16
      %v8718 = vrot.slane %v8716, 5
      %v8719 = vsel %vm341, %v8714, %v8718
      %v8721 = vshrl.u32 %v8609, 16
      %v8723 = vrot.slane %v8721, 4
      %v8724 = vshll.u32 %v8609, 16
      %v8726 = vrot.slane %v8724, 5
      %v8727 = vor.u32 %v8723, %v8726
      %v8728 = vrot.slane %v8727, 4
      %v8730 = vshll.u32 %v8610, 16
      %v8732 = vrot.slane %v8730, 5
      %v8733 = vsel %vm341, %v8728, %v8732
      %v8734 = vshrl.u32 %v8610, 16
      %v8736 = vrot.slane %v8734, 4
      %v8737 = vor.u32 %v8736, %v8732
      %v8738 = vrot.slane %v8737, 4
      %v8740 = vshll.u32 %v8611, 16
      %v8742 = vrot.slane %v8740, 5
      %v8743 = vsel %vm341, %v8738, %v8742
      %v8745 = vshrl.u32 %v8612, 16
      %v8747 = vrot.slane %v8745, 4
      %v8748 = vshll.u32 %v8612, 16
      %v8750 = vrot.slane %v8748, 5
      %v8751 = vor.u32 %v8747, %v8750
      %v8752 = vrot.slane %v8751, 4
      %v8754 = vshll.u32 %v8613, 16
      %v8756 = vrot.slane %v8754, 5
      %v8757 = vsel %vm341, %v8752, %v8756
      %v8758 = vshrl.u32 %v8613, 16
      %v8760 = vrot.slane %v8758, 4
      %v8761 = vor.u32 %v8760, %v8756
      %v8762 = vrot.slane %v8761, 4
      %v8764 = vshll.u32 %v8614, 16
      %v8766 = vrot.slane %v8764, 5
      %v8767 = vsel %vm341, %v8762, %v8766
      %v8769 = vshrl.u32 %v8615, 16
      %v8771 = vrot.slane %v8769, 4
      %v8772 = vshll.u32 %v8615, 16
      %v8774 = vrot.slane %v8772, 5
      %v8775 = vor.u32 %v8771, %v8774
      %v8776 = vrot.slane %v8775, 4
      %v8778 = vshll.u32 %v8616, 16
      %v8780 = vrot.slane %v8778, 5
      %v8781 = vsel %vm341, %v8776, %v8780
      %v8782 = vshrl.u32 %v8616, 16
      %v8784 = vrot.slane %v8782, 4
      %v8785 = vor.u32 %v8784, %v8780
      %v8786 = vrot.slane %v8785, 4
      %v8788 = vshll.u32 %v8617, 16
      %v8790 = vrot.slane %v8788, 5
      %v8791 = vsel %vm341, %v8786, %v8790
      %v8793 = vshrl.u32 %v8618, 16
      %v8795 = vrot.slane %v8793, 4
      %v8796 = vshll.u32 %v8618, 16
      %v8798 = vrot.slane %v8796, 5
      %v8799 = vor.u32 %v8795, %v8798
      %v8800 = vrot.slane %v8799, 4
      %v8802 = vshll.u32 %v8619, 16
      %v8804 = vrot.slane %v8802, 5
      %v8805 = vsel %vm341, %v8800, %v8804
      %v8806 = vshrl.u32 %v8619, 16
      %v8808 = vrot.slane %v8806, 4
      %v8809 = vor.u32 %v8808, %v8804
      %v8810 = vrot.slane %v8809, 4
      %v8812 = vshll.u32 %v8620, 16
      %v8814 = vrot.slane %v8812, 5
      %v8815 = vsel %vm341, %v8810, %v8814
      %v8817 = vshrl.u32 %v8621, 16
      %v8819 = vrot.slane %v8817, 4
      %v8820 = vshll.u32 %v8621, 16
      %v8822 = vrot.slane %v8820, 5
      %v8823 = vor.u32 %v8819, %v8822
      %v8824 = vrot.slane %v8823, 4
      %v8826 = vshll.u32 %v8622, 16
      %v8828 = vrot.slane %v8826, 5
      %v8829 = vsel %vm341, %v8824, %v8828
      %v8830 = vshrl.u32 %v8622, 16
      %v8832 = vrot.slane %v8830, 4
      %v8833 = vor.u32 %v8832, %v8828
      %v8834 = vrot.slane %v8833, 4
      %v8836 = vshll.u32 %v8623, 16
      %v8838 = vrot.slane %v8836, 5
      %v8839 = vsel %vm341, %v8834, %v8838
      %v8841 = vshrl.u32 %v8624, 16
      %v8843 = vrot.slane %v8841, 4
      %v8844 = vshll.u32 %v8624, 16
      %v8846 = vrot.slane %v8844, 5
      %v8847 = vor.u32 %v8843, %v8846
      %v8848 = vrot.slane %v8847, 4
      %v8850 = vshll.u32 %v8625, 16
      %v8852 = vrot.slane %v8850, 5
      %v8853 = vsel %vm341, %v8848, %v8852
      %v8854 = vshrl.u32 %v8625, 16
      %v8856 = vrot.slane %v8854, 4
      %v8857 = vor.u32 %v8856, %v8852
      %v8858 = vrot.slane %v8857, 4
      %v8860 = vshll.u32 %v8626, 16
      %v8862 = vrot.slane %v8860, 5
      %v8863 = vsel %vm341, %v8858, %v8862
      %v8865 = vshrl.u32 %v8627, 16
      %v8867 = vrot.slane %v8865, 4
      %v8868 = vshll.u32 %v8627, 16
      %v8870 = vrot.slane %v8868, 5
      %v8871 = vor.u32 %v8867, %v8870
      %v8872 = vrot.slane %v8871, 4
      %v8874 = vshll.u32 %v8628, 16
      %v8876 = vrot.slane %v8874, 5
      %v8877 = vsel %vm341, %v8872, %v8876
      %v8878 = vshrl.u32 %v8628, 16
      %v8880 = vrot.slane %v8878, 4
      %v8881 = vor.u32 %v8880, %v8876
      %v8882 = vrot.slane %v8881, 4
      %v8884 = vshll.u32 %v8629, 16
      %v8886 = vrot.slane %v8884, 5
      %v8887 = vsel %vm341, %v8882, %v8886
      %v8889 = vshrl.u32 %v8630, 16
      %v8891 = vrot.slane %v8889, 4
      %v8892 = vshll.u32 %v8630, 16
      %v8894 = vrot.slane %v8892, 5
      %v8895 = vor.u32 %v8891, %v8894
      %v8896 = vrot.slane %v8895, 4
      %v8898 = vshll.u32 %v8631, 16
      %v8900 = vrot.slane %v8898, 5
      %v8901 = vsel %vm341, %v8896, %v8900
      %v8902 = vshrl.u32 %v8631, 16
      %v8904 = vrot.slane %v8902, 4
      %v8905 = vor.u32 %v8904, %v8900
      %v8906 = vrot.slane %v8905, 4
      %v8908 = vshll.u32 %v8632, 16
      %v8910 = vrot.slane %v8908, 5
      %v8911 = vsel %vm341, %v8906, %v8910
      %v8913 = vshrl.u32 %v8633, 16
      %v8915 = vrot.slane %v8913, 4
      %v8916 = vshll.u32 %v8633, 16
      %v8918 = vrot.slane %v8916, 5
      %v8919 = vor.u32 %v8915, %v8918
      %v8920 = vrot.slane %v8919, 4
      %v8922 = vshll.u32 %v8634, 16
      %v8924 = vrot.slane %v8922, 5
      %v8925 = vsel %vm341, %v8920, %v8924
      %v8926 = vshrl.u32 %v8634, 16
      %v8928 = vrot.slane %v8926, 4
      %v8929 = vor.u32 %v8928, %v8924
      %v8930 = vrot.slane %v8929, 4
      %v8932 = vshll.u32 %v8635, 16
      %v8934 = vrot.slane %v8932, 5
      %v8935 = vsel %vm341, %v8930, %v8934
      %v8937 = vshrl.u32 %v8636, 16
      %v8939 = vrot.slane %v8937, 4
      %v8940 = vshll.u32 %v8636, 16
      %v8942 = vrot.slane %v8940, 5
      %v8943 = vor.u32 %v8939, %v8942
      %v8944 = vrot.slane %v8943, 4
      %v8946 = vshll.u32 %v8637, 16
      %v8948 = vrot.slane %v8946, 5
      %v8949 = vsel %vm341, %v8944, %v8948
      %v8950 = vshrl.u32 %v8637, 16
      %v8952 = vrot.slane %v8950, 4
      %v8953 = vor.u32 %v8952, %v8948
      %v8954 = vrot.slane %v8953, 4
      %v8956 = vshll.u32 %v8638, 16
      %v8958 = vrot.slane %v8956, 5
      %v8959 = vsel %vm341, %v8954, %v8958
      %v8961 = vshrl.u32 %v8639, 16
      %v8963 = vrot.slane %v8961, 4
      %v8964 = vshll.u32 %v8639, 16
      %v8966 = vrot.slane %v8964, 5
      %v8967 = vor.u32 %v8963, %v8966
      %v8968 = vrot.slane %v8967, 4
      %v8970 = vshll.u32 %v8640, 16
      %v8972 = vrot.slane %v8970, 5
      %v8973 = vsel %vm341, %v8968, %v8972
      %v8974 = vshrl.u32 %v8640, 16
      %v8976 = vrot.slane %v8974, 4
      %v8977 = vor.u32 %v8976, %v8972
      %v8978 = vrot.slane %v8977, 4
      %v8980 = vshll.u32 %v8641, 16
      %v8982 = vrot.slane %v8980, 5
      %v8983 = vsel %vm341, %v8978, %v8982
      %v8985 = vshrl.u32 %v8642, 16
      %v8987 = vrot.slane %v8985, 4
      %v8988 = vshll.u32 %v8642, 16
      %v8990 = vrot.slane %v8988, 5
      %v8991 = vor.u32 %v8987, %v8990
      %v8992 = vrot.slane %v8991, 4
      %v8994 = vshll.u32 %v8643, 16
      %v8996 = vrot.slane %v8994, 5
      %v8997 = vsel %vm341, %v8992, %v8996
      %v8998 = vshrl.u32 %v8643, 16
      %v9000 = vrot.slane %v8998, 4
      %v9001 = vor.u32 %v9000, %v8996
      %v9002 = vrot.slane %v9001, 4
      %v9004 = vshll.u32 %v8644, 16
      %v9006 = vrot.slane %v9004, 5
      %v9007 = vsel %vm341, %v9002, %v9006
      %v9009 = vshrl.u32 %v8645, 16
      %v9011 = vrot.slane %v9009, 4
      %v9012 = vshll.u32 %v8645, 16
      %v9014 = vrot.slane %v9012, 5
      %v9015 = vor.u32 %v9011, %v9014
      %v9016 = vrot.slane %v9015, 4
      %v9018 = vshll.u32 %v8646, 16
      %v9020 = vrot.slane %v9018, 5
      %v9021 = vsel %vm341, %v9016, %v9020
      %v9022 = vshrl.u32 %v8646, 16
      %v9024 = vrot.slane %v9022, 4
      %v9025 = vor.u32 %v9024, %v9020
      %v9026 = vrot.slane %v9025, 4
      %v9028 = vshll.u32 %v8647, 16
      %v9030 = vrot.slane %v9028, 5
      %v9031 = vsel %vm341, %v9026, %v9030
      %v9032 = vld [vmem:[#allocation4] sm:$0xff]
      %v9033 = vld [vmem:[#allocation4 + $0x8] sm:$0xff]
      %v9034 = vld [vmem:[#allocation4 + $0x10] sm:$0xff]
      %v9035 = vld [vmem:[#allocation4 + $0x18] sm:$0xff]
      %v9036 = vld [vmem:[#allocation4 + $0x20] sm:$0xff]
      %v9037 = vld [vmem:[#allocation4 + $0x28] sm:$0xff]
      %v9038 = vld [vmem:[#allocation4 + $0x30] sm:$0xff]
      %v9039 = vld [vmem:[#allocation4 + $0x38] sm:$0xff]
      %v9040 = vld [vmem:[#allocation4 + $0x40] sm:$0xff]
      %v9041 = vld [vmem:[#allocation4 + $0x48] sm:$0xff]
      %v9042 = vld [vmem:[#allocation4 + $0x50] sm:$0xff]
      %v9043 = vld [vmem:[#allocation4 + $0x58] sm:$0xff]
      %v9044 = vld [vmem:[#allocation4 + $0x60] sm:$0xff]
      %v9045 = vld [vmem:[#allocation4 + $0x68] sm:$0xff]
      %v9046 = vld [vmem:[#allocation4 + $0x70] sm:$0xff]
      %v9047 = vld [vmem:[#allocation4 + $0x78] sm:$0xff]
      %v9048 = vld [vmem:[#allocation4 + $0x80] sm:$0xff]
      %v9049 = vld [vmem:[#allocation4 + $0x88] sm:$0xff]
      %v9050 = vld [vmem:[#allocation4 + $0x90] sm:$0xff]
      %v9051 = vld [vmem:[#allocation4 + $0x98] sm:$0xff]
      %v9052 = vld [vmem:[#allocation4 + $0xa0] sm:$0xff]
      %v9053 = vld [vmem:[#allocation4 + $0xa8] sm:$0xff]
      %v9054 = vld [vmem:[#allocation4 + $0xb0] sm:$0xff]
      %v9055 = vld [vmem:[#allocation4 + $0xb8] sm:$0xff]
      %v9056 = vld [vmem:[#allocation4 + $0xc0] sm:$0xff]
      %v9057 = vld [vmem:[#allocation4 + $0xc8] sm:$0xff]
      %v9058 = vld [vmem:[#allocation4 + $0xd0] sm:$0xff]
      %v9059 = vld [vmem:[#allocation4 + $0xd8] sm:$0xff]
      %v9060 = vld [vmem:[#allocation4 + $0xe0] sm:$0xff]
      %v9061 = vld [vmem:[#allocation4 + $0xe8] sm:$0xff]
      %v9062 = vld [vmem:[#allocation4 + $0xf0] sm:$0xff]
      %v9063 = vld [vmem:[#allocation4 + $0xf8] sm:$0xff]
      %s9064 = scalar_lea.vmem %s3, 448
      %v9065 = vld [vmem:[%s9064] sm:$0xf]
      %v9066 = vld [vmem:[%s9064 + $0x4] sm:$0xf]
      %v9067 = vld [vmem:[%s9064 + $0x8] sm:$0xf]
      %v9068 = vld [vmem:[%s9064 + $0xc] sm:$0xf]
      %v9069 = vld [vmem:[%s9064 + $0x10] sm:$0xf]
      %v9070 = vld [vmem:[%s9064 + $0x14] sm:$0xf]
      %v9071 = vld [vmem:[%s9064 + $0x18] sm:$0xf]
      %v9072 = vld [vmem:[%s9064 + $0x1c] sm:$0xf]
      %v9073 = vld [vmem:[%s9064 + $0x20] sm:$0xf]
      %v9074 = vld [vmem:[%s9064 + $0x24] sm:$0xf]
      %v9075 = vld [vmem:[%s9064 + $0x28] sm:$0xf]
      %v9076 = vld [vmem:[%s9064 + $0x2c] sm:$0xf]
      %v9077 = vld [vmem:[%s9064 + $0x30] sm:$0xf]
      %v9078 = vld [vmem:[%s9064 + $0x34] sm:$0xf]
      %v9079 = vld [vmem:[%s9064 + $0x38] sm:$0xf]
      %v9080 = vld [vmem:[%s9064 + $0x3c] sm:$0xf]
      %v9081 = vunpack.c.l.b16 %v8661
      %v9082 = vunpack.c.l.b16 %v8671
      %v9083 = vunpack.c.l.b16 %v8685
      %v9084 = vunpack.c.l.b16 %v8695
      %v9085 = vunpack.c.l.b16 %v8709
      %v9086 = vunpack.c.l.b16 %v8719
      %v9087 = vunpack.c.l.b16 %v8733
      %v9088 = vunpack.c.l.b16 %v8743
      %v9089 = vunpack.c.l.b16 %v8757
      %v9090 = vunpack.c.l.b16 %v8767
      %v9091 = vunpack.c.l.b16 %v8781
      %v9092 = vunpack.c.l.b16 %v8791
      %v9093 = vunpack.c.l.b16 %v8805
      %v9094 = vunpack.c.l.b16 %v8815
      %v9095 = vunpack.c.l.b16 %v8829
      %v9096 = vunpack.c.l.b16 %v8839
      %v9097 = vunpack.c.l.b16 %v8853
      %v9098 = vunpack.c.l.b16 %v8863
      %v9099 = vunpack.c.l.b16 %v8877
      %v9100 = vunpack.c.l.b16 %v8887
      %v9101 = vunpack.c.l.b16 %v8901
      %v9102 = vunpack.c.l.b16 %v8911
      %v9103 = vunpack.c.l.b16 %v8925
      %v9104 = vunpack.c.l.b16 %v8935
      %v9105 = vunpack.c.l.b16 %v8949
      %v9106 = vunpack.c.l.b16 %v8959
      %v9107 = vunpack.c.l.b16 %v8973
      %v9108 = vunpack.c.l.b16 %v8983
      %v9109 = vunpack.c.l.b16 %v8997
      %v9110 = vunpack.c.l.b16 %v9007
      %v9111 = vunpack.c.l.b16 %v9021
      %v9112 = vunpack.c.l.b16 %v9031
      %v9113 = vpack.c.b16 %v9082, %v9081
      %v9114 = vpack.c.b16 %v9084, %v9083
      %v9115 = vpack.c.b16 %v9086, %v9085
      %v9116 = vpack.c.b16 %v9088, %v9087
      %v9117 = vpack.c.b16 %v9090, %v9089
      %v9118 = vpack.c.b16 %v9092, %v9091
      %v9119 = vpack.c.b16 %v9094, %v9093
      %v9120 = vpack.c.b16 %v9096, %v9095
      %v9121 = vpack.c.b16 %v9098, %v9097
      %v9122 = vpack.c.b16 %v9100, %v9099
      %v9123 = vpack.c.b16 %v9102, %v9101
      %v9124 = vpack.c.b16 %v9104, %v9103
      %v9125 = vpack.c.b16 %v9106, %v9105
      %v9126 = vpack.c.b16 %v9108, %v9107
      %v9127 = vpack.c.b16 %v9110, %v9109
      %v9128 = vpack.c.b16 %v9112, %v9111
      %v9161 = vunpack.c.l.b16 %v9065
      %v9162 = vunpack.c.l.b16 %v9066
      %v9163 = vunpack.c.l.b16 %v9067
      %v9164 = vunpack.c.l.b16 %v9068
      %v9165 = vunpack.c.l.b16 %v9069
      %v9166 = vunpack.c.l.b16 %v9070
      %v9167 = vunpack.c.l.b16 %v9071
      %v9168 = vunpack.c.l.b16 %v9072
      %v9169 = vunpack.c.l.b16 %v9073
      %v9170 = vunpack.c.l.b16 %v9074
      %v9171 = vunpack.c.l.b16 %v9075
      %v9172 = vunpack.c.l.b16 %v9076
      %v9173 = vunpack.c.l.b16 %v9077
      %v9174 = vunpack.c.l.b16 %v9078
      %v9175 = vunpack.c.l.b16 %v9079
      %v9176 = vunpack.c.l.b16 %v9080
      %v9177 = vpack.c.b16 %v9162, %v9161
      %v9178 = vpack.c.b16 %v9164, %v9163
      %v9179 = vpack.c.b16 %v9166, %v9165
      %v9180 = vpack.c.b16 %v9168, %v9167
      %v9181 = vpack.c.b16 %v9170, %v9169
      %v9182 = vpack.c.b16 %v9172, %v9171
      %v9183 = vpack.c.b16 %v9174, %v9173
      %v9184 = vpack.c.b16 %v9176, %v9175
      %9193 = vmatprep.subr.bf16.mxu0 0
      %9194 = vmatpush1.bf16.msra.mxu0 %v9184
      %9195 = vmatprep.subr.bf16.mxu0 0
      %9196 = vmatpush1.bf16.msra.mxu0 %v9183
      %9197 = vmatprep.subr.bf16.mxu0 0
      %9198 = vmatpush1.bf16.msra.mxu0 %v9182
      %9199 = vmatprep.subr.bf16.mxu0 0
      %9200 = vmatpush1.bf16.msra.mxu0 %v9181
      %9201 = vmatprep.subr.bf16.mxu0 0
      %9202 = vmatpush1.bf16.msra.mxu0 %v9180
      %9203 = vmatprep.subr.bf16.mxu0 0
      %9204 = vmatpush1.bf16.msra.mxu0 %v9179
      %9205 = vmatprep.subr.bf16.mxu0 0
      %9206 = vmatpush1.bf16.msra.mxu0 %v9178
      %9207 = vmatprep.subr.bf16.mxu0 0
      %9208 = vmatpush1.bf16.msra.mxu0 %v9177
      %9209 = vmatprep.subr.bf16.mxu0 0
      %9210 = vmatpush2.bf16.msra.mxu0 0
      %9211 = vmatprep.subr.bf16.mxu0 0
      %9212 = vmatpush2.bf16.msra.mxu0 0
      %9213 = vmatprep.subr.bf16.mxu0 0
      %9214 = vmatpush2.bf16.msra.mxu0 0
      %9215 = vmatprep.subr.bf16.mxu0 0
      %9216 = vmatpush2.bf16.msra.mxu0 0
      %9217 = vmatprep.subr.bf16.mxu0 0
      %9218 = vmatpush2.bf16.msra.mxu0 0
      %9219 = vmatprep.subr.bf16.mxu0 0
      %9220 = vmatpush2.bf16.msra.mxu0 0
      %9221 = vmatprep.subr.bf16.mxu0 0
      %9222 = vmatpush2.bf16.msra.mxu0 0
      %9223 = vmatprep.subr.bf16.mxu0 0
      %9224 = vmatpush2.bf16.msra.mxu0 0
      %9225 = vmatprep.mubr.bf16.mxu0 0
      %9226 = vmatmul.mubr.bf16.gmra.mxu0 %v9113
      %v9227 = vpop.f32.mrf.mxu0
      %v9228 = vadd.f32 0.0, %v9227
      %v9229 = vpop.f32.mrf.mxu0
      %v9230 = vpop.f32.mrf.mxu0
      %v9231 = vadd.f32 0.0, %v9230
      %v9232 = vpop.f32.mrf.mxu0
      %9233 = vmatprep.mubr.bf16.mxu0 0
      %9234 = vmatmul.mubr.bf16.gmra.mxu0 %v9114
      %v9235 = vpop.f32.mrf.mxu0
      %v9236 = vadd.f32 0.0, %v9235
      %v9237 = vpop.f32.mrf.mxu0
      %v9238 = vpop.f32.mrf.mxu0
      %v9239 = vadd.f32 0.0, %v9238
      %v9240 = vpop.f32.mrf.mxu0
      %9241 = vmatprep.mubr.bf16.mxu0 0
      %9242 = vmatmul.mubr.bf16.gmra.mxu0 %v9115
      %v9243 = vpop.f32.mrf.mxu0
      %v9244 = vadd.f32 0.0, %v9243
      %v9245 = vpop.f32.mrf.mxu0
      %v9246 = vpop.f32.mrf.mxu0
      %v9247 = vadd.f32 0.0, %v9246
      %v9248 = vpop.f32.mrf.mxu0
      %9249 = vmatprep.mubr.bf16.mxu0 0
      %9250 = vmatmul.mubr.bf16.gmra.mxu0 %v9116
      %v9251 = vpop.f32.mrf.mxu0
      %v9252 = vadd.f32 0.0, %v9251
      %v9253 = vpop.f32.mrf.mxu0
      %v9254 = vpop.f32.mrf.mxu0
      %v9255 = vadd.f32 0.0, %v9254
      %v9256 = vpop.f32.mrf.mxu0
      %9257 = vmatprep.mubr.bf16.mxu0 0
      %9258 = vmatmul.mubr.bf16.gmra.mxu0 %v9117
      %v9259 = vpop.f32.mrf.mxu0
      %v9260 = vadd.f32 0.0, %v9259
      %v9261 = vpop.f32.mrf.mxu0
      %v9262 = vpop.f32.mrf.mxu0
      %v9263 = vadd.f32 0.0, %v9262
      %v9264 = vpop.f32.mrf.mxu0
      %9265 = vmatprep.mubr.bf16.mxu0 0
      %9266 = vmatmul.mubr.bf16.gmra.mxu0 %v9118
      %v9267 = vpop.f32.mrf.mxu0
      %v9268 = vadd.f32 0.0, %v9267
      %v9269 = vpop.f32.mrf.mxu0
      %v9270 = vpop.f32.mrf.mxu0
      %v9271 = vadd.f32 0.0, %v9270
      %v9272 = vpop.f32.mrf.mxu0
      %9273 = vmatprep.mubr.bf16.mxu0 0
      %9274 = vmatmul.mubr.bf16.gmra.mxu0 %v9119
      %v9275 = vpop.f32.mrf.mxu0
      %v9276 = vadd.f32 0.0, %v9275
      %v9277 = vpop.f32.mrf.mxu0
      %v9278 = vpop.f32.mrf.mxu0
      %v9279 = vadd.f32 0.0, %v9278
      %v9280 = vpop.f32.mrf.mxu0
      %9281 = vmatprep.mubr.bf16.mxu0 0
      %9282 = vmatmul.mubr.bf16.gmra.mxu0 %v9120
      %v9283 = vpop.f32.mrf.mxu0
      %v9284 = vadd.f32 0.0, %v9283
      %v9285 = vpop.f32.mrf.mxu0
      %v9286 = vpop.f32.mrf.mxu0
      %v9287 = vadd.f32 0.0, %v9286
      %v9288 = vpop.f32.mrf.mxu0
      %9289 = vmatprep.mubr.bf16.mxu0 0
      %9290 = vmatmul.mubr.bf16.gmra.mxu0 %v9121
      %v9291 = vpop.f32.mrf.mxu0
      %v9292 = vadd.f32 0.0, %v9291
      %v9293 = vpop.f32.mrf.mxu0
      %v9294 = vpop.f32.mrf.mxu0
      %v9295 = vadd.f32 0.0, %v9294
      %v9296 = vpop.f32.mrf.mxu0
      %9297 = vmatprep.mubr.bf16.mxu0 0
      %9298 = vmatmul.mubr.bf16.gmra.mxu0 %v9122
      %v9299 = vpop.f32.mrf.mxu0
      %v9300 = vadd.f32 0.0, %v9299
      %v9301 = vpop.f32.mrf.mxu0
      %v9302 = vpop.f32.mrf.mxu0
      %v9303 = vadd.f32 0.0, %v9302
      %v9304 = vpop.f32.mrf.mxu0
      %9305 = vmatprep.mubr.bf16.mxu0 0
      %9306 = vmatmul.mubr.bf16.gmra.mxu0 %v9123
      %v9307 = vpop.f32.mrf.mxu0
      %v9308 = vadd.f32 0.0, %v9307
      %v9309 = vpop.f32.mrf.mxu0
      %v9310 = vpop.f32.mrf.mxu0
      %v9311 = vadd.f32 0.0, %v9310
      %v9312 = vpop.f32.mrf.mxu0
      %9313 = vmatprep.mubr.bf16.mxu0 0
      %9314 = vmatmul.mubr.bf16.gmra.mxu0 %v9124
      %v9315 = vpop.f32.mrf.mxu0
      %v9316 = vadd.f32 0.0, %v9315
      %v9317 = vpop.f32.mrf.mxu0
      %v9318 = vpop.f32.mrf.mxu0
      %v9319 = vadd.f32 0.0, %v9318
      %v9320 = vpop.f32.mrf.mxu0
      %9321 = vmatprep.mubr.bf16.mxu0 0
      %9322 = vmatmul.mubr.bf16.gmra.mxu0 %v9125
      %v9323 = vpop.f32.mrf.mxu0
      %v9324 = vadd.f32 0.0, %v9323
      %v9325 = vpop.f32.mrf.mxu0
      %v9326 = vpop.f32.mrf.mxu0
      %v9327 = vadd.f32 0.0, %v9326
      %v9328 = vpop.f32.mrf.mxu0
      %9329 = vmatprep.mubr.bf16.mxu0 0
      %9330 = vmatmul.mubr.bf16.gmra.mxu0 %v9126
      %v9331 = vpop.f32.mrf.mxu0
      %v9332 = vadd.f32 0.0, %v9331
      %v9333 = vpop.f32.mrf.mxu0
      %v9334 = vpop.f32.mrf.mxu0
      %v9335 = vadd.f32 0.0, %v9334
      %v9336 = vpop.f32.mrf.mxu0
      %9337 = vmatprep.mubr.bf16.mxu0 0
      %9338 = vmatmul.mubr.bf16.gmra.mxu0 %v9127
      %v9339 = vpop.f32.mrf.mxu0
      %v9340 = vadd.f32 0.0, %v9339
      %v9341 = vpop.f32.mrf.mxu0
      %v9342 = vpop.f32.mrf.mxu0
      %v9343 = vadd.f32 0.0, %v9342
      %v9344 = vpop.f32.mrf.mxu0
      %9345 = vmatprep.mubr.bf16.mxu0 0
      %9346 = vmatmul.mubr.bf16.gmra.mxu0 %v9128
      %v9347 = vpop.f32.mrf.mxu0
      %v9348 = vadd.f32 0.0, %v9347
      %v9349 = vpop.f32.mrf.mxu0
      %v9350 = vpop.f32.mrf.mxu0
      %v9351 = vadd.f32 0.0, %v9350
      %v9352 = vpop.f32.mrf.mxu0
      %9353 = vdwg.mxu0
      %v9354 = vadd.f32 %v9032, %v9228
      %v9355 = vadd.f32 %v9033, %v9231
      %v9356 = vadd.f32 %v9034, %v9236
      %v9357 = vadd.f32 %v9035, %v9239
      %v9358 = vadd.f32 %v9036, %v9244
      %v9359 = vadd.f32 %v9037, %v9247
      %v9360 = vadd.f32 %v9038, %v9252
      %v9361 = vadd.f32 %v9039, %v9255
      %v9362 = vadd.f32 %v9040, %v9260
      %v9363 = vadd.f32 %v9041, %v9263
      %v9364 = vadd.f32 %v9042, %v9268
      %v9365 = vadd.f32 %v9043, %v9271
      %v9366 = vadd.f32 %v9044, %v9276
      %v9367 = vadd.f32 %v9045, %v9279
      %v9368 = vadd.f32 %v9046, %v9284
      %v9369 = vadd.f32 %v9047, %v9287
      %v9370 = vadd.f32 %v9048, %v9292
      %v9371 = vadd.f32 %v9049, %v9295
      %v9372 = vadd.f32 %v9050, %v9300
      %v9373 = vadd.f32 %v9051, %v9303
      %v9374 = vadd.f32 %v9052, %v9308
      %v9375 = vadd.f32 %v9053, %v9311
      %v9376 = vadd.f32 %v9054, %v9316
      %v9377 = vadd.f32 %v9055, %v9319
      %v9378 = vadd.f32 %v9056, %v9324
      %v9379 = vadd.f32 %v9057, %v9327
      %v9380 = vadd.f32 %v9058, %v9332
      %v9381 = vadd.f32 %v9059, %v9335
      %v9382 = vadd.f32 %v9060, %v9340
      %v9383 = vadd.f32 %v9061, %v9343
      %v9384 = vadd.f32 %v9062, %v9348
      %v9385 = vadd.f32 %v9063, %v9351
      %9386 = vst [vmem:[#allocation4] sm:$0xff] %v9354
      %9387 = vst [vmem:[#allocation4 + $0x8] sm:$0xff] %v9355
      %9388 = vst [vmem:[#allocation4 + $0x10] sm:$0xff] %v9356
      %9389 = vst [vmem:[#allocation4 + $0x18] sm:$0xff] %v9357
      %9390 = vst [vmem:[#allocation4 + $0x20] sm:$0xff] %v9358
      %9391 = vst [vmem:[#allocation4 + $0x28] sm:$0xff] %v9359
      %9392 = vst [vmem:[#allocation4 + $0x30] sm:$0xff] %v9360
      %9393 = vst [vmem:[#allocation4 + $0x38] sm:$0xff] %v9361
      %9394 = vst [vmem:[#allocation4 + $0x40] sm:$0xff] %v9362
      %9395 = vst [vmem:[#allocation4 + $0x48] sm:$0xff] %v9363
      %9396 = vst [vmem:[#allocation4 + $0x50] sm:$0xff] %v9364
      %9397 = vst [vmem:[#allocation4 + $0x58] sm:$0xff] %v9365
      %9398 = vst [vmem:[#allocation4 + $0x60] sm:$0xff] %v9366
      %9399 = vst [vmem:[#allocation4 + $0x68] sm:$0xff] %v9367
      %9400 = vst [vmem:[#allocation4 + $0x70] sm:$0xff] %v9368
      %9401 = vst [vmem:[#allocation4 + $0x78] sm:$0xff] %v9369
      %9402 = vst [vmem:[#allocation4 + $0x80] sm:$0xff] %v9370
      %9403 = vst [vmem:[#allocation4 + $0x88] sm:$0xff] %v9371
      %9404 = vst [vmem:[#allocation4 + $0x90] sm:$0xff] %v9372
      %9405 = vst [vmem:[#allocation4 + $0x98] sm:$0xff] %v9373
      %9406 = vst [vmem:[#allocation4 + $0xa0] sm:$0xff] %v9374
      %9407 = vst [vmem:[#allocation4 + $0xa8] sm:$0xff] %v9375
      %9408 = vst [vmem:[#allocation4 + $0xb0] sm:$0xff] %v9376
      %9409 = vst [vmem:[#allocation4 + $0xb8] sm:$0xff] %v9377
      %9410 = vst [vmem:[#allocation4 + $0xc0] sm:$0xff] %v9378
      %9411 = vst [vmem:[#allocation4 + $0xc8] sm:$0xff] %v9379
      %9412 = vst [vmem:[#allocation4 + $0xd0] sm:$0xff] %v9380
      %9413 = vst [vmem:[#allocation4 + $0xd8] sm:$0xff] %v9381
      %9414 = vst [vmem:[#allocation4 + $0xe0] sm:$0xff] %v9382
      %9415 = vst [vmem:[#allocation4 + $0xe8] sm:$0xff] %v9383
      %9416 = vst [vmem:[#allocation4 + $0xf0] sm:$0xff] %v9384
      %9417 = vst [vmem:[#allocation4 + $0xf8] sm:$0xff] %v9385
      %v9418 = vld [vmem:[%s8149] sm:$0xe]
      %v9419 = vld [vmem:[%s8149 + $0x4] sm:$0xf]
      %v9420 = vld [vmem:[%s8149 + $0x8] sm:$0x1]
      %v9421 = vld [vmem:[%s8149 + $0xc] sm:$0xe]
      %v9422 = vld [vmem:[%s8149 + $0x10] sm:$0xf]
      %v9423 = vld [vmem:[%s8149 + $0x14] sm:$0x1]
      %v9424 = vld [vmem:[%s8149 + $0x18] sm:$0xe]
      %v9425 = vld [vmem:[%s8149 + $0x1c] sm:$0xf]
      %v9426 = vld [vmem:[%s8149 + $0x20] sm:$0x1]
      %v9427 = vld [vmem:[%s8149 + $0x24] sm:$0xe]
      %v9428 = vld [vmem:[%s8149 + $0x28] sm:$0xf]
      %v9429 = vld [vmem:[%s8149 + $0x2c] sm:$0x1]
      %v9430 = vld [vmem:[%s8149 + $0x30] sm:$0xe]
      %v9431 = vld [vmem:[%s8149 + $0x34] sm:$0xf]
      %v9432 = vld [vmem:[%s8149 + $0x38] sm:$0x1]
      %v9433 = vld [vmem:[%s8149 + $0x3c] sm:$0xe]
      %v9434 = vld [vmem:[%s8149 + $0x40] sm:$0xf]
      %v9435 = vld [vmem:[%s8149 + $0x44] sm:$0x1]
      %v9436 = vld [vmem:[%s8149 + $0x48] sm:$0xe]
      %v9437 = vld [vmem:[%s8149 + $0x4c] sm:$0xf]
      %v9438 = vld [vmem:[%s8149 + $0x50] sm:$0x1]
      %v9439 = vld [vmem:[%s8149 + $0x54] sm:$0xe]
      %v9440 = vld [vmem:[%s8149 + $0x58] sm:$0xf]
      %v9441 = vld [vmem:[%s8149 + $0x5c] sm:$0x1]
      %v9442 = vld [vmem:[%s8149 + $0x60] sm:$0xe]
      %v9443 = vld [vmem:[%s8149 + $0x64] sm:$0xf]
      %v9444 = vld [vmem:[%s8149 + $0x68] sm:$0x1]
      %v9445 = vld [vmem:[%s8149 + $0x6c] sm:$0xe]
      %v9446 = vld [vmem:[%s8149 + $0x70] sm:$0xf]
      %v9447 = vld [vmem:[%s8149 + $0x74] sm:$0x1]
      %v9448 = vld [vmem:[%s8149 + $0x78] sm:$0xe]
      %v9449 = vld [vmem:[%s8149 + $0x7c] sm:$0xf]
      %v9450 = vld [vmem:[%s8149 + $0x80] sm:$0x1]
      %v9451 = vld [vmem:[%s8149 + $0x84] sm:$0xe]
      %v9452 = vld [vmem:[%s8149 + $0x88] sm:$0xf]
      %v9453 = vld [vmem:[%s8149 + $0x8c] sm:$0x1]
      %v9454 = vld [vmem:[%s8149 + $0x90] sm:$0xe]
      %v9455 = vld [vmem:[%s8149 + $0x94] sm:$0xf]
      %v9456 = vld [vmem:[%s8149 + $0x98] sm:$0x1]
      %v9457 = vld [vmem:[%s8149 + $0x9c] sm:$0xe]
      %v9458 = vld [vmem:[%s8149 + $0xa0] sm:$0xf]
      %v9459 = vld [vmem:[%s8149 + $0xa4] sm:$0x1]
      %v9460 = vld [vmem:[%s8149 + $0xa8] sm:$0xe]
      %v9461 = vld [vmem:[%s8149 + $0xac] sm:$0xf]
      %v9462 = vld [vmem:[%s8149 + $0xb0] sm:$0x1]
      %v9463 = vld [vmem:[%s8149 + $0xb4] sm:$0xe]
      %v9464 = vld [vmem:[%s8149 + $0xb8] sm:$0xf]
      %v9465 = vld [vmem:[%s8149 + $0xbc] sm:$0x1]
      %v9514 = vrot.slane %v9418, 5
      %v9515 = vrot.slane %v9514, 4
      %v9516 = vrot.slane %v9419, 5
      %v9517 = vsel %vm953, %v9515, %v9516
      %v9518 = vrot.slane %v9516, 4
      %v9519 = vrot.slane %v9420, 5
      %v9520 = vsel %vm953, %v9518, %v9519
      %v9521 = vrot.slane %v9421, 5
      %v9522 = vrot.slane %v9521, 4
      %v9523 = vrot.slane %v9422, 5
      %v9524 = vsel %vm953, %v9522, %v9523
      %v9525 = vrot.slane %v9523, 4
      %v9526 = vrot.slane %v9423, 5
      %v9527 = vsel %vm953, %v9525, %v9526
      %v9528 = vrot.slane %v9424, 5
      %v9529 = vrot.slane %v9528, 4
      %v9530 = vrot.slane %v9425, 5
      %v9531 = vsel %vm953, %v9529, %v9530
      %v9532 = vrot.slane %v9530, 4
      %v9533 = vrot.slane %v9426, 5
      %v9534 = vsel %vm953, %v9532, %v9533
      %v9535 = vrot.slane %v9427, 5
      %v9536 = vrot.slane %v9535, 4
      %v9537 = vrot.slane %v9428, 5
      %v9538 = vsel %vm953, %v9536, %v9537
      %v9539 = vrot.slane %v9537, 4
      %v9540 = vrot.slane %v9429, 5
      %v9541 = vsel %vm953, %v9539, %v9540
      %v9542 = vrot.slane %v9430, 5
      %v9543 = vrot.slane %v9542, 4
      %v9544 = vrot.slane %v9431, 5
      %v9545 = vsel %vm953, %v9543, %v9544
      %v9546 = vrot.slane %v9544, 4
      %v9547 = vrot.slane %v9432, 5
      %v9548 = vsel %vm953, %v9546, %v9547
      %v9549 = vrot.slane %v9433, 5
      %v9550 = vrot.slane %v9549, 4
      %v9551 = vrot.slane %v9434, 5
      %v9552 = vsel %vm953, %v9550, %v9551
      %v9553 = vrot.slane %v9551, 4
      %v9554 = vrot.slane %v9435, 5
      %v9555 = vsel %vm953, %v9553, %v9554
      %v9556 = vrot.slane %v9436, 5
      %v9557 = vrot.slane %v9556, 4
      %v9558 = vrot.slane %v9437, 5
      %v9559 = vsel %vm953, %v9557, %v9558
      %v9560 = vrot.slane %v9558, 4
      %v9561 = vrot.slane %v9438, 5
      %v9562 = vsel %vm953, %v9560, %v9561
      %v9563 = vrot.slane %v9439, 5
      %v9564 = vrot.slane %v9563, 4
      %v9565 = vrot.slane %v9440, 5
      %v9566 = vsel %vm953, %v9564, %v9565
      %v9567 = vrot.slane %v9565, 4
      %v9568 = vrot.slane %v9441, 5
      %v9569 = vsel %vm953, %v9567, %v9568
      %v9570 = vrot.slane %v9442, 5
      %v9571 = vrot.slane %v9570, 4
      %v9572 = vrot.slane %v9443, 5
      %v9573 = vsel %vm953, %v9571, %v9572
      %v9574 = vrot.slane %v9572, 4
      %v9575 = vrot.slane %v9444, 5
      %v9576 = vsel %vm953, %v9574, %v9575
      %v9577 = vrot.slane %v9445, 5
      %v9578 = vrot.slane %v9577, 4
      %v9579 = vrot.slane %v9446, 5
      %v9580 = vsel %vm953, %v9578, %v9579
      %v9581 = vrot.slane %v9579, 4
      %v9582 = vrot.slane %v9447, 5
      %v9583 = vsel %vm953, %v9581, %v9582
      %v9584 = vrot.slane %v9448, 5
      %v9585 = vrot.slane %v9584, 4
      %v9586 = vrot.slane %v9449, 5
      %v9587 = vsel %vm953, %v9585, %v9586
      %v9588 = vrot.slane %v9586, 4
      %v9589 = vrot.slane %v9450, 5
      %v9590 = vsel %vm953, %v9588, %v9589
      %v9591 = vrot.slane %v9451, 5
      %v9592 = vrot.slane %v9591, 4
      %v9593 = vrot.slane %v9452, 5
      %v9594 = vsel %vm953, %v9592, %v9593
      %v9595 = vrot.slane %v9593, 4
      %v9596 = vrot.slane %v9453, 5
      %v9597 = vsel %vm953, %v9595, %v9596
      %v9598 = vrot.slane %v9454, 5
      %v9599 = vrot.slane %v9598, 4
      %v9600 = vrot.slane %v9455, 5
      %v9601 = vsel %vm953, %v9599, %v9600
      %v9602 = vrot.slane %v9600, 4
      %v9603 = vrot.slane %v9456, 5
      %v9604 = vsel %vm953, %v9602, %v9603
      %v9605 = vrot.slane %v9457, 5
      %v9606 = vrot.slane %v9605, 4
      %v9607 = vrot.slane %v9458, 5
      %v9608 = vsel %vm953, %v9606, %v9607
      %v9609 = vrot.slane %v9607, 4
      %v9610 = vrot.slane %v9459, 5
      %v9611 = vsel %vm953, %v9609, %v9610
      %v9612 = vrot.slane %v9460, 5
      %v9613 = vrot.slane %v9612, 4
      %v9614 = vrot.slane %v9461, 5
      %v9615 = vsel %vm953, %v9613, %v9614
      %v9616 = vrot.slane %v9614, 4
      %v9617 = vrot.slane %v9462, 5
      %v9618 = vsel %vm953, %v9616, %v9617
      %v9619 = vrot.slane %v9463, 5
      %v9620 = vrot.slane %v9619, 4
      %v9621 = vrot.slane %v9464, 5
      %v9622 = vsel %vm953, %v9620, %v9621
      %v9623 = vrot.slane %v9621, 4
      %v9624 = vrot.slane %v9465, 5
      %v9625 = vsel %vm953, %v9623, %v9624
      %v9626 = vld [vmem:[#allocation4] sm:$0xff]
      %v9627 = vld [vmem:[#allocation4 + $0x8] sm:$0xff]
      %v9628 = vld [vmem:[#allocation4 + $0x10] sm:$0xff]
      %v9629 = vld [vmem:[#allocation4 + $0x18] sm:$0xff]
      %v9630 = vld [vmem:[#allocation4 + $0x20] sm:$0xff]
      %v9631 = vld [vmem:[#allocation4 + $0x28] sm:$0xff]
      %v9632 = vld [vmem:[#allocation4 + $0x30] sm:$0xff]
      %v9633 = vld [vmem:[#allocation4 + $0x38] sm:$0xff]
      %v9634 = vld [vmem:[#allocation4 + $0x40] sm:$0xff]
      %v9635 = vld [vmem:[#allocation4 + $0x48] sm:$0xff]
      %v9636 = vld [vmem:[#allocation4 + $0x50] sm:$0xff]
      %v9637 = vld [vmem:[#allocation4 + $0x58] sm:$0xff]
      %v9638 = vld [vmem:[#allocation4 + $0x60] sm:$0xff]
      %v9639 = vld [vmem:[#allocation4 + $0x68] sm:$0xff]
      %v9640 = vld [vmem:[#allocation4 + $0x70] sm:$0xff]
      %v9641 = vld [vmem:[#allocation4 + $0x78] sm:$0xff]
      %v9642 = vld [vmem:[#allocation4 + $0x80] sm:$0xff]
      %v9643 = vld [vmem:[#allocation4 + $0x88] sm:$0xff]
      %v9644 = vld [vmem:[#allocation4 + $0x90] sm:$0xff]
      %v9645 = vld [vmem:[#allocation4 + $0x98] sm:$0xff]
      %v9646 = vld [vmem:[#allocation4 + $0xa0] sm:$0xff]
      %v9647 = vld [vmem:[#allocation4 + $0xa8] sm:$0xff]
      %v9648 = vld [vmem:[#allocation4 + $0xb0] sm:$0xff]
      %v9649 = vld [vmem:[#allocation4 + $0xb8] sm:$0xff]
      %v9650 = vld [vmem:[#allocation4 + $0xc0] sm:$0xff]
      %v9651 = vld [vmem:[#allocation4 + $0xc8] sm:$0xff]
      %v9652 = vld [vmem:[#allocation4 + $0xd0] sm:$0xff]
      %v9653 = vld [vmem:[#allocation4 + $0xd8] sm:$0xff]
      %v9654 = vld [vmem:[#allocation4 + $0xe0] sm:$0xff]
      %v9655 = vld [vmem:[#allocation4 + $0xe8] sm:$0xff]
      %v9656 = vld [vmem:[#allocation4 + $0xf0] sm:$0xff]
      %v9657 = vld [vmem:[#allocation4 + $0xf8] sm:$0xff]
      %s9658 = scalar_lea.vmem %s3, 512
      %v9659 = vld [vmem:[%s9658] sm:$0xf]
      %v9660 = vld [vmem:[%s9658 + $0x4] sm:$0xf]
      %v9661 = vld [vmem:[%s9658 + $0x8] sm:$0xf]
      %v9662 = vld [vmem:[%s9658 + $0xc] sm:$0xf]
      %v9663 = vld [vmem:[%s9658 + $0x10] sm:$0xf]
      %v9664 = vld [vmem:[%s9658 + $0x14] sm:$0xf]
      %v9665 = vld [vmem:[%s9658 + $0x18] sm:$0xf]
      %v9666 = vld [vmem:[%s9658 + $0x1c] sm:$0xf]
      %v9667 = vld [vmem:[%s9658 + $0x20] sm:$0xf]
      %v9668 = vld [vmem:[%s9658 + $0x24] sm:$0xf]
      %v9669 = vld [vmem:[%s9658 + $0x28] sm:$0xf]
      %v9670 = vld [vmem:[%s9658 + $0x2c] sm:$0xf]
      %v9671 = vld [vmem:[%s9658 + $0x30] sm:$0xf]
      %v9672 = vld [vmem:[%s9658 + $0x34] sm:$0xf]
      %v9673 = vld [vmem:[%s9658 + $0x38] sm:$0xf]
      %v9674 = vld [vmem:[%s9658 + $0x3c] sm:$0xf]
      %v9675 = vunpack.c.l.b16 %v9517
      %v9676 = vunpack.c.l.b16 %v9520
      %v9677 = vunpack.c.l.b16 %v9524
      %v9678 = vunpack.c.l.b16 %v9527
      %v9679 = vunpack.c.l.b16 %v9531
      %v9680 = vunpack.c.l.b16 %v9534
      %v9681 = vunpack.c.l.b16 %v9538
      %v9682 = vunpack.c.l.b16 %v9541
      %v9683 = vunpack.c.l.b16 %v9545
      %v9684 = vunpack.c.l.b16 %v9548
      %v9685 = vunpack.c.l.b16 %v9552
      %v9686 = vunpack.c.l.b16 %v9555
      %v9687 = vunpack.c.l.b16 %v9559
      %v9688 = vunpack.c.l.b16 %v9562
      %v9689 = vunpack.c.l.b16 %v9566
      %v9690 = vunpack.c.l.b16 %v9569
      %v9691 = vunpack.c.l.b16 %v9573
      %v9692 = vunpack.c.l.b16 %v9576
      %v9693 = vunpack.c.l.b16 %v9580
      %v9694 = vunpack.c.l.b16 %v9583
      %v9695 = vunpack.c.l.b16 %v9587
      %v9696 = vunpack.c.l.b16 %v9590
      %v9697 = vunpack.c.l.b16 %v9594
      %v9698 = vunpack.c.l.b16 %v9597
      %v9699 = vunpack.c.l.b16 %v9601
      %v9700 = vunpack.c.l.b16 %v9604
      %v9701 = vunpack.c.l.b16 %v9608
      %v9702 = vunpack.c.l.b16 %v9611
      %v9703 = vunpack.c.l.b16 %v9615
      %v9704 = vunpack.c.l.b16 %v9618
      %v9705 = vunpack.c.l.b16 %v9622
      %v9706 = vunpack.c.l.b16 %v9625
      %v9707 = vpack.c.b16 %v9676, %v9675
      %v9708 = vpack.c.b16 %v9678, %v9677
      %v9709 = vpack.c.b16 %v9680, %v9679
      %v9710 = vpack.c.b16 %v9682, %v9681
      %v9711 = vpack.c.b16 %v9684, %v9683
      %v9712 = vpack.c.b16 %v9686, %v9685
      %v9713 = vpack.c.b16 %v9688, %v9687
      %v9714 = vpack.c.b16 %v9690, %v9689
      %v9715 = vpack.c.b16 %v9692, %v9691
      %v9716 = vpack.c.b16 %v9694, %v9693
      %v9717 = vpack.c.b16 %v9696, %v9695
      %v9718 = vpack.c.b16 %v9698, %v9697
      %v9719 = vpack.c.b16 %v9700, %v9699
      %v9720 = vpack.c.b16 %v9702, %v9701
      %v9721 = vpack.c.b16 %v9704, %v9703
      %v9722 = vpack.c.b16 %v9706, %v9705
      %v9755 = vunpack.c.l.b16 %v9659
      %v9756 = vunpack.c.l.b16 %v9660
      %v9757 = vunpack.c.l.b16 %v9661
      %v9758 = vunpack.c.l.b16 %v9662
      %v9759 = vunpack.c.l.b16 %v9663
      %v9760 = vunpack.c.l.b16 %v9664
      %v9761 = vunpack.c.l.b16 %v9665
      %v9762 = vunpack.c.l.b16 %v9666
      %v9763 = vunpack.c.l.b16 %v9667
      %v9764 = vunpack.c.l.b16 %v9668
      %v9765 = vunpack.c.l.b16 %v9669
      %v9766 = vunpack.c.l.b16 %v9670
      %v9767 = vunpack.c.l.b16 %v9671
      %v9768 = vunpack.c.l.b16 %v9672
      %v9769 = vunpack.c.l.b16 %v9673
      %v9770 = vunpack.c.l.b16 %v9674
      %v9771 = vpack.c.b16 %v9756, %v9755
      %v9772 = vpack.c.b16 %v9758, %v9757
      %v9773 = vpack.c.b16 %v9760, %v9759
      %v9774 = vpack.c.b16 %v9762, %v9761
      %v9775 = vpack.c.b16 %v9764, %v9763
      %v9776 = vpack.c.b16 %v9766, %v9765
      %v9777 = vpack.c.b16 %v9768, %v9767
      %v9778 = vpack.c.b16 %v9770, %v9769
      %9787 = vmatprep.subr.bf16.mxu0 0
      %9788 = vmatpush1.bf16.msra.mxu0 %v9778
      %9789 = vmatprep.subr.bf16.mxu0 0
      %9790 = vmatpush1.bf16.msra.mxu0 %v9777
      %9791 = vmatprep.subr.bf16.mxu0 0
      %9792 = vmatpush1.bf16.msra.mxu0 %v9776
      %9793 = vmatprep.subr.bf16.mxu0 0
      %9794 = vmatpush1.bf16.msra.mxu0 %v9775
      %9795 = vmatprep.subr.bf16.mxu0 0
      %9796 = vmatpush1.bf16.msra.mxu0 %v9774
      %9797 = vmatprep.subr.bf16.mxu0 0
      %9798 = vmatpush1.bf16.msra.mxu0 %v9773
      %9799 = vmatprep.subr.bf16.mxu0 0
      %9800 = vmatpush1.bf16.msra.mxu0 %v9772
      %9801 = vmatprep.subr.bf16.mxu0 0
      %9802 = vmatpush1.bf16.msra.mxu0 %v9771
      %9803 = vmatprep.subr.bf16.mxu0 0
      %9804 = vmatpush2.bf16.msra.mxu0 0
      %9805 = vmatprep.subr.bf16.mxu0 0
      %9806 = vmatpush2.bf16.msra.mxu0 0
      %9807 = vmatprep.subr.bf16.mxu0 0
      %9808 = vmatpush2.bf16.msra.mxu0 0
      %9809 = vmatprep.subr.bf16.mxu0 0
      %9810 = vmatpush2.bf16.msra.mxu0 0
      %9811 = vmatprep.subr.bf16.mxu0 0
      %9812 = vmatpush2.bf16.msra.mxu0 0
      %9813 = vmatprep.subr.bf16.mxu0 0
      %9814 = vmatpush2.bf16.msra.mxu0 0
      %9815 = vmatprep.subr.bf16.mxu0 0
      %9816 = vmatpush2.bf16.msra.mxu0 0
      %9817 = vmatprep.subr.bf16.mxu0 0
      %9818 = vmatpush2.bf16.msra.mxu0 0
      %9819 = vmatprep.mubr.bf16.mxu0 0
      %9820 = vmatmul.mubr.bf16.gmra.mxu0 %v9707
      %v9821 = vpop.f32.mrf.mxu0
      %v9822 = vadd.f32 0.0, %v9821
      %v9823 = vpop.f32.mrf.mxu0
      %v9824 = vpop.f32.mrf.mxu0
      %v9825 = vadd.f32 0.0, %v9824
      %v9826 = vpop.f32.mrf.mxu0
      %9827 = vmatprep.mubr.bf16.mxu0 0
      %9828 = vmatmul.mubr.bf16.gmra.mxu0 %v9708
      %v9829 = vpop.f32.mrf.mxu0
      %v9830 = vadd.f32 0.0, %v9829
      %v9831 = vpop.f32.mrf.mxu0
      %v9832 = vpop.f32.mrf.mxu0
      %v9833 = vadd.f32 0.0, %v9832
      %v9834 = vpop.f32.mrf.mxu0
      %9835 = vmatprep.mubr.bf16.mxu0 0
      %9836 = vmatmul.mubr.bf16.gmra.mxu0 %v9709
      %v9837 = vpop.f32.mrf.mxu0
      %v9838 = vadd.f32 0.0, %v9837
      %v9839 = vpop.f32.mrf.mxu0
      %v9840 = vpop.f32.mrf.mxu0
      %v9841 = vadd.f32 0.0, %v9840
      %v9842 = vpop.f32.mrf.mxu0
      %9843 = vmatprep.mubr.bf16.mxu0 0
      %9844 = vmatmul.mubr.bf16.gmra.mxu0 %v9710
      %v9845 = vpop.f32.mrf.mxu0
      %v9846 = vadd.f32 0.0, %v9845
      %v9847 = vpop.f32.mrf.mxu0
      %v9848 = vpop.f32.mrf.mxu0
      %v9849 = vadd.f32 0.0, %v9848
      %v9850 = vpop.f32.mrf.mxu0
      %9851 = vmatprep.mubr.bf16.mxu0 0
      %9852 = vmatmul.mubr.bf16.gmra.mxu0 %v9711
      %v9853 = vpop.f32.mrf.mxu0
      %v9854 = vadd.f32 0.0, %v9853
      %v9855 = vpop.f32.mrf.mxu0
      %v9856 = vpop.f32.mrf.mxu0
      %v9857 = vadd.f32 0.0, %v9856
      %v9858 = vpop.f32.mrf.mxu0
      %9859 = vmatprep.mubr.bf16.mxu0 0
      %9860 = vmatmul.mubr.bf16.gmra.mxu0 %v9712
      %v9861 = vpop.f32.mrf.mxu0
      %v9862 = vadd.f32 0.0, %v9861
      %v9863 = vpop.f32.mrf.mxu0
      %v9864 = vpop.f32.mrf.mxu0
      %v9865 = vadd.f32 0.0, %v9864
      %v9866 = vpop.f32.mrf.mxu0
      %9867 = vmatprep.mubr.bf16.mxu0 0
      %9868 = vmatmul.mubr.bf16.gmra.mxu0 %v9713
      %v9869 = vpop.f32.mrf.mxu0
      %v9870 = vadd.f32 0.0, %v9869
      %v9871 = vpop.f32.mrf.mxu0
      %v9872 = vpop.f32.mrf.mxu0
      %v9873 = vadd.f32 0.0, %v9872
      %v9874 = vpop.f32.mrf.mxu0
      %9875 = vmatprep.mubr.bf16.mxu0 0
      %9876 = vmatmul.mubr.bf16.gmra.mxu0 %v9714
      %v9877 = vpop.f32.mrf.mxu0
      %v9878 = vadd.f32 0.0, %v9877
      %v9879 = vpop.f32.mrf.mxu0
      %v9880 = vpop.f32.mrf.mxu0
      %v9881 = vadd.f32 0.0, %v9880
      %v9882 = vpop.f32.mrf.mxu0
      %9883 = vmatprep.mubr.bf16.mxu0 0
      %9884 = vmatmul.mubr.bf16.gmra.mxu0 %v9715
      %v9885 = vpop.f32.mrf.mxu0
      %v9886 = vadd.f32 0.0, %v9885
      %v9887 = vpop.f32.mrf.mxu0
      %v9888 = vpop.f32.mrf.mxu0
      %v9889 = vadd.f32 0.0, %v9888
      %v9890 = vpop.f32.mrf.mxu0
      %9891 = vmatprep.mubr.bf16.mxu0 0
      %9892 = vmatmul.mubr.bf16.gmra.mxu0 %v9716
      %v9893 = vpop.f32.mrf.mxu0
      %v9894 = vadd.f32 0.0, %v9893
      %v9895 = vpop.f32.mrf.mxu0
      %v9896 = vpop.f32.mrf.mxu0
      %v9897 = vadd.f32 0.0, %v9896
      %v9898 = vpop.f32.mrf.mxu0
      %9899 = vmatprep.mubr.bf16.mxu0 0
      %9900 = vmatmul.mubr.bf16.gmra.mxu0 %v9717
      %v9901 = vpop.f32.mrf.mxu0
      %v9902 = vadd.f32 0.0, %v9901
      %v9903 = vpop.f32.mrf.mxu0
      %v9904 = vpop.f32.mrf.mxu0
      %v9905 = vadd.f32 0.0, %v9904
      %v9906 = vpop.f32.mrf.mxu0
      %9907 = vmatprep.mubr.bf16.mxu0 0
      %9908 = vmatmul.mubr.bf16.gmra.mxu0 %v9718
      %v9909 = vpop.f32.mrf.mxu0
      %v9910 = vadd.f32 0.0, %v9909
      %v9911 = vpop.f32.mrf.mxu0
      %v9912 = vpop.f32.mrf.mxu0
      %v9913 = vadd.f32 0.0, %v9912
      %v9914 = vpop.f32.mrf.mxu0
      %9915 = vmatprep.mubr.bf16.mxu0 0
      %9916 = vmatmul.mubr.bf16.gmra.mxu0 %v9719
      %v9917 = vpop.f32.mrf.mxu0
      %v9918 = vadd.f32 0.0, %v9917
      %v9919 = vpop.f32.mrf.mxu0
      %v9920 = vpop.f32.mrf.mxu0
      %v9921 = vadd.f32 0.0, %v9920
      %v9922 = vpop.f32.mrf.mxu0
      %9923 = vmatprep.mubr.bf16.mxu0 0
      %9924 = vmatmul.mubr.bf16.gmra.mxu0 %v9720
      %v9925 = vpop.f32.mrf.mxu0
      %v9926 = vadd.f32 0.0, %v9925
      %v9927 = vpop.f32.mrf.mxu0
      %v9928 = vpop.f32.mrf.mxu0
      %v9929 = vadd.f32 0.0, %v9928
      %v9930 = vpop.f32.mrf.mxu0
      %9931 = vmatprep.mubr.bf16.mxu0 0
      %9932 = vmatmul.mubr.bf16.gmra.mxu0 %v9721
      %v9933 = vpop.f32.mrf.mxu0
      %v9934 = vadd.f32 0.0, %v9933
      %v9935 = vpop.f32.mrf.mxu0
      %v9936 = vpop.f32.mrf.mxu0
      %v9937 = vadd.f32 0.0, %v9936
      %v9938 = vpop.f32.mrf.mxu0
      %9939 = vmatprep.mubr.bf16.mxu0 0
      %9940 = vmatmul.mubr.bf16.gmra.mxu0 %v9722
      %v9941 = vpop.f32.mrf.mxu0
      %v9942 = vadd.f32 0.0, %v9941
      %v9943 = vpop.f32.mrf.mxu0
      %v9944 = vpop.f32.mrf.mxu0
      %v9945 = vadd.f32 0.0, %v9944
      %v9946 = vpop.f32.mrf.mxu0
      %9947 = vdwg.mxu0
      %v9948 = vadd.f32 %v9626, %v9822
      %v9949 = vadd.f32 %v9627, %v9825
      %v9950 = vadd.f32 %v9628, %v9830
      %v9951 = vadd.f32 %v9629, %v9833
      %v9952 = vadd.f32 %v9630, %v9838
      %v9953 = vadd.f32 %v9631, %v9841
      %v9954 = vadd.f32 %v9632, %v9846
      %v9955 = vadd.f32 %v9633, %v9849
      %v9956 = vadd.f32 %v9634, %v9854
      %v9957 = vadd.f32 %v9635, %v9857
      %v9958 = vadd.f32 %v9636, %v9862
      %v9959 = vadd.f32 %v9637, %v9865
      %v9960 = vadd.f32 %v9638, %v9870
      %v9961 = vadd.f32 %v9639, %v9873
      %v9962 = vadd.f32 %v9640, %v9878
      %v9963 = vadd.f32 %v9641, %v9881
      %v9964 = vadd.f32 %v9642, %v9886
      %v9965 = vadd.f32 %v9643, %v9889
      %v9966 = vadd.f32 %v9644, %v9894
      %v9967 = vadd.f32 %v9645, %v9897
      %v9968 = vadd.f32 %v9646, %v9902
      %v9969 = vadd.f32 %v9647, %v9905
      %v9970 = vadd.f32 %v9648, %v9910
      %v9971 = vadd.f32 %v9649, %v9913
      %v9972 = vadd.f32 %v9650, %v9918
      %v9973 = vadd.f32 %v9651, %v9921
      %v9974 = vadd.f32 %v9652, %v9926
      %v9975 = vadd.f32 %v9653, %v9929
      %v9976 = vadd.f32 %v9654, %v9934
      %v9977 = vadd.f32 %v9655, %v9937
      %v9978 = vadd.f32 %v9656, %v9942
      %v9979 = vadd.f32 %v9657, %v9945
      %9980 = vst [vmem:[#allocation4] sm:$0xff] %v9948
      %9981 = vst [vmem:[#allocation4 + $0x8] sm:$0xff] %v9949
      %9982 = vst [vmem:[#allocation4 + $0x10] sm:$0xff] %v9950
      %9983 = vst [vmem:[#allocation4 + $0x18] sm:$0xff] %v9951
      %9984 = vst [vmem:[#allocation4 + $0x20] sm:$0xff] %v9952
      %9985 = vst [vmem:[#allocation4 + $0x28] sm:$0xff] %v9953
      %9986 = vst [vmem:[#allocation4 + $0x30] sm:$0xff] %v9954
      %9987 = vst [vmem:[#allocation4 + $0x38] sm:$0xff] %v9955
      %9988 = vst [vmem:[#allocation4 + $0x40] sm:$0xff] %v9956
      %9989 = vst [vmem:[#allocation4 + $0x48] sm:$0xff] %v9957
      %9990 = vst [vmem:[#allocation4 + $0x50] sm:$0xff] %v9958
      %9991 = vst [vmem:[#allocation4 + $0x58] sm:$0xff] %v9959
      %9992 = vst [vmem:[#allocation4 + $0x60] sm:$0xff] %v9960
      %9993 = vst [vmem:[#allocation4 + $0x68] sm:$0xff] %v9961
      %9994 = vst [vmem:[#allocation4 + $0x70] sm:$0xff] %v9962
      %9995 = vst [vmem:[#allocation4 + $0x78] sm:$0xff] %v9963
      %9996 = vst [vmem:[#allocation4 + $0x80] sm:$0xff] %v9964
      %9997 = vst [vmem:[#allocation4 + $0x88] sm:$0xff] %v9965
      %9998 = vst [vmem:[#allocation4 + $0x90] sm:$0xff] %v9966
      %9999 = vst [vmem:[#allocation4 + $0x98] sm:$0xff] %v9967
      %10000 = vst [vmem:[#allocation4 + $0xa0] sm:$0xff] %v9968
      %10001 = vst [vmem:[#allocation4 + $0xa8] sm:$0xff] %v9969
      %10002 = vst [vmem:[#allocation4 + $0xb0] sm:$0xff] %v9970
      %10003 = vst [vmem:[#allocation4 + $0xb8] sm:$0xff] %v9971
      %10004 = vst [vmem:[#allocation4 + $0xc0] sm:$0xff] %v9972
      %10005 = vst [vmem:[#allocation4 + $0xc8] sm:$0xff] %v9973
      %10006 = vst [vmem:[#allocation4 + $0xd0] sm:$0xff] %v9974
      %10007 = vst [vmem:[#allocation4 + $0xd8] sm:$0xff] %v9975
      %10008 = vst [vmem:[#allocation4 + $0xe0] sm:$0xff] %v9976
      %10009 = vst [vmem:[#allocation4 + $0xe8] sm:$0xff] %v9977
      %10010 = vst [vmem:[#allocation4 + $0xf0] sm:$0xff] %v9978
      %10011 = vst [vmem:[#allocation4 + $0xf8] sm:$0xff] %v9979
      %v10012 = vld [vmem:[#allocation4] sm:$0xff]
      %v10013 = vld [vmem:[#allocation4 + $0x8] sm:$0xff]
      %v10014 = vld [vmem:[#allocation4 + $0x10] sm:$0xff]
      %v10015 = vld [vmem:[#allocation4 + $0x18] sm:$0xff]
      %v10016 = vld [vmem:[#allocation4 + $0x20] sm:$0xff]
      %v10017 = vld [vmem:[#allocation4 + $0x28] sm:$0xff]
      %v10018 = vld [vmem:[#allocation4 + $0x30] sm:$0xff]
      %v10019 = vld [vmem:[#allocation4 + $0x38] sm:$0xff]
      %v10020 = vld [vmem:[#allocation4 + $0x40] sm:$0xff]
      %v10021 = vld [vmem:[#allocation4 + $0x48] sm:$0xff]
      %v10022 = vld [vmem:[#allocation4 + $0x50] sm:$0xff]
      %v10023 = vld [vmem:[#allocation4 + $0x58] sm:$0xff]
      %v10024 = vld [vmem:[#allocation4 + $0x60] sm:$0xff]
      %v10025 = vld [vmem:[#allocation4 + $0x68] sm:$0xff]
      %v10026 = vld [vmem:[#allocation4 + $0x70] sm:$0xff]
      %v10027 = vld [vmem:[#allocation4 + $0x78] sm:$0xff]
      %v10028 = vld [vmem:[#allocation4 + $0x80] sm:$0xff]
      %v10029 = vld [vmem:[#allocation4 + $0x88] sm:$0xff]
      %v10030 = vld [vmem:[#allocation4 + $0x90] sm:$0xff]
      %v10031 = vld [vmem:[#allocation4 + $0x98] sm:$0xff]
      %v10032 = vld [vmem:[#allocation4 + $0xa0] sm:$0xff]
      %v10033 = vld [vmem:[#allocation4 + $0xa8] sm:$0xff]
      %v10034 = vld [vmem:[#allocation4 + $0xb0] sm:$0xff]
      %v10035 = vld [vmem:[#allocation4 + $0xb8] sm:$0xff]
      %v10036 = vld [vmem:[#allocation4 + $0xc0] sm:$0xff]
      %v10037 = vld [vmem:[#allocation4 + $0xc8] sm:$0xff]
      %v10038 = vld [vmem:[#allocation4 + $0xd0] sm:$0xff]
      %v10039 = vld [vmem:[#allocation4 + $0xd8] sm:$0xff]
      %v10040 = vld [vmem:[#allocation4 + $0xe0] sm:$0xff]
      %v10041 = vld [vmem:[#allocation4 + $0xe8] sm:$0xff]
      %v10042 = vld [vmem:[#allocation4 + $0xf0] sm:$0xff]
      %v10043 = vld [vmem:[#allocation4 + $0xf8] sm:$0xff]
      %v10044 = vmul.f32 %v10012, 0.2
      %v10045 = vmul.f32 %v10013, 0.2
      %v10046 = vmul.f32 %v10014, 0.2
      %v10047 = vmul.f32 %v10015, 0.2
      %v10048 = vmul.f32 %v10016, 0.2
      %v10049 = vmul.f32 %v10017, 0.2
      %v10050 = vmul.f32 %v10018, 0.2
      %v10051 = vmul.f32 %v10019, 0.2
      %v10052 = vmul.f32 %v10020, 0.2
      %v10053 = vmul.f32 %v10021, 0.2
      %v10054 = vmul.f32 %v10022, 0.2
      %v10055 = vmul.f32 %v10023, 0.2
      %v10056 = vmul.f32 %v10024, 0.2
      %v10057 = vmul.f32 %v10025, 0.2
      %v10058 = vmul.f32 %v10026, 0.2
      %v10059 = vmul.f32 %v10027, 0.2
      %v10060 = vmul.f32 %v10028, 0.2
      %v10061 = vmul.f32 %v10029, 0.2
      %v10062 = vmul.f32 %v10030, 0.2
      %v10063 = vmul.f32 %v10031, 0.2
      %v10064 = vmul.f32 %v10032, 0.2
      %v10065 = vmul.f32 %v10033, 0.2
      %v10066 = vmul.f32 %v10034, 0.2
      %v10067 = vmul.f32 %v10035, 0.2
      %v10068 = vmul.f32 %v10036, 0.2
      %v10069 = vmul.f32 %v10037, 0.2
      %v10070 = vmul.f32 %v10038, 0.2
      %v10071 = vmul.f32 %v10039, 0.2
      %v10072 = vmul.f32 %v10040, 0.2
      %v10073 = vmul.f32 %v10041, 0.2
      %v10074 = vmul.f32 %v10042, 0.2
      %v10075 = vmul.f32 %v10043, 0.2
      %v10076 = vmax.f32 %v10012, %v10044
      %v10077 = vmax.f32 %v10013, %v10045
      %v10078 = vmax.f32 %v10014, %v10046
      %v10079 = vmax.f32 %v10015, %v10047
      %v10080 = vmax.f32 %v10016, %v10048
      %v10081 = vmax.f32 %v10017, %v10049
      %v10082 = vmax.f32 %v10018, %v10050
      %v10083 = vmax.f32 %v10019, %v10051
      %v10084 = vmax.f32 %v10020, %v10052
      %v10085 = vmax.f32 %v10021, %v10053
      %v10086 = vmax.f32 %v10022, %v10054
      %v10087 = vmax.f32 %v10023, %v10055
      %v10088 = vmax.f32 %v10024, %v10056
      %v10089 = vmax.f32 %v10025, %v10057
      %v10090 = vmax.f32 %v10026, %v10058
      %v10091 = vmax.f32 %v10027, %v10059
      %v10092 = vmax.f32 %v10028, %v10060
      %v10093 = vmax.f32 %v10029, %v10061
      %v10094 = vmax.f32 %v10030, %v10062
      %v10095 = vmax.f32 %v10031, %v10063
      %v10096 = vmax.f32 %v10032, %v10064
      %v10097 = vmax.f32 %v10033, %v10065
      %v10098 = vmax.f32 %v10034, %v10066
      %v10099 = vmax.f32 %v10035, %v10067
      %v10100 = vmax.f32 %v10036, %v10068
      %v10101 = vmax.f32 %v10037, %v10069
      %v10102 = vmax.f32 %v10038, %v10070
      %v10103 = vmax.f32 %v10039, %v10071
      %v10104 = vmax.f32 %v10040, %v10072
      %v10105 = vmax.f32 %v10041, %v10073
      %v10106 = vmax.f32 %v10042, %v10074
      %v10107 = vmax.f32 %v10043, %v10075
      %10108 = vst [vmem:[%s224] sm:$0xff] %v10076
      %10109 = vst [vmem:[%s224 + $0x8] sm:$0xff] %v10077
      %10110 = vst [vmem:[%s224 + $0x10] sm:$0xff] %v10078
      %10111 = vst [vmem:[%s224 + $0x18] sm:$0xff] %v10079
      %10112 = vst [vmem:[%s224 + $0x20] sm:$0xff] %v10080
      %10113 = vst [vmem:[%s224 + $0x28] sm:$0xff] %v10081
      %10114 = vst [vmem:[%s224 + $0x30] sm:$0xff] %v10082
      %10115 = vst [vmem:[%s224 + $0x38] sm:$0xff] %v10083
      %10116 = vst [vmem:[%s224 + $0x40] sm:$0xff] %v10084
      %10117 = vst [vmem:[%s224 + $0x48] sm:$0xff] %v10085
      %10118 = vst [vmem:[%s224 + $0x50] sm:$0xff] %v10086
      %10119 = vst [vmem:[%s224 + $0x58] sm:$0xff] %v10087
      %10120 = vst [vmem:[%s224 + $0x60] sm:$0xff] %v10088
      %10121 = vst [vmem:[%s224 + $0x68] sm:$0xff] %v10089
      %10122 = vst [vmem:[%s224 + $0x70] sm:$0xff] %v10090
      %10123 = vst [vmem:[%s224 + $0x78] sm:$0xff] %v10091
      %10124 = vst [vmem:[%s224 + $0x80] sm:$0xff] %v10092
      %10125 = vst [vmem:[%s224 + $0x88] sm:$0xff] %v10093
      %10126 = vst [vmem:[%s224 + $0x90] sm:$0xff] %v10094
      %10127 = vst [vmem:[%s224 + $0x98] sm:$0xff] %v10095
      %10128 = vst [vmem:[%s224 + $0xa0] sm:$0xff] %v10096
      %10129 = vst [vmem:[%s224 + $0xa8] sm:$0xff] %v10097
      %10130 = vst [vmem:[%s224 + $0xb0] sm:$0xff] %v10098
      %10131 = vst [vmem:[%s224 + $0xb8] sm:$0xff] %v10099
      %10132 = vst [vmem:[%s224 + $0xc0] sm:$0xff] %v10100
      %10133 = vst [vmem:[%s224 + $0xc8] sm:$0xff] %v10101
      %10134 = vst [vmem:[%s224 + $0xd0] sm:$0xff] %v10102
      %10135 = vst [vmem:[%s224 + $0xd8] sm:$0xff] %v10103
      %10136 = vst [vmem:[%s224 + $0xe0] sm:$0xff] %v10104
      %10137 = vst [vmem:[%s224 + $0xe8] sm:$0xff] %v10105
      %10138 = vst [vmem:[%s224 + $0xf0] sm:$0xff] %v10106
      %10139 = vst [vmem:[%s224 + $0xf8] sm:$0xff] %v10107
      %p10140 = scmp.lt.s32.totalorder %s16, 1
      %s10141 = scalar_select %p10140, %s16, 1
      %s10142 = smul.addr %s10141, 32
      %s10143 = smul.addr %s10142, 8
      %s10144 = scalar_lea.vmem %s5, %s10143
      // Predicated region
      $region41: #{conv_block_forward.1} parent=39 // pred_check
        %p10145 = pneg %p144
      $region42: #{conv_block_forward.1} parent=39 // pred_check_branch
        %10147 = sbr.rel (%p10145) target = $region44
      $region43: #{conv_block_forward.1} parent=39 // pred_region
        _
      $region44: #{conv_block_forward.1} parent=39 // pred_fallthru
        _
    $region40: #{conv_block_forward.1} parent=5 // pred_fallthru
      _
    %p10148 = scmp.le.s32.totalorder 2, %s11
    // Predicated region
    $region45: #{conv_block_forward.1} parent=5 // pred_check
      %p10149 = pneg %p10148
    $region46: #{conv_block_forward.1} parent=5 // pred_check_branch
      %10151 = sbr.rel (%p10149) target = $region48
    $region47: #{conv_block_forward.1} parent=5 // pred_region
      %s10152 = ssub.s32 %s11, 2
      // Predicated region
      $region49: #{conv_block_forward.1} parent=47 // pred_check
        %p10153 = pneg %p150
      $region50: #{conv_block_forward.1} parent=47 // pred_check_branch
        %10155 = sbr.rel (%p10153) target = $region52
      $region51: #{conv_block_forward.1} parent=47 // pred_region
        %p10156 = scmp.lt.s32.totalorder %s17, 1
        %s10157 = scalar_select %p10156, %s17, 1
        %s10158 = smul.addr %s10157, 32
        %s10159 = smul.addr %s10158, 8
        %s10160 = scalar_lea.vmem %s5, %s10159
      $region52: #{conv_block_forward.1} parent=47 // pred_fallthru
        _
    $region48: #{conv_block_forward.1} parent=5 // pred_fallthru
      _
  $region6: #{conv_block_forward.1} parent=0 // loop_footer
    %s15 = sadd.s32 1, %s11
  $region7: #{conv_block_forward.1} parent=0 // loop_footer_branch
    %10 = sbr.rel target = $region3
  $region8: #{conv_block_forward.1} parent=0 // loop_exit
    _

</llo_original>
